<compile_context>
chip_gen: v7x
topology: tpu7x:2x2x1
jax: 0.10.0
libtpu: 0.0.40
codegen_flags: <defaults>
</compile_context>

<pallas_src>
import functools

import jax
import jax.numpy as jnp
from jax.experimental import pallas as pl
from jax.experimental.pallas import tpu as pltpu

_BN_EPS = 1e-5


def _pick_m_chunk(hw):
    # 64-128 row chunks keep the f32 accumulator at <=16 vregs (no spills)
    # while K=3*C=384 keeps the MXU pipeline reasonably fat.
    for cand in (128, 256, 64, 32, 16, 8):
        if hw % cand == 0:
            return cand
    return hw


# ----------------------------------------------------------------------------
# Kernel 1/2: 3x3 'same' conv (optionally fused with a BN-affine+ReLU prologue)
#             + per-image BN partial statistics.
# ----------------------------------------------------------------------------
def _conv3x3_stats_kernel(*refs, H, W, C, m_chunk, fuse_prologue):
    # refs (prologue fused): x_ref, s_ref, b_ref, w_ref, o_ref, st_ref, p_ref
    # refs (no prologue):    x_ref,               w_ref, o_ref, st_ref, p_ref
    #   x_ref : (H*W, C)        f32   one image, row m = y*W + j (batch squeezed)
    #   s_ref : (1, C)          f32   BN-affine scale   (only if fuse_prologue)
    #   b_ref : (1, C)          f32   BN-affine shift   (only if fuse_prologue)
    #   w_ref : (3, 3*C, Cout)  bf16  K-stacked taps: [ky, kx*C + ci, co]
    #   o_ref : (H*W, Cout)     f32   conv output
    #   st_ref: (2, Cout)       f32   per-image [sum, sum-of-squares]
    #   p_ref : ((H+2)*W, 3*C)  bf16  scratch: dx-stacked rows, zero H-halo
    if fuse_prologue:
        x_ref, s_ref, b_ref, w_ref, o_ref, st_ref, p_ref = refs
    else:
        x_ref, w_ref, o_ref, st_ref, p_ref = refs

    HW = H * W
    Cout = o_ref.shape[-1]

    xf = x_ref[...]                                     # (HW, C) f32
    if fuse_prologue:                                   # fused ReLU(BN-affine(.))
        xf = jnp.maximum(xf * s_ref[...] + b_ref[...], 0.0)

    # Zero ONLY the 2*W halo rows (top/bottom image-row padding); the interior
    # is fully overwritten below.  Re-done every grid step so it stays correct
    # under batch-parallel megacore execution (no program_id gating).
    zrow = jnp.zeros((W, 3 * C), jnp.bfloat16)
    p_ref[0:W, :] = zrow
    p_ref[(H + 1) * W:(H + 2) * W, :] = zrow

    # Column index of each flattened row (for the left/right edge masks).
    m_idx = jax.lax.broadcasted_iota(jnp.int32, (HW, 1), 0)
    if (W & (W - 1)) == 0:                              # W power of two (common)
        col = jnp.bitwise_and(m_idx, W - 1)
    else:
        col = jax.lax.broadcasted_iota(jnp.int32, (H, W, 1), 1).reshape(HW, 1)

    # dx taps via XLU sublane rolls of the flattened image + cheap column masks
    # (no misaligned sublane slices, no full-scratch zero fill).  Rolled values
    # that wrap across an image row land exactly on the masked columns.
    left = jnp.where(col == 0, 0.0, pltpu.roll(xf, 1, axis=0))          # x[y, j-1]
    right = jnp.where(col == W - 1, 0.0, pltpu.roll(xf, HW - 1, axis=0))  # x[y, j+1]

    # K-stack the taps on the lane axis (aligned 128-lane slabs), bf16 scratch.
    p_ref[W:W + HW, 0:C] = left.astype(jnp.bfloat16)
    p_ref[W:W + HW, C:2 * C] = xf.astype(jnp.bfloat16)
    p_ref[W:W + HW, 2 * C:3 * C] = right.astype(jnp.bfloat16)

    # M-chunked fat MXU matmuls (K = 3*C): value-level accumulation (no o_ref
    # read-modify-write), one store per chunk, stats from the live accumulator.
    s_acc = jnp.zeros((1, Cout), jnp.float32)
    ss_acc = jnp.zeros((1, Cout), jnp.float32)
    for r0 in range(0, HW, m_chunk):                    # static unroll, few iters
        a = jnp.dot(p_ref[r0:r0 + m_chunk, :], w_ref[0],
                    preferred_element_type=jnp.float32)
        a = a + jnp.dot(p_ref[r0 + W:r0 + W + m_chunk, :], w_ref[1],
                        preferred_element_type=jnp.float32)
        a = a + jnp.dot(p_ref[r0 + 2 * W:r0 + 2 * W + m_chunk, :], w_ref[2],
                        preferred_element_type=jnp.float32)
        o_ref[r0:r0 + m_chunk, :] = a
        s_acc = s_acc + jnp.sum(a, axis=0, keepdims=True)
        ss_acc = ss_acc + jnp.sum(a * a, axis=0, keepdims=True)

    # Per-image partials, reduced across the batch by tiny JAX glue.
    st_ref[...] = jnp.concatenate([s_acc, ss_acc], axis=0)


def conv3x3_stats(x_flat, w_k, H, W, prologue=None):
    """3x3 'same' conv (bias-free), optionally prefixed by ReLU(x*scale+shift).

    x_flat:   (B, H*W, C) f32, NHWC flattened over the spatial dims
    w_k:      (3, 3*C, Cout) bf16, K-stacked taps [ky, kx*C + ci, co]
    prologue: optional (scale, shift), each (1, C) f32

    Returns (pre, stats): pre (B, H*W, Cout) f32, stats (B, 2, Cout) f32 with
    stats[b] = [sum over pixels, sum of squares over pixels] of pre[b].
    """
    B, HW, C = x_flat.shape
    assert HW == H * W
    Cout = w_k.shape[-1]
    fuse = prologue is not None
    m_chunk = _pick_m_chunk(HW)

    kernel = functools.partial(_conv3x3_stats_kernel, H=H, W=W, C=C,
                               m_chunk=m_chunk, fuse_prologue=fuse)
    x_spec = pl.BlockSpec((None, HW, C), lambda b: (b, 0, 0))
    v_spec = pl.BlockSpec((1, C), lambda b: (0, 0))
    w_spec = pl.BlockSpec((3, 3 * C, Cout), lambda b: (0, 0, 0))
    in_specs = [x_spec] + ([v_spec, v_spec] if fuse else []) + [w_spec]
    args = (x_flat,) + (tuple(prologue) if fuse else ()) + (w_k,)

    return pl.pallas_call(
        kernel,
        out_shape=(jax.ShapeDtypeStruct((B, HW, Cout), jnp.float32),
                   jax.ShapeDtypeStruct((B, 2, Cout), jnp.float32)),
        grid_spec=pltpu.PrefetchScalarGridSpec(
            num_scalar_prefetch=0,
            grid=(B,),
            in_specs=in_specs,
            out_specs=[pl.BlockSpec((None, HW, Cout), lambda b: (b, 0, 0)),
                       pl.BlockSpec((None, 2, Cout), lambda b: (b, 0, 0))],
            scratch_shapes=[pltpu.VMEM(((H + 2) * W, 3 * C), jnp.bfloat16)]),
        compiler_params=pltpu.CompilerParams(
            dimension_semantics=("parallel",),   # batch shards across TCs on v7x
            vmem_limit_bytes=32 * 1024 * 1024),  # v5e default is only 16 MiB
    )(*args)


# ----------------------------------------------------------------------------
# Kernel 3: fused BN2-affine + residual add + ReLU epilogue (row-tiled).
# ----------------------------------------------------------------------------
def _bn_residual_relu_kernel(p_ref, s_ref, b_ref, r_ref, o_ref):
    # o = relu(residual + p*scale + shift)
    o_ref[...] = jnp.maximum(r_ref[...] + p_ref[...] * s_ref[...] + b_ref[...], 0.0)


def bn_residual_relu(pre, scale, shift, residual):
    B, HW, C = pre.shape
    tile = 128 if HW % 128 == 0 else HW          # >=4 grid steps -> DMA overlap
    t_spec = pl.BlockSpec((None, tile, C), lambda b, t: (b, t, 0))
    v_spec = pl.BlockSpec((1, C), lambda b, t: (0, 0))
    return pl.pallas_call(
        _bn_residual_relu_kernel,
        out_shape=jax.ShapeDtypeStruct((B, HW, C), jnp.float32),
        grid_spec=pltpu.PrefetchScalarGridSpec(
            num_scalar_prefetch=0, grid=(B, HW // tile),
            in_specs=[t_spec, v_spec, v_spec, t_spec],
            out_specs=t_spec),
        input_output_aliases={0: 0},             # write y over pre2's buffer
        compiler_params=pltpu.CompilerParams(
            dimension_semantics=("parallel", "parallel")),
    )(pre, scale, shift, residual)


# ----------------------------------------------------------------------------
# Glue: fold training-mode BN into per-channel scale/shift (tiny (2,C) math).
# ----------------------------------------------------------------------------
def _bn_scale_shift(partial_stats, count, gamma, beta, eps=_BN_EPS):
    # TODO(synk): E[x^2]-E[x]^2 in f32 can cancel for very large counts/means;
    # switch to centered/two-pass accumulation if scales grow.
    s = jnp.sum(partial_stats, axis=0)                  # (2, C): [sum, sumsq]
    mean = s[0] / count
    var = s[1] / count - mean * mean                    # biased batch variance
    scale = gamma * jax.lax.rsqrt(var + eps)
    shift = beta - mean * scale
    return (scale.reshape(1, -1).astype(jnp.float32),
            shift.reshape(1, -1).astype(jnp.float32))


def projected_residual_block_forward_nhwc(params, x_nhwc):
    """Pallas forward on NHWC activations (training-mode BN semantics)."""
    B, H, W, C = x_nhwc.shape
    # Layout requirements of this lane-dense implementation.
    assert C % 128 == 0, "channels must be a multiple of 128 (lane axis)"
    assert W % 8 == 0, "W must be a multiple of 8 (sublane axis)"
    n_pix = float(B * H * W)
    xf = x_nhwc.reshape(B, H * W, C)

    # NOTE: the reference forward computes h = relu(bn0(conv0(x))) and then
    # immediately overwrites h with relu(bn1(conv1(x))); conv0/bn0 do not affect
    # the returned value, so that dead branch is intentionally not executed.

    # pre1 = conv1(x), plus per-image BN1 partial stats from the same kernel.
    pre1, st1 = conv3x3_stats(xf, params["w1"], H, W)
    s1, b1 = _bn_scale_shift(st1, n_pix, params["g1"], params["beta1"])

    # pre2 = conv2(relu(bn1(pre1))): BN1 affine + ReLU fused as conv2's prologue.
    pre2, st2 = conv3x3_stats(pre1, params["w2"], H, W, prologue=(s1, b1))
    s2, b2 = _bn_scale_shift(st2, n_pix, params["g2"], params["beta2"])

    # y = relu(x + bn2(pre2)): affine + residual add + ReLU in one fused pass.
    y = bn_residual_relu(pre2, s2, b2, xf)
    return y.reshape(B, H, W, C)


def projected_residual_block_forward(params, x_nchw):
    """NCHW (PyTorch) wrapper.  In a real network keep activations NHWC across
    blocks and hoist these transposes to once per network, not per block."""
    x = jnp.transpose(x_nchw, (0, 2, 3, 1)).astype(jnp.float32)
    y = projected_residual_block_forward_nhwc(params, x)
    return jnp.transpose(y, (0, 3, 1, 2))


# ----------------------------------------------------------------------------
# Deterministic synthetic parameters + pure-JAX reference for a sanity check.
# ----------------------------------------------------------------------------
def init_params(key, n_channels, embed_dim):
    # The reference forward applies conv1 (embed_dim->embed_dim) to x and adds
    # conv2's output back onto x, so it only type-checks when they are equal.
    assert n_channels == embed_dim
    k1, k2, kg1, kb1, kg2, kb2 = jax.random.split(key, 6)

    def conv_w(k, cin, cout):
        fan_in = cin * 9
        w = jax.random.normal(k, (3, 3, cin, cout), jnp.float32) * jnp.sqrt(2.0 / fan_in)
        # [ky, kx, ci, co] -> (3, 3*cin, cout): row index kx*cin + ci (matches the
        # in-kernel K-stacked tap layout). bf16 for the MXU's native rate.
        return w.reshape(3, 3 * cin, cout).astype(jnp.bfloat16)

    return {
        # conv0/bn0 exist in __init__ but are dead in forward(); omitted here.
        "w1": conv_w(k1, embed_dim, embed_dim),
        "g1": 1.0 + 0.1 * jax.random.normal(kg1, (embed_dim,), jnp.float32),
        "beta1": 0.1 * jax.random.normal(kb1, (embed_dim,), jnp.float32),
        "w2": conv_w(k2, embed_dim, n_channels),
        "g2": 1.0 + 0.1 * jax.random.normal(kg2, (n_channels,), jnp.float32),
        "beta2": 0.1 * jax.random.normal(kb2, (n_channels,), jnp.float32),
    }


def reference_forward(params, x_nchw, eps=_BN_EPS):
    """Pure-JAX (f32 conv) reference of the same forward, for verification."""
    x = jnp.transpose(x_nchw, (0, 2, 3, 1)).astype(jnp.float32)
    C = x.shape[-1]

    def conv(h, w_k, cin, cout):
        w = w_k.astype(jnp.float32).reshape(3, 3, cin, cout)        # HWIO
        return jax.lax.conv_general_dilated(
            h, w, window_strides=(1, 1), padding=((1, 1), (1, 1)),
            dimension_numbers=("NHWC", "HWIO", "NHWC"))

    def bn(h, g, b):
        mean = jnp.mean(h, axis=(0, 1, 2))
        var = jnp.mean(jnp.square(h), axis=(0, 1, 2)) - mean * mean
        return (h - mean) * (g * jax.lax.rsqrt(var + eps)) + b

    h = jax.nn.relu(bn(conv(x, params["w1"], C, C), params["g1"], params["beta1"]))
    y = jax.nn.relu(x + bn(conv(h, params["w2"], C, C), params["g2"], params["beta2"]))
    return jnp.transpose(y, (0, 3, 1, 2))


if __name__ == "__main__":
    key = jax.random.PRNGKey(0)
    k_param, k_x = jax.random.split(key)

    # ProjectedResidualBlock(n_channels=128, embed_dim=128) on a (2, 128, 16, 16)
    # NCHW input (the module's forward requires n_channels == embed_dim).
    B, C, H, W = 2, 128, 16, 16
    params = init_params(k_param, n_channels=C, embed_dim=C)
    x = jax.random.normal(k_x, (B, C, H, W), jnp.float32)   # PyTorch-style NCHW

    fwd = jax.jit(projected_residual_block_forward)
    y = jax.block_until_ready(fwd(params, x))
    assert y.shape == (B, C, H, W) and y.dtype == jnp.float32

    # Check against a pure-JAX f32 reference (the Pallas convs feed bf16 to the
    # MXU with f32 accumulation, so use a combined abs/rel tolerance).
    y_ref = jax.block_until_ready(jax.jit(reference_forward)(params, x))
    ok = bool(jnp.all(jnp.abs(y - y_ref) <= 0.05 + 0.05 * jnp.abs(y_ref)))
    max_err = float(jnp.max(jnp.abs(y - y_ref)))
    assert ok, f"Pallas output mismatch vs reference: max abs err {max_err}"

    print("KERNEL_OK")
</pallas_src>

<mosaic_0001>
module attributes {stable_mosaic.version = 11 : i64} {
  func.func @_conv3x3_stats_kernel(%arg0: i32, %arg1: memref<1x256x128xf32, #tpu.memory_space<vmem>>, %arg2: memref<3x384x128xbf16, #tpu.memory_space<vmem>>, %arg3: memref<1x256x128xf32, #tpu.memory_space<vmem>>, %arg4: memref<1x2x128xf32, #tpu.memory_space<vmem>>, %arg5: memref<288x384xbf16, #tpu.memory_space<vmem>>) attributes {dimension_semantics = [#tpu.dimension_semantics<parallel>], iteration_bounds = array<i64: 2>, scalar_prefetch = 0 : i64, scratch_operands = 1 : i64, tpu.core_type = #tpu.core_type<tc>, window_params = [{transform_indices = @transform_0, window_bounds = array<i64: 1, 256, 128>}, {pipeline_mode = #tpu.pipeline_mode<synchronous>, transform_indices = @transform_1, window_bounds = array<i64: 3, 384, 128>}, {transform_indices = @transform_2, window_bounds = array<i64: 1, 256, 128>}, {transform_indices = @transform_3, window_bounds = array<i64: 1, 2, 128>}]} {
    %c0 = arith.constant 0 : index
    %c0_0 = arith.constant 0 : index
    %c0_1 = arith.constant 0 : index
    %0 = vector.load %arg1[%c0, %c0_0, %c0_1] : memref<1x256x128xf32, #tpu.memory_space<vmem>>, vector<1x256x128xf32>
    %1 = vector.shape_cast %0 : vector<1x256x128xf32> to vector<256x128xf32>
    %cst = arith.constant 0.000000e+00 : bf16
    %2 = vector.broadcast %cst : bf16 to vector<16x384xbf16>
    %c0_2 = arith.constant 0 : index
    %c0_3 = arith.constant 0 : index
    %3 = vector.load %arg5[%c0_2, %c0_3] : memref<288x384xbf16, #tpu.memory_space<vmem>>, vector<16x384xbf16>
    tpu.vector_store %arg5[%c0_2, %c0_3], %2 {strides = array<i32>} : memref<288x384xbf16, #tpu.memory_space<vmem>>, vector<16x384xbf16>,
    %c272 = arith.constant 272 : index
    %c0_4 = arith.constant 0 : index
    %4 = vector.load %arg5[%c272, %c0_4] : memref<288x384xbf16, #tpu.memory_space<vmem>>, vector<16x384xbf16>
    tpu.vector_store %arg5[%c272, %c0_4], %2 {strides = array<i32>} : memref<288x384xbf16, #tpu.memory_space<vmem>>, vector<16x384xbf16>,
    %5 = tpu.iota {dimensions = array<i32: 0>} : vector<256x1xi32>
    %c15_i32 = arith.constant 15 : i32
    %6 = vector.broadcast %c15_i32 : i32 to vector<256x1xi32>
    %7 = arith.andi %5, %6 : vector<256x1xi32>
    %c0_i32 = arith.constant 0 : i32
    %8 = vector.broadcast %c0_i32 : i32 to vector<256x1xi32>
    %9 = arith.cmpi eq, %7, %8 : vector<256x1xi32>
    %c1_i32 = arith.constant 1 : i32
    %10 = tpu.dynamic_rotate %1 by %c1_i32 dim 0 : vector<256x128xf32>, i32 -> vector<256x128xf32>
    %cst_5 = arith.constant 0.000000e+00 : f32
    %11 = vector.shape_cast %9 : vector<256x1xi1> to vector<256x1xi1>
    %12 = vector.broadcast %11 : vector<256x1xi1> to vector<256x128xi1>
    %13 = vector.broadcast %cst_5 : f32 to vector<256x128xf32>
    %14 = arith.select %12, %13, %10 : vector<256x128xi1>, vector<256x128xf32>
    %c15_i32_6 = arith.constant 15 : i32
    %15 = vector.broadcast %c15_i32_6 : i32 to vector<256x1xi32>
    %16 = arith.cmpi eq, %7, %15 : vector<256x1xi32>
    %c255_i32 = arith.constant 255 : i32
    %17 = tpu.dynamic_rotate %1 by %c255_i32 dim 0 : vector<256x128xf32>, i32 -> vector<256x128xf32>
    %cst_7 = arith.constant 0.000000e+00 : f32
    %18 = vector.shape_cast %16 : vector<256x1xi1> to vector<256x1xi1>
    %19 = vector.broadcast %18 : vector<256x1xi1> to vector<256x128xi1>
    %20 = vector.broadcast %cst_7 : f32 to vector<256x128xf32>
    %21 = arith.select %19, %20, %17 : vector<256x128xi1>, vector<256x128xf32>
    %22 = arith.truncf %14 : vector<256x128xf32> to vector<256x128xbf16>
    %c16 = arith.constant 16 : index
    %c0_8 = arith.constant 0 : index
    %23 = vector.load %arg5[%c16, %c0_8] : memref<288x384xbf16, #tpu.memory_space<vmem>>, vector<256x128xbf16>
    tpu.vector_store %arg5[%c16, %c0_8], %22 {strides = array<i32>} : memref<288x384xbf16, #tpu.memory_space<vmem>>, vector<256x128xbf16>,
    %24 = arith.truncf %1 : vector<256x128xf32> to vector<256x128xbf16>
    %c16_9 = arith.constant 16 : index
    %c128 = arith.constant 128 : index
    %25 = vector.load %arg5[%c16_9, %c128] : memref<288x384xbf16, #tpu.memory_space<vmem>>, vector<256x128xbf16>
    tpu.vector_store %arg5[%c16_9, %c128], %24 {strides = array<i32>} : memref<288x384xbf16, #tpu.memory_space<vmem>>, vector<256x128xbf16>,
    %26 = arith.truncf %21 : vector<256x128xf32> to vector<256x128xbf16>
    %c16_10 = arith.constant 16 : index
    %c256 = arith.constant 256 : index
    %27 = vector.load %arg5[%c16_10, %c256] : memref<288x384xbf16, #tpu.memory_space<vmem>>, vector<256x128xbf16>
    tpu.vector_store %arg5[%c16_10, %c256], %26 {strides = array<i32>} : memref<288x384xbf16, #tpu.memory_space<vmem>>, vector<256x128xbf16>,
    %cst_11 = arith.constant 0.000000e+00 : f32
    %28 = vector.broadcast %cst_11 : f32 to vector<1x128xf32>
    %cst_12 = arith.constant 0.000000e+00 : f32
    %29 = vector.broadcast %cst_12 : f32 to vector<1x128xf32>
    %c0_13 = arith.constant 0 : index
    %c0_14 = arith.constant 0 : index
    %30 = vector.load %arg5[%c0_13, %c0_14] : memref<288x384xbf16, #tpu.memory_space<vmem>>, vector<128x384xbf16>
    %c0_15 = arith.constant 0 : index
    %c0_16 = arith.constant 0 : index
    %c0_17 = arith.constant 0 : index
    %31 = vector.load %arg2[%c0_15, %c0_16, %c0_17] : memref<3x384x128xbf16, #tpu.memory_space<vmem>>, vector<1x384x128xbf16>
    %32 = vector.shape_cast %31 : vector<1x384x128xbf16> to vector<384x128xbf16>
    %cst_18 = arith.constant dense<0.000000e+00> : vector<128x128xf32>
    %33 = tpu.matmul %30, %32, %cst_18 {dimension_numbers = #tpu.dot_dimension_numbers<[1], [0], [0], [1], [0, 0, 1, 1], [], []>} : vector<128x384xbf16>, vector<384x128xbf16>, vector<128x128xf32> -> vector<128x128xf32>
    %c16_19 = arith.constant 16 : index
    %c0_20 = arith.constant 0 : index
    %34 = vector.load %arg5[%c16_19, %c0_20] : memref<288x384xbf16, #tpu.memory_space<vmem>>, vector<128x384xbf16>
    %c1 = arith.constant 1 : index
    %c0_21 = arith.constant 0 : index
    %c0_22 = arith.constant 0 : index
    %35 = vector.load %arg2[%c1, %c0_21, %c0_22] : memref<3x384x128xbf16, #tpu.memory_space<vmem>>, vector<1x384x128xbf16>
    %36 = vector.shape_cast %35 : vector<1x384x128xbf16> to vector<384x128xbf16>
    %cst_23 = arith.constant dense<0.000000e+00> : vector<128x128xf32>
    %37 = tpu.matmul %34, %36, %cst_23 {dimension_numbers = #tpu.dot_dimension_numbers<[1], [0], [0], [1], [0, 0, 1, 1], [], []>} : vector<128x384xbf16>, vector<384x128xbf16>, vector<128x128xf32> -> vector<128x128xf32>
    %38 = arith.addf %33, %37 : vector<128x128xf32>
    %c32 = arith.constant 32 : index
    %c0_24 = arith.constant 0 : index
    %39 = vector.load %arg5[%c32, %c0_24] : memref<288x384xbf16, #tpu.memory_space<vmem>>, vector<128x384xbf16>
    %c2 = arith.constant 2 : index
    %c0_25 = arith.constant 0 : index
    %c0_26 = arith.constant 0 : index
    %40 = vector.load %arg2[%c2, %c0_25, %c0_26] : memref<3x384x128xbf16, #tpu.memory_space<vmem>>, vector<1x384x128xbf16>
    %41 = vector.shape_cast %40 : vector<1x384x128xbf16> to vector<384x128xbf16>
    %cst_27 = arith.constant dense<0.000000e+00> : vector<128x128xf32>
    %42 = tpu.matmul %39, %41, %cst_27 {dimension_numbers = #tpu.dot_dimension_numbers<[1], [0], [0], [1], [0, 0, 1, 1], [], []>} : vector<128x384xbf16>, vector<384x128xbf16>, vector<128x128xf32> -> vector<128x128xf32>
    %43 = arith.addf %38, %42 : vector<128x128xf32>
    %c0_28 = arith.constant 0 : index
    %c0_29 = arith.constant 0 : index
    %c0_30 = arith.constant 0 : index
    %44 = vector.load %arg3[%c0_28, %c0_29, %c0_30] : memref<1x256x128xf32, #tpu.memory_space<vmem>>, vector<1x128x128xf32>
    %45 = vector.shape_cast %44 : vector<1x128x128xf32> to vector<128x128xf32>
    %46 = vector.shape_cast %43 : vector<128x128xf32> to vector<1x128x128xf32>
    tpu.vector_store %arg3[%c0_28, %c0_29, %c0_30], %46 {strides = array<i32>} : memref<1x256x128xf32, #tpu.memory_space<vmem>>, vector<1x128x128xf32>,
    %cst_31 = arith.constant dense<0.000000e+00> : vector<128xf32>
    %47 = vector.multi_reduction <add>, %43, %cst_31 [0] : vector<128x128xf32> to vector<128xf32>
    %48 = vector.shape_cast %47 : vector<128xf32> to vector<1x128xf32>
    %49 = arith.addf %28, %48 : vector<1x128xf32>
    %50 = arith.mulf %43, %43 : vector<128x128xf32>
    %cst_32 = arith.constant dense<0.000000e+00> : vector<128xf32>
    %51 = vector.multi_reduction <add>, %50, %cst_32 [0] : vector<128x128xf32> to vector<128xf32>
    %52 = vector.shape_cast %51 : vector<128xf32> to vector<1x128xf32>
    %53 = arith.addf %29, %52 : vector<1x128xf32>
    %c128_33 = arith.constant 128 : index
    %c0_34 = arith.constant 0 : index
    %54 = vector.load %arg5[%c128_33, %c0_34] : memref<288x384xbf16, #tpu.memory_space<vmem>>, vector<128x384xbf16>
    %c0_35 = arith.constant 0 : index
    %c0_36 = arith.constant 0 : index
    %c0_37 = arith.constant 0 : index
    %55 = vector.load %arg2[%c0_35, %c0_36, %c0_37] : memref<3x384x128xbf16, #tpu.memory_space<vmem>>, vector<1x384x128xbf16>
    %56 = vector.shape_cast %55 : vector<1x384x128xbf16> to vector<384x128xbf16>
    %cst_38 = arith.constant dense<0.000000e+00> : vector<128x128xf32>
    %57 = tpu.matmul %54, %56, %cst_38 {dimension_numbers = #tpu.dot_dimension_numbers<[1], [0], [0], [1], [0, 0, 1, 1], [], []>} : vector<128x384xbf16>, vector<384x128xbf16>, vector<128x128xf32> -> vector<128x128xf32>
    %c144 = arith.constant 144 : index
    %c0_39 = arith.constant 0 : index
    %58 = vector.load %arg5[%c144, %c0_39] : memref<288x384xbf16, #tpu.memory_space<vmem>>, vector<128x384xbf16>
    %c1_40 = arith.constant 1 : index
    %c0_41 = arith.constant 0 : index
    %c0_42 = arith.constant 0 : index
    %59 = vector.load %arg2[%c1_40, %c0_41, %c0_42] : memref<3x384x128xbf16, #tpu.memory_space<vmem>>, vector<1x384x128xbf16>
    %60 = vector.shape_cast %59 : vector<1x384x128xbf16> to vector<384x128xbf16>
    %cst_43 = arith.constant dense<0.000000e+00> : vector<128x128xf32>
    %61 = tpu.matmul %58, %60, %cst_43 {dimension_numbers = #tpu.dot_dimension_numbers<[1], [0], [0], [1], [0, 0, 1, 1], [], []>} : vector<128x384xbf16>, vector<384x128xbf16>, vector<128x128xf32> -> vector<128x128xf32>
    %62 = arith.addf %57, %61 : vector<128x128xf32>
    %c160 = arith.constant 160 : index
    %c0_44 = arith.constant 0 : index
    %63 = vector.load %arg5[%c160, %c0_44] : memref<288x384xbf16, #tpu.memory_space<vmem>>, vector<128x384xbf16>
    %c2_45 = arith.constant 2 : index
    %c0_46 = arith.constant 0 : index
    %c0_47 = arith.constant 0 : index
    %64 = vector.load %arg2[%c2_45, %c0_46, %c0_47] : memref<3x384x128xbf16, #tpu.memory_space<vmem>>, vector<1x384x128xbf16>
    %65 = vector.shape_cast %64 : vector<1x384x128xbf16> to vector<384x128xbf16>
    %cst_48 = arith.constant dense<0.000000e+00> : vector<128x128xf32>
    %66 = tpu.matmul %63, %65, %cst_48 {dimension_numbers = #tpu.dot_dimension_numbers<[1], [0], [0], [1], [0, 0, 1, 1], [], []>} : vector<128x384xbf16>, vector<384x128xbf16>, vector<128x128xf32> -> vector<128x128xf32>
    %67 = arith.addf %62, %66 : vector<128x128xf32>
    %c0_49 = arith.constant 0 : index
    %c128_50 = arith.constant 128 : index
    %c0_51 = arith.constant 0 : index
    %68 = vector.load %arg3[%c0_49, %c128_50, %c0_51] : memref<1x256x128xf32, #tpu.memory_space<vmem>>, vector<1x128x128xf32>
    %69 = vector.shape_cast %68 : vector<1x128x128xf32> to vector<128x128xf32>
    %70 = vector.shape_cast %67 : vector<128x128xf32> to vector<1x128x128xf32>
    tpu.vector_store %arg3[%c0_49, %c128_50, %c0_51], %70 {strides = array<i32>} : memref<1x256x128xf32, #tpu.memory_space<vmem>>, vector<1x128x128xf32>,
    %cst_52 = arith.constant dense<0.000000e+00> : vector<128xf32>
    %71 = vector.multi_reduction <add>, %67, %cst_52 [0] : vector<128x128xf32> to vector<128xf32>
    %72 = vector.shape_cast %71 : vector<128xf32> to vector<1x128xf32>
    %73 = arith.addf %49, %72 : vector<1x128xf32>
    %74 = arith.mulf %67, %67 : vector<128x128xf32>
    %cst_53 = arith.constant dense<0.000000e+00> : vector<128xf32>
    %75 = vector.multi_reduction <add>, %74, %cst_53 [0] : vector<128x128xf32> to vector<128xf32>
    %76 = vector.shape_cast %75 : vector<128xf32> to vector<1x128xf32>
    %77 = arith.addf %53, %76 : vector<1x128xf32>
    %78 = tpu.concatenate %73, %77 in 0 : vector<1x128xf32>, vector<1x128xf32> -> vector<2x128xf32>
    %c0_54 = arith.constant 0 : index
    %c0_55 = arith.constant 0 : index
    %c0_56 = arith.constant 0 : index
    %79 = vector.load %arg4[%c0_54, %c0_55, %c0_56] : memref<1x2x128xf32, #tpu.memory_space<vmem>>, vector<1x2x128xf32>
    %80 = vector.shape_cast %79 : vector<1x2x128xf32> to vector<2x128xf32>
    %81 = vector.shape_cast %78 : vector<2x128xf32> to vector<1x2x128xf32>
    tpu.vector_store %arg4[%c0_54, %c0_55, %c0_56], %81 {strides = array<i32>} : memref<1x2x128xf32, #tpu.memory_space<vmem>>, vector<1x2x128xf32>,
    return
  }
  func.func @transform_0(%arg0: i32) -> (i32, i32, i32) {
    %c0_i32 = arith.constant 0 : i32
    %c0_i32_0 = arith.constant 0 : i32
    %c0_i32_1 = arith.constant 0 : i32
    return %arg0, %c0_i32, %c0_i32_0 : i32, i32, i32
  }
  func.func @transform_1(%arg0: i32) -> (i32, i32, i32) {
    %c0_i32 = arith.constant 0 : i32
    %c0_i32_0 = arith.constant 0 : i32
    %c0_i32_1 = arith.constant 0 : i32
    %c0_i32_2 = arith.constant 0 : i32
    return %c0_i32, %c0_i32_0, %c0_i32_1 : i32, i32, i32
  }
  func.func @transform_2(%arg0: i32) -> (i32, i32, i32) {
    %c0_i32 = arith.constant 0 : i32
    %c0_i32_0 = arith.constant 0 : i32
    %c0_i32_1 = arith.constant 0 : i32
    return %arg0, %c0_i32, %c0_i32_0 : i32, i32, i32
  }
  func.func @transform_3(%arg0: i32) -> (i32, i32, i32) {
    %c0_i32 = arith.constant 0 : i32
    %c0_i32_0 = arith.constant 0 : i32
    %c0_i32_1 = arith.constant 0 : i32
    return %arg0, %c0_i32, %c0_i32_0 : i32, i32, i32
  }
}

module attributes {stable_mosaic.version = 11 : i64} {
  func.func @_conv3x3_stats_kernel(%arg0: i32, %arg1: memref<1x256x128xf32, #tpu.memory_space<vmem>>, %arg2: memref<1x128xf32, #tpu.memory_space<vmem>>, %arg3: memref<1x128xf32, #tpu.memory_space<vmem>>, %arg4: memref<3x384x128xbf16, #tpu.memory_space<vmem>>, %arg5: memref<1x256x128xf32, #tpu.memory_space<vmem>>, %arg6: memref<1x2x128xf32, #tpu.memory_space<vmem>>, %arg7: memref<288x384xbf16, #tpu.memory_space<vmem>>) attributes {dimension_semantics = [#tpu.dimension_semantics<parallel>], iteration_bounds = array<i64: 2>, scalar_prefetch = 0 : i64, scratch_operands = 1 : i64, tpu.core_type = #tpu.core_type<tc>, window_params = [{transform_indices = @transform_0, window_bounds = array<i64: 1, 256, 128>}, {pipeline_mode = #tpu.pipeline_mode<synchronous>, transform_indices = @transform_1, window_bounds = array<i64: 1, 128>}, {pipeline_mode = #tpu.pipeline_mode<synchronous>, transform_indices = @transform_2, window_bounds = array<i64: 1, 128>}, {pipeline_mode = #tpu.pipeline_mode<synchronous>, transform_indices = @transform_3, window_bounds = array<i64: 3, 384, 128>}, {transform_indices = @transform_4, window_bounds = array<i64: 1, 256, 128>}, {transform_indices = @transform_5, window_bounds = array<i64: 1, 2, 128>}]} {
    %c0 = arith.constant 0 : index
    %c0_0 = arith.constant 0 : index
    %c0_1 = arith.constant 0 : index
    %0 = vector.load %arg1[%c0, %c0_0, %c0_1] : memref<1x256x128xf32, #tpu.memory_space<vmem>>, vector<1x256x128xf32>
    %1 = vector.shape_cast %0 : vector<1x256x128xf32> to vector<256x128xf32>
    %c0_2 = arith.constant 0 : index
    %c0_3 = arith.constant 0 : index
    %2 = vector.load %arg2[%c0_2, %c0_3] : memref<1x128xf32, #tpu.memory_space<vmem>>, vector<1x128xf32>
    %3 = vector.broadcast %2 : vector<1x128xf32> to vector<256x128xf32>
    %4 = arith.mulf %1, %3 : vector<256x128xf32>
    %c0_4 = arith.constant 0 : index
    %c0_5 = arith.constant 0 : index
    %5 = vector.load %arg3[%c0_4, %c0_5] : memref<1x128xf32, #tpu.memory_space<vmem>>, vector<1x128xf32>
    %6 = vector.broadcast %5 : vector<1x128xf32> to vector<256x128xf32>
    %7 = arith.addf %4, %6 : vector<256x128xf32>
    %cst = arith.constant 0.000000e+00 : f32
    %8 = vector.broadcast %cst : f32 to vector<256x128xf32>
    %9 = arith.maximumf %7, %8 : vector<256x128xf32>
    %cst_6 = arith.constant 0.000000e+00 : bf16
    %10 = vector.broadcast %cst_6 : bf16 to vector<16x384xbf16>
    %c0_7 = arith.constant 0 : index
    %c0_8 = arith.constant 0 : index
    %11 = vector.load %arg7[%c0_7, %c0_8] : memref<288x384xbf16, #tpu.memory_space<vmem>>, vector<16x384xbf16>
    tpu.vector_store %arg7[%c0_7, %c0_8], %10 {strides = array<i32>} : memref<288x384xbf16, #tpu.memory_space<vmem>>, vector<16x384xbf16>,
    %c272 = arith.constant 272 : index
    %c0_9 = arith.constant 0 : index
    %12 = vector.load %arg7[%c272, %c0_9] : memref<288x384xbf16, #tpu.memory_space<vmem>>, vector<16x384xbf16>
    tpu.vector_store %arg7[%c272, %c0_9], %10 {strides = array<i32>} : memref<288x384xbf16, #tpu.memory_space<vmem>>, vector<16x384xbf16>,
    %13 = tpu.iota {dimensions = array<i32: 0>} : vector<256x1xi32>
    %c15_i32 = arith.constant 15 : i32
    %14 = vector.broadcast %c15_i32 : i32 to vector<256x1xi32>
    %15 = arith.andi %13, %14 : vector<256x1xi32>
    %c0_i32 = arith.constant 0 : i32
    %16 = vector.broadcast %c0_i32 : i32 to vector<256x1xi32>
    %17 = arith.cmpi eq, %15, %16 : vector<256x1xi32>
    %c1_i32 = arith.constant 1 : i32
    %18 = tpu.dynamic_rotate %9 by %c1_i32 dim 0 : vector<256x128xf32>, i32 -> vector<256x128xf32>
    %cst_10 = arith.constant 0.000000e+00 : f32
    %19 = vector.shape_cast %17 : vector<256x1xi1> to vector<256x1xi1>
    %20 = vector.broadcast %19 : vector<256x1xi1> to vector<256x128xi1>
    %21 = vector.broadcast %cst_10 : f32 to vector<256x128xf32>
    %22 = arith.select %20, %21, %18 : vector<256x128xi1>, vector<256x128xf32>
    %c15_i32_11 = arith.constant 15 : i32
    %23 = vector.broadcast %c15_i32_11 : i32 to vector<256x1xi32>
    %24 = arith.cmpi eq, %15, %23 : vector<256x1xi32>
    %c255_i32 = arith.constant 255 : i32
    %25 = tpu.dynamic_rotate %9 by %c255_i32 dim 0 : vector<256x128xf32>, i32 -> vector<256x128xf32>
    %cst_12 = arith.constant 0.000000e+00 : f32
    %26 = vector.shape_cast %24 : vector<256x1xi1> to vector<256x1xi1>
    %27 = vector.broadcast %26 : vector<256x1xi1> to vector<256x128xi1>
    %28 = vector.broadcast %cst_12 : f32 to vector<256x128xf32>
    %29 = arith.select %27, %28, %25 : vector<256x128xi1>, vector<256x128xf32>
    %30 = arith.truncf %22 : vector<256x128xf32> to vector<256x128xbf16>
    %c16 = arith.constant 16 : index
    %c0_13 = arith.constant 0 : index
    %31 = vector.load %arg7[%c16, %c0_13] : memref<288x384xbf16, #tpu.memory_space<vmem>>, vector<256x128xbf16>
    tpu.vector_store %arg7[%c16, %c0_13], %30 {strides = array<i32>} : memref<288x384xbf16, #tpu.memory_space<vmem>>, vector<256x128xbf16>,
    %32 = arith.truncf %9 : vector<256x128xf32> to vector<256x128xbf16>
    %c16_14 = arith.constant 16 : index
    %c128 = arith.constant 128 : index
    %33 = vector.load %arg7[%c16_14, %c128] : memref<288x384xbf16, #tpu.memory_space<vmem>>, vector<256x128xbf16>
    tpu.vector_store %arg7[%c16_14, %c128], %32 {strides = array<i32>} : memref<288x384xbf16, #tpu.memory_space<vmem>>, vector<256x128xbf16>,
    %34 = arith.truncf %29 : vector<256x128xf32> to vector<256x128xbf16>
    %c16_15 = arith.constant 16 : index
    %c256 = arith.constant 256 : index
    %35 = vector.load %arg7[%c16_15, %c256] : memref<288x384xbf16, #tpu.memory_space<vmem>>, vector<256x128xbf16>
    tpu.vector_store %arg7[%c16_15, %c256], %34 {strides = array<i32>} : memref<288x384xbf16, #tpu.memory_space<vmem>>, vector<256x128xbf16>,
    %cst_16 = arith.constant 0.000000e+00 : f32
    %36 = vector.broadcast %cst_16 : f32 to vector<1x128xf32>
    %cst_17 = arith.constant 0.000000e+00 : f32
    %37 = vector.broadcast %cst_17 : f32 to vector<1x128xf32>
    %c0_18 = arith.constant 0 : index
    %c0_19 = arith.constant 0 : index
    %38 = vector.load %arg7[%c0_18, %c0_19] : memref<288x384xbf16, #tpu.memory_space<vmem>>, vector<128x384xbf16>
    %c0_20 = arith.constant 0 : index
    %c0_21 = arith.constant 0 : index
    %c0_22 = arith.constant 0 : index
    %39 = vector.load %arg4[%c0_20, %c0_21, %c0_22] : memref<3x384x128xbf16, #tpu.memory_space<vmem>>, vector<1x384x128xbf16>
    %40 = vector.shape_cast %39 : vector<1x384x128xbf16> to vector<384x128xbf16>
    %cst_23 = arith.constant dense<0.000000e+00> : vector<128x128xf32>
    %41 = tpu.matmul %38, %40, %cst_23 {dimension_numbers = #tpu.dot_dimension_numbers<[1], [0], [0], [1], [0, 0, 1, 1], [], []>} : vector<128x384xbf16>, vector<384x128xbf16>, vector<128x128xf32> -> vector<128x128xf32>
    %c16_24 = arith.constant 16 : index
    %c0_25 = arith.constant 0 : index
    %42 = vector.load %arg7[%c16_24, %c0_25] : memref<288x384xbf16, #tpu.memory_space<vmem>>, vector<128x384xbf16>
    %c1 = arith.constant 1 : index
    %c0_26 = arith.constant 0 : index
    %c0_27 = arith.constant 0 : index
    %43 = vector.load %arg4[%c1, %c0_26, %c0_27] : memref<3x384x128xbf16, #tpu.memory_space<vmem>>, vector<1x384x128xbf16>
    %44 = vector.shape_cast %43 : vector<1x384x128xbf16> to vector<384x128xbf16>
    %cst_28 = arith.constant dense<0.000000e+00> : vector<128x128xf32>
    %45 = tpu.matmul %42, %44, %cst_28 {dimension_numbers = #tpu.dot_dimension_numbers<[1], [0], [0], [1], [0, 0, 1, 1], [], []>} : vector<128x384xbf16>, vector<384x128xbf16>, vector<128x128xf32> -> vector<128x128xf32>
    %46 = arith.addf %41, %45 : vector<128x128xf32>
    %c32 = arith.constant 32 : index
    %c0_29 = arith.constant 0 : index
    %47 = vector.load %arg7[%c32, %c0_29] : memref<288x384xbf16, #tpu.memory_space<vmem>>, vector<128x384xbf16>
    %c2 = arith.constant 2 : index
    %c0_30 = arith.constant 0 : index
    %c0_31 = arith.constant 0 : index
    %48 = vector.load %arg4[%c2, %c0_30, %c0_31] : memref<3x384x128xbf16, #tpu.memory_space<vmem>>, vector<1x384x128xbf16>
    %49 = vector.shape_cast %48 : vector<1x384x128xbf16> to vector<384x128xbf16>
    %cst_32 = arith.constant dense<0.000000e+00> : vector<128x128xf32>
    %50 = tpu.matmul %47, %49, %cst_32 {dimension_numbers = #tpu.dot_dimension_numbers<[1], [0], [0], [1], [0, 0, 1, 1], [], []>} : vector<128x384xbf16>, vector<384x128xbf16>, vector<128x128xf32> -> vector<128x128xf32>
    %51 = arith.addf %46, %50 : vector<128x128xf32>
    %c0_33 = arith.constant 0 : index
    %c0_34 = arith.constant 0 : index
    %c0_35 = arith.constant 0 : index
    %52 = vector.load %arg5[%c0_33, %c0_34, %c0_35] : memref<1x256x128xf32, #tpu.memory_space<vmem>>, vector<1x128x128xf32>
    %53 = vector.shape_cast %52 : vector<1x128x128xf32> to vector<128x128xf32>
    %54 = vector.shape_cast %51 : vector<128x128xf32> to vector<1x128x128xf32>
    tpu.vector_store %arg5[%c0_33, %c0_34, %c0_35], %54 {strides = array<i32>} : memref<1x256x128xf32, #tpu.memory_space<vmem>>, vector<1x128x128xf32>,
    %cst_36 = arith.constant dense<0.000000e+00> : vector<128xf32>
    %55 = vector.multi_reduction <add>, %51, %cst_36 [0] : vector<128x128xf32> to vector<128xf32>
    %56 = vector.shape_cast %55 : vector<128xf32> to vector<1x128xf32>
    %57 = arith.addf %36, %56 : vector<1x128xf32>
    %58 = arith.mulf %51, %51 : vector<128x128xf32>
    %cst_37 = arith.constant dense<0.000000e+00> : vector<128xf32>
    %59 = vector.multi_reduction <add>, %58, %cst_37 [0] : vector<128x128xf32> to vector<128xf32>
    %60 = vector.shape_cast %59 : vector<128xf32> to vector<1x128xf32>
    %61 = arith.addf %37, %60 : vector<1x128xf32>
    %c128_38 = arith.constant 128 : index
    %c0_39 = arith.constant 0 : index
    %62 = vector.load %arg7[%c128_38, %c0_39] : memref<288x384xbf16, #tpu.memory_space<vmem>>, vector<128x384xbf16>
    %c0_40 = arith.constant 0 : index
    %c0_41 = arith.constant 0 : index
    %c0_42 = arith.constant 0 : index
    %63 = vector.load %arg4[%c0_40, %c0_41, %c0_42] : memref<3x384x128xbf16, #tpu.memory_space<vmem>>, vector<1x384x128xbf16>
    %64 = vector.shape_cast %63 : vector<1x384x128xbf16> to vector<384x128xbf16>
    %cst_43 = arith.constant dense<0.000000e+00> : vector<128x128xf32>
    %65 = tpu.matmul %62, %64, %cst_43 {dimension_numbers = #tpu.dot_dimension_numbers<[1], [0], [0], [1], [0, 0, 1, 1], [], []>} : vector<128x384xbf16>, vector<384x128xbf16>, vector<128x128xf32> -> vector<128x128xf32>
    %c144 = arith.constant 144 : index
    %c0_44 = arith.constant 0 : index
    %66 = vector.load %arg7[%c144, %c0_44] : memref<288x384xbf16, #tpu.memory_space<vmem>>, vector<128x384xbf16>
    %c1_45 = arith.constant 1 : index
    %c0_46 = arith.constant 0 : index
    %c0_47 = arith.constant 0 : index
    %67 = vector.load %arg4[%c1_45, %c0_46, %c0_47] : memref<3x384x128xbf16, #tpu.memory_space<vmem>>, vector<1x384x128xbf16>
    %68 = vector.shape_cast %67 : vector<1x384x128xbf16> to vector<384x128xbf16>
    %cst_48 = arith.constant dense<0.000000e+00> : vector<128x128xf32>
    %69 = tpu.matmul %66, %68, %cst_48 {dimension_numbers = #tpu.dot_dimension_numbers<[1], [0], [0], [1], [0, 0, 1, 1], [], []>} : vector<128x384xbf16>, vector<384x128xbf16>, vector<128x128xf32> -> vector<128x128xf32>
    %70 = arith.addf %65, %69 : vector<128x128xf32>
    %c160 = arith.constant 160 : index
    %c0_49 = arith.constant 0 : index
    %71 = vector.load %arg7[%c160, %c0_49] : memref<288x384xbf16, #tpu.memory_space<vmem>>, vector<128x384xbf16>
    %c2_50 = arith.constant 2 : index
    %c0_51 = arith.constant 0 : index
    %c0_52 = arith.constant 0 : index
    %72 = vector.load %arg4[%c2_50, %c0_51, %c0_52] : memref<3x384x128xbf16, #tpu.memory_space<vmem>>, vector<1x384x128xbf16>
    %73 = vector.shape_cast %72 : vector<1x384x128xbf16> to vector<384x128xbf16>
    %cst_53 = arith.constant dense<0.000000e+00> : vector<128x128xf32>
    %74 = tpu.matmul %71, %73, %cst_53 {dimension_numbers = #tpu.dot_dimension_numbers<[1], [0], [0], [1], [0, 0, 1, 1], [], []>} : vector<128x384xbf16>, vector<384x128xbf16>, vector<128x128xf32> -> vector<128x128xf32>
    %75 = arith.addf %70, %74 : vector<128x128xf32>
    %c0_54 = arith.constant 0 : index
    %c128_55 = arith.constant 128 : index
    %c0_56 = arith.constant 0 : index
    %76 = vector.load %arg5[%c0_54, %c128_55, %c0_56] : memref<1x256x128xf32, #tpu.memory_space<vmem>>, vector<1x128x128xf32>
    %77 = vector.shape_cast %76 : vector<1x128x128xf32> to vector<128x128xf32>
    %78 = vector.shape_cast %75 : vector<128x128xf32> to vector<1x128x128xf32>
    tpu.vector_store %arg5[%c0_54, %c128_55, %c0_56], %78 {strides = array<i32>} : memref<1x256x128xf32, #tpu.memory_space<vmem>>, vector<1x128x128xf32>,
    %cst_57 = arith.constant dense<0.000000e+00> : vector<128xf32>
    %79 = vector.multi_reduction <add>, %75, %cst_57 [0] : vector<128x128xf32> to vector<128xf32>
    %80 = vector.shape_cast %79 : vector<128xf32> to vector<1x128xf32>
    %81 = arith.addf %57, %80 : vector<1x128xf32>
    %82 = arith.mulf %75, %75 : vector<128x128xf32>
    %cst_58 = arith.constant dense<0.000000e+00> : vector<128xf32>
    %83 = vector.multi_reduction <add>, %82, %cst_58 [0] : vector<128x128xf32> to vector<128xf32>
    %84 = vector.shape_cast %83 : vector<128xf32> to vector<1x128xf32>
    %85 = arith.addf %61, %84 : vector<1x128xf32>
    %86 = tpu.concatenate %81, %85 in 0 : vector<1x128xf32>, vector<1x128xf32> -> vector<2x128xf32>
    %c0_59 = arith.constant 0 : index
    %c0_60 = arith.constant 0 : index
    %c0_61 = arith.constant 0 : index
    %87 = vector.load %arg6[%c0_59, %c0_60, %c0_61] : memref<1x2x128xf32, #tpu.memory_space<vmem>>, vector<1x2x128xf32>
    %88 = vector.shape_cast %87 : vector<1x2x128xf32> to vector<2x128xf32>
    %89 = vector.shape_cast %86 : vector<2x128xf32> to vector<1x2x128xf32>
    tpu.vector_store %arg6[%c0_59, %c0_60, %c0_61], %89 {strides = array<i32>} : memref<1x2x128xf32, #tpu.memory_space<vmem>>, vector<1x2x128xf32>,
    return
  }
  func.func @transform_0(%arg0: i32) -> (i32, i32, i32) {
    %c0_i32 = arith.constant 0 : i32
    %c0_i32_0 = arith.constant 0 : i32
    %c0_i32_1 = arith.constant 0 : i32
    return %arg0, %c0_i32, %c0_i32_0 : i32, i32, i32
  }
  func.func @transform_1(%arg0: i32) -> (i32, i32) {
    %c0_i32 = arith.constant 0 : i32
    %c0_i32_0 = arith.constant 0 : i32
    %c0_i32_1 = arith.constant 0 : i32
    return %c0_i32, %c0_i32_0 : i32, i32
  }
  func.func @transform_2(%arg0: i32) -> (i32, i32) {
    %c0_i32 = arith.constant 0 : i32
    %c0_i32_0 = arith.constant 0 : i32
    %c0_i32_1 = arith.constant 0 : i32
    return %c0_i32, %c0_i32_0 : i32, i32
  }
  func.func @transform_3(%arg0: i32) -> (i32, i32, i32) {
    %c0_i32 = arith.constant 0 : i32
    %c0_i32_0 = arith.constant 0 : i32
    %c0_i32_1 = arith.constant 0 : i32
    %c0_i32_2 = arith.constant 0 : i32
    return %c0_i32, %c0_i32_0, %c0_i32_1 : i32, i32, i32
  }
  func.func @transform_4(%arg0: i32) -> (i32, i32, i32) {
    %c0_i32 = arith.constant 0 : i32
    %c0_i32_0 = arith.constant 0 : i32
    %c0_i32_1 = arith.constant 0 : i32
    return %arg0, %c0_i32, %c0_i32_0 : i32, i32, i32
  }
  func.func @transform_5(%arg0: i32) -> (i32, i32, i32) {
    %c0_i32 = arith.constant 0 : i32
    %c0_i32_0 = arith.constant 0 : i32
    %c0_i32_1 = arith.constant 0 : i32
    return %arg0, %c0_i32, %c0_i32_0 : i32, i32, i32
  }
}

module attributes {stable_mosaic.version = 11 : i64} {
  func.func @_bn_residual_relu_kernel(%arg0: i32, %arg1: i32, %arg2: memref<1x128x128xf32, #tpu.memory_space<vmem>>, %arg3: memref<1x128xf32, #tpu.memory_space<vmem>>, %arg4: memref<1x128xf32, #tpu.memory_space<vmem>>, %arg5: memref<1x128x128xf32, #tpu.memory_space<vmem>>, %arg6: memref<1x128x128xf32, #tpu.memory_space<vmem>>) attributes {dimension_semantics = [#tpu.dimension_semantics<parallel>, #tpu.dimension_semantics<parallel>], iteration_bounds = array<i64: 2, 2>, scalar_prefetch = 0 : i64, scratch_operands = 0 : i64, tpu.core_type = #tpu.core_type<tc>, window_params = [{transform_indices = @transform_0, window_bounds = array<i64: 1, 128, 128>}, {pipeline_mode = #tpu.pipeline_mode<synchronous>, transform_indices = @transform_1, window_bounds = array<i64: 1, 128>}, {pipeline_mode = #tpu.pipeline_mode<synchronous>, transform_indices = @transform_2, window_bounds = array<i64: 1, 128>}, {transform_indices = @transform_3, window_bounds = array<i64: 1, 128, 128>}, {transform_indices = @transform_4, window_bounds = array<i64: 1, 128, 128>}]} {
    %c0 = arith.constant 0 : index
    %c0_0 = arith.constant 0 : index
    %c0_1 = arith.constant 0 : index
    %0 = vector.load %arg5[%c0, %c0_0, %c0_1] : memref<1x128x128xf32, #tpu.memory_space<vmem>>, vector<1x128x128xf32>
    %1 = vector.shape_cast %0 : vector<1x128x128xf32> to vector<128x128xf32>
    %c0_2 = arith.constant 0 : index
    %c0_3 = arith.constant 0 : index
    %c0_4 = arith.constant 0 : index
    %2 = vector.load %arg2[%c0_2, %c0_3, %c0_4] : memref<1x128x128xf32, #tpu.memory_space<vmem>>, vector<1x128x128xf32>
    %3 = vector.shape_cast %2 : vector<1x128x128xf32> to vector<128x128xf32>
    %c0_5 = arith.constant 0 : index
    %c0_6 = arith.constant 0 : index
    %4 = vector.load %arg3[%c0_5, %c0_6] : memref<1x128xf32, #tpu.memory_space<vmem>>, vector<1x128xf32>
    %5 = vector.broadcast %4 : vector<1x128xf32> to vector<128x128xf32>
    %6 = arith.mulf %3, %5 : vector<128x128xf32>
    %7 = arith.addf %1, %6 : vector<128x128xf32>
    %c0_7 = arith.constant 0 : index
    %c0_8 = arith.constant 0 : index
    %8 = vector.load %arg4[%c0_7, %c0_8] : memref<1x128xf32, #tpu.memory_space<vmem>>, vector<1x128xf32>
    %9 = vector.broadcast %8 : vector<1x128xf32> to vector<128x128xf32>
    %10 = arith.addf %7, %9 : vector<128x128xf32>
    %cst = arith.constant 0.000000e+00 : f32
    %11 = vector.broadcast %cst : f32 to vector<128x128xf32>
    %12 = arith.maximumf %10, %11 : vector<128x128xf32>
    %c0_9 = arith.constant 0 : index
    %c0_10 = arith.constant 0 : index
    %c0_11 = arith.constant 0 : index
    %13 = vector.load %arg6[%c0_9, %c0_10, %c0_11] : memref<1x128x128xf32, #tpu.memory_space<vmem>>, vector<1x128x128xf32>
    %14 = vector.shape_cast %13 : vector<1x128x128xf32> to vector<128x128xf32>
    %15 = vector.shape_cast %12 : vector<128x128xf32> to vector<1x128x128xf32>
    tpu.vector_store %arg6[%c0_9, %c0_10, %c0_11], %15 {strides = array<i32>} : memref<1x128x128xf32, #tpu.memory_space<vmem>>, vector<1x128x128xf32>,
    return
  }
  func.func @transform_0(%arg0: i32, %arg1: i32) -> (i32, i32, i32) {
    %c0_i32 = arith.constant 0 : i32
    %c0_i32_0 = arith.constant 0 : i32
    return %arg0, %arg1, %c0_i32 : i32, i32, i32
  }
  func.func @transform_1(%arg0: i32, %arg1: i32) -> (i32, i32) {
    %c0_i32 = arith.constant 0 : i32
    %c0_i32_0 = arith.constant 0 : i32
    %c0_i32_1 = arith.constant 0 : i32
    return %c0_i32, %c0_i32_0 : i32, i32
  }
  func.func @transform_2(%arg0: i32, %arg1: i32) -> (i32, i32) {
    %c0_i32 = arith.constant 0 : i32
    %c0_i32_0 = arith.constant 0 : i32
    %c0_i32_1 = arith.constant 0 : i32
    return %c0_i32, %c0_i32_0 : i32, i32
  }
  func.func @transform_3(%arg0: i32, %arg1: i32) -> (i32, i32, i32) {
    %c0_i32 = arith.constant 0 : i32
    %c0_i32_0 = arith.constant 0 : i32
    return %arg0, %arg1, %c0_i32 : i32, i32, i32
  }
  func.func @transform_4(%arg0: i32, %arg1: i32) -> (i32, i32, i32) {
    %c0_i32 = arith.constant 0 : i32
    %c0_i32_0 = arith.constant 0 : i32
    return %arg0, %arg1, %c0_i32 : i32, i32, i32
  }
}

</mosaic_0001>

<llo_original>
// kernel: projected_residual_block_forward.5
$region0: #{projected_residual_block_forward.5}
  #allocation0 [shape = 'u32[]', space=smem, size = 0x4, offset = 0x4, fixed_abs, tag = 'smem constant byte address 0x4 - core index']
  #allocation1 [shape = 'u32[144,128]{1,0:T(1,128)}', space=vmem, size = 0x12000, scoped, tag = 'internal scratch']
  %s0 = inlined_call_operand.vmem [shape: f32[2,256,128], index: 0, kind: input, shape index: {}, may-alias: {0,4}]
  %s1 = inlined_call_operand.vmem [shape: f32[1,128], index: 1, kind: input, shape index: {}]
  %s2 = inlined_call_operand.vmem [shape: f32[1,128], index: 2, kind: input, shape index: {}]
  %s3 = inlined_call_operand.vmem [shape: f32[2,256,128], index: 3, kind: input, shape index: {}]
  %s4 = inlined_call_operand.vmem [shape: f32[2,256,128], index: 4, kind: output, shape index: {}, may-alias: {0,4}]
  %s5 = sld [smem:[#allocation0]]
  $region49: #{projected_residual_block_forward.5} parent=0
    _
  %s7 = ssub.s32 1, %s5
  %s8 = scalar_select 0, %s7, %s5
  loop: start=0, step=1, limit=6
  $region2: #{projected_residual_block_forward.5} parent=0 // loop_pre_header
    _
  $region3: #{projected_residual_block_forward.5} parent=0 // loop_header
    %s10 = sphi 0, %s14
    %p11 = scmp.ge.s32.totalorder %s10, 6
    %s17 = sphi 0, %s29
    %s18 = sphi 0, %s25
    %s19 = sphi 0, %s17
    %s20 = sphi 0, %s18
    %s21 = sphi 0, %s19
    %s22 = sphi 0, %s20
    %s34 = sphi 0, %s36
    %s37 = sphi 0, %s34
    %s38 = sphi 0, %s37
    %s54 = sphi 0, %s38
    %s58 = sphi 0, %s58
    %s60 = sphi 0, %s58
    %s61 = sphi 0, %s60
    %s75 = sphi 0, %s61
    %s79 = sphi 0, %s79
    %s81 = sphi 0, %s79
    %s82 = sphi 0, %s81
    %s96 = sphi 0, %s82
    %s104 = sphi 0, %s106
    %s107 = sphi 0, %s104
    %s108 = sphi 0, %s107
    %s124 = sphi 0, %s108
    %s132 = sphi 0, %s134
    %s135 = sphi 0, %s132
    %s136 = sphi 0, %s135
    %s152 = sphi 0, %s136
  $region4: #{projected_residual_block_forward.5} parent=0 // loop_header_branch
    %13 = sbr.rel (%p11) target = $region8
  $region5: #{projected_residual_block_forward.5} parent=0 // loop_body
    %s15 = ssub.s32 %s10, 1
    %s16 = ssub.s32 %s10, 2
    %s23 = sadd.s32 1, %s18
    %p24 = scmp.ge.s32.totalorder %s23, 2
    %s25 = scalar_select %p24, 0, %s23
    %s26 = sadd.s32 1, %s17
    %s27 = scalar_select %p24, %s26, %s17
    %p28 = scmp.ge.s32.totalorder %s27, 2
    %s29 = scalar_select %p28, 0, %s27
    %s30 = ssub.s32 %s17, %s29
    %s31 = ssub.s32 %s18, %s25
    %s32 = sor.u32 %s30, %s31
    %p33 = scmp.eq.s32.totalorder %s32, 0
    %s35 = sadd.s32 %s34, 1
    %s36 = scalar_select %p33, %s34, %s35
    %p39 = pneg %p33
    %p40 = scmp.eq.s32.totalorder %s10, 3
    %p41 = por %p39, %p40
    %p42 = scmp.ne.s32.totalorder %s34, %s37
    %p43 = scmp.eq.s32.totalorder %s10, 0
    %p44 = por %p42, %p43
    %p45 = scmp.ne.s32.totalorder %s34, %s37
    %p46 = scmp.eq.s32.totalorder %s15, 3
    %p47 = por %p45, %p46
    %p48 = scmp.ne.s32.totalorder %s37, %s38
    %p49 = scmp.eq.s32.totalorder %s15, 0
    %p50 = por %p48, %p49
    %p51 = scmp.ne.s32.totalorder %s37, %s38
    %p52 = scmp.eq.s32.totalorder %s16, 3
    %p53 = por %p51, %p52
    %p55 = scmp.ne.s32.totalorder %s38, %s54
    %p56 = scmp.eq.s32.totalorder %s16, 0
    %p57 = por %p55, %p56
    %s59 = sadd.s32 %s58, 1
    %p62 = scmp.eq.s32.totalorder %s10, 3
    %p63 = scmp.ne.s32.totalorder %s58, %s60
    %p64 = scmp.eq.s32.totalorder %s10, 0
    %p65 = por %p63, %p64
    %p66 = scmp.ne.s32.totalorder %s58, %s60
    %p67 = scmp.eq.s32.totalorder %s15, 3
    %p68 = por %p66, %p67
    %p69 = scmp.ne.s32.totalorder %s60, %s61
    %p70 = scmp.eq.s32.totalorder %s15, 0
    %p71 = por %p69, %p70
    %p72 = scmp.ne.s32.totalorder %s60, %s61
    %p73 = scmp.eq.s32.totalorder %s16, 3
    %p74 = por %p72, %p73
    %p76 = scmp.ne.s32.totalorder %s61, %s75
    %p77 = scmp.eq.s32.totalorder %s16, 0
    %p78 = por %p76, %p77
    %s80 = sadd.s32 %s79, 1
    %p83 = scmp.eq.s32.totalorder %s10, 3
    %p84 = scmp.ne.s32.totalorder %s79, %s81
    %p85 = scmp.eq.s32.totalorder %s10, 0
    %p86 = por %p84, %p85
    %p87 = scmp.ne.s32.totalorder %s79, %s81
    %p88 = scmp.eq.s32.totalorder %s15, 3
    %p89 = por %p87, %p88
    %p90 = scmp.ne.s32.totalorder %s81, %s82
    %p91 = scmp.eq.s32.totalorder %s15, 0
    %p92 = por %p90, %p91
    %p93 = scmp.ne.s32.totalorder %s81, %s82
    %p94 = scmp.eq.s32.totalorder %s16, 3
    %p95 = por %p93, %p94
    %p97 = scmp.ne.s32.totalorder %s82, %s96
    %p98 = scmp.eq.s32.totalorder %s16, 0
    %p99 = por %p97, %p98
    %s100 = ssub.s32 %s17, %s29
    %s101 = ssub.s32 %s18, %s25
    %s102 = sor.u32 %s100, %s101
    %p103 = scmp.eq.s32.totalorder %s102, 0
    %s105 = sadd.s32 %s104, 1
    %s106 = scalar_select %p103, %s104, %s105
    %p109 = pneg %p103
    %p110 = scmp.eq.s32.totalorder %s10, 3
    %p111 = por %p109, %p110
    %p112 = scmp.ne.s32.totalorder %s104, %s107
    %p113 = scmp.eq.s32.totalorder %s10, 0
    %p114 = por %p112, %p113
    %p115 = scmp.ne.s32.totalorder %s104, %s107
    %p116 = scmp.eq.s32.totalorder %s15, 3
    %p117 = por %p115, %p116
    %p118 = scmp.ne.s32.totalorder %s107, %s108
    %p119 = scmp.eq.s32.totalorder %s15, 0
    %p120 = por %p118, %p119
    %p121 = scmp.ne.s32.totalorder %s107, %s108
    %p122 = scmp.eq.s32.totalorder %s16, 3
    %p123 = por %p121, %p122
    %p125 = scmp.ne.s32.totalorder %s108, %s124
    %p126 = scmp.eq.s32.totalorder %s16, 0
    %p127 = por %p125, %p126
    %s128 = ssub.s32 %s17, %s29
    %s129 = ssub.s32 %s18, %s25
    %s130 = sor.u32 %s128, %s129
    %p131 = scmp.eq.s32.totalorder %s130, 0
    %s133 = sadd.s32 %s132, 1
    %s134 = scalar_select %p131, %s132, %s133
    %p137 = pneg %p131
    %p138 = scmp.eq.s32.totalorder %s10, 3
    %p139 = por %p137, %p138
    %p140 = scmp.ne.s32.totalorder %s132, %s135
    %p141 = scmp.eq.s32.totalorder %s10, 0
    %p142 = por %p140, %p141
    %p143 = scmp.ne.s32.totalorder %s132, %s135
    %p144 = scmp.eq.s32.totalorder %s15, 3
    %p145 = por %p143, %p144
    %p146 = scmp.ne.s32.totalorder %s135, %s136
    %p147 = scmp.eq.s32.totalorder %s15, 0
    %p148 = por %p146, %p147
    %p149 = scmp.ne.s32.totalorder %s135, %s136
    %p150 = scmp.eq.s32.totalorder %s16, 3
    %p151 = por %p149, %p150
    %p153 = scmp.ne.s32.totalorder %s136, %s152
    %p154 = scmp.eq.s32.totalorder %s16, 0
    %p155 = por %p153, %p154
    %p156 = scmp.le.s32.totalorder 1, %s10
    %p157 = scmp.lt.s32.totalorder %s10, 5
    %p158 = pnand %p156, %p157
    %p159 = pneg %p158
    // Predicated region
    $region9: #{projected_residual_block_forward.5} parent=5 // pred_check
      _
    $region10: #{projected_residual_block_forward.5} parent=5 // pred_check_branch
      %161 = sbr.rel (%p158) target = $region12
    $region11: #{projected_residual_block_forward.5} parent=5 // pred_region
      %s162 = ssub.s32 %s10, 1
      // Predicated region
      $region13: #{projected_residual_block_forward.5} parent=11 // pred_check
        %p163 = pneg %p71
      $region14: #{projected_residual_block_forward.5} parent=11 // pred_check_branch
        %165 = sbr.rel (%p163) target = $region16
      $region15: #{projected_residual_block_forward.5} parent=11 // pred_region
        _
      $region16: #{projected_residual_block_forward.5} parent=11 // pred_fallthru
        _
      // Predicated region
      $region17: #{projected_residual_block_forward.5} parent=11 // pred_check
        %p166 = pneg %p92
      $region18: #{projected_residual_block_forward.5} parent=11 // pred_check_branch
        %168 = sbr.rel (%p166) target = $region20
      $region19: #{projected_residual_block_forward.5} parent=11 // pred_region
        _
      $region20: #{projected_residual_block_forward.5} parent=11 // pred_fallthru
        _
    $region12: #{projected_residual_block_forward.5} parent=5 // pred_fallthru
      _
    %p169 = scmp.lt.s32.totalorder %s10, 4
    // Predicated region
    $region21: #{projected_residual_block_forward.5} parent=5 // pred_check
      %p170 = pneg %p169
    $region22: #{projected_residual_block_forward.5} parent=5 // pred_check_branch
      %172 = sbr.rel (%p170) target = $region24
    $region23: #{projected_residual_block_forward.5} parent=5 // pred_region
      // Predicated region
      $region25: #{projected_residual_block_forward.5} parent=23 // pred_check
        %p173 = pneg %p44
      $region26: #{projected_residual_block_forward.5} parent=23 // pred_check_branch
        %175 = sbr.rel (%p173) target = $region28
      $region27: #{projected_residual_block_forward.5} parent=23 // pred_region
        %s176 = smul.u32 16, %s18
        %p177 = scmp.lt.s32.totalorder %s17, 1
        %s178 = scalar_select %p177, %s17, 1
        %p179 = scmp.lt.s32.totalorder %s176, 31
        %s180 = scalar_select %p179, %s176, 31
        %s181 = smul.addr %s178, 32
        %s182 = sadd.s32 %s180, %s181
        %s183 = smul.addr %s182, 8
        %s184 = scalar_lea.vmem %s0, %s183
        %s185 = smul.u32 16, %s18
      $region28: #{projected_residual_block_forward.5} parent=23 // pred_fallthru
        _
      // Predicated region
      $region29: #{projected_residual_block_forward.5} parent=23 // pred_check
        %p186 = pneg %p114
      $region30: #{projected_residual_block_forward.5} parent=23 // pred_check_branch
        %188 = sbr.rel (%p186) target = $region32
      $region31: #{projected_residual_block_forward.5} parent=23 // pred_region
        %s189 = smul.u32 16, %s18
        %p190 = scmp.lt.s32.totalorder %s17, 1
        %s191 = scalar_select %p190, %s17, 1
        %p192 = scmp.lt.s32.totalorder %s189, 31
        %s193 = scalar_select %p192, %s189, 31
        %s194 = smul.addr %s191, 32
        %s195 = sadd.s32 %s193, %s194
        %s196 = smul.addr %s195, 8
        %s197 = scalar_lea.vmem %s3, %s196
        %s198 = smul.u32 16, %s18
      $region32: #{projected_residual_block_forward.5} parent=23 // pred_fallthru
        _
    $region24: #{projected_residual_block_forward.5} parent=5 // pred_fallthru
      _
    %p199 = scmp.le.s32.totalorder 1, %s10
    %p200 = scmp.lt.s32.totalorder %s10, 5
    %p201 = pnand %p199, %p200
    %p202 = pneg %p201
    // Predicated region
    $region33: #{projected_residual_block_forward.5} parent=5 // pred_check
      _
    $region34: #{projected_residual_block_forward.5} parent=5 // pred_check_branch
      %204 = sbr.rel (%p201) target = $region36
    $region35: #{projected_residual_block_forward.5} parent=5 // pred_region
      %s205 = ssub.s32 %s10, 1
      %s206 = smul.u32 16, %s20
      %p207 = scmp.lt.s32.totalorder %s19, 1
      %s208 = scalar_select %p207, %s19, 1
      %p209 = scmp.lt.s32.totalorder %s206, 31
      %s210 = scalar_select %p209, %s206, 31
      %s211 = smul.addr %s208, 32
      %s212 = sadd.s32 %s210, %s211
      %s213 = smul.addr %s212, 8
      %s214 = scalar_lea.vmem %s0, %s213
      %p215 = pneg %p50
      %p216 = pneg %p47
      %p217 = pneg %p71
      %p218 = pneg %p68
      %p219 = pneg %p92
      %p220 = pneg %p89
      %s221 = smul.u32 16, %s20
      %p222 = scmp.lt.s32.totalorder %s19, 1
      %s223 = scalar_select %p222, %s19, 1
      %p224 = scmp.lt.s32.totalorder %s221, 31
      %s225 = scalar_select %p224, %s221, 31
      %s226 = smul.addr %s223, 32
      %s227 = sadd.s32 %s225, %s226
      %s228 = smul.addr %s227, 8
      %s229 = scalar_lea.vmem %s3, %s228
      %p230 = pneg %p120
      %p231 = pneg %p117
      %p232 = pneg %p148
      %p233 = pneg %p145
      %s234 = smul.u32 16, %s20
      %p235 = scmp.lt.s32.totalorder %s19, 1
      %s236 = scalar_select %p235, %s19, 1
      %p237 = scmp.lt.s32.totalorder %s234, 31
      %s238 = scalar_select %p237, %s234, 31
      %s239 = smul.addr %s236, 32
      %s240 = sadd.s32 %s238, %s239
      %s241 = smul.addr %s240, 8
      %s242 = scalar_lea.vmem %s4, %s241
      %s243 = smul.u32 16, %s20
      %p244 = scmp.lt.s32.totalorder %s19, 1
      %s245 = scalar_select %p244, %s19, 1
      %p246 = scmp.lt.s32.totalorder %s243, 31
      %s247 = scalar_select %p246, %s243, 31
      %s248 = smul.addr %s245, 32
      %s249 = sadd.s32 %s247, %s248
      %s250 = smul.addr %s249, 8
      %s251 = scalar_lea.vmem %s0, %s250
      %s252 = smul.u32 16, %s20
      %s253 = smul.u32 16, %s20
      %p254 = scmp.lt.s32.totalorder %s19, 1
      %s255 = scalar_select %p254, %s19, 1
      %p256 = scmp.lt.s32.totalorder %s253, 31
      %s257 = scalar_select %p256, %s253, 31
      %s258 = smul.addr %s255, 32
      %s259 = sadd.s32 %s257, %s258
      %s260 = smul.addr %s259, 8
      %s261 = scalar_lea.vmem %s3, %s260
      %s262 = smul.u32 16, %s20
      %s263 = smul.u32 16, %s20
      %p264 = scmp.lt.s32.totalorder %s19, 1
      %s265 = scalar_select %p264, %s19, 1
      %p266 = scmp.lt.s32.totalorder %s263, 31
      %s267 = scalar_select %p266, %s263, 31
      %s268 = smul.addr %s265, 32
      %s269 = sadd.s32 %s267, %s268
      %s270 = smul.addr %s269, 8
      %s271 = scalar_lea.vmem %s4, %s270
      %s272 = smul.u32 16, %s20
      %v273 = vld [vmem:[%s261] sm:$0xff]
      %v274 = vld [vmem:[%s261 + $0x8] sm:$0xff]
      %v275 = vld [vmem:[%s261 + $0x10] sm:$0xff]
      %v276 = vld [vmem:[%s261 + $0x18] sm:$0xff]
      %v277 = vld [vmem:[%s261 + $0x20] sm:$0xff]
      %v278 = vld [vmem:[%s261 + $0x28] sm:$0xff]
      %v279 = vld [vmem:[%s261 + $0x30] sm:$0xff]
      %v280 = vld [vmem:[%s261 + $0x38] sm:$0xff]
      %v281 = vld [vmem:[%s261 + $0x40] sm:$0xff]
      %v282 = vld [vmem:[%s261 + $0x48] sm:$0xff]
      %v283 = vld [vmem:[%s261 + $0x50] sm:$0xff]
      %v284 = vld [vmem:[%s261 + $0x58] sm:$0xff]
      %v285 = vld [vmem:[%s261 + $0x60] sm:$0xff]
      %v286 = vld [vmem:[%s261 + $0x68] sm:$0xff]
      %v287 = vld [vmem:[%s261 + $0x70] sm:$0xff]
      %v288 = vld [vmem:[%s261 + $0x78] sm:$0xff]
      %v289 = vld [vmem:[%s251] sm:$0xff]
      %v290 = vld [vmem:[%s251 + $0x8] sm:$0xff]
      %v291 = vld [vmem:[%s251 + $0x10] sm:$0xff]
      %v292 = vld [vmem:[%s251 + $0x18] sm:$0xff]
      %v293 = vld [vmem:[%s251 + $0x20] sm:$0xff]
      %v294 = vld [vmem:[%s251 + $0x28] sm:$0xff]
      %v295 = vld [vmem:[%s251 + $0x30] sm:$0xff]
      %v296 = vld [vmem:[%s251 + $0x38] sm:$0xff]
      %v297 = vld [vmem:[%s251 + $0x40] sm:$0xff]
      %v298 = vld [vmem:[%s251 + $0x48] sm:$0xff]
      %v299 = vld [vmem:[%s251 + $0x50] sm:$0xff]
      %v300 = vld [vmem:[%s251 + $0x58] sm:$0xff]
      %v301 = vld [vmem:[%s251 + $0x60] sm:$0xff]
      %v302 = vld [vmem:[%s251 + $0x68] sm:$0xff]
      %v303 = vld [vmem:[%s251 + $0x70] sm:$0xff]
      %v304 = vld [vmem:[%s251 + $0x78] sm:$0xff]
      %v305 = vld [vmem:[%s1] sm:$0x1]
      %v307 = vlaneseq
      %v308 = vshrl.u32 %v307, 7
      %v309 = vsub.s32 0, %v308
      %v310 = vrot.slane %v305, %v309
      %v312 = vmul.f32 %v289, %v310
      %v313 = vmul.f32 %v290, %v310
      %v314 = vmul.f32 %v291, %v310
      %v315 = vmul.f32 %v292, %v310
      %v316 = vmul.f32 %v293, %v310
      %v317 = vmul.f32 %v294, %v310
      %v318 = vmul.f32 %v295, %v310
      %v319 = vmul.f32 %v296, %v310
      %v320 = vmul.f32 %v297, %v310
      %v321 = vmul.f32 %v298, %v310
      %v322 = vmul.f32 %v299, %v310
      %v323 = vmul.f32 %v300, %v310
      %v324 = vmul.f32 %v301, %v310
      %v325 = vmul.f32 %v302, %v310
      %v326 = vmul.f32 %v303, %v310
      %v327 = vmul.f32 %v304, %v310
      %v328 = vadd.f32 %v273, %v312
      %v329 = vadd.f32 %v274, %v313
      %v330 = vadd.f32 %v275, %v314
      %v331 = vadd.f32 %v276, %v315
      %v332 = vadd.f32 %v277, %v316
      %v333 = vadd.f32 %v278, %v317
      %v334 = vadd.f32 %v279, %v318
      %v335 = vadd.f32 %v280, %v319
      %v336 = vadd.f32 %v281, %v320
      %v337 = vadd.f32 %v282, %v321
      %v338 = vadd.f32 %v283, %v322
      %v339 = vadd.f32 %v284, %v323
      %v340 = vadd.f32 %v285, %v324
      %v341 = vadd.f32 %v286, %v325
      %v342 = vadd.f32 %v287, %v326
      %v343 = vadd.f32 %v288, %v327
      %v344 = vld [vmem:[%s2] sm:$0x1]
      %v346 = vlaneseq
      %v347 = vshrl.u32 %v346, 7
      %v348 = vsub.s32 0, %v347
      %v349 = vrot.slane %v344, %v348
      %v351 = vadd.f32 %v328, %v349
      %v352 = vadd.f32 %v329, %v349
      %v353 = vadd.f32 %v330, %v349
      %v354 = vadd.f32 %v331, %v349
      %v355 = vadd.f32 %v332, %v349
      %v356 = vadd.f32 %v333, %v349
      %v357 = vadd.f32 %v334, %v349
      %v358 = vadd.f32 %v335, %v349
      %v359 = vadd.f32 %v336, %v349
      %v360 = vadd.f32 %v337, %v349
      %v361 = vadd.f32 %v338, %v349
      %v362 = vadd.f32 %v339, %v349
      %v363 = vadd.f32 %v340, %v349
      %v364 = vadd.f32 %v341, %v349
      %v365 = vadd.f32 %v342, %v349
      %v366 = vadd.f32 %v343, %v349
      %v367 = vmax.f32 %v351, 0.0
      %v368 = vmax.f32 %v352, 0.0
      %v369 = vmax.f32 %v353, 0.0
      %v370 = vmax.f32 %v354, 0.0
      %v371 = vmax.f32 %v355, 0.0
      %v372 = vmax.f32 %v356, 0.0
      %v373 = vmax.f32 %v357, 0.0
      %v374 = vmax.f32 %v358, 0.0
      %v375 = vmax.f32 %v359, 0.0
      %v376 = vmax.f32 %v360, 0.0
      %v377 = vmax.f32 %v361, 0.0
      %v378 = vmax.f32 %v362, 0.0
      %v379 = vmax.f32 %v363, 0.0
      %v380 = vmax.f32 %v364, 0.0
      %v381 = vmax.f32 %v365, 0.0
      %v382 = vmax.f32 %v366, 0.0
      %383 = vst [vmem:[%s271] sm:$0xff] %v367
      %384 = vst [vmem:[%s271 + $0x8] sm:$0xff] %v368
      %385 = vst [vmem:[%s271 + $0x10] sm:$0xff] %v369
      %386 = vst [vmem:[%s271 + $0x18] sm:$0xff] %v370
      %387 = vst [vmem:[%s271 + $0x20] sm:$0xff] %v371
      %388 = vst [vmem:[%s271 + $0x28] sm:$0xff] %v372
      %389 = vst [vmem:[%s271 + $0x30] sm:$0xff] %v373
      %390 = vst [vmem:[%s271 + $0x38] sm:$0xff] %v374
      %391 = vst [vmem:[%s271 + $0x40] sm:$0xff] %v375
      %392 = vst [vmem:[%s271 + $0x48] sm:$0xff] %v376
      %393 = vst [vmem:[%s271 + $0x50] sm:$0xff] %v377
      %394 = vst [vmem:[%s271 + $0x58] sm:$0xff] %v378
      %395 = vst [vmem:[%s271 + $0x60] sm:$0xff] %v379
      %396 = vst [vmem:[%s271 + $0x68] sm:$0xff] %v380
      %397 = vst [vmem:[%s271 + $0x70] sm:$0xff] %v381
      %398 = vst [vmem:[%s271 + $0x78] sm:$0xff] %v382
      %s399 = smul.u32 16, %s20
      %p400 = scmp.lt.s32.totalorder %s19, 1
      %s401 = scalar_select %p400, %s19, 1
      %p402 = scmp.lt.s32.totalorder %s399, 31
      %s403 = scalar_select %p402, %s399, 31
      %s404 = smul.addr %s401, 32
      %s405 = sadd.s32 %s403, %s404
      %s406 = smul.addr %s405, 8
      %s407 = scalar_lea.vmem %s4, %s406
      // Predicated region
      $region37: #{projected_residual_block_forward.5} parent=35 // pred_check
        %p408 = pneg %p145
      $region38: #{projected_residual_block_forward.5} parent=35 // pred_check_branch
        %410 = sbr.rel (%p408) target = $region40
      $region39: #{projected_residual_block_forward.5} parent=35 // pred_region
        %s411 = smul.u32 16, %s20
      $region40: #{projected_residual_block_forward.5} parent=35 // pred_fallthru
        _
    $region36: #{projected_residual_block_forward.5} parent=5 // pred_fallthru
      _
    %p412 = scmp.le.s32.totalorder 2, %s10
    // Predicated region
    $region41: #{projected_residual_block_forward.5} parent=5 // pred_check
      %p413 = pneg %p412
    $region42: #{projected_residual_block_forward.5} parent=5 // pred_check_branch
      %415 = sbr.rel (%p413) target = $region44
    $region43: #{projected_residual_block_forward.5} parent=5 // pred_region
      %s416 = ssub.s32 %s10, 2
      // Predicated region
      $region45: #{projected_residual_block_forward.5} parent=43 // pred_check
        %p417 = pneg %p151
      $region46: #{projected_residual_block_forward.5} parent=43 // pred_check_branch
        %419 = sbr.rel (%p417) target = $region48
      $region47: #{projected_residual_block_forward.5} parent=43 // pred_region
        %s420 = smul.u32 16, %s22
        %p421 = scmp.lt.s32.totalorder %s21, 1
        %s422 = scalar_select %p421, %s21, 1
        %p423 = scmp.lt.s32.totalorder %s420, 31
        %s424 = scalar_select %p423, %s420, 31
        %s425 = smul.addr %s422, 32
        %s426 = sadd.s32 %s424, %s425
        %s427 = smul.addr %s426, 8
        %s428 = scalar_lea.vmem %s4, %s427
      $region48: #{projected_residual_block_forward.5} parent=43 // pred_fallthru
        _
    $region44: #{projected_residual_block_forward.5} parent=5 // pred_fallthru
      _
  $region6: #{projected_residual_block_forward.5} parent=0 // loop_footer
    %s14 = sadd.s32 1, %s10
  $region7: #{projected_residual_block_forward.5} parent=0 // loop_footer_branch
    %9 = sbr.rel target = $region3
  $region8: #{projected_residual_block_forward.5} parent=0 // loop_exit
    _

// kernel: projected_residual_block_forward.4
$region0: #{projected_residual_block_forward.4}
  #allocation0 [shape = 'u32[]', space=smem, size = 0x4, offset = 0x4, fixed_abs, tag = 'smem constant byte address 0x4 - core index']
  #allocation1 [shape = 'u32[144,128]{1,0:T(1,128)}', space=vmem, size = 0x12000, scoped, tag = 'internal scratch']
  #allocation2 [shape = 'bf16[288,384]{1,0:T(16,128)(2,1)}', space=vmem, size = 0x36000, scoped, tag = 'scratch operand']
  %s0 = inlined_call_operand.vmem [shape: f32[2,256,128], index: 0, kind: input, shape index: {}]
  %s1 = inlined_call_operand.vmem [shape: f32[1,128], index: 1, kind: input, shape index: {}]
  %s2 = inlined_call_operand.vmem [shape: f32[1,128], index: 2, kind: input, shape index: {}]
  %s3 = inlined_call_operand.vmem [shape: bf16[3,384,128], index: 3, kind: input, shape index: {}]
  %s4 = inlined_call_operand.vmem [shape: f32[2,256,128], index: 4, kind: output, shape index: {0}]
  %s5 = inlined_call_operand.vmem [shape: f32[2,2,128], index: 5, kind: output, shape index: {1}]
  %6 = xla_tuple %s4, %s5
  %s7 = sld [smem:[#allocation0]]
  $region57: #{projected_residual_block_forward.4} parent=0
    _
  %s9 = ssub.s32 1, %s7
  %s10 = scalar_select 0, %s9, %s7
  loop: start=0, step=1, limit=4
  $region2: #{projected_residual_block_forward.4} parent=0 // loop_pre_header
    _
  $region3: #{projected_residual_block_forward.4} parent=0 // loop_header
    %s12 = sphi 0, %s16
    %p13 = scmp.ge.s32.totalorder %s12, 4
    %s22 = sphi 0, %s24
    %s25 = sphi 0, %s22
    %s26 = sphi 0, %s25
    %s42 = sphi 0, %s26
    %s46 = sphi 0, %s46
    %s48 = sphi 0, %s46
    %s49 = sphi 0, %s48
    %s63 = sphi 0, %s49
    %s67 = sphi 0, %s67
    %s69 = sphi 0, %s67
    %s70 = sphi 0, %s69
    %s84 = sphi 0, %s70
    %s88 = sphi 0, %s88
    %s90 = sphi 0, %s88
    %s91 = sphi 0, %s90
    %s105 = sphi 0, %s91
    %s111 = sphi 0, %s113
    %s114 = sphi 0, %s111
    %s115 = sphi 0, %s114
    %s131 = sphi 0, %s115
    %s137 = sphi 0, %s139
    %s140 = sphi 0, %s137
    %s141 = sphi 0, %s140
    %s157 = sphi 0, %s141
  $region4: #{projected_residual_block_forward.4} parent=0 // loop_header_branch
    %15 = sbr.rel (%p13) target = $region8
  $region5: #{projected_residual_block_forward.4} parent=0 // loop_body
    %s17 = ssub.s32 %s12, 1
    %s18 = ssub.s32 %s12, 2
    %s19 = sadd.s32 %s12, 1
    %s20 = ssub.s32 %s12, %s19
    %p21 = scmp.eq.s32.totalorder %s20, 0
    %s23 = sadd.s32 %s22, 1
    %s24 = scalar_select %p21, %s22, %s23
    %p27 = pneg %p21
    %p28 = scmp.eq.s32.totalorder %s12, 1
    %p29 = por %p27, %p28
    %p30 = scmp.ne.s32.totalorder %s22, %s25
    %p31 = scmp.eq.s32.totalorder %s12, 0
    %p32 = por %p30, %p31
    %p33 = scmp.ne.s32.totalorder %s22, %s25
    %p34 = scmp.eq.s32.totalorder %s17, 1
    %p35 = por %p33, %p34
    %p36 = scmp.ne.s32.totalorder %s25, %s26
    %p37 = scmp.eq.s32.totalorder %s17, 0
    %p38 = por %p36, %p37
    %p39 = scmp.ne.s32.totalorder %s25, %s26
    %p40 = scmp.eq.s32.totalorder %s18, 1
    %p41 = por %p39, %p40
    %p43 = scmp.ne.s32.totalorder %s26, %s42
    %p44 = scmp.eq.s32.totalorder %s18, 0
    %p45 = por %p43, %p44
    %s47 = sadd.s32 %s46, 1
    %p50 = scmp.eq.s32.totalorder %s12, 1
    %p51 = scmp.ne.s32.totalorder %s46, %s48
    %p52 = scmp.eq.s32.totalorder %s12, 0
    %p53 = por %p51, %p52
    %p54 = scmp.ne.s32.totalorder %s46, %s48
    %p55 = scmp.eq.s32.totalorder %s17, 1
    %p56 = por %p54, %p55
    %p57 = scmp.ne.s32.totalorder %s48, %s49
    %p58 = scmp.eq.s32.totalorder %s17, 0
    %p59 = por %p57, %p58
    %p60 = scmp.ne.s32.totalorder %s48, %s49
    %p61 = scmp.eq.s32.totalorder %s18, 1
    %p62 = por %p60, %p61
    %p64 = scmp.ne.s32.totalorder %s49, %s63
    %p65 = scmp.eq.s32.totalorder %s18, 0
    %p66 = por %p64, %p65
    %s68 = sadd.s32 %s67, 1
    %p71 = scmp.eq.s32.totalorder %s12, 1
    %p72 = scmp.ne.s32.totalorder %s67, %s69
    %p73 = scmp.eq.s32.totalorder %s12, 0
    %p74 = por %p72, %p73
    %p75 = scmp.ne.s32.totalorder %s67, %s69
    %p76 = scmp.eq.s32.totalorder %s17, 1
    %p77 = por %p75, %p76
    %p78 = scmp.ne.s32.totalorder %s69, %s70
    %p79 = scmp.eq.s32.totalorder %s17, 0
    %p80 = por %p78, %p79
    %p81 = scmp.ne.s32.totalorder %s69, %s70
    %p82 = scmp.eq.s32.totalorder %s18, 1
    %p83 = por %p81, %p82
    %p85 = scmp.ne.s32.totalorder %s70, %s84
    %p86 = scmp.eq.s32.totalorder %s18, 0
    %p87 = por %p85, %p86
    %s89 = sadd.s32 %s88, 1
    %p92 = scmp.eq.s32.totalorder %s12, 1
    %p93 = scmp.ne.s32.totalorder %s88, %s90
    %p94 = scmp.eq.s32.totalorder %s12, 0
    %p95 = por %p93, %p94
    %p96 = scmp.ne.s32.totalorder %s88, %s90
    %p97 = scmp.eq.s32.totalorder %s17, 1
    %p98 = por %p96, %p97
    %p99 = scmp.ne.s32.totalorder %s90, %s91
    %p100 = scmp.eq.s32.totalorder %s17, 0
    %p101 = por %p99, %p100
    %p102 = scmp.ne.s32.totalorder %s90, %s91
    %p103 = scmp.eq.s32.totalorder %s18, 1
    %p104 = por %p102, %p103
    %p106 = scmp.ne.s32.totalorder %s91, %s105
    %p107 = scmp.eq.s32.totalorder %s18, 0
    %p108 = por %p106, %p107
    %s109 = ssub.s32 %s12, %s19
    %p110 = scmp.eq.s32.totalorder %s109, 0
    %s112 = sadd.s32 %s111, 1
    %s113 = scalar_select %p110, %s111, %s112
    %p116 = pneg %p110
    %p117 = scmp.eq.s32.totalorder %s12, 1
    %p118 = por %p116, %p117
    %p119 = scmp.ne.s32.totalorder %s111, %s114
    %p120 = scmp.eq.s32.totalorder %s12, 0
    %p121 = por %p119, %p120
    %p122 = scmp.ne.s32.totalorder %s111, %s114
    %p123 = scmp.eq.s32.totalorder %s17, 1
    %p124 = por %p122, %p123
    %p125 = scmp.ne.s32.totalorder %s114, %s115
    %p126 = scmp.eq.s32.totalorder %s17, 0
    %p127 = por %p125, %p126
    %p128 = scmp.ne.s32.totalorder %s114, %s115
    %p129 = scmp.eq.s32.totalorder %s18, 1
    %p130 = por %p128, %p129
    %p132 = scmp.ne.s32.totalorder %s115, %s131
    %p133 = scmp.eq.s32.totalorder %s18, 0
    %p134 = por %p132, %p133
    %s135 = ssub.s32 %s12, %s19
    %p136 = scmp.eq.s32.totalorder %s135, 0
    %s138 = sadd.s32 %s137, 1
    %s139 = scalar_select %p136, %s137, %s138
    %p142 = pneg %p136
    %p143 = scmp.eq.s32.totalorder %s12, 1
    %p144 = por %p142, %p143
    %p145 = scmp.ne.s32.totalorder %s137, %s140
    %p146 = scmp.eq.s32.totalorder %s12, 0
    %p147 = por %p145, %p146
    %p148 = scmp.ne.s32.totalorder %s137, %s140
    %p149 = scmp.eq.s32.totalorder %s17, 1
    %p150 = por %p148, %p149
    %p151 = scmp.ne.s32.totalorder %s140, %s141
    %p152 = scmp.eq.s32.totalorder %s17, 0
    %p153 = por %p151, %p152
    %p154 = scmp.ne.s32.totalorder %s140, %s141
    %p155 = scmp.eq.s32.totalorder %s18, 1
    %p156 = por %p154, %p155
    %p158 = scmp.ne.s32.totalorder %s141, %s157
    %p159 = scmp.eq.s32.totalorder %s18, 0
    %p160 = por %p158, %p159
    %p161 = scmp.le.s32.totalorder 1, %s12
    %p162 = scmp.lt.s32.totalorder %s12, 3
    %p163 = pnand %p161, %p162
    %p164 = pneg %p163
    // Predicated region
    $region9: #{projected_residual_block_forward.4} parent=5 // pred_check
      _
    $region10: #{projected_residual_block_forward.4} parent=5 // pred_check_branch
      %166 = sbr.rel (%p163) target = $region12
    $region11: #{projected_residual_block_forward.4} parent=5 // pred_region
      %s167 = ssub.s32 %s12, 1
      // Predicated region
      $region13: #{projected_residual_block_forward.4} parent=11 // pred_check
        %p168 = pneg %p59
      $region14: #{projected_residual_block_forward.4} parent=11 // pred_check_branch
        %170 = sbr.rel (%p168) target = $region16
      $region15: #{projected_residual_block_forward.4} parent=11 // pred_region
        _
      $region16: #{projected_residual_block_forward.4} parent=11 // pred_fallthru
        _
      // Predicated region
      $region17: #{projected_residual_block_forward.4} parent=11 // pred_check
        %p171 = pneg %p80
      $region18: #{projected_residual_block_forward.4} parent=11 // pred_check_branch
        %173 = sbr.rel (%p171) target = $region20
      $region19: #{projected_residual_block_forward.4} parent=11 // pred_region
        _
      $region20: #{projected_residual_block_forward.4} parent=11 // pred_fallthru
        _
      // Predicated region
      $region21: #{projected_residual_block_forward.4} parent=11 // pred_check
        %p174 = pneg %p101
      $region22: #{projected_residual_block_forward.4} parent=11 // pred_check_branch
        %176 = sbr.rel (%p174) target = $region24
      $region23: #{projected_residual_block_forward.4} parent=11 // pred_region
        _
      $region24: #{projected_residual_block_forward.4} parent=11 // pred_fallthru
        _
    $region12: #{projected_residual_block_forward.4} parent=5 // pred_fallthru
      _
    %p177 = scmp.lt.s32.totalorder %s12, 2
    // Predicated region
    $region25: #{projected_residual_block_forward.4} parent=5 // pred_check
      %p178 = pneg %p177
    $region26: #{projected_residual_block_forward.4} parent=5 // pred_check_branch
      %180 = sbr.rel (%p178) target = $region28
    $region27: #{projected_residual_block_forward.4} parent=5 // pred_region
      // Predicated region
      $region29: #{projected_residual_block_forward.4} parent=27 // pred_check
        %p181 = pneg %p32
      $region30: #{projected_residual_block_forward.4} parent=27 // pred_check_branch
        %183 = sbr.rel (%p181) target = $region32
      $region31: #{projected_residual_block_forward.4} parent=27 // pred_region
        %p184 = scmp.lt.s32.totalorder %s12, 1
        %s185 = scalar_select %p184, %s12, 1
        %s186 = smul.addr %s185, 32
        %s187 = smul.addr %s186, 8
        %s188 = scalar_lea.vmem %s0, %s187
      $region32: #{projected_residual_block_forward.4} parent=27 // pred_fallthru
        _
    $region28: #{projected_residual_block_forward.4} parent=5 // pred_fallthru
      _
    %p189 = scmp.le.s32.totalorder 1, %s12
    %p190 = scmp.lt.s32.totalorder %s12, 3
    %p191 = pnand %p189, %p190
    %p192 = pneg %p191
    // Predicated region
    $region33: #{projected_residual_block_forward.4} parent=5 // pred_check
      _
    $region34: #{projected_residual_block_forward.4} parent=5 // pred_check_branch
      %194 = sbr.rel (%p191) target = $region36
    $region35: #{projected_residual_block_forward.4} parent=5 // pred_region
      %s195 = ssub.s32 %s12, 1
      %p196 = scmp.lt.s32.totalorder %s17, 1
      %s197 = scalar_select %p196, %s17, 1
      %s198 = smul.addr %s197, 32
      %s199 = smul.addr %s198, 8
      %s200 = scalar_lea.vmem %s0, %s199
      %p201 = pneg %p38
      %p202 = pneg %p35
      %p203 = pneg %p59
      %p204 = pneg %p56
      %p205 = pneg %p80
      %p206 = pneg %p77
      %p207 = pneg %p101
      %p208 = pneg %p98
      %p209 = pneg %p127
      %p210 = pneg %p124
      %p211 = scmp.lt.s32.totalorder %s17, 1
      %s212 = scalar_select %p211, %s17, 1
      %s213 = smul.addr %s212, 32
      %s214 = smul.addr %s213, 8
      %s215 = scalar_lea.vmem %s4, %s214
      %p216 = pneg %p153
      %p217 = pneg %p150
      %p218 = scmp.lt.s32.totalorder %s17, 1
      %s219 = scalar_select %p218, %s17, 1
      %s220 = smul.addr %s219, 2
      %s221 = scalar_lea.vmem %s5, %s220
      %p222 = scmp.lt.s32.totalorder %s17, 1
      %s223 = scalar_select %p222, %s17, 1
      %s224 = smul.addr %s223, 32
      %s225 = smul.addr %s224, 8
      %s226 = scalar_lea.vmem %s0, %s225
      %p227 = scmp.lt.s32.totalorder %s17, 1
      %s228 = scalar_select %p227, %s17, 1
      %s229 = smul.addr %s228, 32
      %s230 = smul.addr %s229, 8
      %s231 = scalar_lea.vmem %s4, %s230
      %p232 = scmp.lt.s32.totalorder %s17, 1
      %s233 = scalar_select %p232, %s17, 1
      %s234 = smul.addr %s233, 2
      %s235 = scalar_lea.vmem %s5, %s234
      %v237 = vld [vmem:[%s226] sm:$0xff]
      %v238 = vld [vmem:[%s226 + $0x8] sm:$0xff]
      %v239 = vld [vmem:[%s226 + $0x10] sm:$0xff]
      %v240 = vld [vmem:[%s226 + $0x18] sm:$0xff]
      %v241 = vld [vmem:[%s226 + $0x20] sm:$0xff]
      %v242 = vld [vmem:[%s226 + $0x28] sm:$0xff]
      %v243 = vld [vmem:[%s226 + $0x30] sm:$0xff]
      %v244 = vld [vmem:[%s226 + $0x38] sm:$0xff]
      %v245 = vld [vmem:[%s226 + $0x40] sm:$0xff]
      %v246 = vld [vmem:[%s226 + $0x48] sm:$0xff]
      %v247 = vld [vmem:[%s226 + $0x50] sm:$0xff]
      %v248 = vld [vmem:[%s226 + $0x58] sm:$0xff]
      %v249 = vld [vmem:[%s226 + $0x60] sm:$0xff]
      %v250 = vld [vmem:[%s226 + $0x68] sm:$0xff]
      %v251 = vld [vmem:[%s226 + $0x70] sm:$0xff]
      %v252 = vld [vmem:[%s226 + $0x78] sm:$0xff]
      %v253 = vld [vmem:[%s226 + $0x80] sm:$0xff]
      %v254 = vld [vmem:[%s226 + $0x88] sm:$0xff]
      %v255 = vld [vmem:[%s226 + $0x90] sm:$0xff]
      %v256 = vld [vmem:[%s226 + $0x98] sm:$0xff]
      %v257 = vld [vmem:[%s226 + $0xa0] sm:$0xff]
      %v258 = vld [vmem:[%s226 + $0xa8] sm:$0xff]
      %v259 = vld [vmem:[%s226 + $0xb0] sm:$0xff]
      %v260 = vld [vmem:[%s226 + $0xb8] sm:$0xff]
      %v261 = vld [vmem:[%s226 + $0xc0] sm:$0xff]
      %v262 = vld [vmem:[%s226 + $0xc8] sm:$0xff]
      %v263 = vld [vmem:[%s226 + $0xd0] sm:$0xff]
      %v264 = vld [vmem:[%s226 + $0xd8] sm:$0xff]
      %v265 = vld [vmem:[%s226 + $0xe0] sm:$0xff]
      %v266 = vld [vmem:[%s226 + $0xe8] sm:$0xff]
      %v267 = vld [vmem:[%s226 + $0xf0] sm:$0xff]
      %v268 = vld [vmem:[%s226 + $0xf8] sm:$0xff]
      %v269 = vld [vmem:[%s1] sm:$0x1]
      %v271 = vlaneseq
      %v272 = vshrl.u32 %v271, 7
      %v273 = vsub.s32 0, %v272
      %v274 = vrot.slane %v269, %v273
      %v276 = vmul.f32 %v237, %v274
      %v277 = vmul.f32 %v238, %v274
      %v278 = vmul.f32 %v239, %v274
      %v279 = vmul.f32 %v240, %v274
      %v280 = vmul.f32 %v241, %v274
      %v281 = vmul.f32 %v242, %v274
      %v282 = vmul.f32 %v243, %v274
      %v283 = vmul.f32 %v244, %v274
      %v284 = vmul.f32 %v245, %v274
      %v285 = vmul.f32 %v246, %v274
      %v286 = vmul.f32 %v247, %v274
      %v287 = vmul.f32 %v248, %v274
      %v288 = vmul.f32 %v249, %v274
      %v289 = vmul.f32 %v250, %v274
      %v290 = vmul.f32 %v251, %v274
      %v291 = vmul.f32 %v252, %v274
      %v292 = vmul.f32 %v253, %v274
      %v293 = vmul.f32 %v254, %v274
      %v294 = vmul.f32 %v255, %v274
      %v295 = vmul.f32 %v256, %v274
      %v296 = vmul.f32 %v257, %v274
      %v297 = vmul.f32 %v258, %v274
      %v298 = vmul.f32 %v259, %v274
      %v299 = vmul.f32 %v260, %v274
      %v300 = vmul.f32 %v261, %v274
      %v301 = vmul.f32 %v262, %v274
      %v302 = vmul.f32 %v263, %v274
      %v303 = vmul.f32 %v264, %v274
      %v304 = vmul.f32 %v265, %v274
      %v305 = vmul.f32 %v266, %v274
      %v306 = vmul.f32 %v267, %v274
      %v307 = vmul.f32 %v268, %v274
      %v308 = vld [vmem:[%s2] sm:$0x1]
      %v310 = vlaneseq
      %v311 = vshrl.u32 %v310, 7
      %v312 = vsub.s32 0, %v311
      %v313 = vrot.slane %v308, %v312
      %v315 = vadd.f32 %v276, %v313
      %v316 = vadd.f32 %v277, %v313
      %v317 = vadd.f32 %v278, %v313
      %v318 = vadd.f32 %v279, %v313
      %v319 = vadd.f32 %v280, %v313
      %v320 = vadd.f32 %v281, %v313
      %v321 = vadd.f32 %v282, %v313
      %v322 = vadd.f32 %v283, %v313
      %v323 = vadd.f32 %v284, %v313
      %v324 = vadd.f32 %v285, %v313
      %v325 = vadd.f32 %v286, %v313
      %v326 = vadd.f32 %v287, %v313
      %v327 = vadd.f32 %v288, %v313
      %v328 = vadd.f32 %v289, %v313
      %v329 = vadd.f32 %v290, %v313
      %v330 = vadd.f32 %v291, %v313
      %v331 = vadd.f32 %v292, %v313
      %v332 = vadd.f32 %v293, %v313
      %v333 = vadd.f32 %v294, %v313
      %v334 = vadd.f32 %v295, %v313
      %v335 = vadd.f32 %v296, %v313
      %v336 = vadd.f32 %v297, %v313
      %v337 = vadd.f32 %v298, %v313
      %v338 = vadd.f32 %v299, %v313
      %v339 = vadd.f32 %v300, %v313
      %v340 = vadd.f32 %v301, %v313
      %v341 = vadd.f32 %v302, %v313
      %v342 = vadd.f32 %v303, %v313
      %v343 = vadd.f32 %v304, %v313
      %v344 = vadd.f32 %v305, %v313
      %v345 = vadd.f32 %v306, %v313
      %v346 = vadd.f32 %v307, %v313
      %v347 = vmax.f32 %v315, 0.0
      %v348 = vmax.f32 %v316, 0.0
      %v349 = vmax.f32 %v317, 0.0
      %v350 = vmax.f32 %v318, 0.0
      %v351 = vmax.f32 %v319, 0.0
      %v352 = vmax.f32 %v320, 0.0
      %v353 = vmax.f32 %v321, 0.0
      %v354 = vmax.f32 %v322, 0.0
      %v355 = vmax.f32 %v323, 0.0
      %v356 = vmax.f32 %v324, 0.0
      %v357 = vmax.f32 %v325, 0.0
      %v358 = vmax.f32 %v326, 0.0
      %v359 = vmax.f32 %v327, 0.0
      %v360 = vmax.f32 %v328, 0.0
      %v361 = vmax.f32 %v329, 0.0
      %v362 = vmax.f32 %v330, 0.0
      %v363 = vmax.f32 %v331, 0.0
      %v364 = vmax.f32 %v332, 0.0
      %v365 = vmax.f32 %v333, 0.0
      %v366 = vmax.f32 %v334, 0.0
      %v367 = vmax.f32 %v335, 0.0
      %v368 = vmax.f32 %v336, 0.0
      %v369 = vmax.f32 %v337, 0.0
      %v370 = vmax.f32 %v338, 0.0
      %v371 = vmax.f32 %v339, 0.0
      %v372 = vmax.f32 %v340, 0.0
      %v373 = vmax.f32 %v341, 0.0
      %v374 = vmax.f32 %v342, 0.0
      %v375 = vmax.f32 %v343, 0.0
      %v376 = vmax.f32 %v344, 0.0
      %v377 = vmax.f32 %v345, 0.0
      %v378 = vmax.f32 %v346, 0.0
      %379 = vst [vmem:[#allocation2] sm:$0xff] 0
      %380 = vst [vmem:[#allocation2 + $0x8] sm:$0xff] 0
      %381 = vst [vmem:[#allocation2 + $0x10] sm:$0xff] 0
      %382 = vst [vmem:[#allocation2 + $0x198] sm:$0xff] 0
      %383 = vst [vmem:[#allocation2 + $0x1a0] sm:$0xff] 0
      %384 = vst [vmem:[#allocation2 + $0x1a8] sm:$0xff] 0
      %v385 = vlaneseq
      %v386 = vshrl.u32 %v385, 7
      %v387 = vadd.s32 %v386, 8
      %v388 = vadd.s32 %v386, 16
      %v389 = vadd.s32 %v386, 24
      %v390 = vadd.s32 %v386, 32
      %v391 = vadd.s32 %v386, 40
      %v392 = vadd.s32 %v386, 48
      %v393 = vadd.s32 %v386, 56
      %v394 = vadd.s32 %v386, 64
      %v395 = vadd.s32 %v386, 72
      %v396 = vadd.s32 %v386, 80
      %v397 = vadd.s32 %v386, 88
      %v398 = vadd.s32 %v386, 96
      %v399 = vadd.s32 %v386, 104
      %v400 = vadd.s32 %v386, 112
      %v401 = vadd.s32 %v386, 120
      %v402 = vadd.s32 %v386, 128
      %v403 = vadd.s32 %v386, 136
      %v404 = vadd.s32 %v386, 144
      %v405 = vadd.s32 %v386, 152
      %v406 = vadd.s32 %v386, 160
      %v407 = vadd.s32 %v386, 168
      %v408 = vadd.s32 %v386, 176
      %v409 = vadd.s32 %v386, 184
      %v410 = vadd.s32 %v386, 192
      %v411 = vadd.s32 %v386, 200
      %v412 = vadd.s32 %v386, 208
      %v413 = vadd.s32 %v386, 216
      %v414 = vadd.s32 %v386, 224
      %v415 = vadd.s32 %v386, 232
      %v416 = vadd.s32 %v386, 240
      %v417 = vadd.s32 %v386, 248
      %v418 = vand.u32 %v386, 15
      %v419 = vand.u32 %v387, 15
      %v420 = vand.u32 %v388, 15
      %v421 = vand.u32 %v389, 15
      %v422 = vand.u32 %v390, 15
      %v423 = vand.u32 %v391, 15
      %v424 = vand.u32 %v392, 15
      %v425 = vand.u32 %v393, 15
      %v426 = vand.u32 %v394, 15
      %v427 = vand.u32 %v395, 15
      %v428 = vand.u32 %v396, 15
      %v429 = vand.u32 %v397, 15
      %v430 = vand.u32 %v398, 15
      %v431 = vand.u32 %v399, 15
      %v432 = vand.u32 %v400, 15
      %v433 = vand.u32 %v401, 15
      %v434 = vand.u32 %v402, 15
      %v435 = vand.u32 %v403, 15
      %v436 = vand.u32 %v404, 15
      %v437 = vand.u32 %v405, 15
      %v438 = vand.u32 %v406, 15
      %v439 = vand.u32 %v407, 15
      %v440 = vand.u32 %v408, 15
      %v441 = vand.u32 %v409, 15
      %v442 = vand.u32 %v410, 15
      %v443 = vand.u32 %v411, 15
      %v444 = vand.u32 %v412, 15
      %v445 = vand.u32 %v413, 15
      %v446 = vand.u32 %v414, 15
      %v447 = vand.u32 %v415, 15
      %v448 = vand.u32 %v416, 15
      %v449 = vand.u32 %v417, 15
      %vm450 = vcmp.eq.s32.totalorder %v418, 0
      %vm451 = vcmp.eq.s32.totalorder %v419, 0
      %vm452 = vcmp.eq.s32.totalorder %v420, 0
      %vm453 = vcmp.eq.s32.totalorder %v421, 0
      %vm454 = vcmp.eq.s32.totalorder %v422, 0
      %vm455 = vcmp.eq.s32.totalorder %v423, 0
      %vm456 = vcmp.eq.s32.totalorder %v424, 0
      %vm457 = vcmp.eq.s32.totalorder %v425, 0
      %vm458 = vcmp.eq.s32.totalorder %v426, 0
      %vm459 = vcmp.eq.s32.totalorder %v427, 0
      %vm460 = vcmp.eq.s32.totalorder %v428, 0
      %vm461 = vcmp.eq.s32.totalorder %v429, 0
      %vm462 = vcmp.eq.s32.totalorder %v430, 0
      %vm463 = vcmp.eq.s32.totalorder %v431, 0
      %vm464 = vcmp.eq.s32.totalorder %v432, 0
      %vm465 = vcmp.eq.s32.totalorder %v433, 0
      %vm466 = vcmp.eq.s32.totalorder %v434, 0
      %vm467 = vcmp.eq.s32.totalorder %v435, 0
      %vm468 = vcmp.eq.s32.totalorder %v436, 0
      %vm469 = vcmp.eq.s32.totalorder %v437, 0
      %vm470 = vcmp.eq.s32.totalorder %v438, 0
      %vm471 = vcmp.eq.s32.totalorder %v439, 0
      %vm472 = vcmp.eq.s32.totalorder %v440, 0
      %vm473 = vcmp.eq.s32.totalorder %v441, 0
      %vm474 = vcmp.eq.s32.totalorder %v442, 0
      %vm475 = vcmp.eq.s32.totalorder %v443, 0
      %vm476 = vcmp.eq.s32.totalorder %v444, 0
      %vm477 = vcmp.eq.s32.totalorder %v445, 0
      %vm478 = vcmp.eq.s32.totalorder %v446, 0
      %vm479 = vcmp.eq.s32.totalorder %v447, 0
      %vm480 = vcmp.eq.s32.totalorder %v448, 0
      %vm481 = vcmp.eq.s32.totalorder %v449, 0
      %v482 = vrot.slane %v347, 7
      %v483 = vrot.slane %v348, 7
      %v484 = vrot.slane %v349, 7
      %v485 = vrot.slane %v350, 7
      %v486 = vrot.slane %v351, 7
      %v487 = vrot.slane %v352, 7
      %v488 = vrot.slane %v353, 7
      %v489 = vrot.slane %v354, 7
      %v490 = vrot.slane %v355, 7
      %v491 = vrot.slane %v356, 7
      %v492 = vrot.slane %v357, 7
      %v493 = vrot.slane %v358, 7
      %v494 = vrot.slane %v359, 7
      %v495 = vrot.slane %v360, 7
      %v496 = vrot.slane %v361, 7
      %v497 = vrot.slane %v362, 7
      %v498 = vrot.slane %v363, 7
      %v499 = vrot.slane %v364, 7
      %v500 = vrot.slane %v365, 7
      %v501 = vrot.slane %v366, 7
      %v502 = vrot.slane %v367, 7
      %v503 = vrot.slane %v368, 7
      %v504 = vrot.slane %v369, 7
      %v505 = vrot.slane %v370, 7
      %v506 = vrot.slane %v371, 7
      %v507 = vrot.slane %v372, 7
      %v508 = vrot.slane %v373, 7
      %v509 = vrot.slane %v374, 7
      %v510 = vrot.slane %v375, 7
      %v511 = vrot.slane %v376, 7
      %v512 = vrot.slane %v377, 7
      %v513 = vrot.slane %v378, 7
      %vm514 = vcmp.lt.s32.totalorder %v386, 1
      %v515 = vsel %vm514, %v512, %v513
      %v516 = vsel %vm514, %v511, %v512
      %v517 = vsel %vm514, %v510, %v511
      %v518 = vsel %vm514, %v509, %v510
      %v519 = vsel %vm514, %v508, %v509
      %v520 = vsel %vm514, %v507, %v508
      %v521 = vsel %vm514, %v506, %v507
      %v522 = vsel %vm514, %v505, %v506
      %v523 = vsel %vm514, %v504, %v505
      %v524 = vsel %vm514, %v503, %v504
      %v525 = vsel %vm514, %v502, %v503
      %v526 = vsel %vm514, %v501, %v502
      %v527 = vsel %vm514, %v500, %v501
      %v528 = vsel %vm514, %v499, %v500
      %v529 = vsel %vm514, %v498, %v499
      %v530 = vsel %vm514, %v497, %v498
      %v531 = vsel %vm514, %v496, %v497
      %v532 = vsel %vm514, %v495, %v496
      %v533 = vsel %vm514, %v494, %v495
      %v534 = vsel %vm514, %v493, %v494
      %v535 = vsel %vm514, %v492, %v493
      %v536 = vsel %vm514, %v491, %v492
      %v537 = vsel %vm514, %v490, %v491
      %v538 = vsel %vm514, %v489, %v490
      %v539 = vsel %vm514, %v488, %v489
      %v540 = vsel %vm514, %v487, %v488
      %v541 = vsel %vm514, %v486, %v487
      %v542 = vsel %vm514, %v485, %v486
      %v543 = vsel %vm514, %v484, %v485
      %v544 = vsel %vm514, %v483, %v484
      %v545 = vsel %vm514, %v482, %v483
      %v546 = vsel %vm514, %v513, %v482
      %v547 = vsel %vm450, 1, 0
      %v548 = vsel %vm451, 1, 0
      %v549 = vsel %vm452, 1, 0
      %v550 = vsel %vm453, 1, 0
      %v551 = vsel %vm454, 1, 0
      %v552 = vsel %vm455, 1, 0
      %v553 = vsel %vm456, 1, 0
      %v554 = vsel %vm457, 1, 0
      %v555 = vsel %vm458, 1, 0
      %v556 = vsel %vm459, 1, 0
      %v557 = vsel %vm460, 1, 0
      %v558 = vsel %vm461, 1, 0
      %v559 = vsel %vm462, 1, 0
      %v560 = vsel %vm463, 1, 0
      %v561 = vsel %vm464, 1, 0
      %v562 = vsel %vm465, 1, 0
      %v563 = vsel %vm466, 1, 0
      %v564 = vsel %vm467, 1, 0
      %v565 = vsel %vm468, 1, 0
      %v566 = vsel %vm469, 1, 0
      %v567 = vsel %vm470, 1, 0
      %v568 = vsel %vm471, 1, 0
      %v569 = vsel %vm472, 1, 0
      %v570 = vsel %vm473, 1, 0
      %v571 = vsel %vm474, 1, 0
      %v572 = vsel %vm475, 1, 0
      %v573 = vsel %vm476, 1, 0
      %v574 = vsel %vm477, 1, 0
      %v575 = vsel %vm478, 1, 0
      %v576 = vsel %vm479, 1, 0
      %v577 = vsel %vm480, 1, 0
      %v578 = vsel %vm481, 1, 0
      %vm579 = vcmp.eq.s32.totalorder %v547, 1
      %vm580 = vcmp.eq.s32.totalorder %v548, 1
      %vm581 = vcmp.eq.s32.totalorder %v549, 1
      %vm582 = vcmp.eq.s32.totalorder %v550, 1
      %vm583 = vcmp.eq.s32.totalorder %v551, 1
      %vm584 = vcmp.eq.s32.totalorder %v552, 1
      %vm585 = vcmp.eq.s32.totalorder %v553, 1
      %vm586 = vcmp.eq.s32.totalorder %v554, 1
      %vm587 = vcmp.eq.s32.totalorder %v555, 1
      %vm588 = vcmp.eq.s32.totalorder %v556, 1
      %vm589 = vcmp.eq.s32.totalorder %v557, 1
      %vm590 = vcmp.eq.s32.totalorder %v558, 1
      %vm591 = vcmp.eq.s32.totalorder %v559, 1
      %vm592 = vcmp.eq.s32.totalorder %v560, 1
      %vm593 = vcmp.eq.s32.totalorder %v561, 1
      %vm594 = vcmp.eq.s32.totalorder %v562, 1
      %vm595 = vcmp.eq.s32.totalorder %v563, 1
      %vm596 = vcmp.eq.s32.totalorder %v564, 1
      %vm597 = vcmp.eq.s32.totalorder %v565, 1
      %vm598 = vcmp.eq.s32.totalorder %v566, 1
      %vm599 = vcmp.eq.s32.totalorder %v567, 1
      %vm600 = vcmp.eq.s32.totalorder %v568, 1
      %vm601 = vcmp.eq.s32.totalorder %v569, 1
      %vm602 = vcmp.eq.s32.totalorder %v570, 1
      %vm603 = vcmp.eq.s32.totalorder %v571, 1
      %vm604 = vcmp.eq.s32.totalorder %v572, 1
      %vm605 = vcmp.eq.s32.totalorder %v573, 1
      %vm606 = vcmp.eq.s32.totalorder %v574, 1
      %vm607 = vcmp.eq.s32.totalorder %v575, 1
      %vm608 = vcmp.eq.s32.totalorder %v576, 1
      %vm609 = vcmp.eq.s32.totalorder %v577, 1
      %vm610 = vcmp.eq.s32.totalorder %v578, 1
      %v611 = vsel %vm579, 0.0, %v546
      %v612 = vsel %vm580, 0.0, %v545
      %v613 = vsel %vm581, 0.0, %v544
      %v614 = vsel %vm582, 0.0, %v543
      %v615 = vsel %vm583, 0.0, %v542
      %v616 = vsel %vm584, 0.0, %v541
      %v617 = vsel %vm585, 0.0, %v540
      %v618 = vsel %vm586, 0.0, %v539
      %v619 = vsel %vm587, 0.0, %v538
      %v620 = vsel %vm588, 0.0, %v537
      %v621 = vsel %vm589, 0.0, %v536
      %v622 = vsel %vm590, 0.0, %v535
      %v623 = vsel %vm591, 0.0, %v534
      %v624 = vsel %vm592, 0.0, %v533
      %v625 = vsel %vm593, 0.0, %v532
      %v626 = vsel %vm594, 0.0, %v531
      %v627 = vsel %vm595, 0.0, %v530
      %v628 = vsel %vm596, 0.0, %v529
      %v629 = vsel %vm597, 0.0, %v528
      %v630 = vsel %vm598, 0.0, %v527
      %v631 = vsel %vm599, 0.0, %v526
      %v632 = vsel %vm600, 0.0, %v525
      %v633 = vsel %vm601, 0.0, %v524
      %v634 = vsel %vm602, 0.0, %v523
      %v635 = vsel %vm603, 0.0, %v522
      %v636 = vsel %vm604, 0.0, %v521
      %v637 = vsel %vm605, 0.0, %v520
      %v638 = vsel %vm606, 0.0, %v519
      %v639 = vsel %vm607, 0.0, %v518
      %v640 = vsel %vm608, 0.0, %v517
      %v641 = vsel %vm609, 0.0, %v516
      %v642 = vsel %vm610, 0.0, %v515
      %vm643 = vcmp.eq.s32.totalorder %v418, 15
      %vm644 = vcmp.eq.s32.totalorder %v419, 15
      %vm645 = vcmp.eq.s32.totalorder %v420, 15
      %vm646 = vcmp.eq.s32.totalorder %v421, 15
      %vm647 = vcmp.eq.s32.totalorder %v422, 15
      %vm648 = vcmp.eq.s32.totalorder %v423, 15
      %vm649 = vcmp.eq.s32.totalorder %v424, 15
      %vm650 = vcmp.eq.s32.totalorder %v425, 15
      %vm651 = vcmp.eq.s32.totalorder %v426, 15
      %vm652 = vcmp.eq.s32.totalorder %v427, 15
      %vm653 = vcmp.eq.s32.totalorder %v428, 15
      %vm654 = vcmp.eq.s32.totalorder %v429, 15
      %vm655 = vcmp.eq.s32.totalorder %v430, 15
      %vm656 = vcmp.eq.s32.totalorder %v431, 15
      %vm657 = vcmp.eq.s32.totalorder %v432, 15
      %vm658 = vcmp.eq.s32.totalorder %v433, 15
      %vm659 = vcmp.eq.s32.totalorder %v434, 15
      %vm660 = vcmp.eq.s32.totalorder %v435, 15
      %vm661 = vcmp.eq.s32.totalorder %v436, 15
      %vm662 = vcmp.eq.s32.totalorder %v437, 15
      %vm663 = vcmp.eq.s32.totalorder %v438, 15
      %vm664 = vcmp.eq.s32.totalorder %v439, 15
      %vm665 = vcmp.eq.s32.totalorder %v440, 15
      %vm666 = vcmp.eq.s32.totalorder %v441, 15
      %vm667 = vcmp.eq.s32.totalorder %v442, 15
      %vm668 = vcmp.eq.s32.totalorder %v443, 15
      %vm669 = vcmp.eq.s32.totalorder %v444, 15
      %vm670 = vcmp.eq.s32.totalorder %v445, 15
      %vm671 = vcmp.eq.s32.totalorder %v446, 15
      %vm672 = vcmp.eq.s32.totalorder %v447, 15
      %vm673 = vcmp.eq.s32.totalorder %v448, 15
      %vm674 = vcmp.eq.s32.totalorder %v449, 15
      %v675 = vrot.slane %v347, 1
      %v676 = vrot.slane %v348, 1
      %v677 = vrot.slane %v349, 1
      %v678 = vrot.slane %v350, 1
      %v679 = vrot.slane %v351, 1
      %v680 = vrot.slane %v352, 1
      %v681 = vrot.slane %v353, 1
      %v682 = vrot.slane %v354, 1
      %v683 = vrot.slane %v355, 1
      %v684 = vrot.slane %v356, 1
      %v685 = vrot.slane %v357, 1
      %v686 = vrot.slane %v358, 1
      %v687 = vrot.slane %v359, 1
      %v688 = vrot.slane %v360, 1
      %v689 = vrot.slane %v361, 1
      %v690 = vrot.slane %v362, 1
      %v691 = vrot.slane %v363, 1
      %v692 = vrot.slane %v364, 1
      %v693 = vrot.slane %v365, 1
      %v694 = vrot.slane %v366, 1
      %v695 = vrot.slane %v367, 1
      %v696 = vrot.slane %v368, 1
      %v697 = vrot.slane %v369, 1
      %v698 = vrot.slane %v370, 1
      %v699 = vrot.slane %v371, 1
      %v700 = vrot.slane %v372, 1
      %v701 = vrot.slane %v373, 1
      %v702 = vrot.slane %v374, 1
      %v703 = vrot.slane %v375, 1
      %v704 = vrot.slane %v376, 1
      %v705 = vrot.slane %v377, 1
      %v706 = vrot.slane %v378, 1
      %vm707 = vcmp.lt.s32.totalorder %v386, 7
      %v708 = vsel %vm707, %v705, %v706
      %v709 = vsel %vm707, %v704, %v705
      %v710 = vsel %vm707, %v703, %v704
      %v711 = vsel %vm707, %v702, %v703
      %v712 = vsel %vm707, %v701, %v702
      %v713 = vsel %vm707, %v700, %v701
      %v714 = vsel %vm707, %v699, %v700
      %v715 = vsel %vm707, %v698, %v699
      %v716 = vsel %vm707, %v697, %v698
      %v717 = vsel %vm707, %v696, %v697
      %v718 = vsel %vm707, %v695, %v696
      %v719 = vsel %vm707, %v694, %v695
      %v720 = vsel %vm707, %v693, %v694
      %v721 = vsel %vm707, %v692, %v693
      %v722 = vsel %vm707, %v691, %v692
      %v723 = vsel %vm707, %v690, %v691
      %v724 = vsel %vm707, %v689, %v690
      %v725 = vsel %vm707, %v688, %v689
      %v726 = vsel %vm707, %v687, %v688
      %v727 = vsel %vm707, %v686, %v687
      %v728 = vsel %vm707, %v685, %v686
      %v729 = vsel %vm707, %v684, %v685
      %v730 = vsel %vm707, %v683, %v684
      %v731 = vsel %vm707, %v682, %v683
      %v732 = vsel %vm707, %v681, %v682
      %v733 = vsel %vm707, %v680, %v681
      %v734 = vsel %vm707, %v679, %v680
      %v735 = vsel %vm707, %v678, %v679
      %v736 = vsel %vm707, %v677, %v678
      %v737 = vsel %vm707, %v676, %v677
      %v738 = vsel %vm707, %v675, %v676
      %v739 = vsel %vm707, %v706, %v675
      %v740 = vsel %vm643, 1, 0
      %v741 = vsel %vm644, 1, 0
      %v742 = vsel %vm645, 1, 0
      %v743 = vsel %vm646, 1, 0
      %v744 = vsel %vm647, 1, 0
      %v745 = vsel %vm648, 1, 0
      %v746 = vsel %vm649, 1, 0
      %v747 = vsel %vm650, 1, 0
      %v748 = vsel %vm651, 1, 0
      %v749 = vsel %vm652, 1, 0
      %v750 = vsel %vm653, 1, 0
      %v751 = vsel %vm654, 1, 0
      %v752 = vsel %vm655, 1, 0
      %v753 = vsel %vm656, 1, 0
      %v754 = vsel %vm657, 1, 0
      %v755 = vsel %vm658, 1, 0
      %v756 = vsel %vm659, 1, 0
      %v757 = vsel %vm660, 1, 0
      %v758 = vsel %vm661, 1, 0
      %v759 = vsel %vm662, 1, 0
      %v760 = vsel %vm663, 1, 0
      %v761 = vsel %vm664, 1, 0
      %v762 = vsel %vm665, 1, 0
      %v763 = vsel %vm666, 1, 0
      %v764 = vsel %vm667, 1, 0
      %v765 = vsel %vm668, 1, 0
      %v766 = vsel %vm669, 1, 0
      %v767 = vsel %vm670, 1, 0
      %v768 = vsel %vm671, 1, 0
      %v769 = vsel %vm672, 1, 0
      %v770 = vsel %vm673, 1, 0
      %v771 = vsel %vm674, 1, 0
      %vm772 = vcmp.eq.s32.totalorder %v740, 1
      %vm773 = vcmp.eq.s32.totalorder %v741, 1
      %vm774 = vcmp.eq.s32.totalorder %v742, 1
      %vm775 = vcmp.eq.s32.totalorder %v743, 1
      %vm776 = vcmp.eq.s32.totalorder %v744, 1
      %vm777 = vcmp.eq.s32.totalorder %v745, 1
      %vm778 = vcmp.eq.s32.totalorder %v746, 1
      %vm779 = vcmp.eq.s32.totalorder %v747, 1
      %vm780 = vcmp.eq.s32.totalorder %v748, 1
      %vm781 = vcmp.eq.s32.totalorder %v749, 1
      %vm782 = vcmp.eq.s32.totalorder %v750, 1
      %vm783 = vcmp.eq.s32.totalorder %v751, 1
      %vm784 = vcmp.eq.s32.totalorder %v752, 1
      %vm785 = vcmp.eq.s32.totalorder %v753, 1
      %vm786 = vcmp.eq.s32.totalorder %v754, 1
      %vm787 = vcmp.eq.s32.totalorder %v755, 1
      %vm788 = vcmp.eq.s32.totalorder %v756, 1
      %vm789 = vcmp.eq.s32.totalorder %v757, 1
      %vm790 = vcmp.eq.s32.totalorder %v758, 1
      %vm791 = vcmp.eq.s32.totalorder %v759, 1
      %vm792 = vcmp.eq.s32.totalorder %v760, 1
      %vm793 = vcmp.eq.s32.totalorder %v761, 1
      %vm794 = vcmp.eq.s32.totalorder %v762, 1
      %vm795 = vcmp.eq.s32.totalorder %v763, 1
      %vm796 = vcmp.eq.s32.totalorder %v764, 1
      %vm797 = vcmp.eq.s32.totalorder %v765, 1
      %vm798 = vcmp.eq.s32.totalorder %v766, 1
      %vm799 = vcmp.eq.s32.totalorder %v767, 1
      %vm800 = vcmp.eq.s32.totalorder %v768, 1
      %vm801 = vcmp.eq.s32.totalorder %v769, 1
      %vm802 = vcmp.eq.s32.totalorder %v770, 1
      %vm803 = vcmp.eq.s32.totalorder %v771, 1
      %v804 = vsel %vm772, 0.0, %v738
      %v805 = vsel %vm773, 0.0, %v737
      %v806 = vsel %vm774, 0.0, %v736
      %v807 = vsel %vm775, 0.0, %v735
      %v808 = vsel %vm776, 0.0, %v734
      %v809 = vsel %vm777, 0.0, %v733
      %v810 = vsel %vm778, 0.0, %v732
      %v811 = vsel %vm779, 0.0, %v731
      %v812 = vsel %vm780, 0.0, %v730
      %v813 = vsel %vm781, 0.0, %v729
      %v814 = vsel %vm782, 0.0, %v728
      %v815 = vsel %vm783, 0.0, %v727
      %v816 = vsel %vm784, 0.0, %v726
      %v817 = vsel %vm785, 0.0, %v725
      %v818 = vsel %vm786, 0.0, %v724
      %v819 = vsel %vm787, 0.0, %v723
      %v820 = vsel %vm788, 0.0, %v722
      %v821 = vsel %vm789, 0.0, %v721
      %v822 = vsel %vm790, 0.0, %v720
      %v823 = vsel %vm791, 0.0, %v719
      %v824 = vsel %vm792, 0.0, %v718
      %v825 = vsel %vm793, 0.0, %v717
      %v826 = vsel %vm794, 0.0, %v716
      %v827 = vsel %vm795, 0.0, %v715
      %v828 = vsel %vm796, 0.0, %v714
      %v829 = vsel %vm797, 0.0, %v713
      %v830 = vsel %vm798, 0.0, %v712
      %v831 = vsel %vm799, 0.0, %v711
      %v832 = vsel %vm800, 0.0, %v710
      %v833 = vsel %vm801, 0.0, %v709
      %v834 = vsel %vm802, 0.0, %v708
      %v835 = vsel %vm803, 0.0, %v739
      %v836 = vpack.c.bf16 %v612, %v611
      %v837 = vpack.c.bf16 %v614, %v613
      %v838 = vpack.c.bf16 %v616, %v615
      %v839 = vpack.c.bf16 %v618, %v617
      %v840 = vpack.c.bf16 %v620, %v619
      %v841 = vpack.c.bf16 %v622, %v621
      %v842 = vpack.c.bf16 %v624, %v623
      %v843 = vpack.c.bf16 %v626, %v625
      %v844 = vpack.c.bf16 %v628, %v627
      %v845 = vpack.c.bf16 %v630, %v629
      %v846 = vpack.c.bf16 %v632, %v631
      %v847 = vpack.c.bf16 %v634, %v633
      %v848 = vpack.c.bf16 %v636, %v635
      %v849 = vpack.c.bf16 %v638, %v637
      %v850 = vpack.c.bf16 %v640, %v639
      %v851 = vpack.c.bf16 %v642, %v641
      %852 = vst [vmem:[#allocation2 + $0x18] sm:$0xff] %v836
      %853 = vst [vmem:[#allocation2 + $0x30] sm:$0xff] %v837
      %854 = vst [vmem:[#allocation2 + $0x48] sm:$0xff] %v838
      %855 = vst [vmem:[#allocation2 + $0x60] sm:$0xff] %v839
      %856 = vst [vmem:[#allocation2 + $0x78] sm:$0xff] %v840
      %857 = vst [vmem:[#allocation2 + $0x90] sm:$0xff] %v841
      %858 = vst [vmem:[#allocation2 + $0xa8] sm:$0xff] %v842
      %859 = vst [vmem:[#allocation2 + $0xc0] sm:$0xff] %v843
      %860 = vst [vmem:[#allocation2 + $0xd8] sm:$0xff] %v844
      %861 = vst [vmem:[#allocation2 + $0xf0] sm:$0xff] %v845
      %862 = vst [vmem:[#allocation2 + $0x108] sm:$0xff] %v846
      %863 = vst [vmem:[#allocation2 + $0x120] sm:$0xff] %v847
      %864 = vst [vmem:[#allocation2 + $0x138] sm:$0xff] %v848
      %865 = vst [vmem:[#allocation2 + $0x150] sm:$0xff] %v849
      %866 = vst [vmem:[#allocation2 + $0x168] sm:$0xff] %v850
      %867 = vst [vmem:[#allocation2 + $0x180] sm:$0xff] %v851
      %v868 = vpack.c.bf16 %v348, %v347
      %v869 = vpack.c.bf16 %v350, %v349
      %v870 = vpack.c.bf16 %v352, %v351
      %v871 = vpack.c.bf16 %v354, %v353
      %v872 = vpack.c.bf16 %v356, %v355
      %v873 = vpack.c.bf16 %v358, %v357
      %v874 = vpack.c.bf16 %v360, %v359
      %v875 = vpack.c.bf16 %v362, %v361
      %v876 = vpack.c.bf16 %v364, %v363
      %v877 = vpack.c.bf16 %v366, %v365
      %v878 = vpack.c.bf16 %v368, %v367
      %v879 = vpack.c.bf16 %v370, %v369
      %v880 = vpack.c.bf16 %v372, %v371
      %v881 = vpack.c.bf16 %v374, %v373
      %v882 = vpack.c.bf16 %v376, %v375
      %v883 = vpack.c.bf16 %v378, %v377
      %884 = vst [vmem:[#allocation2 + $0x20] sm:$0xff] %v868
      %885 = vst [vmem:[#allocation2 + $0x38] sm:$0xff] %v869
      %886 = vst [vmem:[#allocation2 + $0x50] sm:$0xff] %v870
      %887 = vst [vmem:[#allocation2 + $0x68] sm:$0xff] %v871
      %888 = vst [vmem:[#allocation2 + $0x80] sm:$0xff] %v872
      %889 = vst [vmem:[#allocation2 + $0x98] sm:$0xff] %v873
      %890 = vst [vmem:[#allocation2 + $0xb0] sm:$0xff] %v874
      %891 = vst [vmem:[#allocation2 + $0xc8] sm:$0xff] %v875
      %892 = vst [vmem:[#allocation2 + $0xe0] sm:$0xff] %v876
      %893 = vst [vmem:[#allocation2 + $0xf8] sm:$0xff] %v877
      %894 = vst [vmem:[#allocation2 + $0x110] sm:$0xff] %v878
      %895 = vst [vmem:[#allocation2 + $0x128] sm:$0xff] %v879
      %896 = vst [vmem:[#allocation2 + $0x140] sm:$0xff] %v880
      %897 = vst [vmem:[#allocation2 + $0x158] sm:$0xff] %v881
      %898 = vst [vmem:[#allocation2 + $0x170] sm:$0xff] %v882
      %899 = vst [vmem:[#allocation2 + $0x188] sm:$0xff] %v883
      %v900 = vpack.c.bf16 %v805, %v804
      %v901 = vpack.c.bf16 %v807, %v806
      %v902 = vpack.c.bf16 %v809, %v808
      %v903 = vpack.c.bf16 %v811, %v810
      %v904 = vpack.c.bf16 %v813, %v812
      %v905 = vpack.c.bf16 %v815, %v814
      %v906 = vpack.c.bf16 %v817, %v816
      %v907 = vpack.c.bf16 %v819, %v818
      %v908 = vpack.c.bf16 %v821, %v820
      %v909 = vpack.c.bf16 %v823, %v822
      %v910 = vpack.c.bf16 %v825, %v824
      %v911 = vpack.c.bf16 %v827, %v826
      %v912 = vpack.c.bf16 %v829, %v828
      %v913 = vpack.c.bf16 %v831, %v830
      %v914 = vpack.c.bf16 %v833, %v832
      %v915 = vpack.c.bf16 %v835, %v834
      %916 = vst [vmem:[#allocation2 + $0x28] sm:$0xff] %v900
      %917 = vst [vmem:[#allocation2 + $0x40] sm:$0xff] %v901
      %918 = vst [vmem:[#allocation2 + $0x58] sm:$0xff] %v902
      %919 = vst [vmem:[#allocation2 + $0x70] sm:$0xff] %v903
      %920 = vst [vmem:[#allocation2 + $0x88] sm:$0xff] %v904
      %921 = vst [vmem:[#allocation2 + $0xa0] sm:$0xff] %v905
      %922 = vst [vmem:[#allocation2 + $0xb8] sm:$0xff] %v906
      %923 = vst [vmem:[#allocation2 + $0xd0] sm:$0xff] %v907
      %924 = vst [vmem:[#allocation2 + $0xe8] sm:$0xff] %v908
      %925 = vst [vmem:[#allocation2 + $0x100] sm:$0xff] %v909
      %926 = vst [vmem:[#allocation2 + $0x118] sm:$0xff] %v910
      %927 = vst [vmem:[#allocation2 + $0x130] sm:$0xff] %v911
      %928 = vst [vmem:[#allocation2 + $0x148] sm:$0xff] %v912
      %929 = vst [vmem:[#allocation2 + $0x160] sm:$0xff] %v913
      %930 = vst [vmem:[#allocation2 + $0x178] sm:$0xff] %v914
      %931 = vst [vmem:[#allocation2 + $0x190] sm:$0xff] %v915
      %v932 = vld [vmem:[#allocation2] sm:$0xff]
      %v933 = vld [vmem:[#allocation2 + $0x8] sm:$0xff]
      %v934 = vld [vmem:[#allocation2 + $0x10] sm:$0xff]
      %v935 = vld [vmem:[#allocation2 + $0x18] sm:$0xff]
      %v936 = vld [vmem:[#allocation2 + $0x20] sm:$0xff]
      %v937 = vld [vmem:[#allocation2 + $0x28] sm:$0xff]
      %v938 = vld [vmem:[#allocation2 + $0x30] sm:$0xff]
      %v939 = vld [vmem:[#allocation2 + $0x38] sm:$0xff]
      %v940 = vld [vmem:[#allocation2 + $0x40] sm:$0xff]
      %v941 = vld [vmem:[#allocation2 + $0x48] sm:$0xff]
      %v942 = vld [vmem:[#allocation2 + $0x50] sm:$0xff]
      %v943 = vld [vmem:[#allocation2 + $0x58] sm:$0xff]
      %v944 = vld [vmem:[#allocation2 + $0x60] sm:$0xff]
      %v945 = vld [vmem:[#allocation2 + $0x68] sm:$0xff]
      %v946 = vld [vmem:[#allocation2 + $0x70] sm:$0xff]
      %v947 = vld [vmem:[#allocation2 + $0x78] sm:$0xff]
      %v948 = vld [vmem:[#allocation2 + $0x80] sm:$0xff]
      %v949 = vld [vmem:[#allocation2 + $0x88] sm:$0xff]
      %v950 = vld [vmem:[#allocation2 + $0x90] sm:$0xff]
      %v951 = vld [vmem:[#allocation2 + $0x98] sm:$0xff]
      %v952 = vld [vmem:[#allocation2 + $0xa0] sm:$0xff]
      %v953 = vld [vmem:[#allocation2 + $0xa8] sm:$0xff]
      %v954 = vld [vmem:[#allocation2 + $0xb0] sm:$0xff]
      %v955 = vld [vmem:[#allocation2 + $0xb8] sm:$0xff]
      %v956 = vld [vmem:[%s3] sm:$0xf]
      %v957 = vld [vmem:[%s3 + $0x4] sm:$0xf]
      %v958 = vld [vmem:[%s3 + $0x8] sm:$0xf]
      %v959 = vld [vmem:[%s3 + $0xc] sm:$0xf]
      %v960 = vld [vmem:[%s3 + $0x10] sm:$0xf]
      %v961 = vld [vmem:[%s3 + $0x14] sm:$0xf]
      %v962 = vld [vmem:[%s3 + $0x18] sm:$0xf]
      %v963 = vld [vmem:[%s3 + $0x1c] sm:$0xf]
      %v964 = vld [vmem:[%s3 + $0x20] sm:$0xf]
      %v965 = vld [vmem:[%s3 + $0x24] sm:$0xf]
      %v966 = vld [vmem:[%s3 + $0x28] sm:$0xf]
      %v967 = vld [vmem:[%s3 + $0x2c] sm:$0xf]
      %v968 = vld [vmem:[%s3 + $0x30] sm:$0xf]
      %v969 = vld [vmem:[%s3 + $0x34] sm:$0xf]
      %v970 = vld [vmem:[%s3 + $0x38] sm:$0xf]
      %v971 = vld [vmem:[%s3 + $0x3c] sm:$0xf]
      %v972 = vld [vmem:[%s3 + $0x40] sm:$0xf]
      %v973 = vld [vmem:[%s3 + $0x44] sm:$0xf]
      %v974 = vld [vmem:[%s3 + $0x48] sm:$0xf]
      %v975 = vld [vmem:[%s3 + $0x4c] sm:$0xf]
      %v976 = vld [vmem:[%s3 + $0x50] sm:$0xf]
      %v977 = vld [vmem:[%s3 + $0x54] sm:$0xf]
      %v978 = vld [vmem:[%s3 + $0x58] sm:$0xf]
      %v979 = vld [vmem:[%s3 + $0x5c] sm:$0xf]
      %v980 = vld [vmem:[%s3 + $0x60] sm:$0xf]
      %v981 = vld [vmem:[%s3 + $0x64] sm:$0xf]
      %v982 = vld [vmem:[%s3 + $0x68] sm:$0xf]
      %v983 = vld [vmem:[%s3 + $0x6c] sm:$0xf]
      %v984 = vld [vmem:[%s3 + $0x70] sm:$0xf]
      %v985 = vld [vmem:[%s3 + $0x74] sm:$0xf]
      %v986 = vld [vmem:[%s3 + $0x78] sm:$0xf]
      %v987 = vld [vmem:[%s3 + $0x7c] sm:$0xf]
      %v988 = vld [vmem:[%s3 + $0x80] sm:$0xf]
      %v989 = vld [vmem:[%s3 + $0x84] sm:$0xf]
      %v990 = vld [vmem:[%s3 + $0x88] sm:$0xf]
      %v991 = vld [vmem:[%s3 + $0x8c] sm:$0xf]
      %v992 = vld [vmem:[%s3 + $0x90] sm:$0xf]
      %v993 = vld [vmem:[%s3 + $0x94] sm:$0xf]
      %v994 = vld [vmem:[%s3 + $0x98] sm:$0xf]
      %v995 = vld [vmem:[%s3 + $0x9c] sm:$0xf]
      %v996 = vld [vmem:[%s3 + $0xa0] sm:$0xf]
      %v997 = vld [vmem:[%s3 + $0xa4] sm:$0xf]
      %v998 = vld [vmem:[%s3 + $0xa8] sm:$0xf]
      %v999 = vld [vmem:[%s3 + $0xac] sm:$0xf]
      %v1000 = vld [vmem:[%s3 + $0xb0] sm:$0xf]
      %v1001 = vld [vmem:[%s3 + $0xb4] sm:$0xf]
      %v1002 = vld [vmem:[%s3 + $0xb8] sm:$0xf]
      %v1003 = vld [vmem:[%s3 + $0xbc] sm:$0xf]
      %v1004 = vld [vmem:[#allocation2 + $0xc0] sm:$0xff]
      %v1005 = vld [vmem:[#allocation2 + $0xc8] sm:$0xff]
      %v1006 = vld [vmem:[#allocation2 + $0xd0] sm:$0xff]
      %s1007 = scalar_lea.vmem %s3, 192
      %v1008 = vld [vmem:[%s1007] sm:$0xf]
      %v1009 = vld [vmem:[%s1007 + $0x4] sm:$0xf]
      %v1010 = vld [vmem:[%s1007 + $0x8] sm:$0xf]
      %v1011 = vld [vmem:[%s1007 + $0xc] sm:$0xf]
      %v1012 = vld [vmem:[%s1007 + $0x10] sm:$0xf]
      %v1013 = vld [vmem:[%s1007 + $0x14] sm:$0xf]
      %v1014 = vld [vmem:[%s1007 + $0x18] sm:$0xf]
      %v1015 = vld [vmem:[%s1007 + $0x1c] sm:$0xf]
      %v1016 = vld [vmem:[%s1007 + $0x20] sm:$0xf]
      %v1017 = vld [vmem:[%s1007 + $0x24] sm:$0xf]
      %v1018 = vld [vmem:[%s1007 + $0x28] sm:$0xf]
      %v1019 = vld [vmem:[%s1007 + $0x2c] sm:$0xf]
      %v1020 = vld [vmem:[%s1007 + $0x30] sm:$0xf]
      %v1021 = vld [vmem:[%s1007 + $0x34] sm:$0xf]
      %v1022 = vld [vmem:[%s1007 + $0x38] sm:$0xf]
      %v1023 = vld [vmem:[%s1007 + $0x3c] sm:$0xf]
      %v1024 = vld [vmem:[%s1007 + $0x40] sm:$0xf]
      %v1025 = vld [vmem:[%s1007 + $0x44] sm:$0xf]
      %v1026 = vld [vmem:[%s1007 + $0x48] sm:$0xf]
      %v1027 = vld [vmem:[%s1007 + $0x4c] sm:$0xf]
      %v1028 = vld [vmem:[%s1007 + $0x50] sm:$0xf]
      %v1029 = vld [vmem:[%s1007 + $0x54] sm:$0xf]
      %v1030 = vld [vmem:[%s1007 + $0x58] sm:$0xf]
      %v1031 = vld [vmem:[%s1007 + $0x5c] sm:$0xf]
      %v1032 = vld [vmem:[%s1007 + $0x60] sm:$0xf]
      %v1033 = vld [vmem:[%s1007 + $0x64] sm:$0xf]
      %v1034 = vld [vmem:[%s1007 + $0x68] sm:$0xf]
      %v1035 = vld [vmem:[%s1007 + $0x6c] sm:$0xf]
      %v1036 = vld [vmem:[%s1007 + $0x70] sm:$0xf]
      %v1037 = vld [vmem:[%s1007 + $0x74] sm:$0xf]
      %v1038 = vld [vmem:[%s1007 + $0x78] sm:$0xf]
      %v1039 = vld [vmem:[%s1007 + $0x7c] sm:$0xf]
      %v1040 = vld [vmem:[%s1007 + $0x80] sm:$0xf]
      %v1041 = vld [vmem:[%s1007 + $0x84] sm:$0xf]
      %v1042 = vld [vmem:[%s1007 + $0x88] sm:$0xf]
      %v1043 = vld [vmem:[%s1007 + $0x8c] sm:$0xf]
      %v1044 = vld [vmem:[%s1007 + $0x90] sm:$0xf]
      %v1045 = vld [vmem:[%s1007 + $0x94] sm:$0xf]
      %v1046 = vld [vmem:[%s1007 + $0x98] sm:$0xf]
      %v1047 = vld [vmem:[%s1007 + $0x9c] sm:$0xf]
      %v1048 = vld [vmem:[%s1007 + $0xa0] sm:$0xf]
      %v1049 = vld [vmem:[%s1007 + $0xa4] sm:$0xf]
      %v1050 = vld [vmem:[%s1007 + $0xa8] sm:$0xf]
      %v1051 = vld [vmem:[%s1007 + $0xac] sm:$0xf]
      %v1052 = vld [vmem:[%s1007 + $0xb0] sm:$0xf]
      %v1053 = vld [vmem:[%s1007 + $0xb4] sm:$0xf]
      %v1054 = vld [vmem:[%s1007 + $0xb8] sm:$0xf]
      %v1055 = vld [vmem:[%s1007 + $0xbc] sm:$0xf]
      %v1104 = vunpack.c.l.b16 %v1008
      %v1105 = vunpack.c.l.b16 %v1009
      %v1106 = vunpack.c.l.b16 %v1010
      %v1107 = vunpack.c.l.b16 %v1011
      %v1108 = vunpack.c.l.b16 %v1012
      %v1109 = vunpack.c.l.b16 %v1013
      %v1110 = vunpack.c.l.b16 %v1014
      %v1111 = vunpack.c.l.b16 %v1015
      %v1112 = vunpack.c.l.b16 %v1016
      %v1113 = vunpack.c.l.b16 %v1017
      %v1114 = vunpack.c.l.b16 %v1018
      %v1115 = vunpack.c.l.b16 %v1019
      %v1116 = vunpack.c.l.b16 %v1020
      %v1117 = vunpack.c.l.b16 %v1021
      %v1118 = vunpack.c.l.b16 %v1022
      %v1119 = vunpack.c.l.b16 %v1023
      %v1120 = vunpack.c.l.b16 %v1024
      %v1121 = vunpack.c.l.b16 %v1025
      %v1122 = vunpack.c.l.b16 %v1026
      %v1123 = vunpack.c.l.b16 %v1027
      %v1124 = vunpack.c.l.b16 %v1028
      %v1125 = vunpack.c.l.b16 %v1029
      %v1126 = vunpack.c.l.b16 %v1030
      %v1127 = vunpack.c.l.b16 %v1031
      %v1128 = vunpack.c.l.b16 %v1032
      %v1129 = vunpack.c.l.b16 %v1033
      %v1130 = vunpack.c.l.b16 %v1034
      %v1131 = vunpack.c.l.b16 %v1035
      %v1132 = vunpack.c.l.b16 %v1036
      %v1133 = vunpack.c.l.b16 %v1037
      %v1134 = vunpack.c.l.b16 %v1038
      %v1135 = vunpack.c.l.b16 %v1039
      %v1136 = vunpack.c.l.b16 %v1040
      %v1137 = vunpack.c.l.b16 %v1041
      %v1138 = vunpack.c.l.b16 %v1042
      %v1139 = vunpack.c.l.b16 %v1043
      %v1140 = vunpack.c.l.b16 %v1044
      %v1141 = vunpack.c.l.b16 %v1045
      %v1142 = vunpack.c.l.b16 %v1046
      %v1143 = vunpack.c.l.b16 %v1047
      %v1144 = vunpack.c.l.b16 %v1048
      %v1145 = vunpack.c.l.b16 %v1049
      %v1146 = vunpack.c.l.b16 %v1050
      %v1147 = vunpack.c.l.b16 %v1051
      %v1148 = vunpack.c.l.b16 %v1052
      %v1149 = vunpack.c.l.b16 %v1053
      %v1150 = vunpack.c.l.b16 %v1054
      %v1151 = vunpack.c.l.b16 %v1055
      %v1152 = vpack.c.b16 %v1105, %v1104
      %v1153 = vpack.c.b16 %v1107, %v1106
      %v1154 = vpack.c.b16 %v1109, %v1108
      %v1155 = vpack.c.b16 %v1111, %v1110
      %v1156 = vpack.c.b16 %v1113, %v1112
      %v1157 = vpack.c.b16 %v1115, %v1114
      %v1158 = vpack.c.b16 %v1117, %v1116
      %v1159 = vpack.c.b16 %v1119, %v1118
      %v1160 = vpack.c.b16 %v1121, %v1120
      %v1161 = vpack.c.b16 %v1123, %v1122
      %v1162 = vpack.c.b16 %v1125, %v1124
      %v1163 = vpack.c.b16 %v1127, %v1126
      %v1164 = vpack.c.b16 %v1129, %v1128
      %v1165 = vpack.c.b16 %v1131, %v1130
      %v1166 = vpack.c.b16 %v1133, %v1132
      %v1167 = vpack.c.b16 %v1135, %v1134
      %v1168 = vpack.c.b16 %v1137, %v1136
      %v1169 = vpack.c.b16 %v1139, %v1138
      %v1170 = vpack.c.b16 %v1141, %v1140
      %v1171 = vpack.c.b16 %v1143, %v1142
      %v1172 = vpack.c.b16 %v1145, %v1144
      %v1173 = vpack.c.b16 %v1147, %v1146
      %v1174 = vpack.c.b16 %v1149, %v1148
      %v1175 = vpack.c.b16 %v1151, %v1150
      %1200 = vmatprep.subr.bf16.mxu0 0
      %1201 = vmatpush1.bf16.msra.mxu0 %v1152
      %1202 = vmatprep.subr.bf16.mxu0 0
      %1203 = vmatpush1.bf16.msra.mxu0 %v1153
      %1204 = vmatprep.subr.bf16.mxu0 0
      %1205 = vmatpush1.bf16.msra.mxu0 %v1154
      %1206 = vmatprep.subr.bf16.mxu0 0
      %1207 = vmatpush1.bf16.msra.mxu0 %v1155
      %1208 = vmatprep.subr.bf16.mxu0 0
      %1209 = vmatpush1.bf16.msra.mxu0 %v1156
      %1210 = vmatprep.subr.bf16.mxu0 0
      %1211 = vmatpush1.bf16.msra.mxu0 %v1157
      %1212 = vmatprep.subr.bf16.mxu0 0
      %1213 = vmatpush1.bf16.msra.mxu0 %v1158
      %1214 = vmatprep.subr.bf16.mxu0 0
      %1215 = vmatpush1.bf16.msra.mxu0 %v1159
      %1216 = vmatprep.subr.bf16.mxu0 0
      %1217 = vmatpush1.bf16.msra.mxu0 %v1160
      %1218 = vmatprep.subr.bf16.mxu0 0
      %1219 = vmatpush1.bf16.msra.mxu0 %v1161
      %1220 = vmatprep.subr.bf16.mxu0 0
      %1221 = vmatpush1.bf16.msra.mxu0 %v1162
      %1222 = vmatprep.subr.bf16.mxu0 0
      %1223 = vmatpush1.bf16.msra.mxu0 %v1163
      %1224 = vmatprep.subr.bf16.mxu0 0
      %1225 = vmatpush1.bf16.msra.mxu0 %v1164
      %1226 = vmatprep.subr.bf16.mxu0 0
      %1227 = vmatpush1.bf16.msra.mxu0 %v1165
      %1228 = vmatprep.subr.bf16.mxu0 0
      %1229 = vmatpush1.bf16.msra.mxu0 %v1166
      %1230 = vmatprep.subr.bf16.mxu0 0
      %1231 = vmatpush1.bf16.msra.mxu0 %v1167
      %1232 = vmatprep.mubr.bf16.mxu0 %v936
      %1233 = vmatmul.mubr.bf16.gmra.mrb[0].mxu0 %v935
      %v1234 = vpop.f32.mrb[0].mxu0
      %v1235 = vadd.f32 0.0, %v1234
      %v1236 = vpop.f32.mrb[0].mxu0
      %v1237 = vpop.f32.mrb[0].mxu0
      %v1238 = vadd.f32 0.0, %v1237
      %v1239 = vpop.f32.mrb[0].mxu0
      %1240 = vmatprep.mubr.bf16.mxu0 %v939
      %1241 = vmatmul.mubr.bf16.gmra.mrb[0].mxu0 %v938
      %v1242 = vpop.f32.mrb[0].mxu0
      %v1243 = vadd.f32 0.0, %v1242
      %v1244 = vpop.f32.mrb[0].mxu0
      %v1245 = vpop.f32.mrb[0].mxu0
      %v1246 = vadd.f32 0.0, %v1245
      %v1247 = vpop.f32.mrb[0].mxu0
      %1248 = vmatprep.mubr.bf16.mxu0 %v942
      %1249 = vmatmul.mubr.bf16.gmra.mrb[0].mxu0 %v941
      %v1250 = vpop.f32.mrb[0].mxu0
      %v1251 = vadd.f32 0.0, %v1250
      %v1252 = vpop.f32.mrb[0].mxu0
      %v1253 = vpop.f32.mrb[0].mxu0
      %v1254 = vadd.f32 0.0, %v1253
      %v1255 = vpop.f32.mrb[0].mxu0
      %1256 = vmatprep.mubr.bf16.mxu0 %v945
      %1257 = vmatmul.mubr.bf16.gmra.mrb[0].mxu0 %v944
      %v1258 = vpop.f32.mrb[0].mxu0
      %v1259 = vadd.f32 0.0, %v1258
      %v1260 = vpop.f32.mrb[0].mxu0
      %v1261 = vpop.f32.mrb[0].mxu0
      %v1262 = vadd.f32 0.0, %v1261
      %v1263 = vpop.f32.mrb[0].mxu0
      %1264 = vmatprep.mubr.bf16.mxu0 %v948
      %1265 = vmatmul.mubr.bf16.gmra.mrb[0].mxu0 %v947
      %v1266 = vpop.f32.mrb[0].mxu0
      %v1267 = vadd.f32 0.0, %v1266
      %v1268 = vpop.f32.mrb[0].mxu0
      %v1269 = vpop.f32.mrb[0].mxu0
      %v1270 = vadd.f32 0.0, %v1269
      %v1271 = vpop.f32.mrb[0].mxu0
      %1272 = vmatprep.mubr.bf16.mxu0 %v951
      %1273 = vmatmul.mubr.bf16.gmra.mrb[0].mxu0 %v950
      %v1274 = vpop.f32.mrb[0].mxu0
      %v1275 = vadd.f32 0.0, %v1274
      %v1276 = vpop.f32.mrb[0].mxu0
      %v1277 = vpop.f32.mrb[0].mxu0
      %v1278 = vadd.f32 0.0, %v1277
      %v1279 = vpop.f32.mrb[0].mxu0
      %1280 = vmatprep.mubr.bf16.mxu0 %v954
      %1281 = vmatmul.mubr.bf16.gmra.mrb[0].mxu0 %v953
      %v1282 = vpop.f32.mrb[0].mxu0
      %v1283 = vadd.f32 0.0, %v1282
      %v1284 = vpop.f32.mrb[0].mxu0
      %v1285 = vpop.f32.mrb[0].mxu0
      %v1286 = vadd.f32 0.0, %v1285
      %v1287 = vpop.f32.mrb[0].mxu0
      %1288 = vmatprep.mubr.bf16.mxu0 %v1005
      %1289 = vmatmul.mubr.bf16.gmra.mrb[0].mxu0 %v1004
      %v1290 = vpop.f32.mrb[0].mxu0
      %v1291 = vadd.f32 0.0, %v1290
      %v1292 = vpop.f32.mrb[0].mxu0
      %v1293 = vpop.f32.mrb[0].mxu0
      %v1294 = vadd.f32 0.0, %v1293
      %v1295 = vpop.f32.mrb[0].mxu0
      %1296 = vdwg.mxu0
      %1297 = vmatprep.subr.bf16.mxu0 0
      %1298 = vmatpush1.bf16.msra.mxu0 %v1168
      %1299 = vmatprep.subr.bf16.mxu0 0
      %1300 = vmatpush1.bf16.msra.mxu0 %v1169
      %1301 = vmatprep.subr.bf16.mxu0 0
      %1302 = vmatpush1.bf16.msra.mxu0 %v1170
      %1303 = vmatprep.subr.bf16.mxu0 0
      %1304 = vmatpush1.bf16.msra.mxu0 %v1171
      %1305 = vmatprep.subr.bf16.mxu0 0
      %1306 = vmatpush1.bf16.msra.mxu0 %v1172
      %1307 = vmatprep.subr.bf16.mxu0 0
      %1308 = vmatpush1.bf16.msra.mxu0 %v1173
      %1309 = vmatprep.subr.bf16.mxu0 0
      %1310 = vmatpush1.bf16.msra.mxu0 %v1174
      %1311 = vmatprep.subr.bf16.mxu0 0
      %1312 = vmatpush1.bf16.msra.mxu0 %v1175
      %1313 = vmatprep.subr.bf16.mxu0 0
      %1314 = vmatpush1.bf16.msra.mxu0 0
      %1315 = vmatprep.subr.bf16.mxu0 0
      %1316 = vmatpush1.bf16.msra.mxu0 0
      %1317 = vmatprep.subr.bf16.mxu0 0
      %1318 = vmatpush1.bf16.msra.mxu0 0
      %1319 = vmatprep.subr.bf16.mxu0 0
      %1320 = vmatpush1.bf16.msra.mxu0 0
      %1321 = vmatprep.subr.bf16.mxu0 0
      %1322 = vmatpush1.bf16.msra.mxu0 0
      %1323 = vmatprep.subr.bf16.mxu0 0
      %1324 = vmatpush1.bf16.msra.mxu0 0
      %1325 = vmatprep.subr.bf16.mxu0 0
      %1326 = vmatpush1.bf16.msra.mxu0 0
      %1327 = vmatprep.subr.bf16.mxu0 0
      %1328 = vmatpush1.bf16.msra.mxu0 0
      %1329 = vmatprep.mubr.bf16.mxu0 0
      %1330 = vmatmul.mubr.bf16.gmra.mrb[0].mxu0 %v937
      %v1331 = vpop.f32.mrb[0].mxu0
      %v1332 = vadd.f32 %v1235, %v1331
      %v1333 = vpop.f32.mrb[0].mxu0
      %v1334 = vpop.f32.mrb[0].mxu0
      %v1335 = vadd.f32 %v1238, %v1334
      %v1336 = vpop.f32.mrb[0].mxu0
      %1337 = vmatprep.mubr.bf16.mxu0 0
      %1338 = vmatmul.mubr.bf16.gmra.mrb[0].mxu0 %v940
      %v1339 = vpop.f32.mrb[0].mxu0
      %v1340 = vadd.f32 %v1243, %v1339
      %v1341 = vpop.f32.mrb[0].mxu0
      %v1342 = vpop.f32.mrb[0].mxu0
      %v1343 = vadd.f32 %v1246, %v1342
      %v1344 = vpop.f32.mrb[0].mxu0
      %1345 = vmatprep.mubr.bf16.mxu0 0
      %1346 = vmatmul.mubr.bf16.gmra.mrb[0].mxu0 %v943
      %v1347 = vpop.f32.mrb[0].mxu0
      %v1348 = vadd.f32 %v1251, %v1347
      %v1349 = vpop.f32.mrb[0].mxu0
      %v1350 = vpop.f32.mrb[0].mxu0
      %v1351 = vadd.f32 %v1254, %v1350
      %v1352 = vpop.f32.mrb[0].mxu0
      %1353 = vmatprep.mubr.bf16.mxu0 0
      %1354 = vmatmul.mubr.bf16.gmra.mrb[0].mxu0 %v946
      %v1355 = vpop.f32.mrb[0].mxu0
      %v1356 = vadd.f32 %v1259, %v1355
      %v1357 = vpop.f32.mrb[0].mxu0
      %v1358 = vpop.f32.mrb[0].mxu0
      %v1359 = vadd.f32 %v1262, %v1358
      %v1360 = vpop.f32.mrb[0].mxu0
      %1361 = vmatprep.mubr.bf16.mxu0 0
      %1362 = vmatmul.mubr.bf16.gmra.mrb[0].mxu0 %v949
      %v1363 = vpop.f32.mrb[0].mxu0
      %v1364 = vadd.f32 %v1267, %v1363
      %v1365 = vpop.f32.mrb[0].mxu0
      %v1366 = vpop.f32.mrb[0].mxu0
      %v1367 = vadd.f32 %v1270, %v1366
      %v1368 = vpop.f32.mrb[0].mxu0
      %1369 = vmatprep.mubr.bf16.mxu0 0
      %1370 = vmatmul.mubr.bf16.gmra.mrb[0].mxu0 %v952
      %v1371 = vpop.f32.mrb[0].mxu0
      %v1372 = vadd.f32 %v1275, %v1371
      %v1373 = vpop.f32.mrb[0].mxu0
      %v1374 = vpop.f32.mrb[0].mxu0
      %v1375 = vadd.f32 %v1278, %v1374
      %v1376 = vpop.f32.mrb[0].mxu0
      %1377 = vmatprep.mubr.bf16.mxu0 0
      %1378 = vmatmul.mubr.bf16.gmra.mrb[0].mxu0 %v955
      %v1379 = vpop.f32.mrb[0].mxu0
      %v1380 = vadd.f32 %v1283, %v1379
      %v1381 = vpop.f32.mrb[0].mxu0
      %v1382 = vpop.f32.mrb[0].mxu0
      %v1383 = vadd.f32 %v1286, %v1382
      %v1384 = vpop.f32.mrb[0].mxu0
      %1385 = vmatprep.mubr.bf16.mxu0 0
      %1386 = vmatmul.mubr.bf16.gmra.mrb[0].mxu0 %v1006
      %v1387 = vpop.f32.mrb[0].mxu0
      %v1388 = vadd.f32 %v1291, %v1387
      %v1389 = vpop.f32.mrb[0].mxu0
      %v1390 = vpop.f32.mrb[0].mxu0
      %v1391 = vadd.f32 %v1294, %v1390
      %v1392 = vpop.f32.mrb[0].mxu0
      %1393 = vdwg.mxu0
      %v1442 = vunpack.c.l.b16 %v956
      %v1443 = vunpack.c.l.b16 %v957
      %v1444 = vunpack.c.l.b16 %v958
      %v1445 = vunpack.c.l.b16 %v959
      %v1446 = vunpack.c.l.b16 %v960
      %v1447 = vunpack.c.l.b16 %v961
      %v1448 = vunpack.c.l.b16 %v962
      %v1449 = vunpack.c.l.b16 %v963
      %v1450 = vunpack.c.l.b16 %v964
      %v1451 = vunpack.c.l.b16 %v965
      %v1452 = vunpack.c.l.b16 %v966
      %v1453 = vunpack.c.l.b16 %v967
      %v1454 = vunpack.c.l.b16 %v968
      %v1455 = vunpack.c.l.b16 %v969
      %v1456 = vunpack.c.l.b16 %v970
      %v1457 = vunpack.c.l.b16 %v971
      %v1458 = vunpack.c.l.b16 %v972
      %v1459 = vunpack.c.l.b16 %v973
      %v1460 = vunpack.c.l.b16 %v974
      %v1461 = vunpack.c.l.b16 %v975
      %v1462 = vunpack.c.l.b16 %v976
      %v1463 = vunpack.c.l.b16 %v977
      %v1464 = vunpack.c.l.b16 %v978
      %v1465 = vunpack.c.l.b16 %v979
      %v1466 = vunpack.c.l.b16 %v980
      %v1467 = vunpack.c.l.b16 %v981
      %v1468 = vunpack.c.l.b16 %v982
      %v1469 = vunpack.c.l.b16 %v983
      %v1470 = vunpack.c.l.b16 %v984
      %v1471 = vunpack.c.l.b16 %v985
      %v1472 = vunpack.c.l.b16 %v986
      %v1473 = vunpack.c.l.b16 %v987
      %v1474 = vunpack.c.l.b16 %v988
      %v1475 = vunpack.c.l.b16 %v989
      %v1476 = vunpack.c.l.b16 %v990
      %v1477 = vunpack.c.l.b16 %v991
      %v1478 = vunpack.c.l.b16 %v992
      %v1479 = vunpack.c.l.b16 %v993
      %v1480 = vunpack.c.l.b16 %v994
      %v1481 = vunpack.c.l.b16 %v995
      %v1482 = vunpack.c.l.b16 %v996
      %v1483 = vunpack.c.l.b16 %v997
      %v1484 = vunpack.c.l.b16 %v998
      %v1485 = vunpack.c.l.b16 %v999
      %v1486 = vunpack.c.l.b16 %v1000
      %v1487 = vunpack.c.l.b16 %v1001
      %v1488 = vunpack.c.l.b16 %v1002
      %v1489 = vunpack.c.l.b16 %v1003
      %v1490 = vpack.c.b16 %v1443, %v1442
      %v1491 = vpack.c.b16 %v1445, %v1444
      %v1492 = vpack.c.b16 %v1447, %v1446
      %v1493 = vpack.c.b16 %v1449, %v1448
      %v1494 = vpack.c.b16 %v1451, %v1450
      %v1495 = vpack.c.b16 %v1453, %v1452
      %v1496 = vpack.c.b16 %v1455, %v1454
      %v1497 = vpack.c.b16 %v1457, %v1456
      %v1498 = vpack.c.b16 %v1459, %v1458
      %v1499 = vpack.c.b16 %v1461, %v1460
      %v1500 = vpack.c.b16 %v1463, %v1462
      %v1501 = vpack.c.b16 %v1465, %v1464
      %v1502 = vpack.c.b16 %v1467, %v1466
      %v1503 = vpack.c.b16 %v1469, %v1468
      %v1504 = vpack.c.b16 %v1471, %v1470
      %v1505 = vpack.c.b16 %v1473, %v1472
      %v1506 = vpack.c.b16 %v1475, %v1474
      %v1507 = vpack.c.b16 %v1477, %v1476
      %v1508 = vpack.c.b16 %v1479, %v1478
      %v1509 = vpack.c.b16 %v1481, %v1480
      %v1510 = vpack.c.b16 %v1483, %v1482
      %v1511 = vpack.c.b16 %v1485, %v1484
      %v1512 = vpack.c.b16 %v1487, %v1486
      %v1513 = vpack.c.b16 %v1489, %v1488
      %1538 = vmatprep.subr.bf16.mxu0 0
      %1539 = vmatpush1.bf16.msra.mxu0 %v1490
      %1540 = vmatprep.subr.bf16.mxu0 0
      %1541 = vmatpush1.bf16.msra.mxu0 %v1491
      %1542 = vmatprep.subr.bf16.mxu0 0
      %1543 = vmatpush1.bf16.msra.mxu0 %v1492
      %1544 = vmatprep.subr.bf16.mxu0 0
      %1545 = vmatpush1.bf16.msra.mxu0 %v1493
      %1546 = vmatprep.subr.bf16.mxu0 0
      %1547 = vmatpush1.bf16.msra.mxu0 %v1494
      %1548 = vmatprep.subr.bf16.mxu0 0
      %1549 = vmatpush1.bf16.msra.mxu0 %v1495
      %1550 = vmatprep.subr.bf16.mxu0 0
      %1551 = vmatpush1.bf16.msra.mxu0 %v1496
      %1552 = vmatprep.subr.bf16.mxu0 0
      %1553 = vmatpush1.bf16.msra.mxu0 %v1497
      %1554 = vmatprep.subr.bf16.mxu0 0
      %1555 = vmatpush1.bf16.msra.mxu0 %v1498
      %1556 = vmatprep.subr.bf16.mxu0 0
      %1557 = vmatpush1.bf16.msra.mxu0 %v1499
      %1558 = vmatprep.subr.bf16.mxu0 0
      %1559 = vmatpush1.bf16.msra.mxu0 %v1500
      %1560 = vmatprep.subr.bf16.mxu0 0
      %1561 = vmatpush1.bf16.msra.mxu0 %v1501
      %1562 = vmatprep.subr.bf16.mxu0 0
      %1563 = vmatpush1.bf16.msra.mxu0 %v1502
      %1564 = vmatprep.subr.bf16.mxu0 0
      %1565 = vmatpush1.bf16.msra.mxu0 %v1503
      %1566 = vmatprep.subr.bf16.mxu0 0
      %1567 = vmatpush1.bf16.msra.mxu0 %v1504
      %1568 = vmatprep.subr.bf16.mxu0 0
      %1569 = vmatpush1.bf16.msra.mxu0 %v1505
      %1570 = vmatprep.mubr.bf16.mxu0 %v933
      %1571 = vmatmul.mubr.bf16.gmra.mrb[0].mxu0 %v932
      %v1572 = vpop.f32.mrb[0].mxu0
      %v1573 = vadd.f32 %v1332, %v1572
      %v1574 = vpop.f32.mrb[0].mxu0
      %v1575 = vpop.f32.mrb[0].mxu0
      %v1576 = vadd.f32 %v1335, %v1575
      %v1577 = vpop.f32.mrb[0].mxu0
      %1578 = vmatprep.mubr.bf16.mxu0 %v936
      %1579 = vmatmul.mubr.bf16.gmra.mrb[0].mxu0 %v935
      %v1580 = vpop.f32.mrb[0].mxu0
      %v1581 = vadd.f32 %v1340, %v1580
      %v1582 = vpop.f32.mrb[0].mxu0
      %v1583 = vpop.f32.mrb[0].mxu0
      %v1584 = vadd.f32 %v1343, %v1583
      %v1585 = vpop.f32.mrb[0].mxu0
      %1586 = vmatprep.mubr.bf16.mxu0 %v939
      %1587 = vmatmul.mubr.bf16.gmra.mrb[0].mxu0 %v938
      %v1588 = vpop.f32.mrb[0].mxu0
      %v1589 = vadd.f32 %v1348, %v1588
      %v1590 = vpop.f32.mrb[0].mxu0
      %v1591 = vpop.f32.mrb[0].mxu0
      %v1592 = vadd.f32 %v1351, %v1591
      %v1593 = vpop.f32.mrb[0].mxu0
      %1594 = vmatprep.mubr.bf16.mxu0 %v942
      %1595 = vmatmul.mubr.bf16.gmra.mrb[0].mxu0 %v941
      %v1596 = vpop.f32.mrb[0].mxu0
      %v1597 = vadd.f32 %v1356, %v1596
      %v1598 = vpop.f32.mrb[0].mxu0
      %v1599 = vpop.f32.mrb[0].mxu0
      %v1600 = vadd.f32 %v1359, %v1599
      %v1601 = vpop.f32.mrb[0].mxu0
      %1602 = vmatprep.mubr.bf16.mxu0 %v945
      %1603 = vmatmul.mubr.bf16.gmra.mrb[0].mxu0 %v944
      %v1604 = vpop.f32.mrb[0].mxu0
      %v1605 = vadd.f32 %v1364, %v1604
      %v1606 = vpop.f32.mrb[0].mxu0
      %v1607 = vpop.f32.mrb[0].mxu0
      %v1608 = vadd.f32 %v1367, %v1607
      %v1609 = vpop.f32.mrb[0].mxu0
      %1610 = vmatprep.mubr.bf16.mxu0 %v948
      %1611 = vmatmul.mubr.bf16.gmra.mrb[0].mxu0 %v947
      %v1612 = vpop.f32.mrb[0].mxu0
      %v1613 = vadd.f32 %v1372, %v1612
      %v1614 = vpop.f32.mrb[0].mxu0
      %v1615 = vpop.f32.mrb[0].mxu0
      %v1616 = vadd.f32 %v1375, %v1615
      %v1617 = vpop.f32.mrb[0].mxu0
      %1618 = vmatprep.mubr.bf16.mxu0 %v951
      %1619 = vmatmul.mubr.bf16.gmra.mrb[0].mxu0 %v950
      %v1620 = vpop.f32.mrb[0].mxu0
      %v1621 = vadd.f32 %v1380, %v1620
      %v1622 = vpop.f32.mrb[0].mxu0
      %v1623 = vpop.f32.mrb[0].mxu0
      %v1624 = vadd.f32 %v1383, %v1623
      %v1625 = vpop.f32.mrb[0].mxu0
      %1626 = vmatprep.mubr.bf16.mxu0 %v954
      %1627 = vmatmul.mubr.bf16.gmra.mrb[0].mxu0 %v953
      %v1628 = vpop.f32.mrb[0].mxu0
      %v1629 = vadd.f32 %v1388, %v1628
      %v1630 = vpop.f32.mrb[0].mxu0
      %v1631 = vpop.f32.mrb[0].mxu0
      %v1632 = vadd.f32 %v1391, %v1631
      %v1633 = vpop.f32.mrb[0].mxu0
      %1634 = vdwg.mxu0
      %1635 = vmatprep.subr.bf16.mxu0 0
      %1636 = vmatpush1.bf16.msra.mxu0 %v1506
      %1637 = vmatprep.subr.bf16.mxu0 0
      %1638 = vmatpush1.bf16.msra.mxu0 %v1507
      %1639 = vmatprep.subr.bf16.mxu0 0
      %1640 = vmatpush1.bf16.msra.mxu0 %v1508
      %1641 = vmatprep.subr.bf16.mxu0 0
      %1642 = vmatpush1.bf16.msra.mxu0 %v1509
      %1643 = vmatprep.subr.bf16.mxu0 0
      %1644 = vmatpush1.bf16.msra.mxu0 %v1510
      %1645 = vmatprep.subr.bf16.mxu0 0
      %1646 = vmatpush1.bf16.msra.mxu0 %v1511
      %1647 = vmatprep.subr.bf16.mxu0 0
      %1648 = vmatpush1.bf16.msra.mxu0 %v1512
      %1649 = vmatprep.subr.bf16.mxu0 0
      %1650 = vmatpush1.bf16.msra.mxu0 %v1513
      %1651 = vmatprep.subr.bf16.mxu0 0
      %1652 = vmatpush1.bf16.msra.mxu0 0
      %1653 = vmatprep.subr.bf16.mxu0 0
      %1654 = vmatpush1.bf16.msra.mxu0 0
      %1655 = vmatprep.subr.bf16.mxu0 0
      %1656 = vmatpush1.bf16.msra.mxu0 0
      %1657 = vmatprep.subr.bf16.mxu0 0
      %1658 = vmatpush1.bf16.msra.mxu0 0
      %1659 = vmatprep.subr.bf16.mxu0 0
      %1660 = vmatpush1.bf16.msra.mxu0 0
      %1661 = vmatprep.subr.bf16.mxu0 0
      %1662 = vmatpush1.bf16.msra.mxu0 0
      %1663 = vmatprep.subr.bf16.mxu0 0
      %1664 = vmatpush1.bf16.msra.mxu0 0
      %1665 = vmatprep.subr.bf16.mxu0 0
      %1666 = vmatpush1.bf16.msra.mxu0 0
      %1667 = vmatprep.mubr.bf16.mxu0 0
      %1668 = vmatmul.mubr.bf16.gmra.mrb[0].mxu0 %v934
      %v1669 = vpop.f32.mrb[0].mxu0
      %v1670 = vadd.f32 %v1573, %v1669
      %v1671 = vpop.f32.mrb[0].mxu0
      %v1672 = vpop.f32.mrb[0].mxu0
      %v1673 = vadd.f32 %v1576, %v1672
      %v1674 = vpop.f32.mrb[0].mxu0
      %1675 = vmatprep.mubr.bf16.mxu0 0
      %1676 = vmatmul.mubr.bf16.gmra.mrb[0].mxu0 %v937
      %v1677 = vpop.f32.mrb[0].mxu0
      %v1678 = vadd.f32 %v1581, %v1677
      %v1679 = vpop.f32.mrb[0].mxu0
      %v1680 = vpop.f32.mrb[0].mxu0
      %v1681 = vadd.f32 %v1584, %v1680
      %v1682 = vpop.f32.mrb[0].mxu0
      %1683 = vmatprep.mubr.bf16.mxu0 0
      %1684 = vmatmul.mubr.bf16.gmra.mrb[0].mxu0 %v940
      %v1685 = vpop.f32.mrb[0].mxu0
      %v1686 = vadd.f32 %v1589, %v1685
      %v1687 = vpop.f32.mrb[0].mxu0
      %v1688 = vpop.f32.mrb[0].mxu0
      %v1689 = vadd.f32 %v1592, %v1688
      %v1690 = vpop.f32.mrb[0].mxu0
      %1691 = vmatprep.mubr.bf16.mxu0 0
      %1692 = vmatmul.mubr.bf16.gmra.mrb[0].mxu0 %v943
      %v1693 = vpop.f32.mrb[0].mxu0
      %v1694 = vadd.f32 %v1597, %v1693
      %v1695 = vpop.f32.mrb[0].mxu0
      %v1696 = vpop.f32.mrb[0].mxu0
      %v1697 = vadd.f32 %v1600, %v1696
      %v1698 = vpop.f32.mrb[0].mxu0
      %1699 = vmatprep.mubr.bf16.mxu0 0
      %1700 = vmatmul.mubr.bf16.gmra.mrb[0].mxu0 %v946
      %v1701 = vpop.f32.mrb[0].mxu0
      %v1702 = vadd.f32 %v1605, %v1701
      %v1703 = vpop.f32.mrb[0].mxu0
      %v1704 = vpop.f32.mrb[0].mxu0
      %v1705 = vadd.f32 %v1608, %v1704
      %v1706 = vpop.f32.mrb[0].mxu0
      %1707 = vmatprep.mubr.bf16.mxu0 0
      %1708 = vmatmul.mubr.bf16.gmra.mrb[0].mxu0 %v949
      %v1709 = vpop.f32.mrb[0].mxu0
      %v1710 = vadd.f32 %v1613, %v1709
      %v1711 = vpop.f32.mrb[0].mxu0
      %v1712 = vpop.f32.mrb[0].mxu0
      %v1713 = vadd.f32 %v1616, %v1712
      %v1714 = vpop.f32.mrb[0].mxu0
      %1715 = vmatprep.mubr.bf16.mxu0 0
      %1716 = vmatmul.mubr.bf16.gmra.mrb[0].mxu0 %v952
      %v1717 = vpop.f32.mrb[0].mxu0
      %v1718 = vadd.f32 %v1621, %v1717
      %v1719 = vpop.f32.mrb[0].mxu0
      %v1720 = vpop.f32.mrb[0].mxu0
      %v1721 = vadd.f32 %v1624, %v1720
      %v1722 = vpop.f32.mrb[0].mxu0
      %1723 = vmatprep.mubr.bf16.mxu0 0
      %1724 = vmatmul.mubr.bf16.gmra.mrb[0].mxu0 %v955
      %v1725 = vpop.f32.mrb[0].mxu0
      %v1726 = vadd.f32 %v1629, %v1725
      %v1727 = vpop.f32.mrb[0].mxu0
      %v1728 = vpop.f32.mrb[0].mxu0
      %v1729 = vadd.f32 %v1632, %v1728
      %v1730 = vpop.f32.mrb[0].mxu0
      %1731 = vdwg.mxu0
      %v1732 = vld [vmem:[#allocation2 + $0x30] sm:$0xff]
      %v1733 = vld [vmem:[#allocation2 + $0x38] sm:$0xff]
      %v1734 = vld [vmem:[#allocation2 + $0x40] sm:$0xff]
      %v1735 = vld [vmem:[#allocation2 + $0x48] sm:$0xff]
      %v1736 = vld [vmem:[#allocation2 + $0x50] sm:$0xff]
      %v1737 = vld [vmem:[#allocation2 + $0x58] sm:$0xff]
      %v1738 = vld [vmem:[#allocation2 + $0x60] sm:$0xff]
      %v1739 = vld [vmem:[#allocation2 + $0x68] sm:$0xff]
      %v1740 = vld [vmem:[#allocation2 + $0x70] sm:$0xff]
      %v1741 = vld [vmem:[#allocation2 + $0x78] sm:$0xff]
      %v1742 = vld [vmem:[#allocation2 + $0x80] sm:$0xff]
      %v1743 = vld [vmem:[#allocation2 + $0x88] sm:$0xff]
      %v1744 = vld [vmem:[#allocation2 + $0x90] sm:$0xff]
      %v1745 = vld [vmem:[#allocation2 + $0x98] sm:$0xff]
      %v1746 = vld [vmem:[#allocation2 + $0xa0] sm:$0xff]
      %v1747 = vld [vmem:[#allocation2 + $0xa8] sm:$0xff]
      %v1748 = vld [vmem:[#allocation2 + $0xb0] sm:$0xff]
      %v1749 = vld [vmem:[#allocation2 + $0xb8] sm:$0xff]
      %v1750 = vld [vmem:[#allocation2 + $0xc0] sm:$0xff]
      %v1751 = vld [vmem:[#allocation2 + $0xc8] sm:$0xff]
      %v1752 = vld [vmem:[#allocation2 + $0xd0] sm:$0xff]
      %v1753 = vld [vmem:[#allocation2 + $0xd8] sm:$0xff]
      %v1754 = vld [vmem:[#allocation2 + $0xe0] sm:$0xff]
      %v1755 = vld [vmem:[#allocation2 + $0xe8] sm:$0xff]
      %s1756 = scalar_lea.vmem %s3, 384
      %v1757 = vld [vmem:[%s1756] sm:$0xf]
      %v1758 = vld [vmem:[%s1756 + $0x4] sm:$0xf]
      %v1759 = vld [vmem:[%s1756 + $0x8] sm:$0xf]
      %v1760 = vld [vmem:[%s1756 + $0xc] sm:$0xf]
      %v1761 = vld [vmem:[%s1756 + $0x10] sm:$0xf]
      %v1762 = vld [vmem:[%s1756 + $0x14] sm:$0xf]
      %v1763 = vld [vmem:[%s1756 + $0x18] sm:$0xf]
      %v1764 = vld [vmem:[%s1756 + $0x1c] sm:$0xf]
      %v1765 = vld [vmem:[%s1756 + $0x20] sm:$0xf]
      %v1766 = vld [vmem:[%s1756 + $0x24] sm:$0xf]
      %v1767 = vld [vmem:[%s1756 + $0x28] sm:$0xf]
      %v1768 = vld [vmem:[%s1756 + $0x2c] sm:$0xf]
      %v1769 = vld [vmem:[%s1756 + $0x30] sm:$0xf]
      %v1770 = vld [vmem:[%s1756 + $0x34] sm:$0xf]
      %v1771 = vld [vmem:[%s1756 + $0x38] sm:$0xf]
      %v1772 = vld [vmem:[%s1756 + $0x3c] sm:$0xf]
      %v1773 = vld [vmem:[%s1756 + $0x40] sm:$0xf]
      %v1774 = vld [vmem:[%s1756 + $0x44] sm:$0xf]
      %v1775 = vld [vmem:[%s1756 + $0x48] sm:$0xf]
      %v1776 = vld [vmem:[%s1756 + $0x4c] sm:$0xf]
      %v1777 = vld [vmem:[%s1756 + $0x50] sm:$0xf]
      %v1778 = vld [vmem:[%s1756 + $0x54] sm:$0xf]
      %v1779 = vld [vmem:[%s1756 + $0x58] sm:$0xf]
      %v1780 = vld [vmem:[%s1756 + $0x5c] sm:$0xf]
      %v1781 = vld [vmem:[%s1756 + $0x60] sm:$0xf]
      %v1782 = vld [vmem:[%s1756 + $0x64] sm:$0xf]
      %v1783 = vld [vmem:[%s1756 + $0x68] sm:$0xf]
      %v1784 = vld [vmem:[%s1756 + $0x6c] sm:$0xf]
      %v1785 = vld [vmem:[%s1756 + $0x70] sm:$0xf]
      %v1786 = vld [vmem:[%s1756 + $0x74] sm:$0xf]
      %v1787 = vld [vmem:[%s1756 + $0x78] sm:$0xf]
      %v1788 = vld [vmem:[%s1756 + $0x7c] sm:$0xf]
      %v1789 = vld [vmem:[%s1756 + $0x80] sm:$0xf]
      %v1790 = vld [vmem:[%s1756 + $0x84] sm:$0xf]
      %v1791 = vld [vmem:[%s1756 + $0x88] sm:$0xf]
      %v1792 = vld [vmem:[%s1756 + $0x8c] sm:$0xf]
      %v1793 = vld [vmem:[%s1756 + $0x90] sm:$0xf]
      %v1794 = vld [vmem:[%s1756 + $0x94] sm:$0xf]
      %v1795 = vld [vmem:[%s1756 + $0x98] sm:$0xf]
      %v1796 = vld [vmem:[%s1756 + $0x9c] sm:$0xf]
      %v1797 = vld [vmem:[%s1756 + $0xa0] sm:$0xf]
      %v1798 = vld [vmem:[%s1756 + $0xa4] sm:$0xf]
      %v1799 = vld [vmem:[%s1756 + $0xa8] sm:$0xf]
      %v1800 = vld [vmem:[%s1756 + $0xac] sm:$0xf]
      %v1801 = vld [vmem:[%s1756 + $0xb0] sm:$0xf]
      %v1802 = vld [vmem:[%s1756 + $0xb4] sm:$0xf]
      %v1803 = vld [vmem:[%s1756 + $0xb8] sm:$0xf]
      %v1804 = vld [vmem:[%s1756 + $0xbc] sm:$0xf]
      %v1853 = vunpack.c.l.b16 %v1757
      %v1854 = vunpack.c.l.b16 %v1758
      %v1855 = vunpack.c.l.b16 %v1759
      %v1856 = vunpack.c.l.b16 %v1760
      %v1857 = vunpack.c.l.b16 %v1761
      %v1858 = vunpack.c.l.b16 %v1762
      %v1859 = vunpack.c.l.b16 %v1763
      %v1860 = vunpack.c.l.b16 %v1764
      %v1861 = vunpack.c.l.b16 %v1765
      %v1862 = vunpack.c.l.b16 %v1766
      %v1863 = vunpack.c.l.b16 %v1767
      %v1864 = vunpack.c.l.b16 %v1768
      %v1865 = vunpack.c.l.b16 %v1769
      %v1866 = vunpack.c.l.b16 %v1770
      %v1867 = vunpack.c.l.b16 %v1771
      %v1868 = vunpack.c.l.b16 %v1772
      %v1869 = vunpack.c.l.b16 %v1773
      %v1870 = vunpack.c.l.b16 %v1774
      %v1871 = vunpack.c.l.b16 %v1775
      %v1872 = vunpack.c.l.b16 %v1776
      %v1873 = vunpack.c.l.b16 %v1777
      %v1874 = vunpack.c.l.b16 %v1778
      %v1875 = vunpack.c.l.b16 %v1779
      %v1876 = vunpack.c.l.b16 %v1780
      %v1877 = vunpack.c.l.b16 %v1781
      %v1878 = vunpack.c.l.b16 %v1782
      %v1879 = vunpack.c.l.b16 %v1783
      %v1880 = vunpack.c.l.b16 %v1784
      %v1881 = vunpack.c.l.b16 %v1785
      %v1882 = vunpack.c.l.b16 %v1786
      %v1883 = vunpack.c.l.b16 %v1787
      %v1884 = vunpack.c.l.b16 %v1788
      %v1885 = vunpack.c.l.b16 %v1789
      %v1886 = vunpack.c.l.b16 %v1790
      %v1887 = vunpack.c.l.b16 %v1791
      %v1888 = vunpack.c.l.b16 %v1792
      %v1889 = vunpack.c.l.b16 %v1793
      %v1890 = vunpack.c.l.b16 %v1794
      %v1891 = vunpack.c.l.b16 %v1795
      %v1892 = vunpack.c.l.b16 %v1796
      %v1893 = vunpack.c.l.b16 %v1797
      %v1894 = vunpack.c.l.b16 %v1798
      %v1895 = vunpack.c.l.b16 %v1799
      %v1896 = vunpack.c.l.b16 %v1800
      %v1897 = vunpack.c.l.b16 %v1801
      %v1898 = vunpack.c.l.b16 %v1802
      %v1899 = vunpack.c.l.b16 %v1803
      %v1900 = vunpack.c.l.b16 %v1804
      %v1901 = vpack.c.b16 %v1854, %v1853
      %v1902 = vpack.c.b16 %v1856, %v1855
      %v1903 = vpack.c.b16 %v1858, %v1857
      %v1904 = vpack.c.b16 %v1860, %v1859
      %v1905 = vpack.c.b16 %v1862, %v1861
      %v1906 = vpack.c.b16 %v1864, %v1863
      %v1907 = vpack.c.b16 %v1866, %v1865
      %v1908 = vpack.c.b16 %v1868, %v1867
      %v1909 = vpack.c.b16 %v1870, %v1869
      %v1910 = vpack.c.b16 %v1872, %v1871
      %v1911 = vpack.c.b16 %v1874, %v1873
      %v1912 = vpack.c.b16 %v1876, %v1875
      %v1913 = vpack.c.b16 %v1878, %v1877
      %v1914 = vpack.c.b16 %v1880, %v1879
      %v1915 = vpack.c.b16 %v1882, %v1881
      %v1916 = vpack.c.b16 %v1884, %v1883
      %v1917 = vpack.c.b16 %v1886, %v1885
      %v1918 = vpack.c.b16 %v1888, %v1887
      %v1919 = vpack.c.b16 %v1890, %v1889
      %v1920 = vpack.c.b16 %v1892, %v1891
      %v1921 = vpack.c.b16 %v1894, %v1893
      %v1922 = vpack.c.b16 %v1896, %v1895
      %v1923 = vpack.c.b16 %v1898, %v1897
      %v1924 = vpack.c.b16 %v1900, %v1899
      %1949 = vmatprep.subr.bf16.mxu0 0
      %1950 = vmatpush1.bf16.msra.mxu0 %v1901
      %1951 = vmatprep.subr.bf16.mxu0 0
      %1952 = vmatpush1.bf16.msra.mxu0 %v1902
      %1953 = vmatprep.subr.bf16.mxu0 0
      %1954 = vmatpush1.bf16.msra.mxu0 %v1903
      %1955 = vmatprep.subr.bf16.mxu0 0
      %1956 = vmatpush1.bf16.msra.mxu0 %v1904
      %1957 = vmatprep.subr.bf16.mxu0 0
      %1958 = vmatpush1.bf16.msra.mxu0 %v1905
      %1959 = vmatprep.subr.bf16.mxu0 0
      %1960 = vmatpush1.bf16.msra.mxu0 %v1906
      %1961 = vmatprep.subr.bf16.mxu0 0
      %1962 = vmatpush1.bf16.msra.mxu0 %v1907
      %1963 = vmatprep.subr.bf16.mxu0 0
      %1964 = vmatpush1.bf16.msra.mxu0 %v1908
      %1965 = vmatprep.subr.bf16.mxu0 0
      %1966 = vmatpush1.bf16.msra.mxu0 %v1909
      %1967 = vmatprep.subr.bf16.mxu0 0
      %1968 = vmatpush1.bf16.msra.mxu0 %v1910
      %1969 = vmatprep.subr.bf16.mxu0 0
      %1970 = vmatpush1.bf16.msra.mxu0 %v1911
      %1971 = vmatprep.subr.bf16.mxu0 0
      %1972 = vmatpush1.bf16.msra.mxu0 %v1912
      %1973 = vmatprep.subr.bf16.mxu0 0
      %1974 = vmatpush1.bf16.msra.mxu0 %v1913
      %1975 = vmatprep.subr.bf16.mxu0 0
      %1976 = vmatpush1.bf16.msra.mxu0 %v1914
      %1977 = vmatprep.subr.bf16.mxu0 0
      %1978 = vmatpush1.bf16.msra.mxu0 %v1915
      %1979 = vmatprep.subr.bf16.mxu0 0
      %1980 = vmatpush1.bf16.msra.mxu0 %v1916
      %1981 = vmatprep.mubr.bf16.mxu0 %v1733
      %1982 = vmatmul.mubr.bf16.gmra.mrb[0].mxu0 %v1732
      %v1983 = vpop.f32.mrb[0].mxu0
      %v1984 = vadd.f32 0.0, %v1983
      %v1985 = vpop.f32.mrb[0].mxu0
      %v1986 = vpop.f32.mrb[0].mxu0
      %v1987 = vadd.f32 0.0, %v1986
      %v1988 = vpop.f32.mrb[0].mxu0
      %1989 = vmatprep.mubr.bf16.mxu0 %v1736
      %1990 = vmatmul.mubr.bf16.gmra.mrb[0].mxu0 %v1735
      %v1991 = vpop.f32.mrb[0].mxu0
      %v1992 = vadd.f32 0.0, %v1991
      %v1993 = vpop.f32.mrb[0].mxu0
      %v1994 = vpop.f32.mrb[0].mxu0
      %v1995 = vadd.f32 0.0, %v1994
      %v1996 = vpop.f32.mrb[0].mxu0
      %1997 = vmatprep.mubr.bf16.mxu0 %v1739
      %1998 = vmatmul.mubr.bf16.gmra.mrb[0].mxu0 %v1738
      %v1999 = vpop.f32.mrb[0].mxu0
      %v2000 = vadd.f32 0.0, %v1999
      %v2001 = vpop.f32.mrb[0].mxu0
      %v2002 = vpop.f32.mrb[0].mxu0
      %v2003 = vadd.f32 0.0, %v2002
      %v2004 = vpop.f32.mrb[0].mxu0
      %2005 = vmatprep.mubr.bf16.mxu0 %v1742
      %2006 = vmatmul.mubr.bf16.gmra.mrb[0].mxu0 %v1741
      %v2007 = vpop.f32.mrb[0].mxu0
      %v2008 = vadd.f32 0.0, %v2007
      %v2009 = vpop.f32.mrb[0].mxu0
      %v2010 = vpop.f32.mrb[0].mxu0
      %v2011 = vadd.f32 0.0, %v2010
      %v2012 = vpop.f32.mrb[0].mxu0
      %2013 = vmatprep.mubr.bf16.mxu0 %v1745
      %2014 = vmatmul.mubr.bf16.gmra.mrb[0].mxu0 %v1744
      %v2015 = vpop.f32.mrb[0].mxu0
      %v2016 = vadd.f32 0.0, %v2015
      %v2017 = vpop.f32.mrb[0].mxu0
      %v2018 = vpop.f32.mrb[0].mxu0
      %v2019 = vadd.f32 0.0, %v2018
      %v2020 = vpop.f32.mrb[0].mxu0
      %2021 = vmatprep.mubr.bf16.mxu0 %v1748
      %2022 = vmatmul.mubr.bf16.gmra.mrb[0].mxu0 %v1747
      %v2023 = vpop.f32.mrb[0].mxu0
      %v2024 = vadd.f32 0.0, %v2023
      %v2025 = vpop.f32.mrb[0].mxu0
      %v2026 = vpop.f32.mrb[0].mxu0
      %v2027 = vadd.f32 0.0, %v2026
      %v2028 = vpop.f32.mrb[0].mxu0
      %2029 = vmatprep.mubr.bf16.mxu0 %v1751
      %2030 = vmatmul.mubr.bf16.gmra.mrb[0].mxu0 %v1750
      %v2031 = vpop.f32.mrb[0].mxu0
      %v2032 = vadd.f32 0.0, %v2031
      %v2033 = vpop.f32.mrb[0].mxu0
      %v2034 = vpop.f32.mrb[0].mxu0
      %v2035 = vadd.f32 0.0, %v2034
      %v2036 = vpop.f32.mrb[0].mxu0
      %2037 = vmatprep.mubr.bf16.mxu0 %v1754
      %2038 = vmatmul.mubr.bf16.gmra.mrb[0].mxu0 %v1753
      %v2039 = vpop.f32.mrb[0].mxu0
      %v2040 = vadd.f32 0.0, %v2039
      %v2041 = vpop.f32.mrb[0].mxu0
      %v2042 = vpop.f32.mrb[0].mxu0
      %v2043 = vadd.f32 0.0, %v2042
      %v2044 = vpop.f32.mrb[0].mxu0
      %2045 = vdwg.mxu0
      %2046 = vmatprep.subr.bf16.mxu0 0
      %2047 = vmatpush1.bf16.msra.mxu0 %v1917
      %2048 = vmatprep.subr.bf16.mxu0 0
      %2049 = vmatpush1.bf16.msra.mxu0 %v1918
      %2050 = vmatprep.subr.bf16.mxu0 0
      %2051 = vmatpush1.bf16.msra.mxu0 %v1919
      %2052 = vmatprep.subr.bf16.mxu0 0
      %2053 = vmatpush1.bf16.msra.mxu0 %v1920
      %2054 = vmatprep.subr.bf16.mxu0 0
      %2055 = vmatpush1.bf16.msra.mxu0 %v1921
      %2056 = vmatprep.subr.bf16.mxu0 0
      %2057 = vmatpush1.bf16.msra.mxu0 %v1922
      %2058 = vmatprep.subr.bf16.mxu0 0
      %2059 = vmatpush1.bf16.msra.mxu0 %v1923
      %2060 = vmatprep.subr.bf16.mxu0 0
      %2061 = vmatpush1.bf16.msra.mxu0 %v1924
      %2062 = vmatprep.subr.bf16.mxu0 0
      %2063 = vmatpush1.bf16.msra.mxu0 0
      %2064 = vmatprep.subr.bf16.mxu0 0
      %2065 = vmatpush1.bf16.msra.mxu0 0
      %2066 = vmatprep.subr.bf16.mxu0 0
      %2067 = vmatpush1.bf16.msra.mxu0 0
      %2068 = vmatprep.subr.bf16.mxu0 0
      %2069 = vmatpush1.bf16.msra.mxu0 0
      %2070 = vmatprep.subr.bf16.mxu0 0
      %2071 = vmatpush1.bf16.msra.mxu0 0
      %2072 = vmatprep.subr.bf16.mxu0 0
      %2073 = vmatpush1.bf16.msra.mxu0 0
      %2074 = vmatprep.subr.bf16.mxu0 0
      %2075 = vmatpush1.bf16.msra.mxu0 0
      %2076 = vmatprep.subr.bf16.mxu0 0
      %2077 = vmatpush1.bf16.msra.mxu0 0
      %2078 = vmatprep.mubr.bf16.mxu0 0
      %2079 = vmatmul.mubr.bf16.gmra.mrb[0].mxu0 %v1734
      %v2080 = vpop.f32.mrb[0].mxu0
      %v2081 = vadd.f32 %v1984, %v2080
      %v2082 = vpop.f32.mrb[0].mxu0
      %v2083 = vpop.f32.mrb[0].mxu0
      %v2084 = vadd.f32 %v1987, %v2083
      %v2085 = vpop.f32.mrb[0].mxu0
      %2086 = vmatprep.mubr.bf16.mxu0 0
      %2087 = vmatmul.mubr.bf16.gmra.mrb[0].mxu0 %v1737
      %v2088 = vpop.f32.mrb[0].mxu0
      %v2089 = vadd.f32 %v1992, %v2088
      %v2090 = vpop.f32.mrb[0].mxu0
      %v2091 = vpop.f32.mrb[0].mxu0
      %v2092 = vadd.f32 %v1995, %v2091
      %v2093 = vpop.f32.mrb[0].mxu0
      %2094 = vmatprep.mubr.bf16.mxu0 0
      %2095 = vmatmul.mubr.bf16.gmra.mrb[0].mxu0 %v1740
      %v2096 = vpop.f32.mrb[0].mxu0
      %v2097 = vadd.f32 %v2000, %v2096
      %v2098 = vpop.f32.mrb[0].mxu0
      %v2099 = vpop.f32.mrb[0].mxu0
      %v2100 = vadd.f32 %v2003, %v2099
      %v2101 = vpop.f32.mrb[0].mxu0
      %2102 = vmatprep.mubr.bf16.mxu0 0
      %2103 = vmatmul.mubr.bf16.gmra.mrb[0].mxu0 %v1743
      %v2104 = vpop.f32.mrb[0].mxu0
      %v2105 = vadd.f32 %v2008, %v2104
      %v2106 = vpop.f32.mrb[0].mxu0
      %v2107 = vpop.f32.mrb[0].mxu0
      %v2108 = vadd.f32 %v2011, %v2107
      %v2109 = vpop.f32.mrb[0].mxu0
      %2110 = vmatprep.mubr.bf16.mxu0 0
      %2111 = vmatmul.mubr.bf16.gmra.mrb[0].mxu0 %v1746
      %v2112 = vpop.f32.mrb[0].mxu0
      %v2113 = vadd.f32 %v2016, %v2112
      %v2114 = vpop.f32.mrb[0].mxu0
      %v2115 = vpop.f32.mrb[0].mxu0
      %v2116 = vadd.f32 %v2019, %v2115
      %v2117 = vpop.f32.mrb[0].mxu0
      %2118 = vmatprep.mubr.bf16.mxu0 0
      %2119 = vmatmul.mubr.bf16.gmra.mrb[0].mxu0 %v1749
      %v2120 = vpop.f32.mrb[0].mxu0
      %v2121 = vadd.f32 %v2024, %v2120
      %v2122 = vpop.f32.mrb[0].mxu0
      %v2123 = vpop.f32.mrb[0].mxu0
      %v2124 = vadd.f32 %v2027, %v2123
      %v2125 = vpop.f32.mrb[0].mxu0
      %2126 = vmatprep.mubr.bf16.mxu0 0
      %2127 = vmatmul.mubr.bf16.gmra.mrb[0].mxu0 %v1752
      %v2128 = vpop.f32.mrb[0].mxu0
      %v2129 = vadd.f32 %v2032, %v2128
      %v2130 = vpop.f32.mrb[0].mxu0
      %v2131 = vpop.f32.mrb[0].mxu0
      %v2132 = vadd.f32 %v2035, %v2131
      %v2133 = vpop.f32.mrb[0].mxu0
      %2134 = vmatprep.mubr.bf16.mxu0 0
      %2135 = vmatmul.mubr.bf16.gmra.mrb[0].mxu0 %v1755
      %v2136 = vpop.f32.mrb[0].mxu0
      %v2137 = vadd.f32 %v2040, %v2136
      %v2138 = vpop.f32.mrb[0].mxu0
      %v2139 = vpop.f32.mrb[0].mxu0
      %v2140 = vadd.f32 %v2043, %v2139
      %v2141 = vpop.f32.mrb[0].mxu0
      %2142 = vdwg.mxu0
      %v2143 = vadd.f32 %v1670, %v2081
      %v2144 = vadd.f32 %v1673, %v2084
      %v2145 = vadd.f32 %v1678, %v2089
      %v2146 = vadd.f32 %v1681, %v2092
      %v2147 = vadd.f32 %v1686, %v2097
      %v2148 = vadd.f32 %v1689, %v2100
      %v2149 = vadd.f32 %v1694, %v2105
      %v2150 = vadd.f32 %v1697, %v2108
      %v2151 = vadd.f32 %v1702, %v2113
      %v2152 = vadd.f32 %v1705, %v2116
      %v2153 = vadd.f32 %v1710, %v2121
      %v2154 = vadd.f32 %v1713, %v2124
      %v2155 = vadd.f32 %v1718, %v2129
      %v2156 = vadd.f32 %v1721, %v2132
      %v2157 = vadd.f32 %v1726, %v2137
      %v2158 = vadd.f32 %v1729, %v2140
      %2159 = vst [vmem:[%s231] sm:$0xff] %v2143
      %2160 = vst [vmem:[%s231 + $0x8] sm:$0xff] %v2144
      %2161 = vst [vmem:[%s231 + $0x10] sm:$0xff] %v2145
      %2162 = vst [vmem:[%s231 + $0x18] sm:$0xff] %v2146
      %2163 = vst [vmem:[%s231 + $0x20] sm:$0xff] %v2147
      %2164 = vst [vmem:[%s231 + $0x28] sm:$0xff] %v2148
      %2165 = vst [vmem:[%s231 + $0x30] sm:$0xff] %v2149
      %2166 = vst [vmem:[%s231 + $0x38] sm:$0xff] %v2150
      %2167 = vst [vmem:[%s231 + $0x40] sm:$0xff] %v2151
      %2168 = vst [vmem:[%s231 + $0x48] sm:$0xff] %v2152
      %2169 = vst [vmem:[%s231 + $0x50] sm:$0xff] %v2153
      %2170 = vst [vmem:[%s231 + $0x58] sm:$0xff] %v2154
      %2171 = vst [vmem:[%s231 + $0x60] sm:$0xff] %v2155
      %2172 = vst [vmem:[%s231 + $0x68] sm:$0xff] %v2156
      %2173 = vst [vmem:[%s231 + $0x70] sm:$0xff] %v2157
      %2174 = vst [vmem:[%s231 + $0x78] sm:$0xff] %v2158
      %v2175 = vadd.f32 %v2143, %v2144
      %v2176 = vadd.f32 %v2175, %v2145
      %v2177 = vadd.f32 %v2176, %v2146
      %v2178 = vadd.f32 %v2177, %v2147
      %v2179 = vadd.f32 %v2178, %v2148
      %v2180 = vadd.f32 %v2179, %v2149
      %v2181 = vadd.f32 %v2180, %v2150
      %v2182 = vadd.f32 %v2181, %v2151
      %v2183 = vadd.f32 %v2182, %v2152
      %v2184 = vadd.f32 %v2183, %v2153
      %v2185 = vadd.f32 %v2184, %v2154
      %v2186 = vadd.f32 %v2185, %v2155
      %v2187 = vadd.f32 %v2186, %v2156
      %v2188 = vadd.f32 %v2187, %v2157
      %v2189 = vadd.f32 %v2188, %v2158
      %v2190 = vrot.slane %v2189, 4
      %v2191 = vadd.f32 %v2189, %v2190
      %v2192 = vrot.slane %v2191, 2
      %v2193 = vadd.f32 %v2191, %v2192
      %v2194 = vrot.slane %v2193, 1
      %v2195 = vadd.f32 %v2193, %v2194
      %v2196 = vadd.f32 %v2195, 0.0
      %v2197 = vmul.f32 %v2143, %v2143
      %v2198 = vmul.f32 %v2144, %v2144
      %v2199 = vmul.f32 %v2145, %v2145
      %v2200 = vmul.f32 %v2146, %v2146
      %v2201 = vmul.f32 %v2147, %v2147
      %v2202 = vmul.f32 %v2148, %v2148
      %v2203 = vmul.f32 %v2149, %v2149
      %v2204 = vmul.f32 %v2150, %v2150
      %v2205 = vmul.f32 %v2151, %v2151
      %v2206 = vmul.f32 %v2152, %v2152
      %v2207 = vmul.f32 %v2153, %v2153
      %v2208 = vmul.f32 %v2154, %v2154
      %v2209 = vmul.f32 %v2155, %v2155
      %v2210 = vmul.f32 %v2156, %v2156
      %v2211 = vmul.f32 %v2157, %v2157
      %v2212 = vmul.f32 %v2158, %v2158
      %v2213 = vadd.f32 %v2197, %v2198
      %v2214 = vadd.f32 %v2213, %v2199
      %v2215 = vadd.f32 %v2214, %v2200
      %v2216 = vadd.f32 %v2215, %v2201
      %v2217 = vadd.f32 %v2216, %v2202
      %v2218 = vadd.f32 %v2217, %v2203
      %v2219 = vadd.f32 %v2218, %v2204
      %v2220 = vadd.f32 %v2219, %v2205
      %v2221 = vadd.f32 %v2220, %v2206
      %v2222 = vadd.f32 %v2221, %v2207
      %v2223 = vadd.f32 %v2222, %v2208
      %v2224 = vadd.f32 %v2223, %v2209
      %v2225 = vadd.f32 %v2224, %v2210
      %v2226 = vadd.f32 %v2225, %v2211
      %v2227 = vadd.f32 %v2226, %v2212
      %v2228 = vrot.slane %v2227, 4
      %v2229 = vadd.f32 %v2227, %v2228
      %v2230 = vrot.slane %v2229, 2
      %v2231 = vadd.f32 %v2229, %v2230
      %v2232 = vrot.slane %v2231, 1
      %v2233 = vadd.f32 %v2231, %v2232
      %v2234 = vadd.f32 %v2233, 0.0
      %v2235 = vld [vmem:[#allocation2 + $0xc0] sm:$0xff]
      %v2236 = vld [vmem:[#allocation2 + $0xc8] sm:$0xff]
      %v2237 = vld [vmem:[#allocation2 + $0xd0] sm:$0xff]
      %v2238 = vld [vmem:[#allocation2 + $0xd8] sm:$0xff]
      %v2239 = vld [vmem:[#allocation2 + $0xe0] sm:$0xff]
      %v2240 = vld [vmem:[#allocation2 + $0xe8] sm:$0xff]
      %v2241 = vld [vmem:[#allocation2 + $0xf0] sm:$0xff]
      %v2242 = vld [vmem:[#allocation2 + $0xf8] sm:$0xff]
      %v2243 = vld [vmem:[#allocation2 + $0x100] sm:$0xff]
      %v2244 = vld [vmem:[#allocation2 + $0x108] sm:$0xff]
      %v2245 = vld [vmem:[#allocation2 + $0x110] sm:$0xff]
      %v2246 = vld [vmem:[#allocation2 + $0x118] sm:$0xff]
      %v2247 = vld [vmem:[#allocation2 + $0x120] sm:$0xff]
      %v2248 = vld [vmem:[#allocation2 + $0x128] sm:$0xff]
      %v2249 = vld [vmem:[#allocation2 + $0x130] sm:$0xff]
      %v2250 = vld [vmem:[#allocation2 + $0x138] sm:$0xff]
      %v2251 = vld [vmem:[#allocation2 + $0x140] sm:$0xff]
      %v2252 = vld [vmem:[#allocation2 + $0x148] sm:$0xff]
      %v2253 = vld [vmem:[#allocation2 + $0x150] sm:$0xff]
      %v2254 = vld [vmem:[#allocation2 + $0x158] sm:$0xff]
      %v2255 = vld [vmem:[#allocation2 + $0x160] sm:$0xff]
      %v2256 = vld [vmem:[#allocation2 + $0x168] sm:$0xff]
      %v2257 = vld [vmem:[#allocation2 + $0x170] sm:$0xff]
      %v2258 = vld [vmem:[#allocation2 + $0x178] sm:$0xff]
      %v2259 = vld [vmem:[%s3] sm:$0xf]
      %v2260 = vld [vmem:[%s3 + $0x4] sm:$0xf]
      %v2261 = vld [vmem:[%s3 + $0x8] sm:$0xf]
      %v2262 = vld [vmem:[%s3 + $0xc] sm:$0xf]
      %v2263 = vld [vmem:[%s3 + $0x10] sm:$0xf]
      %v2264 = vld [vmem:[%s3 + $0x14] sm:$0xf]
      %v2265 = vld [vmem:[%s3 + $0x18] sm:$0xf]
      %v2266 = vld [vmem:[%s3 + $0x1c] sm:$0xf]
      %v2267 = vld [vmem:[%s3 + $0x20] sm:$0xf]
      %v2268 = vld [vmem:[%s3 + $0x24] sm:$0xf]
      %v2269 = vld [vmem:[%s3 + $0x28] sm:$0xf]
      %v2270 = vld [vmem:[%s3 + $0x2c] sm:$0xf]
      %v2271 = vld [vmem:[%s3 + $0x30] sm:$0xf]
      %v2272 = vld [vmem:[%s3 + $0x34] sm:$0xf]
      %v2273 = vld [vmem:[%s3 + $0x38] sm:$0xf]
      %v2274 = vld [vmem:[%s3 + $0x3c] sm:$0xf]
      %v2275 = vld [vmem:[%s3 + $0x40] sm:$0xf]
      %v2276 = vld [vmem:[%s3 + $0x44] sm:$0xf]
      %v2277 = vld [vmem:[%s3 + $0x48] sm:$0xf]
      %v2278 = vld [vmem:[%s3 + $0x4c] sm:$0xf]
      %v2279 = vld [vmem:[%s3 + $0x50] sm:$0xf]
      %v2280 = vld [vmem:[%s3 + $0x54] sm:$0xf]
      %v2281 = vld [vmem:[%s3 + $0x58] sm:$0xf]
      %v2282 = vld [vmem:[%s3 + $0x5c] sm:$0xf]
      %v2283 = vld [vmem:[%s3 + $0x60] sm:$0xf]
      %v2284 = vld [vmem:[%s3 + $0x64] sm:$0xf]
      %v2285 = vld [vmem:[%s3 + $0x68] sm:$0xf]
      %v2286 = vld [vmem:[%s3 + $0x6c] sm:$0xf]
      %v2287 = vld [vmem:[%s3 + $0x70] sm:$0xf]
      %v2288 = vld [vmem:[%s3 + $0x74] sm:$0xf]
      %v2289 = vld [vmem:[%s3 + $0x78] sm:$0xf]
      %v2290 = vld [vmem:[%s3 + $0x7c] sm:$0xf]
      %v2291 = vld [vmem:[%s3 + $0x80] sm:$0xf]
      %v2292 = vld [vmem:[%s3 + $0x84] sm:$0xf]
      %v2293 = vld [vmem:[%s3 + $0x88] sm:$0xf]
      %v2294 = vld [vmem:[%s3 + $0x8c] sm:$0xf]
      %v2295 = vld [vmem:[%s3 + $0x90] sm:$0xf]
      %v2296 = vld [vmem:[%s3 + $0x94] sm:$0xf]
      %v2297 = vld [vmem:[%s3 + $0x98] sm:$0xf]
      %v2298 = vld [vmem:[%s3 + $0x9c] sm:$0xf]
      %v2299 = vld [vmem:[%s3 + $0xa0] sm:$0xf]
      %v2300 = vld [vmem:[%s3 + $0xa4] sm:$0xf]
      %v2301 = vld [vmem:[%s3 + $0xa8] sm:$0xf]
      %v2302 = vld [vmem:[%s3 + $0xac] sm:$0xf]
      %v2303 = vld [vmem:[%s3 + $0xb0] sm:$0xf]
      %v2304 = vld [vmem:[%s3 + $0xb4] sm:$0xf]
      %v2305 = vld [vmem:[%s3 + $0xb8] sm:$0xf]
      %v2306 = vld [vmem:[%s3 + $0xbc] sm:$0xf]
      %v2307 = vld [vmem:[#allocation2 + $0x180] sm:$0xff]
      %v2308 = vld [vmem:[#allocation2 + $0x188] sm:$0xff]
      %v2309 = vld [vmem:[#allocation2 + $0x190] sm:$0xff]
      %v2310 = vld [vmem:[%s1007] sm:$0xf]
      %v2311 = vld [vmem:[%s1007 + $0x4] sm:$0xf]
      %v2312 = vld [vmem:[%s1007 + $0x8] sm:$0xf]
      %v2313 = vld [vmem:[%s1007 + $0xc] sm:$0xf]
      %v2314 = vld [vmem:[%s1007 + $0x10] sm:$0xf]
      %v2315 = vld [vmem:[%s1007 + $0x14] sm:$0xf]
      %v2316 = vld [vmem:[%s1007 + $0x18] sm:$0xf]
      %v2317 = vld [vmem:[%s1007 + $0x1c] sm:$0xf]
      %v2318 = vld [vmem:[%s1007 + $0x20] sm:$0xf]
      %v2319 = vld [vmem:[%s1007 + $0x24] sm:$0xf]
      %v2320 = vld [vmem:[%s1007 + $0x28] sm:$0xf]
      %v2321 = vld [vmem:[%s1007 + $0x2c] sm:$0xf]
      %v2322 = vld [vmem:[%s1007 + $0x30] sm:$0xf]
      %v2323 = vld [vmem:[%s1007 + $0x34] sm:$0xf]
      %v2324 = vld [vmem:[%s1007 + $0x38] sm:$0xf]
      %v2325 = vld [vmem:[%s1007 + $0x3c] sm:$0xf]
      %v2326 = vld [vmem:[%s1007 + $0x40] sm:$0xf]
      %v2327 = vld [vmem:[%s1007 + $0x44] sm:$0xf]
      %v2328 = vld [vmem:[%s1007 + $0x48] sm:$0xf]
      %v2329 = vld [vmem:[%s1007 + $0x4c] sm:$0xf]
      %v2330 = vld [vmem:[%s1007 + $0x50] sm:$0xf]
      %v2331 = vld [vmem:[%s1007 + $0x54] sm:$0xf]
      %v2332 = vld [vmem:[%s1007 + $0x58] sm:$0xf]
      %v2333 = vld [vmem:[%s1007 + $0x5c] sm:$0xf]
      %v2334 = vld [vmem:[%s1007 + $0x60] sm:$0xf]
      %v2335 = vld [vmem:[%s1007 + $0x64] sm:$0xf]
      %v2336 = vld [vmem:[%s1007 + $0x68] sm:$0xf]
      %v2337 = vld [vmem:[%s1007 + $0x6c] sm:$0xf]
      %v2338 = vld [vmem:[%s1007 + $0x70] sm:$0xf]
      %v2339 = vld [vmem:[%s1007 + $0x74] sm:$0xf]
      %v2340 = vld [vmem:[%s1007 + $0x78] sm:$0xf]
      %v2341 = vld [vmem:[%s1007 + $0x7c] sm:$0xf]
      %v2342 = vld [vmem:[%s1007 + $0x80] sm:$0xf]
      %v2343 = vld [vmem:[%s1007 + $0x84] sm:$0xf]
      %v2344 = vld [vmem:[%s1007 + $0x88] sm:$0xf]
      %v2345 = vld [vmem:[%s1007 + $0x8c] sm:$0xf]
      %v2346 = vld [vmem:[%s1007 + $0x90] sm:$0xf]
      %v2347 = vld [vmem:[%s1007 + $0x94] sm:$0xf]
      %v2348 = vld [vmem:[%s1007 + $0x98] sm:$0xf]
      %v2349 = vld [vmem:[%s1007 + $0x9c] sm:$0xf]
      %v2350 = vld [vmem:[%s1007 + $0xa0] sm:$0xf]
      %v2351 = vld [vmem:[%s1007 + $0xa4] sm:$0xf]
      %v2352 = vld [vmem:[%s1007 + $0xa8] sm:$0xf]
      %v2353 = vld [vmem:[%s1007 + $0xac] sm:$0xf]
      %v2354 = vld [vmem:[%s1007 + $0xb0] sm:$0xf]
      %v2355 = vld [vmem:[%s1007 + $0xb4] sm:$0xf]
      %v2356 = vld [vmem:[%s1007 + $0xb8] sm:$0xf]
      %v2357 = vld [vmem:[%s1007 + $0xbc] sm:$0xf]
      %v2406 = vunpack.c.l.b16 %v2310
      %v2407 = vunpack.c.l.b16 %v2311
      %v2408 = vunpack.c.l.b16 %v2312
      %v2409 = vunpack.c.l.b16 %v2313
      %v2410 = vunpack.c.l.b16 %v2314
      %v2411 = vunpack.c.l.b16 %v2315
      %v2412 = vunpack.c.l.b16 %v2316
      %v2413 = vunpack.c.l.b16 %v2317
      %v2414 = vunpack.c.l.b16 %v2318
      %v2415 = vunpack.c.l.b16 %v2319
      %v2416 = vunpack.c.l.b16 %v2320
      %v2417 = vunpack.c.l.b16 %v2321
      %v2418 = vunpack.c.l.b16 %v2322
      %v2419 = vunpack.c.l.b16 %v2323
      %v2420 = vunpack.c.l.b16 %v2324
      %v2421 = vunpack.c.l.b16 %v2325
      %v2422 = vunpack.c.l.b16 %v2326
      %v2423 = vunpack.c.l.b16 %v2327
      %v2424 = vunpack.c.l.b16 %v2328
      %v2425 = vunpack.c.l.b16 %v2329
      %v2426 = vunpack.c.l.b16 %v2330
      %v2427 = vunpack.c.l.b16 %v2331
      %v2428 = vunpack.c.l.b16 %v2332
      %v2429 = vunpack.c.l.b16 %v2333
      %v2430 = vunpack.c.l.b16 %v2334
      %v2431 = vunpack.c.l.b16 %v2335
      %v2432 = vunpack.c.l.b16 %v2336
      %v2433 = vunpack.c.l.b16 %v2337
      %v2434 = vunpack.c.l.b16 %v2338
      %v2435 = vunpack.c.l.b16 %v2339
      %v2436 = vunpack.c.l.b16 %v2340
      %v2437 = vunpack.c.l.b16 %v2341
      %v2438 = vunpack.c.l.b16 %v2342
      %v2439 = vunpack.c.l.b16 %v2343
      %v2440 = vunpack.c.l.b16 %v2344
      %v2441 = vunpack.c.l.b16 %v2345
      %v2442 = vunpack.c.l.b16 %v2346
      %v2443 = vunpack.c.l.b16 %v2347
      %v2444 = vunpack.c.l.b16 %v2348
      %v2445 = vunpack.c.l.b16 %v2349
      %v2446 = vunpack.c.l.b16 %v2350
      %v2447 = vunpack.c.l.b16 %v2351
      %v2448 = vunpack.c.l.b16 %v2352
      %v2449 = vunpack.c.l.b16 %v2353
      %v2450 = vunpack.c.l.b16 %v2354
      %v2451 = vunpack.c.l.b16 %v2355
      %v2452 = vunpack.c.l.b16 %v2356
      %v2453 = vunpack.c.l.b16 %v2357
      %v2454 = vpack.c.b16 %v2407, %v2406
      %v2455 = vpack.c.b16 %v2409, %v2408
      %v2456 = vpack.c.b16 %v2411, %v2410
      %v2457 = vpack.c.b16 %v2413, %v2412
      %v2458 = vpack.c.b16 %v2415, %v2414
      %v2459 = vpack.c.b16 %v2417, %v2416
      %v2460 = vpack.c.b16 %v2419, %v2418
      %v2461 = vpack.c.b16 %v2421, %v2420
      %v2462 = vpack.c.b16 %v2423, %v2422
      %v2463 = vpack.c.b16 %v2425, %v2424
      %v2464 = vpack.c.b16 %v2427, %v2426
      %v2465 = vpack.c.b16 %v2429, %v2428
      %v2466 = vpack.c.b16 %v2431, %v2430
      %v2467 = vpack.c.b16 %v2433, %v2432
      %v2468 = vpack.c.b16 %v2435, %v2434
      %v2469 = vpack.c.b16 %v2437, %v2436
      %v2470 = vpack.c.b16 %v2439, %v2438
      %v2471 = vpack.c.b16 %v2441, %v2440
      %v2472 = vpack.c.b16 %v2443, %v2442
      %v2473 = vpack.c.b16 %v2445, %v2444
      %v2474 = vpack.c.b16 %v2447, %v2446
      %v2475 = vpack.c.b16 %v2449, %v2448
      %v2476 = vpack.c.b16 %v2451, %v2450
      %v2477 = vpack.c.b16 %v2453, %v2452
      %2502 = vmatprep.subr.bf16.mxu0 0
      %2503 = vmatpush1.bf16.msra.mxu0 %v2454
      %2504 = vmatprep.subr.bf16.mxu0 0
      %2505 = vmatpush1.bf16.msra.mxu0 %v2455
      %2506 = vmatprep.subr.bf16.mxu0 0
      %2507 = vmatpush1.bf16.msra.mxu0 %v2456
      %2508 = vmatprep.subr.bf16.mxu0 0
      %2509 = vmatpush1.bf16.msra.mxu0 %v2457
      %2510 = vmatprep.subr.bf16.mxu0 0
      %2511 = vmatpush1.bf16.msra.mxu0 %v2458
      %2512 = vmatprep.subr.bf16.mxu0 0
      %2513 = vmatpush1.bf16.msra.mxu0 %v2459
      %2514 = vmatprep.subr.bf16.mxu0 0
      %2515 = vmatpush1.bf16.msra.mxu0 %v2460
      %2516 = vmatprep.subr.bf16.mxu0 0
      %2517 = vmatpush1.bf16.msra.mxu0 %v2461
      %2518 = vmatprep.subr.bf16.mxu0 0
      %2519 = vmatpush1.bf16.msra.mxu0 %v2462
      %2520 = vmatprep.subr.bf16.mxu0 0
      %2521 = vmatpush1.bf16.msra.mxu0 %v2463
      %2522 = vmatprep.subr.bf16.mxu0 0
      %2523 = vmatpush1.bf16.msra.mxu0 %v2464
      %2524 = vmatprep.subr.bf16.mxu0 0
      %2525 = vmatpush1.bf16.msra.mxu0 %v2465
      %2526 = vmatprep.subr.bf16.mxu0 0
      %2527 = vmatpush1.bf16.msra.mxu0 %v2466
      %2528 = vmatprep.subr.bf16.mxu0 0
      %2529 = vmatpush1.bf16.msra.mxu0 %v2467
      %2530 = vmatprep.subr.bf16.mxu0 0
      %2531 = vmatpush1.bf16.msra.mxu0 %v2468
      %2532 = vmatprep.subr.bf16.mxu0 0
      %2533 = vmatpush1.bf16.msra.mxu0 %v2469
      %2534 = vmatprep.mubr.bf16.mxu0 %v2239
      %2535 = vmatmul.mubr.bf16.gmra.mrb[0].mxu0 %v2238
      %v2536 = vpop.f32.mrb[0].mxu0
      %v2537 = vadd.f32 0.0, %v2536
      %v2538 = vpop.f32.mrb[0].mxu0
      %v2539 = vpop.f32.mrb[0].mxu0
      %v2540 = vadd.f32 0.0, %v2539
      %v2541 = vpop.f32.mrb[0].mxu0
      %2542 = vmatprep.mubr.bf16.mxu0 %v2242
      %2543 = vmatmul.mubr.bf16.gmra.mrb[0].mxu0 %v2241
      %v2544 = vpop.f32.mrb[0].mxu0
      %v2545 = vadd.f32 0.0, %v2544
      %v2546 = vpop.f32.mrb[0].mxu0
      %v2547 = vpop.f32.mrb[0].mxu0
      %v2548 = vadd.f32 0.0, %v2547
      %v2549 = vpop.f32.mrb[0].mxu0
      %2550 = vmatprep.mubr.bf16.mxu0 %v2245
      %2551 = vmatmul.mubr.bf16.gmra.mrb[0].mxu0 %v2244
      %v2552 = vpop.f32.mrb[0].mxu0
      %v2553 = vadd.f32 0.0, %v2552
      %v2554 = vpop.f32.mrb[0].mxu0
      %v2555 = vpop.f32.mrb[0].mxu0
      %v2556 = vadd.f32 0.0, %v2555
      %v2557 = vpop.f32.mrb[0].mxu0
      %2558 = vmatprep.mubr.bf16.mxu0 %v2248
      %2559 = vmatmul.mubr.bf16.gmra.mrb[0].mxu0 %v2247
      %v2560 = vpop.f32.mrb[0].mxu0
      %v2561 = vadd.f32 0.0, %v2560
      %v2562 = vpop.f32.mrb[0].mxu0
      %v2563 = vpop.f32.mrb[0].mxu0
      %v2564 = vadd.f32 0.0, %v2563
      %v2565 = vpop.f32.mrb[0].mxu0
      %2566 = vmatprep.mubr.bf16.mxu0 %v2251
      %2567 = vmatmul.mubr.bf16.gmra.mrb[0].mxu0 %v2250
      %v2568 = vpop.f32.mrb[0].mxu0
      %v2569 = vadd.f32 0.0, %v2568
      %v2570 = vpop.f32.mrb[0].mxu0
      %v2571 = vpop.f32.mrb[0].mxu0
      %v2572 = vadd.f32 0.0, %v2571
      %v2573 = vpop.f32.mrb[0].mxu0
      %2574 = vmatprep.mubr.bf16.mxu0 %v2254
      %2575 = vmatmul.mubr.bf16.gmra.mrb[0].mxu0 %v2253
      %v2576 = vpop.f32.mrb[0].mxu0
      %v2577 = vadd.f32 0.0, %v2576
      %v2578 = vpop.f32.mrb[0].mxu0
      %v2579 = vpop.f32.mrb[0].mxu0
      %v2580 = vadd.f32 0.0, %v2579
      %v2581 = vpop.f32.mrb[0].mxu0
      %2582 = vmatprep.mubr.bf16.mxu0 %v2257
      %2583 = vmatmul.mubr.bf16.gmra.mrb[0].mxu0 %v2256
      %v2584 = vpop.f32.mrb[0].mxu0
      %v2585 = vadd.f32 0.0, %v2584
      %v2586 = vpop.f32.mrb[0].mxu0
      %v2587 = vpop.f32.mrb[0].mxu0
      %v2588 = vadd.f32 0.0, %v2587
      %v2589 = vpop.f32.mrb[0].mxu0
      %2590 = vmatprep.mubr.bf16.mxu0 %v2308
      %2591 = vmatmul.mubr.bf16.gmra.mrb[0].mxu0 %v2307
      %v2592 = vpop.f32.mrb[0].mxu0
      %v2593 = vadd.f32 0.0, %v2592
      %v2594 = vpop.f32.mrb[0].mxu0
      %v2595 = vpop.f32.mrb[0].mxu0
      %v2596 = vadd.f32 0.0, %v2595
      %v2597 = vpop.f32.mrb[0].mxu0
      %2598 = vdwg.mxu0
      %2599 = vmatprep.subr.bf16.mxu0 0
      %2600 = vmatpush1.bf16.msra.mxu0 %v2470
      %2601 = vmatprep.subr.bf16.mxu0 0
      %2602 = vmatpush1.bf16.msra.mxu0 %v2471
      %2603 = vmatprep.subr.bf16.mxu0 0
      %2604 = vmatpush1.bf16.msra.mxu0 %v2472
      %2605 = vmatprep.subr.bf16.mxu0 0
      %2606 = vmatpush1.bf16.msra.mxu0 %v2473
      %2607 = vmatprep.subr.bf16.mxu0 0
      %2608 = vmatpush1.bf16.msra.mxu0 %v2474
      %2609 = vmatprep.subr.bf16.mxu0 0
      %2610 = vmatpush1.bf16.msra.mxu0 %v2475
      %2611 = vmatprep.subr.bf16.mxu0 0
      %2612 = vmatpush1.bf16.msra.mxu0 %v2476
      %2613 = vmatprep.subr.bf16.mxu0 0
      %2614 = vmatpush1.bf16.msra.mxu0 %v2477
      %2615 = vmatprep.subr.bf16.mxu0 0
      %2616 = vmatpush1.bf16.msra.mxu0 0
      %2617 = vmatprep.subr.bf16.mxu0 0
      %2618 = vmatpush1.bf16.msra.mxu0 0
      %2619 = vmatprep.subr.bf16.mxu0 0
      %2620 = vmatpush1.bf16.msra.mxu0 0
      %2621 = vmatprep.subr.bf16.mxu0 0
      %2622 = vmatpush1.bf16.msra.mxu0 0
      %2623 = vmatprep.subr.bf16.mxu0 0
      %2624 = vmatpush1.bf16.msra.mxu0 0
      %2625 = vmatprep.subr.bf16.mxu0 0
      %2626 = vmatpush1.bf16.msra.mxu0 0
      %2627 = vmatprep.subr.bf16.mxu0 0
      %2628 = vmatpush1.bf16.msra.mxu0 0
      %2629 = vmatprep.subr.bf16.mxu0 0
      %2630 = vmatpush1.bf16.msra.mxu0 0
      %2631 = vmatprep.mubr.bf16.mxu0 0
      %2632 = vmatmul.mubr.bf16.gmra.mrb[0].mxu0 %v2240
      %v2633 = vpop.f32.mrb[0].mxu0
      %v2634 = vadd.f32 %v2537, %v2633
      %v2635 = vpop.f32.mrb[0].mxu0
      %v2636 = vpop.f32.mrb[0].mxu0
      %v2637 = vadd.f32 %v2540, %v2636
      %v2638 = vpop.f32.mrb[0].mxu0
      %2639 = vmatprep.mubr.bf16.mxu0 0
      %2640 = vmatmul.mubr.bf16.gmra.mrb[0].mxu0 %v2243
      %v2641 = vpop.f32.mrb[0].mxu0
      %v2642 = vadd.f32 %v2545, %v2641
      %v2643 = vpop.f32.mrb[0].mxu0
      %v2644 = vpop.f32.mrb[0].mxu0
      %v2645 = vadd.f32 %v2548, %v2644
      %v2646 = vpop.f32.mrb[0].mxu0
      %2647 = vmatprep.mubr.bf16.mxu0 0
      %2648 = vmatmul.mubr.bf16.gmra.mrb[0].mxu0 %v2246
      %v2649 = vpop.f32.mrb[0].mxu0
      %v2650 = vadd.f32 %v2553, %v2649
      %v2651 = vpop.f32.mrb[0].mxu0
      %v2652 = vpop.f32.mrb[0].mxu0
      %v2653 = vadd.f32 %v2556, %v2652
      %v2654 = vpop.f32.mrb[0].mxu0
      %2655 = vmatprep.mubr.bf16.mxu0 0
      %2656 = vmatmul.mubr.bf16.gmra.mrb[0].mxu0 %v2249
      %v2657 = vpop.f32.mrb[0].mxu0
      %v2658 = vadd.f32 %v2561, %v2657
      %v2659 = vpop.f32.mrb[0].mxu0
      %v2660 = vpop.f32.mrb[0].mxu0
      %v2661 = vadd.f32 %v2564, %v2660
      %v2662 = vpop.f32.mrb[0].mxu0
      %2663 = vmatprep.mubr.bf16.mxu0 0
      %2664 = vmatmul.mubr.bf16.gmra.mrb[0].mxu0 %v2252
      %v2665 = vpop.f32.mrb[0].mxu0
      %v2666 = vadd.f32 %v2569, %v2665
      %v2667 = vpop.f32.mrb[0].mxu0
      %v2668 = vpop.f32.mrb[0].mxu0
      %v2669 = vadd.f32 %v2572, %v2668
      %v2670 = vpop.f32.mrb[0].mxu0
      %2671 = vmatprep.mubr.bf16.mxu0 0
      %2672 = vmatmul.mubr.bf16.gmra.mrb[0].mxu0 %v2255
      %v2673 = vpop.f32.mrb[0].mxu0
      %v2674 = vadd.f32 %v2577, %v2673
      %v2675 = vpop.f32.mrb[0].mxu0
      %v2676 = vpop.f32.mrb[0].mxu0
      %v2677 = vadd.f32 %v2580, %v2676
      %v2678 = vpop.f32.mrb[0].mxu0
      %2679 = vmatprep.mubr.bf16.mxu0 0
      %2680 = vmatmul.mubr.bf16.gmra.mrb[0].mxu0 %v2258
      %v2681 = vpop.f32.mrb[0].mxu0
      %v2682 = vadd.f32 %v2585, %v2681
      %v2683 = vpop.f32.mrb[0].mxu0
      %v2684 = vpop.f32.mrb[0].mxu0
      %v2685 = vadd.f32 %v2588, %v2684
      %v2686 = vpop.f32.mrb[0].mxu0
      %2687 = vmatprep.mubr.bf16.mxu0 0
      %2688 = vmatmul.mubr.bf16.gmra.mrb[0].mxu0 %v2309
      %v2689 = vpop.f32.mrb[0].mxu0
      %v2690 = vadd.f32 %v2593, %v2689
      %v2691 = vpop.f32.mrb[0].mxu0
      %v2692 = vpop.f32.mrb[0].mxu0
      %v2693 = vadd.f32 %v2596, %v2692
      %v2694 = vpop.f32.mrb[0].mxu0
      %2695 = vdwg.mxu0
      %v2744 = vunpack.c.l.b16 %v2259
      %v2745 = vunpack.c.l.b16 %v2260
      %v2746 = vunpack.c.l.b16 %v2261
      %v2747 = vunpack.c.l.b16 %v2262
      %v2748 = vunpack.c.l.b16 %v2263
      %v2749 = vunpack.c.l.b16 %v2264
      %v2750 = vunpack.c.l.b16 %v2265
      %v2751 = vunpack.c.l.b16 %v2266
      %v2752 = vunpack.c.l.b16 %v2267
      %v2753 = vunpack.c.l.b16 %v2268
      %v2754 = vunpack.c.l.b16 %v2269
      %v2755 = vunpack.c.l.b16 %v2270
      %v2756 = vunpack.c.l.b16 %v2271
      %v2757 = vunpack.c.l.b16 %v2272
      %v2758 = vunpack.c.l.b16 %v2273
      %v2759 = vunpack.c.l.b16 %v2274
      %v2760 = vunpack.c.l.b16 %v2275
      %v2761 = vunpack.c.l.b16 %v2276
      %v2762 = vunpack.c.l.b16 %v2277
      %v2763 = vunpack.c.l.b16 %v2278
      %v2764 = vunpack.c.l.b16 %v2279
      %v2765 = vunpack.c.l.b16 %v2280
      %v2766 = vunpack.c.l.b16 %v2281
      %v2767 = vunpack.c.l.b16 %v2282
      %v2768 = vunpack.c.l.b16 %v2283
      %v2769 = vunpack.c.l.b16 %v2284
      %v2770 = vunpack.c.l.b16 %v2285
      %v2771 = vunpack.c.l.b16 %v2286
      %v2772 = vunpack.c.l.b16 %v2287
      %v2773 = vunpack.c.l.b16 %v2288
      %v2774 = vunpack.c.l.b16 %v2289
      %v2775 = vunpack.c.l.b16 %v2290
      %v2776 = vunpack.c.l.b16 %v2291
      %v2777 = vunpack.c.l.b16 %v2292
      %v2778 = vunpack.c.l.b16 %v2293
      %v2779 = vunpack.c.l.b16 %v2294
      %v2780 = vunpack.c.l.b16 %v2295
      %v2781 = vunpack.c.l.b16 %v2296
      %v2782 = vunpack.c.l.b16 %v2297
      %v2783 = vunpack.c.l.b16 %v2298
      %v2784 = vunpack.c.l.b16 %v2299
      %v2785 = vunpack.c.l.b16 %v2300
      %v2786 = vunpack.c.l.b16 %v2301
      %v2787 = vunpack.c.l.b16 %v2302
      %v2788 = vunpack.c.l.b16 %v2303
      %v2789 = vunpack.c.l.b16 %v2304
      %v2790 = vunpack.c.l.b16 %v2305
      %v2791 = vunpack.c.l.b16 %v2306
      %v2792 = vpack.c.b16 %v2745, %v2744
      %v2793 = vpack.c.b16 %v2747, %v2746
      %v2794 = vpack.c.b16 %v2749, %v2748
      %v2795 = vpack.c.b16 %v2751, %v2750
      %v2796 = vpack.c.b16 %v2753, %v2752
      %v2797 = vpack.c.b16 %v2755, %v2754
      %v2798 = vpack.c.b16 %v2757, %v2756
      %v2799 = vpack.c.b16 %v2759, %v2758
      %v2800 = vpack.c.b16 %v2761, %v2760
      %v2801 = vpack.c.b16 %v2763, %v2762
      %v2802 = vpack.c.b16 %v2765, %v2764
      %v2803 = vpack.c.b16 %v2767, %v2766
      %v2804 = vpack.c.b16 %v2769, %v2768
      %v2805 = vpack.c.b16 %v2771, %v2770
      %v2806 = vpack.c.b16 %v2773, %v2772
      %v2807 = vpack.c.b16 %v2775, %v2774
      %v2808 = vpack.c.b16 %v2777, %v2776
      %v2809 = vpack.c.b16 %v2779, %v2778
      %v2810 = vpack.c.b16 %v2781, %v2780
      %v2811 = vpack.c.b16 %v2783, %v2782
      %v2812 = vpack.c.b16 %v2785, %v2784
      %v2813 = vpack.c.b16 %v2787, %v2786
      %v2814 = vpack.c.b16 %v2789, %v2788
      %v2815 = vpack.c.b16 %v2791, %v2790
      %2840 = vmatprep.subr.bf16.mxu0 0
      %2841 = vmatpush1.bf16.msra.mxu0 %v2792
      %2842 = vmatprep.subr.bf16.mxu0 0
      %2843 = vmatpush1.bf16.msra.mxu0 %v2793
      %2844 = vmatprep.subr.bf16.mxu0 0
      %2845 = vmatpush1.bf16.msra.mxu0 %v2794
      %2846 = vmatprep.subr.bf16.mxu0 0
      %2847 = vmatpush1.bf16.msra.mxu0 %v2795
      %2848 = vmatprep.subr.bf16.mxu0 0
      %2849 = vmatpush1.bf16.msra.mxu0 %v2796
      %2850 = vmatprep.subr.bf16.mxu0 0
      %2851 = vmatpush1.bf16.msra.mxu0 %v2797
      %2852 = vmatprep.subr.bf16.mxu0 0
      %2853 = vmatpush1.bf16.msra.mxu0 %v2798
      %2854 = vmatprep.subr.bf16.mxu0 0
      %2855 = vmatpush1.bf16.msra.mxu0 %v2799
      %2856 = vmatprep.subr.bf16.mxu0 0
      %2857 = vmatpush1.bf16.msra.mxu0 %v2800
      %2858 = vmatprep.subr.bf16.mxu0 0
      %2859 = vmatpush1.bf16.msra.mxu0 %v2801
      %2860 = vmatprep.subr.bf16.mxu0 0
      %2861 = vmatpush1.bf16.msra.mxu0 %v2802
      %2862 = vmatprep.subr.bf16.mxu0 0
      %2863 = vmatpush1.bf16.msra.mxu0 %v2803
      %2864 = vmatprep.subr.bf16.mxu0 0
      %2865 = vmatpush1.bf16.msra.mxu0 %v2804
      %2866 = vmatprep.subr.bf16.mxu0 0
      %2867 = vmatpush1.bf16.msra.mxu0 %v2805
      %2868 = vmatprep.subr.bf16.mxu0 0
      %2869 = vmatpush1.bf16.msra.mxu0 %v2806
      %2870 = vmatprep.subr.bf16.mxu0 0
      %2871 = vmatpush1.bf16.msra.mxu0 %v2807
      %2872 = vmatprep.mubr.bf16.mxu0 %v2236
      %2873 = vmatmul.mubr.bf16.gmra.mrb[0].mxu0 %v2235
      %v2874 = vpop.f32.mrb[0].mxu0
      %v2875 = vadd.f32 %v2634, %v2874
      %v2876 = vpop.f32.mrb[0].mxu0
      %v2877 = vpop.f32.mrb[0].mxu0
      %v2878 = vadd.f32 %v2637, %v2877
      %v2879 = vpop.f32.mrb[0].mxu0
      %2880 = vmatprep.mubr.bf16.mxu0 %v2239
      %2881 = vmatmul.mubr.bf16.gmra.mrb[0].mxu0 %v2238
      %v2882 = vpop.f32.mrb[0].mxu0
      %v2883 = vadd.f32 %v2642, %v2882
      %v2884 = vpop.f32.mrb[0].mxu0
      %v2885 = vpop.f32.mrb[0].mxu0
      %v2886 = vadd.f32 %v2645, %v2885
      %v2887 = vpop.f32.mrb[0].mxu0
      %2888 = vmatprep.mubr.bf16.mxu0 %v2242
      %2889 = vmatmul.mubr.bf16.gmra.mrb[0].mxu0 %v2241
      %v2890 = vpop.f32.mrb[0].mxu0
      %v2891 = vadd.f32 %v2650, %v2890
      %v2892 = vpop.f32.mrb[0].mxu0
      %v2893 = vpop.f32.mrb[0].mxu0
      %v2894 = vadd.f32 %v2653, %v2893
      %v2895 = vpop.f32.mrb[0].mxu0
      %2896 = vmatprep.mubr.bf16.mxu0 %v2245
      %2897 = vmatmul.mubr.bf16.gmra.mrb[0].mxu0 %v2244
      %v2898 = vpop.f32.mrb[0].mxu0
      %v2899 = vadd.f32 %v2658, %v2898
      %v2900 = vpop.f32.mrb[0].mxu0
      %v2901 = vpop.f32.mrb[0].mxu0
      %v2902 = vadd.f32 %v2661, %v2901
      %v2903 = vpop.f32.mrb[0].mxu0
      %2904 = vmatprep.mubr.bf16.mxu0 %v2248
      %2905 = vmatmul.mubr.bf16.gmra.mrb[0].mxu0 %v2247
      %v2906 = vpop.f32.mrb[0].mxu0
      %v2907 = vadd.f32 %v2666, %v2906
      %v2908 = vpop.f32.mrb[0].mxu0
      %v2909 = vpop.f32.mrb[0].mxu0
      %v2910 = vadd.f32 %v2669, %v2909
      %v2911 = vpop.f32.mrb[0].mxu0
      %2912 = vmatprep.mubr.bf16.mxu0 %v2251
      %2913 = vmatmul.mubr.bf16.gmra.mrb[0].mxu0 %v2250
      %v2914 = vpop.f32.mrb[0].mxu0
      %v2915 = vadd.f32 %v2674, %v2914
      %v2916 = vpop.f32.mrb[0].mxu0
      %v2917 = vpop.f32.mrb[0].mxu0
      %v2918 = vadd.f32 %v2677, %v2917
      %v2919 = vpop.f32.mrb[0].mxu0
      %2920 = vmatprep.mubr.bf16.mxu0 %v2254
      %2921 = vmatmul.mubr.bf16.gmra.mrb[0].mxu0 %v2253
      %v2922 = vpop.f32.mrb[0].mxu0
      %v2923 = vadd.f32 %v2682, %v2922
      %v2924 = vpop.f32.mrb[0].mxu0
      %v2925 = vpop.f32.mrb[0].mxu0
      %v2926 = vadd.f32 %v2685, %v2925
      %v2927 = vpop.f32.mrb[0].mxu0
      %2928 = vmatprep.mubr.bf16.mxu0 %v2257
      %2929 = vmatmul.mubr.bf16.gmra.mrb[0].mxu0 %v2256
      %v2930 = vpop.f32.mrb[0].mxu0
      %v2931 = vadd.f32 %v2690, %v2930
      %v2932 = vpop.f32.mrb[0].mxu0
      %v2933 = vpop.f32.mrb[0].mxu0
      %v2934 = vadd.f32 %v2693, %v2933
      %v2935 = vpop.f32.mrb[0].mxu0
      %2936 = vdwg.mxu0
      %2937 = vmatprep.subr.bf16.mxu0 0
      %2938 = vmatpush1.bf16.msra.mxu0 %v2808
      %2939 = vmatprep.subr.bf16.mxu0 0
      %2940 = vmatpush1.bf16.msra.mxu0 %v2809
      %2941 = vmatprep.subr.bf16.mxu0 0
      %2942 = vmatpush1.bf16.msra.mxu0 %v2810
      %2943 = vmatprep.subr.bf16.mxu0 0
      %2944 = vmatpush1.bf16.msra.mxu0 %v2811
      %2945 = vmatprep.subr.bf16.mxu0 0
      %2946 = vmatpush1.bf16.msra.mxu0 %v2812
      %2947 = vmatprep.subr.bf16.mxu0 0
      %2948 = vmatpush1.bf16.msra.mxu0 %v2813
      %2949 = vmatprep.subr.bf16.mxu0 0
      %2950 = vmatpush1.bf16.msra.mxu0 %v2814
      %2951 = vmatprep.subr.bf16.mxu0 0
      %2952 = vmatpush1.bf16.msra.mxu0 %v2815
      %2953 = vmatprep.subr.bf16.mxu0 0
      %2954 = vmatpush1.bf16.msra.mxu0 0
      %2955 = vmatprep.subr.bf16.mxu0 0
      %2956 = vmatpush1.bf16.msra.mxu0 0
      %2957 = vmatprep.subr.bf16.mxu0 0
      %2958 = vmatpush1.bf16.msra.mxu0 0
      %2959 = vmatprep.subr.bf16.mxu0 0
      %2960 = vmatpush1.bf16.msra.mxu0 0
      %2961 = vmatprep.subr.bf16.mxu0 0
      %2962 = vmatpush1.bf16.msra.mxu0 0
      %2963 = vmatprep.subr.bf16.mxu0 0
      %2964 = vmatpush1.bf16.msra.mxu0 0
      %2965 = vmatprep.subr.bf16.mxu0 0
      %2966 = vmatpush1.bf16.msra.mxu0 0
      %2967 = vmatprep.subr.bf16.mxu0 0
      %2968 = vmatpush1.bf16.msra.mxu0 0
      %2969 = vmatprep.mubr.bf16.mxu0 0
      %2970 = vmatmul.mubr.bf16.gmra.mrb[0].mxu0 %v2237
      %v2971 = vpop.f32.mrb[0].mxu0
      %v2972 = vadd.f32 %v2875, %v2971
      %v2973 = vpop.f32.mrb[0].mxu0
      %v2974 = vpop.f32.mrb[0].mxu0
      %v2975 = vadd.f32 %v2878, %v2974
      %v2976 = vpop.f32.mrb[0].mxu0
      %2977 = vmatprep.mubr.bf16.mxu0 0
      %2978 = vmatmul.mubr.bf16.gmra.mrb[0].mxu0 %v2240
      %v2979 = vpop.f32.mrb[0].mxu0
      %v2980 = vadd.f32 %v2883, %v2979
      %v2981 = vpop.f32.mrb[0].mxu0
      %v2982 = vpop.f32.mrb[0].mxu0
      %v2983 = vadd.f32 %v2886, %v2982
      %v2984 = vpop.f32.mrb[0].mxu0
      %2985 = vmatprep.mubr.bf16.mxu0 0
      %2986 = vmatmul.mubr.bf16.gmra.mrb[0].mxu0 %v2243
      %v2987 = vpop.f32.mrb[0].mxu0
      %v2988 = vadd.f32 %v2891, %v2987
      %v2989 = vpop.f32.mrb[0].mxu0
      %v2990 = vpop.f32.mrb[0].mxu0
      %v2991 = vadd.f32 %v2894, %v2990
      %v2992 = vpop.f32.mrb[0].mxu0
      %2993 = vmatprep.mubr.bf16.mxu0 0
      %2994 = vmatmul.mubr.bf16.gmra.mrb[0].mxu0 %v2246
      %v2995 = vpop.f32.mrb[0].mxu0
      %v2996 = vadd.f32 %v2899, %v2995
      %v2997 = vpop.f32.mrb[0].mxu0
      %v2998 = vpop.f32.mrb[0].mxu0
      %v2999 = vadd.f32 %v2902, %v2998
      %v3000 = vpop.f32.mrb[0].mxu0
      %3001 = vmatprep.mubr.bf16.mxu0 0
      %3002 = vmatmul.mubr.bf16.gmra.mrb[0].mxu0 %v2249
      %v3003 = vpop.f32.mrb[0].mxu0
      %v3004 = vadd.f32 %v2907, %v3003
      %v3005 = vpop.f32.mrb[0].mxu0
      %v3006 = vpop.f32.mrb[0].mxu0
      %v3007 = vadd.f32 %v2910, %v3006
      %v3008 = vpop.f32.mrb[0].mxu0
      %3009 = vmatprep.mubr.bf16.mxu0 0
      %3010 = vmatmul.mubr.bf16.gmra.mrb[0].mxu0 %v2252
      %v3011 = vpop.f32.mrb[0].mxu0
      %v3012 = vadd.f32 %v2915, %v3011
      %v3013 = vpop.f32.mrb[0].mxu0
      %v3014 = vpop.f32.mrb[0].mxu0
      %v3015 = vadd.f32 %v2918, %v3014
      %v3016 = vpop.f32.mrb[0].mxu0
      %3017 = vmatprep.mubr.bf16.mxu0 0
      %3018 = vmatmul.mubr.bf16.gmra.mrb[0].mxu0 %v2255
      %v3019 = vpop.f32.mrb[0].mxu0
      %v3020 = vadd.f32 %v2923, %v3019
      %v3021 = vpop.f32.mrb[0].mxu0
      %v3022 = vpop.f32.mrb[0].mxu0
      %v3023 = vadd.f32 %v2926, %v3022
      %v3024 = vpop.f32.mrb[0].mxu0
      %3025 = vmatprep.mubr.bf16.mxu0 0
      %3026 = vmatmul.mubr.bf16.gmra.mrb[0].mxu0 %v2258
      %v3027 = vpop.f32.mrb[0].mxu0
      %v3028 = vadd.f32 %v2931, %v3027
      %v3029 = vpop.f32.mrb[0].mxu0
      %v3030 = vpop.f32.mrb[0].mxu0
      %v3031 = vadd.f32 %v2934, %v3030
      %v3032 = vpop.f32.mrb[0].mxu0
      %3033 = vdwg.mxu0
      %v3034 = vld [vmem:[#allocation2 + $0xf0] sm:$0xff]
      %v3035 = vld [vmem:[#allocation2 + $0xf8] sm:$0xff]
      %v3036 = vld [vmem:[#allocation2 + $0x100] sm:$0xff]
      %v3037 = vld [vmem:[#allocation2 + $0x108] sm:$0xff]
      %v3038 = vld [vmem:[#allocation2 + $0x110] sm:$0xff]
      %v3039 = vld [vmem:[#allocation2 + $0x118] sm:$0xff]
      %v3040 = vld [vmem:[#allocation2 + $0x120] sm:$0xff]
      %v3041 = vld [vmem:[#allocation2 + $0x128] sm:$0xff]
      %v3042 = vld [vmem:[#allocation2 + $0x130] sm:$0xff]
      %v3043 = vld [vmem:[#allocation2 + $0x138] sm:$0xff]
      %v3044 = vld [vmem:[#allocation2 + $0x140] sm:$0xff]
      %v3045 = vld [vmem:[#allocation2 + $0x148] sm:$0xff]
      %v3046 = vld [vmem:[#allocation2 + $0x150] sm:$0xff]
      %v3047 = vld [vmem:[#allocation2 + $0x158] sm:$0xff]
      %v3048 = vld [vmem:[#allocation2 + $0x160] sm:$0xff]
      %v3049 = vld [vmem:[#allocation2 + $0x168] sm:$0xff]
      %v3050 = vld [vmem:[#allocation2 + $0x170] sm:$0xff]
      %v3051 = vld [vmem:[#allocation2 + $0x178] sm:$0xff]
      %v3052 = vld [vmem:[#allocation2 + $0x180] sm:$0xff]
      %v3053 = vld [vmem:[#allocation2 + $0x188] sm:$0xff]
      %v3054 = vld [vmem:[#allocation2 + $0x190] sm:$0xff]
      %v3055 = vld [vmem:[#allocation2 + $0x198] sm:$0xff]
      %v3056 = vld [vmem:[#allocation2 + $0x1a0] sm:$0xff]
      %v3057 = vld [vmem:[#allocation2 + $0x1a8] sm:$0xff]
      %v3058 = vld [vmem:[%s1756] sm:$0xf]
      %v3059 = vld [vmem:[%s1756 + $0x4] sm:$0xf]
      %v3060 = vld [vmem:[%s1756 + $0x8] sm:$0xf]
      %v3061 = vld [vmem:[%s1756 + $0xc] sm:$0xf]
      %v3062 = vld [vmem:[%s1756 + $0x10] sm:$0xf]
      %v3063 = vld [vmem:[%s1756 + $0x14] sm:$0xf]
      %v3064 = vld [vmem:[%s1756 + $0x18] sm:$0xf]
      %v3065 = vld [vmem:[%s1756 + $0x1c] sm:$0xf]
      %v3066 = vld [vmem:[%s1756 + $0x20] sm:$0xf]
      %v3067 = vld [vmem:[%s1756 + $0x24] sm:$0xf]
      %v3068 = vld [vmem:[%s1756 + $0x28] sm:$0xf]
      %v3069 = vld [vmem:[%s1756 + $0x2c] sm:$0xf]
      %v3070 = vld [vmem:[%s1756 + $0x30] sm:$0xf]
      %v3071 = vld [vmem:[%s1756 + $0x34] sm:$0xf]
      %v3072 = vld [vmem:[%s1756 + $0x38] sm:$0xf]
      %v3073 = vld [vmem:[%s1756 + $0x3c] sm:$0xf]
      %v3074 = vld [vmem:[%s1756 + $0x40] sm:$0xf]
      %v3075 = vld [vmem:[%s1756 + $0x44] sm:$0xf]
      %v3076 = vld [vmem:[%s1756 + $0x48] sm:$0xf]
      %v3077 = vld [vmem:[%s1756 + $0x4c] sm:$0xf]
      %v3078 = vld [vmem:[%s1756 + $0x50] sm:$0xf]
      %v3079 = vld [vmem:[%s1756 + $0x54] sm:$0xf]
      %v3080 = vld [vmem:[%s1756 + $0x58] sm:$0xf]
      %v3081 = vld [vmem:[%s1756 + $0x5c] sm:$0xf]
      %v3082 = vld [vmem:[%s1756 + $0x60] sm:$0xf]
      %v3083 = vld [vmem:[%s1756 + $0x64] sm:$0xf]
      %v3084 = vld [vmem:[%s1756 + $0x68] sm:$0xf]
      %v3085 = vld [vmem:[%s1756 + $0x6c] sm:$0xf]
      %v3086 = vld [vmem:[%s1756 + $0x70] sm:$0xf]
      %v3087 = vld [vmem:[%s1756 + $0x74] sm:$0xf]
      %v3088 = vld [vmem:[%s1756 + $0x78] sm:$0xf]
      %v3089 = vld [vmem:[%s1756 + $0x7c] sm:$0xf]
      %v3090 = vld [vmem:[%s1756 + $0x80] sm:$0xf]
      %v3091 = vld [vmem:[%s1756 + $0x84] sm:$0xf]
      %v3092 = vld [vmem:[%s1756 + $0x88] sm:$0xf]
      %v3093 = vld [vmem:[%s1756 + $0x8c] sm:$0xf]
      %v3094 = vld [vmem:[%s1756 + $0x90] sm:$0xf]
      %v3095 = vld [vmem:[%s1756 + $0x94] sm:$0xf]
      %v3096 = vld [vmem:[%s1756 + $0x98] sm:$0xf]
      %v3097 = vld [vmem:[%s1756 + $0x9c] sm:$0xf]
      %v3098 = vld [vmem:[%s1756 + $0xa0] sm:$0xf]
      %v3099 = vld [vmem:[%s1756 + $0xa4] sm:$0xf]
      %v3100 = vld [vmem:[%s1756 + $0xa8] sm:$0xf]
      %v3101 = vld [vmem:[%s1756 + $0xac] sm:$0xf]
      %v3102 = vld [vmem:[%s1756 + $0xb0] sm:$0xf]
      %v3103 = vld [vmem:[%s1756 + $0xb4] sm:$0xf]
      %v3104 = vld [vmem:[%s1756 + $0xb8] sm:$0xf]
      %v3105 = vld [vmem:[%s1756 + $0xbc] sm:$0xf]
      %v3154 = vunpack.c.l.b16 %v3058
      %v3155 = vunpack.c.l.b16 %v3059
      %v3156 = vunpack.c.l.b16 %v3060
      %v3157 = vunpack.c.l.b16 %v3061
      %v3158 = vunpack.c.l.b16 %v3062
      %v3159 = vunpack.c.l.b16 %v3063
      %v3160 = vunpack.c.l.b16 %v3064
      %v3161 = vunpack.c.l.b16 %v3065
      %v3162 = vunpack.c.l.b16 %v3066
      %v3163 = vunpack.c.l.b16 %v3067
      %v3164 = vunpack.c.l.b16 %v3068
      %v3165 = vunpack.c.l.b16 %v3069
      %v3166 = vunpack.c.l.b16 %v3070
      %v3167 = vunpack.c.l.b16 %v3071
      %v3168 = vunpack.c.l.b16 %v3072
      %v3169 = vunpack.c.l.b16 %v3073
      %v3170 = vunpack.c.l.b16 %v3074
      %v3171 = vunpack.c.l.b16 %v3075
      %v3172 = vunpack.c.l.b16 %v3076
      %v3173 = vunpack.c.l.b16 %v3077
      %v3174 = vunpack.c.l.b16 %v3078
      %v3175 = vunpack.c.l.b16 %v3079
      %v3176 = vunpack.c.l.b16 %v3080
      %v3177 = vunpack.c.l.b16 %v3081
      %v3178 = vunpack.c.l.b16 %v3082
      %v3179 = vunpack.c.l.b16 %v3083
      %v3180 = vunpack.c.l.b16 %v3084
      %v3181 = vunpack.c.l.b16 %v3085
      %v3182 = vunpack.c.l.b16 %v3086
      %v3183 = vunpack.c.l.b16 %v3087
      %v3184 = vunpack.c.l.b16 %v3088
      %v3185 = vunpack.c.l.b16 %v3089
      %v3186 = vunpack.c.l.b16 %v3090
      %v3187 = vunpack.c.l.b16 %v3091
      %v3188 = vunpack.c.l.b16 %v3092
      %v3189 = vunpack.c.l.b16 %v3093
      %v3190 = vunpack.c.l.b16 %v3094
      %v3191 = vunpack.c.l.b16 %v3095
      %v3192 = vunpack.c.l.b16 %v3096
      %v3193 = vunpack.c.l.b16 %v3097
      %v3194 = vunpack.c.l.b16 %v3098
      %v3195 = vunpack.c.l.b16 %v3099
      %v3196 = vunpack.c.l.b16 %v3100
      %v3197 = vunpack.c.l.b16 %v3101
      %v3198 = vunpack.c.l.b16 %v3102
      %v3199 = vunpack.c.l.b16 %v3103
      %v3200 = vunpack.c.l.b16 %v3104
      %v3201 = vunpack.c.l.b16 %v3105
      %v3202 = vpack.c.b16 %v3155, %v3154
      %v3203 = vpack.c.b16 %v3157, %v3156
      %v3204 = vpack.c.b16 %v3159, %v3158
      %v3205 = vpack.c.b16 %v3161, %v3160
      %v3206 = vpack.c.b16 %v3163, %v3162
      %v3207 = vpack.c.b16 %v3165, %v3164
      %v3208 = vpack.c.b16 %v3167, %v3166
      %v3209 = vpack.c.b16 %v3169, %v3168
      %v3210 = vpack.c.b16 %v3171, %v3170
      %v3211 = vpack.c.b16 %v3173, %v3172
      %v3212 = vpack.c.b16 %v3175, %v3174
      %v3213 = vpack.c.b16 %v3177, %v3176
      %v3214 = vpack.c.b16 %v3179, %v3178
      %v3215 = vpack.c.b16 %v3181, %v3180
      %v3216 = vpack.c.b16 %v3183, %v3182
      %v3217 = vpack.c.b16 %v3185, %v3184
      %v3218 = vpack.c.b16 %v3187, %v3186
      %v3219 = vpack.c.b16 %v3189, %v3188
      %v3220 = vpack.c.b16 %v3191, %v3190
      %v3221 = vpack.c.b16 %v3193, %v3192
      %v3222 = vpack.c.b16 %v3195, %v3194
      %v3223 = vpack.c.b16 %v3197, %v3196
      %v3224 = vpack.c.b16 %v3199, %v3198
      %v3225 = vpack.c.b16 %v3201, %v3200
      %3250 = vmatprep.subr.bf16.mxu0 0
      %3251 = vmatpush1.bf16.msra.mxu0 %v3202
      %3252 = vmatprep.subr.bf16.mxu0 0
      %3253 = vmatpush1.bf16.msra.mxu0 %v3203
      %3254 = vmatprep.subr.bf16.mxu0 0
      %3255 = vmatpush1.bf16.msra.mxu0 %v3204
      %3256 = vmatprep.subr.bf16.mxu0 0
      %3257 = vmatpush1.bf16.msra.mxu0 %v3205
      %3258 = vmatprep.subr.bf16.mxu0 0
      %3259 = vmatpush1.bf16.msra.mxu0 %v3206
      %3260 = vmatprep.subr.bf16.mxu0 0
      %3261 = vmatpush1.bf16.msra.mxu0 %v3207
      %3262 = vmatprep.subr.bf16.mxu0 0
      %3263 = vmatpush1.bf16.msra.mxu0 %v3208
      %3264 = vmatprep.subr.bf16.mxu0 0
      %3265 = vmatpush1.bf16.msra.mxu0 %v3209
      %3266 = vmatprep.subr.bf16.mxu0 0
      %3267 = vmatpush1.bf16.msra.mxu0 %v3210
      %3268 = vmatprep.subr.bf16.mxu0 0
      %3269 = vmatpush1.bf16.msra.mxu0 %v3211
      %3270 = vmatprep.subr.bf16.mxu0 0
      %3271 = vmatpush1.bf16.msra.mxu0 %v3212
      %3272 = vmatprep.subr.bf16.mxu0 0
      %3273 = vmatpush1.bf16.msra.mxu0 %v3213
      %3274 = vmatprep.subr.bf16.mxu0 0
      %3275 = vmatpush1.bf16.msra.mxu0 %v3214
      %3276 = vmatprep.subr.bf16.mxu0 0
      %3277 = vmatpush1.bf16.msra.mxu0 %v3215
      %3278 = vmatprep.subr.bf16.mxu0 0
      %3279 = vmatpush1.bf16.msra.mxu0 %v3216
      %3280 = vmatprep.subr.bf16.mxu0 0
      %3281 = vmatpush1.bf16.msra.mxu0 %v3217
      %3282 = vmatprep.mubr.bf16.mxu0 %v3035
      %3283 = vmatmul.mubr.bf16.gmra.mrb[0].mxu0 %v3034
      %v3284 = vpop.f32.mrb[0].mxu0
      %v3285 = vadd.f32 0.0, %v3284
      %v3286 = vpop.f32.mrb[0].mxu0
      %v3287 = vpop.f32.mrb[0].mxu0
      %v3288 = vadd.f32 0.0, %v3287
      %v3289 = vpop.f32.mrb[0].mxu0
      %3290 = vmatprep.mubr.bf16.mxu0 %v3038
      %3291 = vmatmul.mubr.bf16.gmra.mrb[0].mxu0 %v3037
      %v3292 = vpop.f32.mrb[0].mxu0
      %v3293 = vadd.f32 0.0, %v3292
      %v3294 = vpop.f32.mrb[0].mxu0
      %v3295 = vpop.f32.mrb[0].mxu0
      %v3296 = vadd.f32 0.0, %v3295
      %v3297 = vpop.f32.mrb[0].mxu0
      %3298 = vmatprep.mubr.bf16.mxu0 %v3041
      %3299 = vmatmul.mubr.bf16.gmra.mrb[0].mxu0 %v3040
      %v3300 = vpop.f32.mrb[0].mxu0
      %v3301 = vadd.f32 0.0, %v3300
      %v3302 = vpop.f32.mrb[0].mxu0
      %v3303 = vpop.f32.mrb[0].mxu0
      %v3304 = vadd.f32 0.0, %v3303
      %v3305 = vpop.f32.mrb[0].mxu0
      %3306 = vmatprep.mubr.bf16.mxu0 %v3044
      %3307 = vmatmul.mubr.bf16.gmra.mrb[0].mxu0 %v3043
      %v3308 = vpop.f32.mrb[0].mxu0
      %v3309 = vadd.f32 0.0, %v3308
      %v3310 = vpop.f32.mrb[0].mxu0
      %v3311 = vpop.f32.mrb[0].mxu0
      %v3312 = vadd.f32 0.0, %v3311
      %v3313 = vpop.f32.mrb[0].mxu0
      %3314 = vmatprep.mubr.bf16.mxu0 %v3047
      %3315 = vmatmul.mubr.bf16.gmra.mrb[0].mxu0 %v3046
      %v3316 = vpop.f32.mrb[0].mxu0
      %v3317 = vadd.f32 0.0, %v3316
      %v3318 = vpop.f32.mrb[0].mxu0
      %v3319 = vpop.f32.mrb[0].mxu0
      %v3320 = vadd.f32 0.0, %v3319
      %v3321 = vpop.f32.mrb[0].mxu0
      %3322 = vmatprep.mubr.bf16.mxu0 %v3050
      %3323 = vmatmul.mubr.bf16.gmra.mrb[0].mxu0 %v3049
      %v3324 = vpop.f32.mrb[0].mxu0
      %v3325 = vadd.f32 0.0, %v3324
      %v3326 = vpop.f32.mrb[0].mxu0
      %v3327 = vpop.f32.mrb[0].mxu0
      %v3328 = vadd.f32 0.0, %v3327
      %v3329 = vpop.f32.mrb[0].mxu0
      %3330 = vmatprep.mubr.bf16.mxu0 %v3053
      %3331 = vmatmul.mubr.bf16.gmra.mrb[0].mxu0 %v3052
      %v3332 = vpop.f32.mrb[0].mxu0
      %v3333 = vadd.f32 0.0, %v3332
      %v3334 = vpop.f32.mrb[0].mxu0
      %v3335 = vpop.f32.mrb[0].mxu0
      %v3336 = vadd.f32 0.0, %v3335
      %v3337 = vpop.f32.mrb[0].mxu0
      %3338 = vmatprep.mubr.bf16.mxu0 %v3056
      %3339 = vmatmul.mubr.bf16.gmra.mrb[0].mxu0 %v3055
      %v3340 = vpop.f32.mrb[0].mxu0
      %v3341 = vadd.f32 0.0, %v3340
      %v3342 = vpop.f32.mrb[0].mxu0
      %v3343 = vpop.f32.mrb[0].mxu0
      %v3344 = vadd.f32 0.0, %v3343
      %v3345 = vpop.f32.mrb[0].mxu0
      %3346 = vdwg.mxu0
      %3347 = vmatprep.subr.bf16.mxu0 0
      %3348 = vmatpush1.bf16.msra.mxu0 %v3218
      %3349 = vmatprep.subr.bf16.mxu0 0
      %3350 = vmatpush1.bf16.msra.mxu0 %v3219
      %3351 = vmatprep.subr.bf16.mxu0 0
      %3352 = vmatpush1.bf16.msra.mxu0 %v3220
      %3353 = vmatprep.subr.bf16.mxu0 0
      %3354 = vmatpush1.bf16.msra.mxu0 %v3221
      %3355 = vmatprep.subr.bf16.mxu0 0
      %3356 = vmatpush1.bf16.msra.mxu0 %v3222
      %3357 = vmatprep.subr.bf16.mxu0 0
      %3358 = vmatpush1.bf16.msra.mxu0 %v3223
      %3359 = vmatprep.subr.bf16.mxu0 0
      %3360 = vmatpush1.bf16.msra.mxu0 %v3224
      %3361 = vmatprep.subr.bf16.mxu0 0
      %3362 = vmatpush1.bf16.msra.mxu0 %v3225
      %3363 = vmatprep.subr.bf16.mxu0 0
      %3364 = vmatpush1.bf16.msra.mxu0 0
      %3365 = vmatprep.subr.bf16.mxu0 0
      %3366 = vmatpush1.bf16.msra.mxu0 0
      %3367 = vmatprep.subr.bf16.mxu0 0
      %3368 = vmatpush1.bf16.msra.mxu0 0
      %3369 = vmatprep.subr.bf16.mxu0 0
      %3370 = vmatpush1.bf16.msra.mxu0 0
      %3371 = vmatprep.subr.bf16.mxu0 0
      %3372 = vmatpush1.bf16.msra.mxu0 0
      %3373 = vmatprep.subr.bf16.mxu0 0
      %3374 = vmatpush1.bf16.msra.mxu0 0
      %3375 = vmatprep.subr.bf16.mxu0 0
      %3376 = vmatpush1.bf16.msra.mxu0 0
      %3377 = vmatprep.subr.bf16.mxu0 0
      %3378 = vmatpush1.bf16.msra.mxu0 0
      %3379 = vmatprep.mubr.bf16.mxu0 0
      %3380 = vmatmul.mubr.bf16.gmra.mrb[0].mxu0 %v3036
      %v3381 = vpop.f32.mrb[0].mxu0
      %v3382 = vadd.f32 %v3285, %v3381
      %v3383 = vpop.f32.mrb[0].mxu0
      %v3384 = vpop.f32.mrb[0].mxu0
      %v3385 = vadd.f32 %v3288, %v3384
      %v3386 = vpop.f32.mrb[0].mxu0
      %3387 = vmatprep.mubr.bf16.mxu0 0
      %3388 = vmatmul.mubr.bf16.gmra.mrb[0].mxu0 %v3039
      %v3389 = vpop.f32.mrb[0].mxu0
      %v3390 = vadd.f32 %v3293, %v3389
      %v3391 = vpop.f32.mrb[0].mxu0
      %v3392 = vpop.f32.mrb[0].mxu0
      %v3393 = vadd.f32 %v3296, %v3392
      %v3394 = vpop.f32.mrb[0].mxu0
      %3395 = vmatprep.mubr.bf16.mxu0 0
      %3396 = vmatmul.mubr.bf16.gmra.mrb[0].mxu0 %v3042
      %v3397 = vpop.f32.mrb[0].mxu0
      %v3398 = vadd.f32 %v3301, %v3397
      %v3399 = vpop.f32.mrb[0].mxu0
      %v3400 = vpop.f32.mrb[0].mxu0
      %v3401 = vadd.f32 %v3304, %v3400
      %v3402 = vpop.f32.mrb[0].mxu0
      %3403 = vmatprep.mubr.bf16.mxu0 0
      %3404 = vmatmul.mubr.bf16.gmra.mrb[0].mxu0 %v3045
      %v3405 = vpop.f32.mrb[0].mxu0
      %v3406 = vadd.f32 %v3309, %v3405
      %v3407 = vpop.f32.mrb[0].mxu0
      %v3408 = vpop.f32.mrb[0].mxu0
      %v3409 = vadd.f32 %v3312, %v3408
      %v3410 = vpop.f32.mrb[0].mxu0
      %3411 = vmatprep.mubr.bf16.mxu0 0
      %3412 = vmatmul.mubr.bf16.gmra.mrb[0].mxu0 %v3048
      %v3413 = vpop.f32.mrb[0].mxu0
      %v3414 = vadd.f32 %v3317, %v3413
      %v3415 = vpop.f32.mrb[0].mxu0
      %v3416 = vpop.f32.mrb[0].mxu0
      %v3417 = vadd.f32 %v3320, %v3416
      %v3418 = vpop.f32.mrb[0].mxu0
      %3419 = vmatprep.mubr.bf16.mxu0 0
      %3420 = vmatmul.mubr.bf16.gmra.mrb[0].mxu0 %v3051
      %v3421 = vpop.f32.mrb[0].mxu0
      %v3422 = vadd.f32 %v3325, %v3421
      %v3423 = vpop.f32.mrb[0].mxu0
      %v3424 = vpop.f32.mrb[0].mxu0
      %v3425 = vadd.f32 %v3328, %v3424
      %v3426 = vpop.f32.mrb[0].mxu0
      %3427 = vmatprep.mubr.bf16.mxu0 0
      %3428 = vmatmul.mubr.bf16.gmra.mrb[0].mxu0 %v3054
      %v3429 = vpop.f32.mrb[0].mxu0
      %v3430 = vadd.f32 %v3333, %v3429
      %v3431 = vpop.f32.mrb[0].mxu0
      %v3432 = vpop.f32.mrb[0].mxu0
      %v3433 = vadd.f32 %v3336, %v3432
      %v3434 = vpop.f32.mrb[0].mxu0
      %3435 = vmatprep.mubr.bf16.mxu0 0
      %3436 = vmatmul.mubr.bf16.gmra.mrb[0].mxu0 %v3057
      %v3437 = vpop.f32.mrb[0].mxu0
      %v3438 = vadd.f32 %v3341, %v3437
      %v3439 = vpop.f32.mrb[0].mxu0
      %v3440 = vpop.f32.mrb[0].mxu0
      %v3441 = vadd.f32 %v3344, %v3440
      %v3442 = vpop.f32.mrb[0].mxu0
      %3443 = vdwg.mxu0
      %v3444 = vadd.f32 %v2972, %v3382
      %v3445 = vadd.f32 %v2975, %v3385
      %v3446 = vadd.f32 %v2980, %v3390
      %v3447 = vadd.f32 %v2983, %v3393
      %v3448 = vadd.f32 %v2988, %v3398
      %v3449 = vadd.f32 %v2991, %v3401
      %v3450 = vadd.f32 %v2996, %v3406
      %v3451 = vadd.f32 %v2999, %v3409
      %v3452 = vadd.f32 %v3004, %v3414
      %v3453 = vadd.f32 %v3007, %v3417
      %v3454 = vadd.f32 %v3012, %v3422
      %v3455 = vadd.f32 %v3015, %v3425
      %v3456 = vadd.f32 %v3020, %v3430
      %v3457 = vadd.f32 %v3023, %v3433
      %v3458 = vadd.f32 %v3028, %v3438
      %v3459 = vadd.f32 %v3031, %v3441
      %3460 = vst [vmem:[%s231 + $0x80] sm:$0xff] %v3444
      %3461 = vst [vmem:[%s231 + $0x88] sm:$0xff] %v3445
      %3462 = vst [vmem:[%s231 + $0x90] sm:$0xff] %v3446
      %3463 = vst [vmem:[%s231 + $0x98] sm:$0xff] %v3447
      %3464 = vst [vmem:[%s231 + $0xa0] sm:$0xff] %v3448
      %3465 = vst [vmem:[%s231 + $0xa8] sm:$0xff] %v3449
      %3466 = vst [vmem:[%s231 + $0xb0] sm:$0xff] %v3450
      %3467 = vst [vmem:[%s231 + $0xb8] sm:$0xff] %v3451
      %3468 = vst [vmem:[%s231 + $0xc0] sm:$0xff] %v3452
      %3469 = vst [vmem:[%s231 + $0xc8] sm:$0xff] %v3453
      %3470 = vst [vmem:[%s231 + $0xd0] sm:$0xff] %v3454
      %3471 = vst [vmem:[%s231 + $0xd8] sm:$0xff] %v3455
      %3472 = vst [vmem:[%s231 + $0xe0] sm:$0xff] %v3456
      %3473 = vst [vmem:[%s231 + $0xe8] sm:$0xff] %v3457
      %3474 = vst [vmem:[%s231 + $0xf0] sm:$0xff] %v3458
      %3475 = vst [vmem:[%s231 + $0xf8] sm:$0xff] %v3459
      %v3476 = vadd.f32 %v3444, %v3445
      %v3477 = vadd.f32 %v3476, %v3446
      %v3478 = vadd.f32 %v3477, %v3447
      %v3479 = vadd.f32 %v3478, %v3448
      %v3480 = vadd.f32 %v3479, %v3449
      %v3481 = vadd.f32 %v3480, %v3450
      %v3482 = vadd.f32 %v3481, %v3451
      %v3483 = vadd.f32 %v3482, %v3452
      %v3484 = vadd.f32 %v3483, %v3453
      %v3485 = vadd.f32 %v3484, %v3454
      %v3486 = vadd.f32 %v3485, %v3455
      %v3487 = vadd.f32 %v3486, %v3456
      %v3488 = vadd.f32 %v3487, %v3457
      %v3489 = vadd.f32 %v3488, %v3458
      %v3490 = vadd.f32 %v3489, %v3459
      %v3491 = vrot.slane %v3490, 4
      %v3492 = vadd.f32 %v3490, %v3491
      %v3493 = vrot.slane %v3492, 2
      %v3494 = vadd.f32 %v3492, %v3493
      %v3495 = vrot.slane %v3494, 1
      %v3496 = vadd.f32 %v3494, %v3495
      %v3497 = vadd.f32 %v2196, %v3496
      %v3498 = vmul.f32 %v3444, %v3444
      %v3499 = vmul.f32 %v3445, %v3445
      %v3500 = vmul.f32 %v3446, %v3446
      %v3501 = vmul.f32 %v3447, %v3447
      %v3502 = vmul.f32 %v3448, %v3448
      %v3503 = vmul.f32 %v3449, %v3449
      %v3504 = vmul.f32 %v3450, %v3450
      %v3505 = vmul.f32 %v3451, %v3451
      %v3506 = vmul.f32 %v3452, %v3452
      %v3507 = vmul.f32 %v3453, %v3453
      %v3508 = vmul.f32 %v3454, %v3454
      %v3509 = vmul.f32 %v3455, %v3455
      %v3510 = vmul.f32 %v3456, %v3456
      %v3511 = vmul.f32 %v3457, %v3457
      %v3512 = vmul.f32 %v3458, %v3458
      %v3513 = vmul.f32 %v3459, %v3459
      %v3514 = vadd.f32 %v3498, %v3499
      %v3515 = vadd.f32 %v3514, %v3500
      %v3516 = vadd.f32 %v3515, %v3501
      %v3517 = vadd.f32 %v3516, %v3502
      %v3518 = vadd.f32 %v3517, %v3503
      %v3519 = vadd.f32 %v3518, %v3504
      %v3520 = vadd.f32 %v3519, %v3505
      %v3521 = vadd.f32 %v3520, %v3506
      %v3522 = vadd.f32 %v3521, %v3507
      %v3523 = vadd.f32 %v3522, %v3508
      %v3524 = vadd.f32 %v3523, %v3509
      %v3525 = vadd.f32 %v3524, %v3510
      %v3526 = vadd.f32 %v3525, %v3511
      %v3527 = vadd.f32 %v3526, %v3512
      %v3528 = vadd.f32 %v3527, %v3513
      %v3529 = vrot.slane %v3528, 4
      %v3530 = vadd.f32 %v3528, %v3529
      %v3531 = vrot.slane %v3530, 2
      %v3532 = vadd.f32 %v3530, %v3531
      %v3533 = vrot.slane %v3532, 1
      %v3534 = vadd.f32 %v3532, %v3533
      %v3535 = vadd.f32 %v2234, %v3534
      %vm3536 = vcmask 1040384
      %v3537 = vsel %vm3536, %v3497, %v3535
      %3538 = vst [vmem:[%s235] sm:$0x3] %v3537
      %p3539 = scmp.lt.s32.totalorder %s17, 1
      %s3540 = scalar_select %p3539, %s17, 1
      %s3541 = smul.addr %s3540, 32
      %s3542 = smul.addr %s3541, 8
      %s3543 = scalar_lea.vmem %s4, %s3542
      %p3544 = scmp.lt.s32.totalorder %s17, 1
      %s3545 = scalar_select %p3544, %s17, 1
      %s3546 = smul.addr %s3545, 2
      %s3547 = scalar_lea.vmem %s5, %s3546
      // Predicated region
      $region37: #{projected_residual_block_forward.4} parent=35 // pred_check
        %p3548 = pneg %p124
      $region38: #{projected_residual_block_forward.4} parent=35 // pred_check_branch
        %3550 = sbr.rel (%p3548) target = $region40
      $region39: #{projected_residual_block_forward.4} parent=35 // pred_region
        _
      $region40: #{projected_residual_block_forward.4} parent=35 // pred_fallthru
        _
      // Predicated region
      $region41: #{projected_residual_block_forward.4} parent=35 // pred_check
        %p3551 = pneg %p150
      $region42: #{projected_residual_block_forward.4} parent=35 // pred_check_branch
        %3553 = sbr.rel (%p3551) target = $region44
      $region43: #{projected_residual_block_forward.4} parent=35 // pred_region
        _
      $region44: #{projected_residual_block_forward.4} parent=35 // pred_fallthru
        _
    $region36: #{projected_residual_block_forward.4} parent=5 // pred_fallthru
      _
    %p3554 = scmp.le.s32.totalorder 2, %s12
    // Predicated region
    $region45: #{projected_residual_block_forward.4} parent=5 // pred_check
      %p3555 = pneg %p3554
    $region46: #{projected_residual_block_forward.4} parent=5 // pred_check_branch
      %3557 = sbr.rel (%p3555) target = $region48
    $region47: #{projected_residual_block_forward.4} parent=5 // pred_region
      %s3558 = ssub.s32 %s12, 2
      // Predicated region
      $region49: #{projected_residual_block_forward.4} parent=47 // pred_check
        %p3559 = pneg %p130
      $region50: #{projected_residual_block_forward.4} parent=47 // pred_check_branch
        %3561 = sbr.rel (%p3559) target = $region52
      $region51: #{projected_residual_block_forward.4} parent=47 // pred_region
        %p3562 = scmp.lt.s32.totalorder %s18, 1
        %s3563 = scalar_select %p3562, %s18, 1
        %s3564 = smul.addr %s3563, 32
        %s3565 = smul.addr %s3564, 8
        %s3566 = scalar_lea.vmem %s4, %s3565
      $region52: #{projected_residual_block_forward.4} parent=47 // pred_fallthru
        _
      // Predicated region
      $region53: #{projected_residual_block_forward.4} parent=47 // pred_check
        %p3567 = pneg %p156
      $region54: #{projected_residual_block_forward.4} parent=47 // pred_check_branch
        %3569 = sbr.rel (%p3567) target = $region56
      $region55: #{projected_residual_block_forward.4} parent=47 // pred_region
        %p3570 = scmp.lt.s32.totalorder %s18, 1
        %s3571 = scalar_select %p3570, %s18, 1
        %s3572 = smul.addr %s3571, 2
        %s3573 = scalar_lea.vmem %s5, %s3572
      $region56: #{projected_residual_block_forward.4} parent=47 // pred_fallthru
        _
    $region48: #{projected_residual_block_forward.4} parent=5 // pred_fallthru
      _
  $region6: #{projected_residual_block_forward.4} parent=0 // loop_footer
    %s16 = sadd.s32 1, %s12
  $region7: #{projected_residual_block_forward.4} parent=0 // loop_footer_branch
    %11 = sbr.rel target = $region3
  $region8: #{projected_residual_block_forward.4} parent=0 // loop_exit
    _

// kernel: projected_residual_block_forward.3
$region0: #{projected_residual_block_forward.3}
  #allocation0 [shape = 'u32[]', space=smem, size = 0x4, offset = 0x4, fixed_abs, tag = 'smem constant byte address 0x4 - core index']
  #allocation1 [shape = 'u32[144,128]{1,0:T(1,128)}', space=vmem, size = 0x12000, scoped, tag = 'internal scratch']
  #allocation2 [shape = 'bf16[288,384]{1,0:T(16,128)(2,1)}', space=vmem, size = 0x36000, scoped, tag = 'scratch operand']
  %s0 = inlined_call_operand.hbm [shape: f32[2,256,128], index: 0, kind: input, shape index: {}]
  %s1 = inlined_call_operand.hbm [shape: bf16[3,384,128], index: 1, kind: input, shape index: {}]
  %s2 = inlined_call_operand.vmem [shape: f32[2,256,128], index: 2, kind: output, shape index: {0}]
  %s3 = inlined_call_operand.vmem [shape: f32[2,2,128], index: 3, kind: output, shape index: {1}]
  %4 = xla_tuple %s2, %s3
  %s5 = sld [smem:[#allocation0]]
  $region57: #{projected_residual_block_forward.3} parent=0
    _
  %s7 = ssub.s32 1, %s5
  %s8 = scalar_select 0, %s7, %s5
  $region1: #{projected_residual_block_forward.3} parent=0
    #allocation3 [shape = 'u8[262144]{0}', space=vmem, size = 0x40000, scoped, tag = 'input window, operand 0']
    #allocation4 [shape = 's32[2]{0}', space=sflag, size = 0x8, scoped, tag = 'scoped memory for projected_residual_block_forward.3']
    #allocation5 [shape = 'u8[294912]{0}', space=vmem, size = 0x48000, scoped, tag = 'input window, operand 1, single buffered']
    #allocation6 [shape = 's32[1]{0}', space=sflag, size = 0x4, scoped, tag = 'scoped memory for projected_residual_block_forward.3']
    %9 = vsyncpa [#allocation4], 0
    %s10 = scalar_lea.sflag [#allocation4], 1
    %11 = vsyncpa %s10, 0
    %12 = vsyncpa [#allocation6], 0
    loop: start=0, step=1, limit=4
    $region2: #{projected_residual_block_forward.3} parent=1 // loop_pre_header
      _
    $region3: #{projected_residual_block_forward.3} parent=1 // loop_header
      %s14 = sphi 0, %s18
      %p15 = scmp.ge.s32.totalorder %s14, 4
      %s24 = sphi 0, %s26
      %s27 = sphi 0, %s24
      %s28 = sphi 0, %s27
      %s44 = sphi 0, %s28
      %s48 = sphi 0, %s48
      %s50 = sphi 0, %s48
      %s51 = sphi 0, %s50
      %s65 = sphi 0, %s51
      %s71 = sphi 0, %s73
      %s74 = sphi 0, %s71
      %s75 = sphi 0, %s74
      %s91 = sphi 0, %s75
      %s97 = sphi 0, %s99
      %s100 = sphi 0, %s97
      %s101 = sphi 0, %s100
      %s117 = sphi 0, %s101
    $region4: #{projected_residual_block_forward.3} parent=1 // loop_header_branch
      %17 = sbr.rel (%p15) target = $region8
    $region5: #{projected_residual_block_forward.3} parent=1 // loop_body
      %s19 = ssub.s32 %s14, 1
      %s20 = ssub.s32 %s14, 2
      %s21 = sadd.s32 %s14, 1
      %s22 = ssub.s32 %s14, %s21
      %p23 = scmp.eq.s32.totalorder %s22, 0
      %s25 = sadd.s32 %s24, 1
      %s26 = scalar_select %p23, %s24, %s25
      %p29 = pneg %p23
      %p30 = scmp.eq.s32.totalorder %s14, 1
      %p31 = por %p29, %p30
      %p32 = scmp.ne.s32.totalorder %s24, %s27
      %p33 = scmp.eq.s32.totalorder %s14, 0
      %p34 = por %p32, %p33
      %p35 = scmp.ne.s32.totalorder %s24, %s27
      %p36 = scmp.eq.s32.totalorder %s19, 1
      %p37 = por %p35, %p36
      %p38 = scmp.ne.s32.totalorder %s27, %s28
      %p39 = scmp.eq.s32.totalorder %s19, 0
      %p40 = por %p38, %p39
      %p41 = scmp.ne.s32.totalorder %s27, %s28
      %p42 = scmp.eq.s32.totalorder %s20, 1
      %p43 = por %p41, %p42
      %p45 = scmp.ne.s32.totalorder %s28, %s44
      %p46 = scmp.eq.s32.totalorder %s20, 0
      %p47 = por %p45, %p46
      %s49 = sadd.s32 %s48, 1
      %p52 = scmp.eq.s32.totalorder %s14, 1
      %p53 = scmp.ne.s32.totalorder %s48, %s50
      %p54 = scmp.eq.s32.totalorder %s14, 0
      %p55 = por %p53, %p54
      %p56 = scmp.ne.s32.totalorder %s48, %s50
      %p57 = scmp.eq.s32.totalorder %s19, 1
      %p58 = por %p56, %p57
      %p59 = scmp.ne.s32.totalorder %s50, %s51
      %p60 = scmp.eq.s32.totalorder %s19, 0
      %p61 = por %p59, %p60
      %p62 = scmp.ne.s32.totalorder %s50, %s51
      %p63 = scmp.eq.s32.totalorder %s20, 1
      %p64 = por %p62, %p63
      %p66 = scmp.ne.s32.totalorder %s51, %s65
      %p67 = scmp.eq.s32.totalorder %s20, 0
      %p68 = por %p66, %p67
      %s69 = ssub.s32 %s14, %s21
      %p70 = scmp.eq.s32.totalorder %s69, 0
      %s72 = sadd.s32 %s71, 1
      %s73 = scalar_select %p70, %s71, %s72
      %p76 = pneg %p70
      %p77 = scmp.eq.s32.totalorder %s14, 1
      %p78 = por %p76, %p77
      %p79 = scmp.ne.s32.totalorder %s71, %s74
      %p80 = scmp.eq.s32.totalorder %s14, 0
      %p81 = por %p79, %p80
      %p82 = scmp.ne.s32.totalorder %s71, %s74
      %p83 = scmp.eq.s32.totalorder %s19, 1
      %p84 = por %p82, %p83
      %p85 = scmp.ne.s32.totalorder %s74, %s75
      %p86 = scmp.eq.s32.totalorder %s19, 0
      %p87 = por %p85, %p86
      %p88 = scmp.ne.s32.totalorder %s74, %s75
      %p89 = scmp.eq.s32.totalorder %s20, 1
      %p90 = por %p88, %p89
      %p92 = scmp.ne.s32.totalorder %s75, %s91
      %p93 = scmp.eq.s32.totalorder %s20, 0
      %p94 = por %p92, %p93
      %s95 = ssub.s32 %s14, %s21
      %p96 = scmp.eq.s32.totalorder %s95, 0
      %s98 = sadd.s32 %s97, 1
      %s99 = scalar_select %p96, %s97, %s98
      %p102 = pneg %p96
      %p103 = scmp.eq.s32.totalorder %s14, 1
      %p104 = por %p102, %p103
      %p105 = scmp.ne.s32.totalorder %s97, %s100
      %p106 = scmp.eq.s32.totalorder %s14, 0
      %p107 = por %p105, %p106
      %p108 = scmp.ne.s32.totalorder %s97, %s100
      %p109 = scmp.eq.s32.totalorder %s19, 1
      %p110 = por %p108, %p109
      %p111 = scmp.ne.s32.totalorder %s100, %s101
      %p112 = scmp.eq.s32.totalorder %s19, 0
      %p113 = por %p111, %p112
      %p114 = scmp.ne.s32.totalorder %s100, %s101
      %p115 = scmp.eq.s32.totalorder %s20, 1
      %p116 = por %p114, %p115
      %p118 = scmp.ne.s32.totalorder %s101, %s117
      %p119 = scmp.eq.s32.totalorder %s20, 0
      %p120 = por %p118, %p119
      %p121 = scmp.le.s32.totalorder 1, %s14
      %p122 = scmp.lt.s32.totalorder %s14, 3
      %p123 = pnand %p121, %p122
      %p124 = pneg %p123
      // Predicated region
      $region9: #{projected_residual_block_forward.3} parent=5 // pred_check
        _
      $region10: #{projected_residual_block_forward.3} parent=5 // pred_check_branch
        %126 = sbr.rel (%p123) target = $region12
      $region11: #{projected_residual_block_forward.3} parent=5 // pred_region
        %s127 = ssub.s32 %s14, 1
        // Predicated region
        $region13: #{projected_residual_block_forward.3} parent=11 // pred_check
          %p128 = pneg %p61
        $region14: #{projected_residual_block_forward.3} parent=11 // pred_check_branch
          %130 = sbr.rel (%p128) target = $region16
        $region15: #{projected_residual_block_forward.3} parent=11 // pred_region
          %s132 = ssub.s32 9216, 9216
          %133 = vsyncadd [#allocation6], %s132
          %s134 = sshll.u32 [#allocation5], 4
          %s135 = int_to_ptr.vmem [resolvable:$true] %s134
          %140 = dma.hbm_to_vmem [thread:$0]  %s1, 9216, %s135, [#allocation6], 64, 64, 4
        $region16: #{projected_residual_block_forward.3} parent=11 // pred_fallthru
          _
      $region12: #{projected_residual_block_forward.3} parent=5 // pred_fallthru
        _
      %p141 = scmp.lt.s32.totalorder %s14, 2
      // Predicated region
      $region17: #{projected_residual_block_forward.3} parent=5 // pred_check
        %p142 = pneg %p141
      $region18: #{projected_residual_block_forward.3} parent=5 // pred_check_branch
        %144 = sbr.rel (%p142) target = $region20
      $region19: #{projected_residual_block_forward.3} parent=5 // pred_region
        // Predicated region
        $region21: #{projected_residual_block_forward.3} parent=19 // pred_check
          %p145 = pneg %p34
        $region22: #{projected_residual_block_forward.3} parent=19 // pred_check_branch
          %147 = sbr.rel (%p145) target = $region24
        $region23: #{projected_residual_block_forward.3} parent=19 // pred_region
          %s148 = sand.u32 %s24, 1
          %s149 = scalar_lea.sflag [#allocation4], %s148
          %s150 = sand.u32 %s24, 1
          %s151 = smul.addr %s150, 256
          %s152 = scalar_lea.vmem [#allocation3], %s151
          %s154 = ssub.s32 4096, 4096
          %155 = vsyncadd %s149, %s154
          %s156 = smul.addr %s14, 32
          %s157 = smul.addr %s156, 128
          %s158 = scalar_lea.hbm %s0, %s157
          %s159 = sshll.u32 %s152, 4
          %s160 = int_to_ptr.vmem [resolvable:$true] %s159
          %165 = dma.hbm_to_vmem [thread:$0]  %s158, 4096, %s160, %s149, 128, 128, 8
        $region24: #{projected_residual_block_forward.3} parent=19 // pred_fallthru
          _
      $region20: #{projected_residual_block_forward.3} parent=5 // pred_fallthru
        _
      %p166 = scmp.le.s32.totalorder 1, %s14
      %p167 = scmp.lt.s32.totalorder %s14, 3
      %p168 = pnand %p166, %p167
      %p169 = pneg %p168
      // Predicated region
      $region25: #{projected_residual_block_forward.3} parent=5 // pred_check
        _
      $region26: #{projected_residual_block_forward.3} parent=5 // pred_check_branch
        %171 = sbr.rel (%p168) target = $region28
      $region27: #{projected_residual_block_forward.3} parent=5 // pred_region
        %s172 = ssub.s32 %s14, 1
        %s173 = sand.u32 %s27, 1
        %s174 = scalar_lea.sflag [#allocation4], %s173
        %s175 = sand.u32 %s27, 1
        %s176 = smul.addr %s175, 256
        %s177 = scalar_lea.vmem [#allocation3], %s176
        // Predicated region
        $region29: #{projected_residual_block_forward.3} parent=27 // pred_check
          %p178 = pneg %p40
        $region30: #{projected_residual_block_forward.3} parent=27 // pred_check_branch
          %180 = sbr.rel (%p178) target = $region32
        $region31: #{projected_residual_block_forward.3} parent=27 // pred_region
          %181 = dma.done %s174, 4096
        $region32: #{projected_residual_block_forward.3} parent=27 // pred_fallthru
          _
        // Predicated region
        $region33: #{projected_residual_block_forward.3} parent=27 // pred_check
          %p182 = pneg %p61
        $region34: #{projected_residual_block_forward.3} parent=27 // pred_check_branch
          %184 = sbr.rel (%p182) target = $region36
        $region35: #{projected_residual_block_forward.3} parent=27 // pred_region
          %185 = dma.done [#allocation6], 9216
        $region36: #{projected_residual_block_forward.3} parent=27 // pred_fallthru
          _
        %s186 = sand.u32 %s27, 1
        %s187 = scalar_lea.sflag [#allocation4], %s186
        %s188 = sand.u32 %s27, 1
        %s189 = smul.addr %s188, 256
        %s190 = scalar_lea.vmem [#allocation3], %s189
        %p191 = pneg %p40
        %p192 = pneg %p37
        %p193 = pneg %p61
        %p194 = pneg %p58
        %p195 = pneg %p87
        %p196 = pneg %p84
        %p197 = scmp.lt.s32.totalorder %s19, 1
        %s198 = scalar_select %p197, %s19, 1
        %s199 = smul.addr %s198, 32
        %s200 = smul.addr %s199, 8
        %s201 = scalar_lea.vmem %s2, %s200
        %p202 = pneg %p113
        %p203 = pneg %p110
        %p204 = scmp.lt.s32.totalorder %s19, 1
        %s205 = scalar_select %p204, %s19, 1
        %s206 = smul.addr %s205, 2
        %s207 = scalar_lea.vmem %s3, %s206
        %p208 = scmp.lt.s32.totalorder %s19, 1
        %s209 = scalar_select %p208, %s19, 1
        %s210 = smul.addr %s209, 32
        %s211 = smul.addr %s210, 8
        %s212 = scalar_lea.vmem %s2, %s211
        %p213 = scmp.lt.s32.totalorder %s19, 1
        %s214 = scalar_select %p213, %s19, 1
        %s215 = smul.addr %s214, 2
        %s216 = scalar_lea.vmem %s3, %s215
        %v218 = vld [vmem:[%s177] sm:$0xff]
        %v219 = vld [vmem:[%s177 + $0x8] sm:$0xff]
        %v220 = vld [vmem:[%s177 + $0x10] sm:$0xff]
        %v221 = vld [vmem:[%s177 + $0x18] sm:$0xff]
        %v222 = vld [vmem:[%s177 + $0x20] sm:$0xff]
        %v223 = vld [vmem:[%s177 + $0x28] sm:$0xff]
        %v224 = vld [vmem:[%s177 + $0x30] sm:$0xff]
        %v225 = vld [vmem:[%s177 + $0x38] sm:$0xff]
        %v226 = vld [vmem:[%s177 + $0x40] sm:$0xff]
        %v227 = vld [vmem:[%s177 + $0x48] sm:$0xff]
        %v228 = vld [vmem:[%s177 + $0x50] sm:$0xff]
        %v229 = vld [vmem:[%s177 + $0x58] sm:$0xff]
        %v230 = vld [vmem:[%s177 + $0x60] sm:$0xff]
        %v231 = vld [vmem:[%s177 + $0x68] sm:$0xff]
        %v232 = vld [vmem:[%s177 + $0x70] sm:$0xff]
        %v233 = vld [vmem:[%s177 + $0x78] sm:$0xff]
        %v234 = vld [vmem:[%s177 + $0x80] sm:$0xff]
        %v235 = vld [vmem:[%s177 + $0x88] sm:$0xff]
        %v236 = vld [vmem:[%s177 + $0x90] sm:$0xff]
        %v237 = vld [vmem:[%s177 + $0x98] sm:$0xff]
        %v238 = vld [vmem:[%s177 + $0xa0] sm:$0xff]
        %v239 = vld [vmem:[%s177 + $0xa8] sm:$0xff]
        %v240 = vld [vmem:[%s177 + $0xb0] sm:$0xff]
        %v241 = vld [vmem:[%s177 + $0xb8] sm:$0xff]
        %v242 = vld [vmem:[%s177 + $0xc0] sm:$0xff]
        %v243 = vld [vmem:[%s177 + $0xc8] sm:$0xff]
        %v244 = vld [vmem:[%s177 + $0xd0] sm:$0xff]
        %v245 = vld [vmem:[%s177 + $0xd8] sm:$0xff]
        %v246 = vld [vmem:[%s177 + $0xe0] sm:$0xff]
        %v247 = vld [vmem:[%s177 + $0xe8] sm:$0xff]
        %v248 = vld [vmem:[%s177 + $0xf0] sm:$0xff]
        %v249 = vld [vmem:[%s177 + $0xf8] sm:$0xff]
        %250 = vst [vmem:[#allocation2] sm:$0xff] 0
        %251 = vst [vmem:[#allocation2 + $0x8] sm:$0xff] 0
        %252 = vst [vmem:[#allocation2 + $0x10] sm:$0xff] 0
        %253 = vst [vmem:[#allocation2 + $0x198] sm:$0xff] 0
        %254 = vst [vmem:[#allocation2 + $0x1a0] sm:$0xff] 0
        %255 = vst [vmem:[#allocation2 + $0x1a8] sm:$0xff] 0
        %v256 = vlaneseq
        %v257 = vshrl.u32 %v256, 7
        %v258 = vadd.s32 %v257, 8
        %v259 = vadd.s32 %v257, 16
        %v260 = vadd.s32 %v257, 24
        %v261 = vadd.s32 %v257, 32
        %v262 = vadd.s32 %v257, 40
        %v263 = vadd.s32 %v257, 48
        %v264 = vadd.s32 %v257, 56
        %v265 = vadd.s32 %v257, 64
        %v266 = vadd.s32 %v257, 72
        %v267 = vadd.s32 %v257, 80
        %v268 = vadd.s32 %v257, 88
        %v269 = vadd.s32 %v257, 96
        %v270 = vadd.s32 %v257, 104
        %v271 = vadd.s32 %v257, 112
        %v272 = vadd.s32 %v257, 120
        %v273 = vadd.s32 %v257, 128
        %v274 = vadd.s32 %v257, 136
        %v275 = vadd.s32 %v257, 144
        %v276 = vadd.s32 %v257, 152
        %v277 = vadd.s32 %v257, 160
        %v278 = vadd.s32 %v257, 168
        %v279 = vadd.s32 %v257, 176
        %v280 = vadd.s32 %v257, 184
        %v281 = vadd.s32 %v257, 192
        %v282 = vadd.s32 %v257, 200
        %v283 = vadd.s32 %v257, 208
        %v284 = vadd.s32 %v257, 216
        %v285 = vadd.s32 %v257, 224
        %v286 = vadd.s32 %v257, 232
        %v287 = vadd.s32 %v257, 240
        %v288 = vadd.s32 %v257, 248
        %v289 = vand.u32 %v257, 15
        %v290 = vand.u32 %v258, 15
        %v291 = vand.u32 %v259, 15
        %v292 = vand.u32 %v260, 15
        %v293 = vand.u32 %v261, 15
        %v294 = vand.u32 %v262, 15
        %v295 = vand.u32 %v263, 15
        %v296 = vand.u32 %v264, 15
        %v297 = vand.u32 %v265, 15
        %v298 = vand.u32 %v266, 15
        %v299 = vand.u32 %v267, 15
        %v300 = vand.u32 %v268, 15
        %v301 = vand.u32 %v269, 15
        %v302 = vand.u32 %v270, 15
        %v303 = vand.u32 %v271, 15
        %v304 = vand.u32 %v272, 15
        %v305 = vand.u32 %v273, 15
        %v306 = vand.u32 %v274, 15
        %v307 = vand.u32 %v275, 15
        %v308 = vand.u32 %v276, 15
        %v309 = vand.u32 %v277, 15
        %v310 = vand.u32 %v278, 15
        %v311 = vand.u32 %v279, 15
        %v312 = vand.u32 %v280, 15
        %v313 = vand.u32 %v281, 15
        %v314 = vand.u32 %v282, 15
        %v315 = vand.u32 %v283, 15
        %v316 = vand.u32 %v284, 15
        %v317 = vand.u32 %v285, 15
        %v318 = vand.u32 %v286, 15
        %v319 = vand.u32 %v287, 15
        %v320 = vand.u32 %v288, 15
        %vm321 = vcmp.eq.s32.totalorder %v289, 0
        %vm322 = vcmp.eq.s32.totalorder %v290, 0
        %vm323 = vcmp.eq.s32.totalorder %v291, 0
        %vm324 = vcmp.eq.s32.totalorder %v292, 0
        %vm325 = vcmp.eq.s32.totalorder %v293, 0
        %vm326 = vcmp.eq.s32.totalorder %v294, 0
        %vm327 = vcmp.eq.s32.totalorder %v295, 0
        %vm328 = vcmp.eq.s32.totalorder %v296, 0
        %vm329 = vcmp.eq.s32.totalorder %v297, 0
        %vm330 = vcmp.eq.s32.totalorder %v298, 0
        %vm331 = vcmp.eq.s32.totalorder %v299, 0
        %vm332 = vcmp.eq.s32.totalorder %v300, 0
        %vm333 = vcmp.eq.s32.totalorder %v301, 0
        %vm334 = vcmp.eq.s32.totalorder %v302, 0
        %vm335 = vcmp.eq.s32.totalorder %v303, 0
        %vm336 = vcmp.eq.s32.totalorder %v304, 0
        %vm337 = vcmp.eq.s32.totalorder %v305, 0
        %vm338 = vcmp.eq.s32.totalorder %v306, 0
        %vm339 = vcmp.eq.s32.totalorder %v307, 0
        %vm340 = vcmp.eq.s32.totalorder %v308, 0
        %vm341 = vcmp.eq.s32.totalorder %v309, 0
        %vm342 = vcmp.eq.s32.totalorder %v310, 0
        %vm343 = vcmp.eq.s32.totalorder %v311, 0
        %vm344 = vcmp.eq.s32.totalorder %v312, 0
        %vm345 = vcmp.eq.s32.totalorder %v313, 0
        %vm346 = vcmp.eq.s32.totalorder %v314, 0
        %vm347 = vcmp.eq.s32.totalorder %v315, 0
        %vm348 = vcmp.eq.s32.totalorder %v316, 0
        %vm349 = vcmp.eq.s32.totalorder %v317, 0
        %vm350 = vcmp.eq.s32.totalorder %v318, 0
        %vm351 = vcmp.eq.s32.totalorder %v319, 0
        %vm352 = vcmp.eq.s32.totalorder %v320, 0
        %v353 = vrot.slane %v218, 7
        %v354 = vrot.slane %v219, 7
        %v355 = vrot.slane %v220, 7
        %v356 = vrot.slane %v221, 7
        %v357 = vrot.slane %v222, 7
        %v358 = vrot.slane %v223, 7
        %v359 = vrot.slane %v224, 7
        %v360 = vrot.slane %v225, 7
        %v361 = vrot.slane %v226, 7
        %v362 = vrot.slane %v227, 7
        %v363 = vrot.slane %v228, 7
        %v364 = vrot.slane %v229, 7
        %v365 = vrot.slane %v230, 7
        %v366 = vrot.slane %v231, 7
        %v367 = vrot.slane %v232, 7
        %v368 = vrot.slane %v233, 7
        %v369 = vrot.slane %v234, 7
        %v370 = vrot.slane %v235, 7
        %v371 = vrot.slane %v236, 7
        %v372 = vrot.slane %v237, 7
        %v373 = vrot.slane %v238, 7
        %v374 = vrot.slane %v239, 7
        %v375 = vrot.slane %v240, 7
        %v376 = vrot.slane %v241, 7
        %v377 = vrot.slane %v242, 7
        %v378 = vrot.slane %v243, 7
        %v379 = vrot.slane %v244, 7
        %v380 = vrot.slane %v245, 7
        %v381 = vrot.slane %v246, 7
        %v382 = vrot.slane %v247, 7
        %v383 = vrot.slane %v248, 7
        %v384 = vrot.slane %v249, 7
        %vm385 = vcmp.lt.s32.totalorder %v257, 1
        %v386 = vsel %vm385, %v383, %v384
        %v387 = vsel %vm385, %v382, %v383
        %v388 = vsel %vm385, %v381, %v382
        %v389 = vsel %vm385, %v380, %v381
        %v390 = vsel %vm385, %v379, %v380
        %v391 = vsel %vm385, %v378, %v379
        %v392 = vsel %vm385, %v377, %v378
        %v393 = vsel %vm385, %v376, %v377
        %v394 = vsel %vm385, %v375, %v376
        %v395 = vsel %vm385, %v374, %v375
        %v396 = vsel %vm385, %v373, %v374
        %v397 = vsel %vm385, %v372, %v373
        %v398 = vsel %vm385, %v371, %v372
        %v399 = vsel %vm385, %v370, %v371
        %v400 = vsel %vm385, %v369, %v370
        %v401 = vsel %vm385, %v368, %v369
        %v402 = vsel %vm385, %v367, %v368
        %v403 = vsel %vm385, %v366, %v367
        %v404 = vsel %vm385, %v365, %v366
        %v405 = vsel %vm385, %v364, %v365
        %v406 = vsel %vm385, %v363, %v364
        %v407 = vsel %vm385, %v362, %v363
        %v408 = vsel %vm385, %v361, %v362
        %v409 = vsel %vm385, %v360, %v361
        %v410 = vsel %vm385, %v359, %v360
        %v411 = vsel %vm385, %v358, %v359
        %v412 = vsel %vm385, %v357, %v358
        %v413 = vsel %vm385, %v356, %v357
        %v414 = vsel %vm385, %v355, %v356
        %v415 = vsel %vm385, %v354, %v355
        %v416 = vsel %vm385, %v353, %v354
        %v417 = vsel %vm385, %v384, %v353
        %v418 = vsel %vm321, 1, 0
        %v419 = vsel %vm322, 1, 0
        %v420 = vsel %vm323, 1, 0
        %v421 = vsel %vm324, 1, 0
        %v422 = vsel %vm325, 1, 0
        %v423 = vsel %vm326, 1, 0
        %v424 = vsel %vm327, 1, 0
        %v425 = vsel %vm328, 1, 0
        %v426 = vsel %vm329, 1, 0
        %v427 = vsel %vm330, 1, 0
        %v428 = vsel %vm331, 1, 0
        %v429 = vsel %vm332, 1, 0
        %v430 = vsel %vm333, 1, 0
        %v431 = vsel %vm334, 1, 0
        %v432 = vsel %vm335, 1, 0
        %v433 = vsel %vm336, 1, 0
        %v434 = vsel %vm337, 1, 0
        %v435 = vsel %vm338, 1, 0
        %v436 = vsel %vm339, 1, 0
        %v437 = vsel %vm340, 1, 0
        %v438 = vsel %vm341, 1, 0
        %v439 = vsel %vm342, 1, 0
        %v440 = vsel %vm343, 1, 0
        %v441 = vsel %vm344, 1, 0
        %v442 = vsel %vm345, 1, 0
        %v443 = vsel %vm346, 1, 0
        %v444 = vsel %vm347, 1, 0
        %v445 = vsel %vm348, 1, 0
        %v446 = vsel %vm349, 1, 0
        %v447 = vsel %vm350, 1, 0
        %v448 = vsel %vm351, 1, 0
        %v449 = vsel %vm352, 1, 0
        %vm450 = vcmp.eq.s32.totalorder %v418, 1
        %vm451 = vcmp.eq.s32.totalorder %v419, 1
        %vm452 = vcmp.eq.s32.totalorder %v420, 1
        %vm453 = vcmp.eq.s32.totalorder %v421, 1
        %vm454 = vcmp.eq.s32.totalorder %v422, 1
        %vm455 = vcmp.eq.s32.totalorder %v423, 1
        %vm456 = vcmp.eq.s32.totalorder %v424, 1
        %vm457 = vcmp.eq.s32.totalorder %v425, 1
        %vm458 = vcmp.eq.s32.totalorder %v426, 1
        %vm459 = vcmp.eq.s32.totalorder %v427, 1
        %vm460 = vcmp.eq.s32.totalorder %v428, 1
        %vm461 = vcmp.eq.s32.totalorder %v429, 1
        %vm462 = vcmp.eq.s32.totalorder %v430, 1
        %vm463 = vcmp.eq.s32.totalorder %v431, 1
        %vm464 = vcmp.eq.s32.totalorder %v432, 1
        %vm465 = vcmp.eq.s32.totalorder %v433, 1
        %vm466 = vcmp.eq.s32.totalorder %v434, 1
        %vm467 = vcmp.eq.s32.totalorder %v435, 1
        %vm468 = vcmp.eq.s32.totalorder %v436, 1
        %vm469 = vcmp.eq.s32.totalorder %v437, 1
        %vm470 = vcmp.eq.s32.totalorder %v438, 1
        %vm471 = vcmp.eq.s32.totalorder %v439, 1
        %vm472 = vcmp.eq.s32.totalorder %v440, 1
        %vm473 = vcmp.eq.s32.totalorder %v441, 1
        %vm474 = vcmp.eq.s32.totalorder %v442, 1
        %vm475 = vcmp.eq.s32.totalorder %v443, 1
        %vm476 = vcmp.eq.s32.totalorder %v444, 1
        %vm477 = vcmp.eq.s32.totalorder %v445, 1
        %vm478 = vcmp.eq.s32.totalorder %v446, 1
        %vm479 = vcmp.eq.s32.totalorder %v447, 1
        %vm480 = vcmp.eq.s32.totalorder %v448, 1
        %vm481 = vcmp.eq.s32.totalorder %v449, 1
        %v482 = vsel %vm450, 0.0, %v417
        %v483 = vsel %vm451, 0.0, %v416
        %v484 = vsel %vm452, 0.0, %v415
        %v485 = vsel %vm453, 0.0, %v414
        %v486 = vsel %vm454, 0.0, %v413
        %v487 = vsel %vm455, 0.0, %v412
        %v488 = vsel %vm456, 0.0, %v411
        %v489 = vsel %vm457, 0.0, %v410
        %v490 = vsel %vm458, 0.0, %v409
        %v491 = vsel %vm459, 0.0, %v408
        %v492 = vsel %vm460, 0.0, %v407
        %v493 = vsel %vm461, 0.0, %v406
        %v494 = vsel %vm462, 0.0, %v405
        %v495 = vsel %vm463, 0.0, %v404
        %v496 = vsel %vm464, 0.0, %v403
        %v497 = vsel %vm465, 0.0, %v402
        %v498 = vsel %vm466, 0.0, %v401
        %v499 = vsel %vm467, 0.0, %v400
        %v500 = vsel %vm468, 0.0, %v399
        %v501 = vsel %vm469, 0.0, %v398
        %v502 = vsel %vm470, 0.0, %v397
        %v503 = vsel %vm471, 0.0, %v396
        %v504 = vsel %vm472, 0.0, %v395
        %v505 = vsel %vm473, 0.0, %v394
        %v506 = vsel %vm474, 0.0, %v393
        %v507 = vsel %vm475, 0.0, %v392
        %v508 = vsel %vm476, 0.0, %v391
        %v509 = vsel %vm477, 0.0, %v390
        %v510 = vsel %vm478, 0.0, %v389
        %v511 = vsel %vm479, 0.0, %v388
        %v512 = vsel %vm480, 0.0, %v387
        %v513 = vsel %vm481, 0.0, %v386
        %vm514 = vcmp.eq.s32.totalorder %v289, 15
        %vm515 = vcmp.eq.s32.totalorder %v290, 15
        %vm516 = vcmp.eq.s32.totalorder %v291, 15
        %vm517 = vcmp.eq.s32.totalorder %v292, 15
        %vm518 = vcmp.eq.s32.totalorder %v293, 15
        %vm519 = vcmp.eq.s32.totalorder %v294, 15
        %vm520 = vcmp.eq.s32.totalorder %v295, 15
        %vm521 = vcmp.eq.s32.totalorder %v296, 15
        %vm522 = vcmp.eq.s32.totalorder %v297, 15
        %vm523 = vcmp.eq.s32.totalorder %v298, 15
        %vm524 = vcmp.eq.s32.totalorder %v299, 15
        %vm525 = vcmp.eq.s32.totalorder %v300, 15
        %vm526 = vcmp.eq.s32.totalorder %v301, 15
        %vm527 = vcmp.eq.s32.totalorder %v302, 15
        %vm528 = vcmp.eq.s32.totalorder %v303, 15
        %vm529 = vcmp.eq.s32.totalorder %v304, 15
        %vm530 = vcmp.eq.s32.totalorder %v305, 15
        %vm531 = vcmp.eq.s32.totalorder %v306, 15
        %vm532 = vcmp.eq.s32.totalorder %v307, 15
        %vm533 = vcmp.eq.s32.totalorder %v308, 15
        %vm534 = vcmp.eq.s32.totalorder %v309, 15
        %vm535 = vcmp.eq.s32.totalorder %v310, 15
        %vm536 = vcmp.eq.s32.totalorder %v311, 15
        %vm537 = vcmp.eq.s32.totalorder %v312, 15
        %vm538 = vcmp.eq.s32.totalorder %v313, 15
        %vm539 = vcmp.eq.s32.totalorder %v314, 15
        %vm540 = vcmp.eq.s32.totalorder %v315, 15
        %vm541 = vcmp.eq.s32.totalorder %v316, 15
        %vm542 = vcmp.eq.s32.totalorder %v317, 15
        %vm543 = vcmp.eq.s32.totalorder %v318, 15
        %vm544 = vcmp.eq.s32.totalorder %v319, 15
        %vm545 = vcmp.eq.s32.totalorder %v320, 15
        %v546 = vrot.slane %v218, 1
        %v547 = vrot.slane %v219, 1
        %v548 = vrot.slane %v220, 1
        %v549 = vrot.slane %v221, 1
        %v550 = vrot.slane %v222, 1
        %v551 = vrot.slane %v223, 1
        %v552 = vrot.slane %v224, 1
        %v553 = vrot.slane %v225, 1
        %v554 = vrot.slane %v226, 1
        %v555 = vrot.slane %v227, 1
        %v556 = vrot.slane %v228, 1
        %v557 = vrot.slane %v229, 1
        %v558 = vrot.slane %v230, 1
        %v559 = vrot.slane %v231, 1
        %v560 = vrot.slane %v232, 1
        %v561 = vrot.slane %v233, 1
        %v562 = vrot.slane %v234, 1
        %v563 = vrot.slane %v235, 1
        %v564 = vrot.slane %v236, 1
        %v565 = vrot.slane %v237, 1
        %v566 = vrot.slane %v238, 1
        %v567 = vrot.slane %v239, 1
        %v568 = vrot.slane %v240, 1
        %v569 = vrot.slane %v241, 1
        %v570 = vrot.slane %v242, 1
        %v571 = vrot.slane %v243, 1
        %v572 = vrot.slane %v244, 1
        %v573 = vrot.slane %v245, 1
        %v574 = vrot.slane %v246, 1
        %v575 = vrot.slane %v247, 1
        %v576 = vrot.slane %v248, 1
        %v577 = vrot.slane %v249, 1
        %vm578 = vcmp.lt.s32.totalorder %v257, 7
        %v579 = vsel %vm578, %v576, %v577
        %v580 = vsel %vm578, %v575, %v576
        %v581 = vsel %vm578, %v574, %v575
        %v582 = vsel %vm578, %v573, %v574
        %v583 = vsel %vm578, %v572, %v573
        %v584 = vsel %vm578, %v571, %v572
        %v585 = vsel %vm578, %v570, %v571
        %v586 = vsel %vm578, %v569, %v570
        %v587 = vsel %vm578, %v568, %v569
        %v588 = vsel %vm578, %v567, %v568
        %v589 = vsel %vm578, %v566, %v567
        %v590 = vsel %vm578, %v565, %v566
        %v591 = vsel %vm578, %v564, %v565
        %v592 = vsel %vm578, %v563, %v564
        %v593 = vsel %vm578, %v562, %v563
        %v594 = vsel %vm578, %v561, %v562
        %v595 = vsel %vm578, %v560, %v561
        %v596 = vsel %vm578, %v559, %v560
        %v597 = vsel %vm578, %v558, %v559
        %v598 = vsel %vm578, %v557, %v558
        %v599 = vsel %vm578, %v556, %v557
        %v600 = vsel %vm578, %v555, %v556
        %v601 = vsel %vm578, %v554, %v555
        %v602 = vsel %vm578, %v553, %v554
        %v603 = vsel %vm578, %v552, %v553
        %v604 = vsel %vm578, %v551, %v552
        %v605 = vsel %vm578, %v550, %v551
        %v606 = vsel %vm578, %v549, %v550
        %v607 = vsel %vm578, %v548, %v549
        %v608 = vsel %vm578, %v547, %v548
        %v609 = vsel %vm578, %v546, %v547
        %v610 = vsel %vm578, %v577, %v546
        %v611 = vsel %vm514, 1, 0
        %v612 = vsel %vm515, 1, 0
        %v613 = vsel %vm516, 1, 0
        %v614 = vsel %vm517, 1, 0
        %v615 = vsel %vm518, 1, 0
        %v616 = vsel %vm519, 1, 0
        %v617 = vsel %vm520, 1, 0
        %v618 = vsel %vm521, 1, 0
        %v619 = vsel %vm522, 1, 0
        %v620 = vsel %vm523, 1, 0
        %v621 = vsel %vm524, 1, 0
        %v622 = vsel %vm525, 1, 0
        %v623 = vsel %vm526, 1, 0
        %v624 = vsel %vm527, 1, 0
        %v625 = vsel %vm528, 1, 0
        %v626 = vsel %vm529, 1, 0
        %v627 = vsel %vm530, 1, 0
        %v628 = vsel %vm531, 1, 0
        %v629 = vsel %vm532, 1, 0
        %v630 = vsel %vm533, 1, 0
        %v631 = vsel %vm534, 1, 0
        %v632 = vsel %vm535, 1, 0
        %v633 = vsel %vm536, 1, 0
        %v634 = vsel %vm537, 1, 0
        %v635 = vsel %vm538, 1, 0
        %v636 = vsel %vm539, 1, 0
        %v637 = vsel %vm540, 1, 0
        %v638 = vsel %vm541, 1, 0
        %v639 = vsel %vm542, 1, 0
        %v640 = vsel %vm543, 1, 0
        %v641 = vsel %vm544, 1, 0
        %v642 = vsel %vm545, 1, 0
        %vm643 = vcmp.eq.s32.totalorder %v611, 1
        %vm644 = vcmp.eq.s32.totalorder %v612, 1
        %vm645 = vcmp.eq.s32.totalorder %v613, 1
        %vm646 = vcmp.eq.s32.totalorder %v614, 1
        %vm647 = vcmp.eq.s32.totalorder %v615, 1
        %vm648 = vcmp.eq.s32.totalorder %v616, 1
        %vm649 = vcmp.eq.s32.totalorder %v617, 1
        %vm650 = vcmp.eq.s32.totalorder %v618, 1
        %vm651 = vcmp.eq.s32.totalorder %v619, 1
        %vm652 = vcmp.eq.s32.totalorder %v620, 1
        %vm653 = vcmp.eq.s32.totalorder %v621, 1
        %vm654 = vcmp.eq.s32.totalorder %v622, 1
        %vm655 = vcmp.eq.s32.totalorder %v623, 1
        %vm656 = vcmp.eq.s32.totalorder %v624, 1
        %vm657 = vcmp.eq.s32.totalorder %v625, 1
        %vm658 = vcmp.eq.s32.totalorder %v626, 1
        %vm659 = vcmp.eq.s32.totalorder %v627, 1
        %vm660 = vcmp.eq.s32.totalorder %v628, 1
        %vm661 = vcmp.eq.s32.totalorder %v629, 1
        %vm662 = vcmp.eq.s32.totalorder %v630, 1
        %vm663 = vcmp.eq.s32.totalorder %v631, 1
        %vm664 = vcmp.eq.s32.totalorder %v632, 1
        %vm665 = vcmp.eq.s32.totalorder %v633, 1
        %vm666 = vcmp.eq.s32.totalorder %v634, 1
        %vm667 = vcmp.eq.s32.totalorder %v635, 1
        %vm668 = vcmp.eq.s32.totalorder %v636, 1
        %vm669 = vcmp.eq.s32.totalorder %v637, 1
        %vm670 = vcmp.eq.s32.totalorder %v638, 1
        %vm671 = vcmp.eq.s32.totalorder %v639, 1
        %vm672 = vcmp.eq.s32.totalorder %v640, 1
        %vm673 = vcmp.eq.s32.totalorder %v641, 1
        %vm674 = vcmp.eq.s32.totalorder %v642, 1
        %v675 = vsel %vm643, 0.0, %v609
        %v676 = vsel %vm644, 0.0, %v608
        %v677 = vsel %vm645, 0.0, %v607
        %v678 = vsel %vm646, 0.0, %v606
        %v679 = vsel %vm647, 0.0, %v605
        %v680 = vsel %vm648, 0.0, %v604
        %v681 = vsel %vm649, 0.0, %v603
        %v682 = vsel %vm650, 0.0, %v602
        %v683 = vsel %vm651, 0.0, %v601
        %v684 = vsel %vm652, 0.0, %v600
        %v685 = vsel %vm653, 0.0, %v599
        %v686 = vsel %vm654, 0.0, %v598
        %v687 = vsel %vm655, 0.0, %v597
        %v688 = vsel %vm656, 0.0, %v596
        %v689 = vsel %vm657, 0.0, %v595
        %v690 = vsel %vm658, 0.0, %v594
        %v691 = vsel %vm659, 0.0, %v593
        %v692 = vsel %vm660, 0.0, %v592
        %v693 = vsel %vm661, 0.0, %v591
        %v694 = vsel %vm662, 0.0, %v590
        %v695 = vsel %vm663, 0.0, %v589
        %v696 = vsel %vm664, 0.0, %v588
        %v697 = vsel %vm665, 0.0, %v587
        %v698 = vsel %vm666, 0.0, %v586
        %v699 = vsel %vm667, 0.0, %v585
        %v700 = vsel %vm668, 0.0, %v584
        %v701 = vsel %vm669, 0.0, %v583
        %v702 = vsel %vm670, 0.0, %v582
        %v703 = vsel %vm671, 0.0, %v581
        %v704 = vsel %vm672, 0.0, %v580
        %v705 = vsel %vm673, 0.0, %v579
        %v706 = vsel %vm674, 0.0, %v610
        %v707 = vpack.c.bf16 %v483, %v482
        %v708 = vpack.c.bf16 %v485, %v484
        %v709 = vpack.c.bf16 %v487, %v486
        %v710 = vpack.c.bf16 %v489, %v488
        %v711 = vpack.c.bf16 %v491, %v490
        %v712 = vpack.c.bf16 %v493, %v492
        %v713 = vpack.c.bf16 %v495, %v494
        %v714 = vpack.c.bf16 %v497, %v496
        %v715 = vpack.c.bf16 %v499, %v498
        %v716 = vpack.c.bf16 %v501, %v500
        %v717 = vpack.c.bf16 %v503, %v502
        %v718 = vpack.c.bf16 %v505, %v504
        %v719 = vpack.c.bf16 %v507, %v506
        %v720 = vpack.c.bf16 %v509, %v508
        %v721 = vpack.c.bf16 %v511, %v510
        %v722 = vpack.c.bf16 %v513, %v512
        %723 = vst [vmem:[#allocation2 + $0x18] sm:$0xff] %v707
        %724 = vst [vmem:[#allocation2 + $0x30] sm:$0xff] %v708
        %725 = vst [vmem:[#allocation2 + $0x48] sm:$0xff] %v709
        %726 = vst [vmem:[#allocation2 + $0x60] sm:$0xff] %v710
        %727 = vst [vmem:[#allocation2 + $0x78] sm:$0xff] %v711
        %728 = vst [vmem:[#allocation2 + $0x90] sm:$0xff] %v712
        %729 = vst [vmem:[#allocation2 + $0xa8] sm:$0xff] %v713
        %730 = vst [vmem:[#allocation2 + $0xc0] sm:$0xff] %v714
        %731 = vst [vmem:[#allocation2 + $0xd8] sm:$0xff] %v715
        %732 = vst [vmem:[#allocation2 + $0xf0] sm:$0xff] %v716
        %733 = vst [vmem:[#allocation2 + $0x108] sm:$0xff] %v717
        %734 = vst [vmem:[#allocation2 + $0x120] sm:$0xff] %v718
        %735 = vst [vmem:[#allocation2 + $0x138] sm:$0xff] %v719
        %736 = vst [vmem:[#allocation2 + $0x150] sm:$0xff] %v720
        %737 = vst [vmem:[#allocation2 + $0x168] sm:$0xff] %v721
        %738 = vst [vmem:[#allocation2 + $0x180] sm:$0xff] %v722
        %v739 = vpack.c.bf16 %v219, %v218
        %v740 = vpack.c.bf16 %v221, %v220
        %v741 = vpack.c.bf16 %v223, %v222
        %v742 = vpack.c.bf16 %v225, %v224
        %v743 = vpack.c.bf16 %v227, %v226
        %v744 = vpack.c.bf16 %v229, %v228
        %v745 = vpack.c.bf16 %v231, %v230
        %v746 = vpack.c.bf16 %v233, %v232
        %v747 = vpack.c.bf16 %v235, %v234
        %v748 = vpack.c.bf16 %v237, %v236
        %v749 = vpack.c.bf16 %v239, %v238
        %v750 = vpack.c.bf16 %v241, %v240
        %v751 = vpack.c.bf16 %v243, %v242
        %v752 = vpack.c.bf16 %v245, %v244
        %v753 = vpack.c.bf16 %v247, %v246
        %v754 = vpack.c.bf16 %v249, %v248
        %755 = vst [vmem:[#allocation2 + $0x20] sm:$0xff] %v739
        %756 = vst [vmem:[#allocation2 + $0x38] sm:$0xff] %v740
        %757 = vst [vmem:[#allocation2 + $0x50] sm:$0xff] %v741
        %758 = vst [vmem:[#allocation2 + $0x68] sm:$0xff] %v742
        %759 = vst [vmem:[#allocation2 + $0x80] sm:$0xff] %v743
        %760 = vst [vmem:[#allocation2 + $0x98] sm:$0xff] %v744
        %761 = vst [vmem:[#allocation2 + $0xb0] sm:$0xff] %v745
        %762 = vst [vmem:[#allocation2 + $0xc8] sm:$0xff] %v746
        %763 = vst [vmem:[#allocation2 + $0xe0] sm:$0xff] %v747
        %764 = vst [vmem:[#allocation2 + $0xf8] sm:$0xff] %v748
        %765 = vst [vmem:[#allocation2 + $0x110] sm:$0xff] %v749
        %766 = vst [vmem:[#allocation2 + $0x128] sm:$0xff] %v750
        %767 = vst [vmem:[#allocation2 + $0x140] sm:$0xff] %v751
        %768 = vst [vmem:[#allocation2 + $0x158] sm:$0xff] %v752
        %769 = vst [vmem:[#allocation2 + $0x170] sm:$0xff] %v753
        %770 = vst [vmem:[#allocation2 + $0x188] sm:$0xff] %v754
        %v771 = vpack.c.bf16 %v676, %v675
        %v772 = vpack.c.bf16 %v678, %v677
        %v773 = vpack.c.bf16 %v680, %v679
        %v774 = vpack.c.bf16 %v682, %v681
        %v775 = vpack.c.bf16 %v684, %v683
        %v776 = vpack.c.bf16 %v686, %v685
        %v777 = vpack.c.bf16 %v688, %v687
        %v778 = vpack.c.bf16 %v690, %v689
        %v779 = vpack.c.bf16 %v692, %v691
        %v780 = vpack.c.bf16 %v694, %v693
        %v781 = vpack.c.bf16 %v696, %v695
        %v782 = vpack.c.bf16 %v698, %v697
        %v783 = vpack.c.bf16 %v700, %v699
        %v784 = vpack.c.bf16 %v702, %v701
        %v785 = vpack.c.bf16 %v704, %v703
        %v786 = vpack.c.bf16 %v706, %v705
        %787 = vst [vmem:[#allocation2 + $0x28] sm:$0xff] %v771
        %788 = vst [vmem:[#allocation2 + $0x40] sm:$0xff] %v772
        %789 = vst [vmem:[#allocation2 + $0x58] sm:$0xff] %v773
        %790 = vst [vmem:[#allocation2 + $0x70] sm:$0xff] %v774
        %791 = vst [vmem:[#allocation2 + $0x88] sm:$0xff] %v775
        %792 = vst [vmem:[#allocation2 + $0xa0] sm:$0xff] %v776
        %793 = vst [vmem:[#allocation2 + $0xb8] sm:$0xff] %v777
        %794 = vst [vmem:[#allocation2 + $0xd0] sm:$0xff] %v778
        %795 = vst [vmem:[#allocation2 + $0xe8] sm:$0xff] %v779
        %796 = vst [vmem:[#allocation2 + $0x100] sm:$0xff] %v780
        %797 = vst [vmem:[#allocation2 + $0x118] sm:$0xff] %v781
        %798 = vst [vmem:[#allocation2 + $0x130] sm:$0xff] %v782
        %799 = vst [vmem:[#allocation2 + $0x148] sm:$0xff] %v783
        %800 = vst [vmem:[#allocation2 + $0x160] sm:$0xff] %v784
        %801 = vst [vmem:[#allocation2 + $0x178] sm:$0xff] %v785
        %802 = vst [vmem:[#allocation2 + $0x190] sm:$0xff] %v786
        %v803 = vld [vmem:[#allocation2] sm:$0xff]
        %v804 = vld [vmem:[#allocation2 + $0x8] sm:$0xff]
        %v805 = vld [vmem:[#allocation2 + $0x10] sm:$0xff]
        %v806 = vld [vmem:[#allocation2 + $0x18] sm:$0xff]
        %v807 = vld [vmem:[#allocation2 + $0x20] sm:$0xff]
        %v808 = vld [vmem:[#allocation2 + $0x28] sm:$0xff]
        %v809 = vld [vmem:[#allocation2 + $0x30] sm:$0xff]
        %v810 = vld [vmem:[#allocation2 + $0x38] sm:$0xff]
        %v811 = vld [vmem:[#allocation2 + $0x40] sm:$0xff]
        %v812 = vld [vmem:[#allocation2 + $0x48] sm:$0xff]
        %v813 = vld [vmem:[#allocation2 + $0x50] sm:$0xff]
        %v814 = vld [vmem:[#allocation2 + $0x58] sm:$0xff]
        %v815 = vld [vmem:[#allocation2 + $0x60] sm:$0xff]
        %v816 = vld [vmem:[#allocation2 + $0x68] sm:$0xff]
        %v817 = vld [vmem:[#allocation2 + $0x70] sm:$0xff]
        %v818 = vld [vmem:[#allocation2 + $0x78] sm:$0xff]
        %v819 = vld [vmem:[#allocation2 + $0x80] sm:$0xff]
        %v820 = vld [vmem:[#allocation2 + $0x88] sm:$0xff]
        %v821 = vld [vmem:[#allocation2 + $0x90] sm:$0xff]
        %v822 = vld [vmem:[#allocation2 + $0x98] sm:$0xff]
        %v823 = vld [vmem:[#allocation2 + $0xa0] sm:$0xff]
        %v824 = vld [vmem:[#allocation2 + $0xa8] sm:$0xff]
        %v825 = vld [vmem:[#allocation2 + $0xb0] sm:$0xff]
        %v826 = vld [vmem:[#allocation2 + $0xb8] sm:$0xff]
        %v827 = vld [vmem:[#allocation5] sm:$0xf]
        %v828 = vld [vmem:[#allocation5 + $0x4] sm:$0xf]
        %v829 = vld [vmem:[#allocation5 + $0x8] sm:$0xf]
        %v830 = vld [vmem:[#allocation5 + $0xc] sm:$0xf]
        %v831 = vld [vmem:[#allocation5 + $0x10] sm:$0xf]
        %v832 = vld [vmem:[#allocation5 + $0x14] sm:$0xf]
        %v833 = vld [vmem:[#allocation5 + $0x18] sm:$0xf]
        %v834 = vld [vmem:[#allocation5 + $0x1c] sm:$0xf]
        %v835 = vld [vmem:[#allocation5 + $0x20] sm:$0xf]
        %v836 = vld [vmem:[#allocation5 + $0x24] sm:$0xf]
        %v837 = vld [vmem:[#allocation5 + $0x28] sm:$0xf]
        %v838 = vld [vmem:[#allocation5 + $0x2c] sm:$0xf]
        %v839 = vld [vmem:[#allocation5 + $0x30] sm:$0xf]
        %v840 = vld [vmem:[#allocation5 + $0x34] sm:$0xf]
        %v841 = vld [vmem:[#allocation5 + $0x38] sm:$0xf]
        %v842 = vld [vmem:[#allocation5 + $0x3c] sm:$0xf]
        %v843 = vld [vmem:[#allocation5 + $0x40] sm:$0xf]
        %v844 = vld [vmem:[#allocation5 + $0x44] sm:$0xf]
        %v845 = vld [vmem:[#allocation5 + $0x48] sm:$0xf]
        %v846 = vld [vmem:[#allocation5 + $0x4c] sm:$0xf]
        %v847 = vld [vmem:[#allocation5 + $0x50] sm:$0xf]
        %v848 = vld [vmem:[#allocation5 + $0x54] sm:$0xf]
        %v849 = vld [vmem:[#allocation5 + $0x58] sm:$0xf]
        %v850 = vld [vmem:[#allocation5 + $0x5c] sm:$0xf]
        %v851 = vld [vmem:[#allocation5 + $0x60] sm:$0xf]
        %v852 = vld [vmem:[#allocation5 + $0x64] sm:$0xf]
        %v853 = vld [vmem:[#allocation5 + $0x68] sm:$0xf]
        %v854 = vld [vmem:[#allocation5 + $0x6c] sm:$0xf]
        %v855 = vld [vmem:[#allocation5 + $0x70] sm:$0xf]
        %v856 = vld [vmem:[#allocation5 + $0x74] sm:$0xf]
        %v857 = vld [vmem:[#allocation5 + $0x78] sm:$0xf]
        %v858 = vld [vmem:[#allocation5 + $0x7c] sm:$0xf]
        %v859 = vld [vmem:[#allocation5 + $0x80] sm:$0xf]
        %v860 = vld [vmem:[#allocation5 + $0x84] sm:$0xf]
        %v861 = vld [vmem:[#allocation5 + $0x88] sm:$0xf]
        %v862 = vld [vmem:[#allocation5 + $0x8c] sm:$0xf]
        %v863 = vld [vmem:[#allocation5 + $0x90] sm:$0xf]
        %v864 = vld [vmem:[#allocation5 + $0x94] sm:$0xf]
        %v865 = vld [vmem:[#allocation5 + $0x98] sm:$0xf]
        %v866 = vld [vmem:[#allocation5 + $0x9c] sm:$0xf]
        %v867 = vld [vmem:[#allocation5 + $0xa0] sm:$0xf]
        %v868 = vld [vmem:[#allocation5 + $0xa4] sm:$0xf]
        %v869 = vld [vmem:[#allocation5 + $0xa8] sm:$0xf]
        %v870 = vld [vmem:[#allocation5 + $0xac] sm:$0xf]
        %v871 = vld [vmem:[#allocation5 + $0xb0] sm:$0xf]
        %v872 = vld [vmem:[#allocation5 + $0xb4] sm:$0xf]
        %v873 = vld [vmem:[#allocation5 + $0xb8] sm:$0xf]
        %v874 = vld [vmem:[#allocation5 + $0xbc] sm:$0xf]
        %v875 = vld [vmem:[#allocation2 + $0xc0] sm:$0xff]
        %v876 = vld [vmem:[#allocation2 + $0xc8] sm:$0xff]
        %v877 = vld [vmem:[#allocation2 + $0xd0] sm:$0xff]
        %s878 = scalar_lea.vmem [#allocation5], 192
        %v879 = vld [vmem:[%s878] sm:$0xf]
        %v880 = vld [vmem:[%s878 + $0x4] sm:$0xf]
        %v881 = vld [vmem:[%s878 + $0x8] sm:$0xf]
        %v882 = vld [vmem:[%s878 + $0xc] sm:$0xf]
        %v883 = vld [vmem:[%s878 + $0x10] sm:$0xf]
        %v884 = vld [vmem:[%s878 + $0x14] sm:$0xf]
        %v885 = vld [vmem:[%s878 + $0x18] sm:$0xf]
        %v886 = vld [vmem:[%s878 + $0x1c] sm:$0xf]
        %v887 = vld [vmem:[%s878 + $0x20] sm:$0xf]
        %v888 = vld [vmem:[%s878 + $0x24] sm:$0xf]
        %v889 = vld [vmem:[%s878 + $0x28] sm:$0xf]
        %v890 = vld [vmem:[%s878 + $0x2c] sm:$0xf]
        %v891 = vld [vmem:[%s878 + $0x30] sm:$0xf]
        %v892 = vld [vmem:[%s878 + $0x34] sm:$0xf]
        %v893 = vld [vmem:[%s878 + $0x38] sm:$0xf]
        %v894 = vld [vmem:[%s878 + $0x3c] sm:$0xf]
        %v895 = vld [vmem:[%s878 + $0x40] sm:$0xf]
        %v896 = vld [vmem:[%s878 + $0x44] sm:$0xf]
        %v897 = vld [vmem:[%s878 + $0x48] sm:$0xf]
        %v898 = vld [vmem:[%s878 + $0x4c] sm:$0xf]
        %v899 = vld [vmem:[%s878 + $0x50] sm:$0xf]
        %v900 = vld [vmem:[%s878 + $0x54] sm:$0xf]
        %v901 = vld [vmem:[%s878 + $0x58] sm:$0xf]
        %v902 = vld [vmem:[%s878 + $0x5c] sm:$0xf]
        %v903 = vld [vmem:[%s878 + $0x60] sm:$0xf]
        %v904 = vld [vmem:[%s878 + $0x64] sm:$0xf]
        %v905 = vld [vmem:[%s878 + $0x68] sm:$0xf]
        %v906 = vld [vmem:[%s878 + $0x6c] sm:$0xf]
        %v907 = vld [vmem:[%s878 + $0x70] sm:$0xf]
        %v908 = vld [vmem:[%s878 + $0x74] sm:$0xf]
        %v909 = vld [vmem:[%s878 + $0x78] sm:$0xf]
        %v910 = vld [vmem:[%s878 + $0x7c] sm:$0xf]
        %v911 = vld [vmem:[%s878 + $0x80] sm:$0xf]
        %v912 = vld [vmem:[%s878 + $0x84] sm:$0xf]
        %v913 = vld [vmem:[%s878 + $0x88] sm:$0xf]
        %v914 = vld [vmem:[%s878 + $0x8c] sm:$0xf]
        %v915 = vld [vmem:[%s878 + $0x90] sm:$0xf]
        %v916 = vld [vmem:[%s878 + $0x94] sm:$0xf]
        %v917 = vld [vmem:[%s878 + $0x98] sm:$0xf]
        %v918 = vld [vmem:[%s878 + $0x9c] sm:$0xf]
        %v919 = vld [vmem:[%s878 + $0xa0] sm:$0xf]
        %v920 = vld [vmem:[%s878 + $0xa4] sm:$0xf]
        %v921 = vld [vmem:[%s878 + $0xa8] sm:$0xf]
        %v922 = vld [vmem:[%s878 + $0xac] sm:$0xf]
        %v923 = vld [vmem:[%s878 + $0xb0] sm:$0xf]
        %v924 = vld [vmem:[%s878 + $0xb4] sm:$0xf]
        %v925 = vld [vmem:[%s878 + $0xb8] sm:$0xf]
        %v926 = vld [vmem:[%s878 + $0xbc] sm:$0xf]
        %v975 = vunpack.c.l.b16 %v879
        %v976 = vunpack.c.l.b16 %v880
        %v977 = vunpack.c.l.b16 %v881
        %v978 = vunpack.c.l.b16 %v882
        %v979 = vunpack.c.l.b16 %v883
        %v980 = vunpack.c.l.b16 %v884
        %v981 = vunpack.c.l.b16 %v885
        %v982 = vunpack.c.l.b16 %v886
        %v983 = vunpack.c.l.b16 %v887
        %v984 = vunpack.c.l.b16 %v888
        %v985 = vunpack.c.l.b16 %v889
        %v986 = vunpack.c.l.b16 %v890
        %v987 = vunpack.c.l.b16 %v891
        %v988 = vunpack.c.l.b16 %v892
        %v989 = vunpack.c.l.b16 %v893
        %v990 = vunpack.c.l.b16 %v894
        %v991 = vunpack.c.l.b16 %v895
        %v992 = vunpack.c.l.b16 %v896
        %v993 = vunpack.c.l.b16 %v897
        %v994 = vunpack.c.l.b16 %v898
        %v995 = vunpack.c.l.b16 %v899
        %v996 = vunpack.c.l.b16 %v900
        %v997 = vunpack.c.l.b16 %v901
        %v998 = vunpack.c.l.b16 %v902
        %v999 = vunpack.c.l.b16 %v903
        %v1000 = vunpack.c.l.b16 %v904
        %v1001 = vunpack.c.l.b16 %v905
        %v1002 = vunpack.c.l.b16 %v906
        %v1003 = vunpack.c.l.b16 %v907
        %v1004 = vunpack.c.l.b16 %v908
        %v1005 = vunpack.c.l.b16 %v909
        %v1006 = vunpack.c.l.b16 %v910
        %v1007 = vunpack.c.l.b16 %v911
        %v1008 = vunpack.c.l.b16 %v912
        %v1009 = vunpack.c.l.b16 %v913
        %v1010 = vunpack.c.l.b16 %v914
        %v1011 = vunpack.c.l.b16 %v915
        %v1012 = vunpack.c.l.b16 %v916
        %v1013 = vunpack.c.l.b16 %v917
        %v1014 = vunpack.c.l.b16 %v918
        %v1015 = vunpack.c.l.b16 %v919
        %v1016 = vunpack.c.l.b16 %v920
        %v1017 = vunpack.c.l.b16 %v921
        %v1018 = vunpack.c.l.b16 %v922
        %v1019 = vunpack.c.l.b16 %v923
        %v1020 = vunpack.c.l.b16 %v924
        %v1021 = vunpack.c.l.b16 %v925
        %v1022 = vunpack.c.l.b16 %v926
        %v1023 = vpack.c.b16 %v976, %v975
        %v1024 = vpack.c.b16 %v978, %v977
        %v1025 = vpack.c.b16 %v980, %v979
        %v1026 = vpack.c.b16 %v982, %v981
        %v1027 = vpack.c.b16 %v984, %v983
        %v1028 = vpack.c.b16 %v986, %v985
        %v1029 = vpack.c.b16 %v988, %v987
        %v1030 = vpack.c.b16 %v990, %v989
        %v1031 = vpack.c.b16 %v992, %v991
        %v1032 = vpack.c.b16 %v994, %v993
        %v1033 = vpack.c.b16 %v996, %v995
        %v1034 = vpack.c.b16 %v998, %v997
        %v1035 = vpack.c.b16 %v1000, %v999
        %v1036 = vpack.c.b16 %v1002, %v1001
        %v1037 = vpack.c.b16 %v1004, %v1003
        %v1038 = vpack.c.b16 %v1006, %v1005
        %v1039 = vpack.c.b16 %v1008, %v1007
        %v1040 = vpack.c.b16 %v1010, %v1009
        %v1041 = vpack.c.b16 %v1012, %v1011
        %v1042 = vpack.c.b16 %v1014, %v1013
        %v1043 = vpack.c.b16 %v1016, %v1015
        %v1044 = vpack.c.b16 %v1018, %v1017
        %v1045 = vpack.c.b16 %v1020, %v1019
        %v1046 = vpack.c.b16 %v1022, %v1021
        %1071 = vmatprep.subr.bf16.mxu0 0
        %1072 = vmatpush1.bf16.msra.mxu0 %v1023
        %1073 = vmatprep.subr.bf16.mxu0 0
        %1074 = vmatpush1.bf16.msra.mxu0 %v1024
        %1075 = vmatprep.subr.bf16.mxu0 0
        %1076 = vmatpush1.bf16.msra.mxu0 %v1025
        %1077 = vmatprep.subr.bf16.mxu0 0
        %1078 = vmatpush1.bf16.msra.mxu0 %v1026
        %1079 = vmatprep.subr.bf16.mxu0 0
        %1080 = vmatpush1.bf16.msra.mxu0 %v1027
        %1081 = vmatprep.subr.bf16.mxu0 0
        %1082 = vmatpush1.bf16.msra.mxu0 %v1028
        %1083 = vmatprep.subr.bf16.mxu0 0
        %1084 = vmatpush1.bf16.msra.mxu0 %v1029
        %1085 = vmatprep.subr.bf16.mxu0 0
        %1086 = vmatpush1.bf16.msra.mxu0 %v1030
        %1087 = vmatprep.subr.bf16.mxu0 0
        %1088 = vmatpush1.bf16.msra.mxu0 %v1031
        %1089 = vmatprep.subr.bf16.mxu0 0
        %1090 = vmatpush1.bf16.msra.mxu0 %v1032
        %1091 = vmatprep.subr.bf16.mxu0 0
        %1092 = vmatpush1.bf16.msra.mxu0 %v1033
        %1093 = vmatprep.subr.bf16.mxu0 0
        %1094 = vmatpush1.bf16.msra.mxu0 %v1034
        %1095 = vmatprep.subr.bf16.mxu0 0
        %1096 = vmatpush1.bf16.msra.mxu0 %v1035
        %1097 = vmatprep.subr.bf16.mxu0 0
        %1098 = vmatpush1.bf16.msra.mxu0 %v1036
        %1099 = vmatprep.subr.bf16.mxu0 0
        %1100 = vmatpush1.bf16.msra.mxu0 %v1037
        %1101 = vmatprep.subr.bf16.mxu0 0
        %1102 = vmatpush1.bf16.msra.mxu0 %v1038
        %1103 = vmatprep.mubr.bf16.mxu0 %v807
        %1104 = vmatmul.mubr.bf16.gmra.mrb[0].mxu0 %v806
        %v1105 = vpop.f32.mrb[0].mxu0
        %v1106 = vadd.f32 0.0, %v1105
        %v1107 = vpop.f32.mrb[0].mxu0
        %v1108 = vpop.f32.mrb[0].mxu0
        %v1109 = vadd.f32 0.0, %v1108
        %v1110 = vpop.f32.mrb[0].mxu0
        %1111 = vmatprep.mubr.bf16.mxu0 %v810
        %1112 = vmatmul.mubr.bf16.gmra.mrb[0].mxu0 %v809
        %v1113 = vpop.f32.mrb[0].mxu0
        %v1114 = vadd.f32 0.0, %v1113
        %v1115 = vpop.f32.mrb[0].mxu0
        %v1116 = vpop.f32.mrb[0].mxu0
        %v1117 = vadd.f32 0.0, %v1116
        %v1118 = vpop.f32.mrb[0].mxu0
        %1119 = vmatprep.mubr.bf16.mxu0 %v813
        %1120 = vmatmul.mubr.bf16.gmra.mrb[0].mxu0 %v812
        %v1121 = vpop.f32.mrb[0].mxu0
        %v1122 = vadd.f32 0.0, %v1121
        %v1123 = vpop.f32.mrb[0].mxu0
        %v1124 = vpop.f32.mrb[0].mxu0
        %v1125 = vadd.f32 0.0, %v1124
        %v1126 = vpop.f32.mrb[0].mxu0
        %1127 = vmatprep.mubr.bf16.mxu0 %v816
        %1128 = vmatmul.mubr.bf16.gmra.mrb[0].mxu0 %v815
        %v1129 = vpop.f32.mrb[0].mxu0
        %v1130 = vadd.f32 0.0, %v1129
        %v1131 = vpop.f32.mrb[0].mxu0
        %v1132 = vpop.f32.mrb[0].mxu0
        %v1133 = vadd.f32 0.0, %v1132
        %v1134 = vpop.f32.mrb[0].mxu0
        %1135 = vmatprep.mubr.bf16.mxu0 %v819
        %1136 = vmatmul.mubr.bf16.gmra.mrb[0].mxu0 %v818
        %v1137 = vpop.f32.mrb[0].mxu0
        %v1138 = vadd.f32 0.0, %v1137
        %v1139 = vpop.f32.mrb[0].mxu0
        %v1140 = vpop.f32.mrb[0].mxu0
        %v1141 = vadd.f32 0.0, %v1140
        %v1142 = vpop.f32.mrb[0].mxu0
        %1143 = vmatprep.mubr.bf16.mxu0 %v822
        %1144 = vmatmul.mubr.bf16.gmra.mrb[0].mxu0 %v821
        %v1145 = vpop.f32.mrb[0].mxu0
        %v1146 = vadd.f32 0.0, %v1145
        %v1147 = vpop.f32.mrb[0].mxu0
        %v1148 = vpop.f32.mrb[0].mxu0
        %v1149 = vadd.f32 0.0, %v1148
        %v1150 = vpop.f32.mrb[0].mxu0
        %1151 = vmatprep.mubr.bf16.mxu0 %v825
        %1152 = vmatmul.mubr.bf16.gmra.mrb[0].mxu0 %v824
        %v1153 = vpop.f32.mrb[0].mxu0
        %v1154 = vadd.f32 0.0, %v1153
        %v1155 = vpop.f32.mrb[0].mxu0
        %v1156 = vpop.f32.mrb[0].mxu0
        %v1157 = vadd.f32 0.0, %v1156
        %v1158 = vpop.f32.mrb[0].mxu0
        %1159 = vmatprep.mubr.bf16.mxu0 %v876
        %1160 = vmatmul.mubr.bf16.gmra.mrb[0].mxu0 %v875
        %v1161 = vpop.f32.mrb[0].mxu0
        %v1162 = vadd.f32 0.0, %v1161
        %v1163 = vpop.f32.mrb[0].mxu0
        %v1164 = vpop.f32.mrb[0].mxu0
        %v1165 = vadd.f32 0.0, %v1164
        %v1166 = vpop.f32.mrb[0].mxu0
        %1167 = vdwg.mxu0
        %1168 = vmatprep.subr.bf16.mxu0 0
        %1169 = vmatpush1.bf16.msra.mxu0 %v1039
        %1170 = vmatprep.subr.bf16.mxu0 0
        %1171 = vmatpush1.bf16.msra.mxu0 %v1040
        %1172 = vmatprep.subr.bf16.mxu0 0
        %1173 = vmatpush1.bf16.msra.mxu0 %v1041
        %1174 = vmatprep.subr.bf16.mxu0 0
        %1175 = vmatpush1.bf16.msra.mxu0 %v1042
        %1176 = vmatprep.subr.bf16.mxu0 0
        %1177 = vmatpush1.bf16.msra.mxu0 %v1043
        %1178 = vmatprep.subr.bf16.mxu0 0
        %1179 = vmatpush1.bf16.msra.mxu0 %v1044
        %1180 = vmatprep.subr.bf16.mxu0 0
        %1181 = vmatpush1.bf16.msra.mxu0 %v1045
        %1182 = vmatprep.subr.bf16.mxu0 0
        %1183 = vmatpush1.bf16.msra.mxu0 %v1046
        %1184 = vmatprep.subr.bf16.mxu0 0
        %1185 = vmatpush1.bf16.msra.mxu0 0
        %1186 = vmatprep.subr.bf16.mxu0 0
        %1187 = vmatpush1.bf16.msra.mxu0 0
        %1188 = vmatprep.subr.bf16.mxu0 0
        %1189 = vmatpush1.bf16.msra.mxu0 0
        %1190 = vmatprep.subr.bf16.mxu0 0
        %1191 = vmatpush1.bf16.msra.mxu0 0
        %1192 = vmatprep.subr.bf16.mxu0 0
        %1193 = vmatpush1.bf16.msra.mxu0 0
        %1194 = vmatprep.subr.bf16.mxu0 0
        %1195 = vmatpush1.bf16.msra.mxu0 0
        %1196 = vmatprep.subr.bf16.mxu0 0
        %1197 = vmatpush1.bf16.msra.mxu0 0
        %1198 = vmatprep.subr.bf16.mxu0 0
        %1199 = vmatpush1.bf16.msra.mxu0 0
        %1200 = vmatprep.mubr.bf16.mxu0 0
        %1201 = vmatmul.mubr.bf16.gmra.mrb[0].mxu0 %v808
        %v1202 = vpop.f32.mrb[0].mxu0
        %v1203 = vadd.f32 %v1106, %v1202
        %v1204 = vpop.f32.mrb[0].mxu0
        %v1205 = vpop.f32.mrb[0].mxu0
        %v1206 = vadd.f32 %v1109, %v1205
        %v1207 = vpop.f32.mrb[0].mxu0
        %1208 = vmatprep.mubr.bf16.mxu0 0
        %1209 = vmatmul.mubr.bf16.gmra.mrb[0].mxu0 %v811
        %v1210 = vpop.f32.mrb[0].mxu0
        %v1211 = vadd.f32 %v1114, %v1210
        %v1212 = vpop.f32.mrb[0].mxu0
        %v1213 = vpop.f32.mrb[0].mxu0
        %v1214 = vadd.f32 %v1117, %v1213
        %v1215 = vpop.f32.mrb[0].mxu0
        %1216 = vmatprep.mubr.bf16.mxu0 0
        %1217 = vmatmul.mubr.bf16.gmra.mrb[0].mxu0 %v814
        %v1218 = vpop.f32.mrb[0].mxu0
        %v1219 = vadd.f32 %v1122, %v1218
        %v1220 = vpop.f32.mrb[0].mxu0
        %v1221 = vpop.f32.mrb[0].mxu0
        %v1222 = vadd.f32 %v1125, %v1221
        %v1223 = vpop.f32.mrb[0].mxu0
        %1224 = vmatprep.mubr.bf16.mxu0 0
        %1225 = vmatmul.mubr.bf16.gmra.mrb[0].mxu0 %v817
        %v1226 = vpop.f32.mrb[0].mxu0
        %v1227 = vadd.f32 %v1130, %v1226
        %v1228 = vpop.f32.mrb[0].mxu0
        %v1229 = vpop.f32.mrb[0].mxu0
        %v1230 = vadd.f32 %v1133, %v1229
        %v1231 = vpop.f32.mrb[0].mxu0
        %1232 = vmatprep.mubr.bf16.mxu0 0
        %1233 = vmatmul.mubr.bf16.gmra.mrb[0].mxu0 %v820
        %v1234 = vpop.f32.mrb[0].mxu0
        %v1235 = vadd.f32 %v1138, %v1234
        %v1236 = vpop.f32.mrb[0].mxu0
        %v1237 = vpop.f32.mrb[0].mxu0
        %v1238 = vadd.f32 %v1141, %v1237
        %v1239 = vpop.f32.mrb[0].mxu0
        %1240 = vmatprep.mubr.bf16.mxu0 0
        %1241 = vmatmul.mubr.bf16.gmra.mrb[0].mxu0 %v823
        %v1242 = vpop.f32.mrb[0].mxu0
        %v1243 = vadd.f32 %v1146, %v1242
        %v1244 = vpop.f32.mrb[0].mxu0
        %v1245 = vpop.f32.mrb[0].mxu0
        %v1246 = vadd.f32 %v1149, %v1245
        %v1247 = vpop.f32.mrb[0].mxu0
        %1248 = vmatprep.mubr.bf16.mxu0 0
        %1249 = vmatmul.mubr.bf16.gmra.mrb[0].mxu0 %v826
        %v1250 = vpop.f32.mrb[0].mxu0
        %v1251 = vadd.f32 %v1154, %v1250
        %v1252 = vpop.f32.mrb[0].mxu0
        %v1253 = vpop.f32.mrb[0].mxu0
        %v1254 = vadd.f32 %v1157, %v1253
        %v1255 = vpop.f32.mrb[0].mxu0
        %1256 = vmatprep.mubr.bf16.mxu0 0
        %1257 = vmatmul.mubr.bf16.gmra.mrb[0].mxu0 %v877
        %v1258 = vpop.f32.mrb[0].mxu0
        %v1259 = vadd.f32 %v1162, %v1258
        %v1260 = vpop.f32.mrb[0].mxu0
        %v1261 = vpop.f32.mrb[0].mxu0
        %v1262 = vadd.f32 %v1165, %v1261
        %v1263 = vpop.f32.mrb[0].mxu0
        %1264 = vdwg.mxu0
        %v1313 = vunpack.c.l.b16 %v827
        %v1314 = vunpack.c.l.b16 %v828
        %v1315 = vunpack.c.l.b16 %v829
        %v1316 = vunpack.c.l.b16 %v830
        %v1317 = vunpack.c.l.b16 %v831
        %v1318 = vunpack.c.l.b16 %v832
        %v1319 = vunpack.c.l.b16 %v833
        %v1320 = vunpack.c.l.b16 %v834
        %v1321 = vunpack.c.l.b16 %v835
        %v1322 = vunpack.c.l.b16 %v836
        %v1323 = vunpack.c.l.b16 %v837
        %v1324 = vunpack.c.l.b16 %v838
        %v1325 = vunpack.c.l.b16 %v839
        %v1326 = vunpack.c.l.b16 %v840
        %v1327 = vunpack.c.l.b16 %v841
        %v1328 = vunpack.c.l.b16 %v842
        %v1329 = vunpack.c.l.b16 %v843
        %v1330 = vunpack.c.l.b16 %v844
        %v1331 = vunpack.c.l.b16 %v845
        %v1332 = vunpack.c.l.b16 %v846
        %v1333 = vunpack.c.l.b16 %v847
        %v1334 = vunpack.c.l.b16 %v848
        %v1335 = vunpack.c.l.b16 %v849
        %v1336 = vunpack.c.l.b16 %v850
        %v1337 = vunpack.c.l.b16 %v851
        %v1338 = vunpack.c.l.b16 %v852
        %v1339 = vunpack.c.l.b16 %v853
        %v1340 = vunpack.c.l.b16 %v854
        %v1341 = vunpack.c.l.b16 %v855
        %v1342 = vunpack.c.l.b16 %v856
        %v1343 = vunpack.c.l.b16 %v857
        %v1344 = vunpack.c.l.b16 %v858
        %v1345 = vunpack.c.l.b16 %v859
        %v1346 = vunpack.c.l.b16 %v860
        %v1347 = vunpack.c.l.b16 %v861
        %v1348 = vunpack.c.l.b16 %v862
        %v1349 = vunpack.c.l.b16 %v863
        %v1350 = vunpack.c.l.b16 %v864
        %v1351 = vunpack.c.l.b16 %v865
        %v1352 = vunpack.c.l.b16 %v866
        %v1353 = vunpack.c.l.b16 %v867
        %v1354 = vunpack.c.l.b16 %v868
        %v1355 = vunpack.c.l.b16 %v869
        %v1356 = vunpack.c.l.b16 %v870
        %v1357 = vunpack.c.l.b16 %v871
        %v1358 = vunpack.c.l.b16 %v872
        %v1359 = vunpack.c.l.b16 %v873
        %v1360 = vunpack.c.l.b16 %v874
        %v1361 = vpack.c.b16 %v1314, %v1313
        %v1362 = vpack.c.b16 %v1316, %v1315
        %v1363 = vpack.c.b16 %v1318, %v1317
        %v1364 = vpack.c.b16 %v1320, %v1319
        %v1365 = vpack.c.b16 %v1322, %v1321
        %v1366 = vpack.c.b16 %v1324, %v1323
        %v1367 = vpack.c.b16 %v1326, %v1325
        %v1368 = vpack.c.b16 %v1328, %v1327
        %v1369 = vpack.c.b16 %v1330, %v1329
        %v1370 = vpack.c.b16 %v1332, %v1331
        %v1371 = vpack.c.b16 %v1334, %v1333
        %v1372 = vpack.c.b16 %v1336, %v1335
        %v1373 = vpack.c.b16 %v1338, %v1337
        %v1374 = vpack.c.b16 %v1340, %v1339
        %v1375 = vpack.c.b16 %v1342, %v1341
        %v1376 = vpack.c.b16 %v1344, %v1343
        %v1377 = vpack.c.b16 %v1346, %v1345
        %v1378 = vpack.c.b16 %v1348, %v1347
        %v1379 = vpack.c.b16 %v1350, %v1349
        %v1380 = vpack.c.b16 %v1352, %v1351
        %v1381 = vpack.c.b16 %v1354, %v1353
        %v1382 = vpack.c.b16 %v1356, %v1355
        %v1383 = vpack.c.b16 %v1358, %v1357
        %v1384 = vpack.c.b16 %v1360, %v1359
        %1409 = vmatprep.subr.bf16.mxu0 0
        %1410 = vmatpush1.bf16.msra.mxu0 %v1361
        %1411 = vmatprep.subr.bf16.mxu0 0
        %1412 = vmatpush1.bf16.msra.mxu0 %v1362
        %1413 = vmatprep.subr.bf16.mxu0 0
        %1414 = vmatpush1.bf16.msra.mxu0 %v1363
        %1415 = vmatprep.subr.bf16.mxu0 0
        %1416 = vmatpush1.bf16.msra.mxu0 %v1364
        %1417 = vmatprep.subr.bf16.mxu0 0
        %1418 = vmatpush1.bf16.msra.mxu0 %v1365
        %1419 = vmatprep.subr.bf16.mxu0 0
        %1420 = vmatpush1.bf16.msra.mxu0 %v1366
        %1421 = vmatprep.subr.bf16.mxu0 0
        %1422 = vmatpush1.bf16.msra.mxu0 %v1367
        %1423 = vmatprep.subr.bf16.mxu0 0
        %1424 = vmatpush1.bf16.msra.mxu0 %v1368
        %1425 = vmatprep.subr.bf16.mxu0 0
        %1426 = vmatpush1.bf16.msra.mxu0 %v1369
        %1427 = vmatprep.subr.bf16.mxu0 0
        %1428 = vmatpush1.bf16.msra.mxu0 %v1370
        %1429 = vmatprep.subr.bf16.mxu0 0
        %1430 = vmatpush1.bf16.msra.mxu0 %v1371
        %1431 = vmatprep.subr.bf16.mxu0 0
        %1432 = vmatpush1.bf16.msra.mxu0 %v1372
        %1433 = vmatprep.subr.bf16.mxu0 0
        %1434 = vmatpush1.bf16.msra.mxu0 %v1373
        %1435 = vmatprep.subr.bf16.mxu0 0
        %1436 = vmatpush1.bf16.msra.mxu0 %v1374
        %1437 = vmatprep.subr.bf16.mxu0 0
        %1438 = vmatpush1.bf16.msra.mxu0 %v1375
        %1439 = vmatprep.subr.bf16.mxu0 0
        %1440 = vmatpush1.bf16.msra.mxu0 %v1376
        %1441 = vmatprep.mubr.bf16.mxu0 %v804
        %1442 = vmatmul.mubr.bf16.gmra.mrb[0].mxu0 %v803
        %v1443 = vpop.f32.mrb[0].mxu0
        %v1444 = vadd.f32 %v1203, %v1443
        %v1445 = vpop.f32.mrb[0].mxu0
        %v1446 = vpop.f32.mrb[0].mxu0
        %v1447 = vadd.f32 %v1206, %v1446
        %v1448 = vpop.f32.mrb[0].mxu0
        %1449 = vmatprep.mubr.bf16.mxu0 %v807
        %1450 = vmatmul.mubr.bf16.gmra.mrb[0].mxu0 %v806
        %v1451 = vpop.f32.mrb[0].mxu0
        %v1452 = vadd.f32 %v1211, %v1451
        %v1453 = vpop.f32.mrb[0].mxu0
        %v1454 = vpop.f32.mrb[0].mxu0
        %v1455 = vadd.f32 %v1214, %v1454
        %v1456 = vpop.f32.mrb[0].mxu0
        %1457 = vmatprep.mubr.bf16.mxu0 %v810
        %1458 = vmatmul.mubr.bf16.gmra.mrb[0].mxu0 %v809
        %v1459 = vpop.f32.mrb[0].mxu0
        %v1460 = vadd.f32 %v1219, %v1459
        %v1461 = vpop.f32.mrb[0].mxu0
        %v1462 = vpop.f32.mrb[0].mxu0
        %v1463 = vadd.f32 %v1222, %v1462
        %v1464 = vpop.f32.mrb[0].mxu0
        %1465 = vmatprep.mubr.bf16.mxu0 %v813
        %1466 = vmatmul.mubr.bf16.gmra.mrb[0].mxu0 %v812
        %v1467 = vpop.f32.mrb[0].mxu0
        %v1468 = vadd.f32 %v1227, %v1467
        %v1469 = vpop.f32.mrb[0].mxu0
        %v1470 = vpop.f32.mrb[0].mxu0
        %v1471 = vadd.f32 %v1230, %v1470
        %v1472 = vpop.f32.mrb[0].mxu0
        %1473 = vmatprep.mubr.bf16.mxu0 %v816
        %1474 = vmatmul.mubr.bf16.gmra.mrb[0].mxu0 %v815
        %v1475 = vpop.f32.mrb[0].mxu0
        %v1476 = vadd.f32 %v1235, %v1475
        %v1477 = vpop.f32.mrb[0].mxu0
        %v1478 = vpop.f32.mrb[0].mxu0
        %v1479 = vadd.f32 %v1238, %v1478
        %v1480 = vpop.f32.mrb[0].mxu0
        %1481 = vmatprep.mubr.bf16.mxu0 %v819
        %1482 = vmatmul.mubr.bf16.gmra.mrb[0].mxu0 %v818
        %v1483 = vpop.f32.mrb[0].mxu0
        %v1484 = vadd.f32 %v1243, %v1483
        %v1485 = vpop.f32.mrb[0].mxu0
        %v1486 = vpop.f32.mrb[0].mxu0
        %v1487 = vadd.f32 %v1246, %v1486
        %v1488 = vpop.f32.mrb[0].mxu0
        %1489 = vmatprep.mubr.bf16.mxu0 %v822
        %1490 = vmatmul.mubr.bf16.gmra.mrb[0].mxu0 %v821
        %v1491 = vpop.f32.mrb[0].mxu0
        %v1492 = vadd.f32 %v1251, %v1491
        %v1493 = vpop.f32.mrb[0].mxu0
        %v1494 = vpop.f32.mrb[0].mxu0
        %v1495 = vadd.f32 %v1254, %v1494
        %v1496 = vpop.f32.mrb[0].mxu0
        %1497 = vmatprep.mubr.bf16.mxu0 %v825
        %1498 = vmatmul.mubr.bf16.gmra.mrb[0].mxu0 %v824
        %v1499 = vpop.f32.mrb[0].mxu0
        %v1500 = vadd.f32 %v1259, %v1499
        %v1501 = vpop.f32.mrb[0].mxu0
        %v1502 = vpop.f32.mrb[0].mxu0
        %v1503 = vadd.f32 %v1262, %v1502
        %v1504 = vpop.f32.mrb[0].mxu0
        %1505 = vdwg.mxu0
        %1506 = vmatprep.subr.bf16.mxu0 0
        %1507 = vmatpush1.bf16.msra.mxu0 %v1377
        %1508 = vmatprep.subr.bf16.mxu0 0
        %1509 = vmatpush1.bf16.msra.mxu0 %v1378
        %1510 = vmatprep.subr.bf16.mxu0 0
        %1511 = vmatpush1.bf16.msra.mxu0 %v1379
        %1512 = vmatprep.subr.bf16.mxu0 0
        %1513 = vmatpush1.bf16.msra.mxu0 %v1380
        %1514 = vmatprep.subr.bf16.mxu0 0
        %1515 = vmatpush1.bf16.msra.mxu0 %v1381
        %1516 = vmatprep.subr.bf16.mxu0 0
        %1517 = vmatpush1.bf16.msra.mxu0 %v1382
        %1518 = vmatprep.subr.bf16.mxu0 0
        %1519 = vmatpush1.bf16.msra.mxu0 %v1383
        %1520 = vmatprep.subr.bf16.mxu0 0
        %1521 = vmatpush1.bf16.msra.mxu0 %v1384
        %1522 = vmatprep.subr.bf16.mxu0 0
        %1523 = vmatpush1.bf16.msra.mxu0 0
        %1524 = vmatprep.subr.bf16.mxu0 0
        %1525 = vmatpush1.bf16.msra.mxu0 0
        %1526 = vmatprep.subr.bf16.mxu0 0
        %1527 = vmatpush1.bf16.msra.mxu0 0
        %1528 = vmatprep.subr.bf16.mxu0 0
        %1529 = vmatpush1.bf16.msra.mxu0 0
        %1530 = vmatprep.subr.bf16.mxu0 0
        %1531 = vmatpush1.bf16.msra.mxu0 0
        %1532 = vmatprep.subr.bf16.mxu0 0
        %1533 = vmatpush1.bf16.msra.mxu0 0
        %1534 = vmatprep.subr.bf16.mxu0 0
        %1535 = vmatpush1.bf16.msra.mxu0 0
        %1536 = vmatprep.subr.bf16.mxu0 0
        %1537 = vmatpush1.bf16.msra.mxu0 0
        %1538 = vmatprep.mubr.bf16.mxu0 0
        %1539 = vmatmul.mubr.bf16.gmra.mrb[0].mxu0 %v805
        %v1540 = vpop.f32.mrb[0].mxu0
        %v1541 = vadd.f32 %v1444, %v1540
        %v1542 = vpop.f32.mrb[0].mxu0
        %v1543 = vpop.f32.mrb[0].mxu0
        %v1544 = vadd.f32 %v1447, %v1543
        %v1545 = vpop.f32.mrb[0].mxu0
        %1546 = vmatprep.mubr.bf16.mxu0 0
        %1547 = vmatmul.mubr.bf16.gmra.mrb[0].mxu0 %v808
        %v1548 = vpop.f32.mrb[0].mxu0
        %v1549 = vadd.f32 %v1452, %v1548
        %v1550 = vpop.f32.mrb[0].mxu0
        %v1551 = vpop.f32.mrb[0].mxu0
        %v1552 = vadd.f32 %v1455, %v1551
        %v1553 = vpop.f32.mrb[0].mxu0
        %1554 = vmatprep.mubr.bf16.mxu0 0
        %1555 = vmatmul.mubr.bf16.gmra.mrb[0].mxu0 %v811
        %v1556 = vpop.f32.mrb[0].mxu0
        %v1557 = vadd.f32 %v1460, %v1556
        %v1558 = vpop.f32.mrb[0].mxu0
        %v1559 = vpop.f32.mrb[0].mxu0
        %v1560 = vadd.f32 %v1463, %v1559
        %v1561 = vpop.f32.mrb[0].mxu0
        %1562 = vmatprep.mubr.bf16.mxu0 0
        %1563 = vmatmul.mubr.bf16.gmra.mrb[0].mxu0 %v814
        %v1564 = vpop.f32.mrb[0].mxu0
        %v1565 = vadd.f32 %v1468, %v1564
        %v1566 = vpop.f32.mrb[0].mxu0
        %v1567 = vpop.f32.mrb[0].mxu0
        %v1568 = vadd.f32 %v1471, %v1567
        %v1569 = vpop.f32.mrb[0].mxu0
        %1570 = vmatprep.mubr.bf16.mxu0 0
        %1571 = vmatmul.mubr.bf16.gmra.mrb[0].mxu0 %v817
        %v1572 = vpop.f32.mrb[0].mxu0
        %v1573 = vadd.f32 %v1476, %v1572
        %v1574 = vpop.f32.mrb[0].mxu0
        %v1575 = vpop.f32.mrb[0].mxu0
        %v1576 = vadd.f32 %v1479, %v1575
        %v1577 = vpop.f32.mrb[0].mxu0
        %1578 = vmatprep.mubr.bf16.mxu0 0
        %1579 = vmatmul.mubr.bf16.gmra.mrb[0].mxu0 %v820
        %v1580 = vpop.f32.mrb[0].mxu0
        %v1581 = vadd.f32 %v1484, %v1580
        %v1582 = vpop.f32.mrb[0].mxu0
        %v1583 = vpop.f32.mrb[0].mxu0
        %v1584 = vadd.f32 %v1487, %v1583
        %v1585 = vpop.f32.mrb[0].mxu0
        %1586 = vmatprep.mubr.bf16.mxu0 0
        %1587 = vmatmul.mubr.bf16.gmra.mrb[0].mxu0 %v823
        %v1588 = vpop.f32.mrb[0].mxu0
        %v1589 = vadd.f32 %v1492, %v1588
        %v1590 = vpop.f32.mrb[0].mxu0
        %v1591 = vpop.f32.mrb[0].mxu0
        %v1592 = vadd.f32 %v1495, %v1591
        %v1593 = vpop.f32.mrb[0].mxu0
        %1594 = vmatprep.mubr.bf16.mxu0 0
        %1595 = vmatmul.mubr.bf16.gmra.mrb[0].mxu0 %v826
        %v1596 = vpop.f32.mrb[0].mxu0
        %v1597 = vadd.f32 %v1500, %v1596
        %v1598 = vpop.f32.mrb[0].mxu0
        %v1599 = vpop.f32.mrb[0].mxu0
        %v1600 = vadd.f32 %v1503, %v1599
        %v1601 = vpop.f32.mrb[0].mxu0
        %1602 = vdwg.mxu0
        %v1603 = vld [vmem:[#allocation2 + $0x30] sm:$0xff]
        %v1604 = vld [vmem:[#allocation2 + $0x38] sm:$0xff]
        %v1605 = vld [vmem:[#allocation2 + $0x40] sm:$0xff]
        %v1606 = vld [vmem:[#allocation2 + $0x48] sm:$0xff]
        %v1607 = vld [vmem:[#allocation2 + $0x50] sm:$0xff]
        %v1608 = vld [vmem:[#allocation2 + $0x58] sm:$0xff]
        %v1609 = vld [vmem:[#allocation2 + $0x60] sm:$0xff]
        %v1610 = vld [vmem:[#allocation2 + $0x68] sm:$0xff]
        %v1611 = vld [vmem:[#allocation2 + $0x70] sm:$0xff]
        %v1612 = vld [vmem:[#allocation2 + $0x78] sm:$0xff]
        %v1613 = vld [vmem:[#allocation2 + $0x80] sm:$0xff]
        %v1614 = vld [vmem:[#allocation2 + $0x88] sm:$0xff]
        %v1615 = vld [vmem:[#allocation2 + $0x90] sm:$0xff]
        %v1616 = vld [vmem:[#allocation2 + $0x98] sm:$0xff]
        %v1617 = vld [vmem:[#allocation2 + $0xa0] sm:$0xff]
        %v1618 = vld [vmem:[#allocation2 + $0xa8] sm:$0xff]
        %v1619 = vld [vmem:[#allocation2 + $0xb0] sm:$0xff]
        %v1620 = vld [vmem:[#allocation2 + $0xb8] sm:$0xff]
        %v1621 = vld [vmem:[#allocation2 + $0xc0] sm:$0xff]
        %v1622 = vld [vmem:[#allocation2 + $0xc8] sm:$0xff]
        %v1623 = vld [vmem:[#allocation2 + $0xd0] sm:$0xff]
        %v1624 = vld [vmem:[#allocation2 + $0xd8] sm:$0xff]
        %v1625 = vld [vmem:[#allocation2 + $0xe0] sm:$0xff]
        %v1626 = vld [vmem:[#allocation2 + $0xe8] sm:$0xff]
        %s1627 = scalar_lea.vmem [#allocation5], 384
        %v1628 = vld [vmem:[%s1627] sm:$0xf]
        %v1629 = vld [vmem:[%s1627 + $0x4] sm:$0xf]
        %v1630 = vld [vmem:[%s1627 + $0x8] sm:$0xf]
        %v1631 = vld [vmem:[%s1627 + $0xc] sm:$0xf]
        %v1632 = vld [vmem:[%s1627 + $0x10] sm:$0xf]
        %v1633 = vld [vmem:[%s1627 + $0x14] sm:$0xf]
        %v1634 = vld [vmem:[%s1627 + $0x18] sm:$0xf]
        %v1635 = vld [vmem:[%s1627 + $0x1c] sm:$0xf]
        %v1636 = vld [vmem:[%s1627 + $0x20] sm:$0xf]
        %v1637 = vld [vmem:[%s1627 + $0x24] sm:$0xf]
        %v1638 = vld [vmem:[%s1627 + $0x28] sm:$0xf]
        %v1639 = vld [vmem:[%s1627 + $0x2c] sm:$0xf]
        %v1640 = vld [vmem:[%s1627 + $0x30] sm:$0xf]
        %v1641 = vld [vmem:[%s1627 + $0x34] sm:$0xf]
        %v1642 = vld [vmem:[%s1627 + $0x38] sm:$0xf]
        %v1643 = vld [vmem:[%s1627 + $0x3c] sm:$0xf]
        %v1644 = vld [vmem:[%s1627 + $0x40] sm:$0xf]
        %v1645 = vld [vmem:[%s1627 + $0x44] sm:$0xf]
        %v1646 = vld [vmem:[%s1627 + $0x48] sm:$0xf]
        %v1647 = vld [vmem:[%s1627 + $0x4c] sm:$0xf]
        %v1648 = vld [vmem:[%s1627 + $0x50] sm:$0xf]
        %v1649 = vld [vmem:[%s1627 + $0x54] sm:$0xf]
        %v1650 = vld [vmem:[%s1627 + $0x58] sm:$0xf]
        %v1651 = vld [vmem:[%s1627 + $0x5c] sm:$0xf]
        %v1652 = vld [vmem:[%s1627 + $0x60] sm:$0xf]
        %v1653 = vld [vmem:[%s1627 + $0x64] sm:$0xf]
        %v1654 = vld [vmem:[%s1627 + $0x68] sm:$0xf]
        %v1655 = vld [vmem:[%s1627 + $0x6c] sm:$0xf]
        %v1656 = vld [vmem:[%s1627 + $0x70] sm:$0xf]
        %v1657 = vld [vmem:[%s1627 + $0x74] sm:$0xf]
        %v1658 = vld [vmem:[%s1627 + $0x78] sm:$0xf]
        %v1659 = vld [vmem:[%s1627 + $0x7c] sm:$0xf]
        %v1660 = vld [vmem:[%s1627 + $0x80] sm:$0xf]
        %v1661 = vld [vmem:[%s1627 + $0x84] sm:$0xf]
        %v1662 = vld [vmem:[%s1627 + $0x88] sm:$0xf]
        %v1663 = vld [vmem:[%s1627 + $0x8c] sm:$0xf]
        %v1664 = vld [vmem:[%s1627 + $0x90] sm:$0xf]
        %v1665 = vld [vmem:[%s1627 + $0x94] sm:$0xf]
        %v1666 = vld [vmem:[%s1627 + $0x98] sm:$0xf]
        %v1667 = vld [vmem:[%s1627 + $0x9c] sm:$0xf]
        %v1668 = vld [vmem:[%s1627 + $0xa0] sm:$0xf]
        %v1669 = vld [vmem:[%s1627 + $0xa4] sm:$0xf]
        %v1670 = vld [vmem:[%s1627 + $0xa8] sm:$0xf]
        %v1671 = vld [vmem:[%s1627 + $0xac] sm:$0xf]
        %v1672 = vld [vmem:[%s1627 + $0xb0] sm:$0xf]
        %v1673 = vld [vmem:[%s1627 + $0xb4] sm:$0xf]
        %v1674 = vld [vmem:[%s1627 + $0xb8] sm:$0xf]
        %v1675 = vld [vmem:[%s1627 + $0xbc] sm:$0xf]
        %v1724 = vunpack.c.l.b16 %v1628
        %v1725 = vunpack.c.l.b16 %v1629
        %v1726 = vunpack.c.l.b16 %v1630
        %v1727 = vunpack.c.l.b16 %v1631
        %v1728 = vunpack.c.l.b16 %v1632
        %v1729 = vunpack.c.l.b16 %v1633
        %v1730 = vunpack.c.l.b16 %v1634
        %v1731 = vunpack.c.l.b16 %v1635
        %v1732 = vunpack.c.l.b16 %v1636
        %v1733 = vunpack.c.l.b16 %v1637
        %v1734 = vunpack.c.l.b16 %v1638
        %v1735 = vunpack.c.l.b16 %v1639
        %v1736 = vunpack.c.l.b16 %v1640
        %v1737 = vunpack.c.l.b16 %v1641
        %v1738 = vunpack.c.l.b16 %v1642
        %v1739 = vunpack.c.l.b16 %v1643
        %v1740 = vunpack.c.l.b16 %v1644
        %v1741 = vunpack.c.l.b16 %v1645
        %v1742 = vunpack.c.l.b16 %v1646
        %v1743 = vunpack.c.l.b16 %v1647
        %v1744 = vunpack.c.l.b16 %v1648
        %v1745 = vunpack.c.l.b16 %v1649
        %v1746 = vunpack.c.l.b16 %v1650
        %v1747 = vunpack.c.l.b16 %v1651
        %v1748 = vunpack.c.l.b16 %v1652
        %v1749 = vunpack.c.l.b16 %v1653
        %v1750 = vunpack.c.l.b16 %v1654
        %v1751 = vunpack.c.l.b16 %v1655
        %v1752 = vunpack.c.l.b16 %v1656
        %v1753 = vunpack.c.l.b16 %v1657
        %v1754 = vunpack.c.l.b16 %v1658
        %v1755 = vunpack.c.l.b16 %v1659
        %v1756 = vunpack.c.l.b16 %v1660
        %v1757 = vunpack.c.l.b16 %v1661
        %v1758 = vunpack.c.l.b16 %v1662
        %v1759 = vunpack.c.l.b16 %v1663
        %v1760 = vunpack.c.l.b16 %v1664
        %v1761 = vunpack.c.l.b16 %v1665
        %v1762 = vunpack.c.l.b16 %v1666
        %v1763 = vunpack.c.l.b16 %v1667
        %v1764 = vunpack.c.l.b16 %v1668
        %v1765 = vunpack.c.l.b16 %v1669
        %v1766 = vunpack.c.l.b16 %v1670
        %v1767 = vunpack.c.l.b16 %v1671
        %v1768 = vunpack.c.l.b16 %v1672
        %v1769 = vunpack.c.l.b16 %v1673
        %v1770 = vunpack.c.l.b16 %v1674
        %v1771 = vunpack.c.l.b16 %v1675
        %v1772 = vpack.c.b16 %v1725, %v1724
        %v1773 = vpack.c.b16 %v1727, %v1726
        %v1774 = vpack.c.b16 %v1729, %v1728
        %v1775 = vpack.c.b16 %v1731, %v1730
        %v1776 = vpack.c.b16 %v1733, %v1732
        %v1777 = vpack.c.b16 %v1735, %v1734
        %v1778 = vpack.c.b16 %v1737, %v1736
        %v1779 = vpack.c.b16 %v1739, %v1738
        %v1780 = vpack.c.b16 %v1741, %v1740
        %v1781 = vpack.c.b16 %v1743, %v1742
        %v1782 = vpack.c.b16 %v1745, %v1744
        %v1783 = vpack.c.b16 %v1747, %v1746
        %v1784 = vpack.c.b16 %v1749, %v1748
        %v1785 = vpack.c.b16 %v1751, %v1750
        %v1786 = vpack.c.b16 %v1753, %v1752
        %v1787 = vpack.c.b16 %v1755, %v1754
        %v1788 = vpack.c.b16 %v1757, %v1756
        %v1789 = vpack.c.b16 %v1759, %v1758
        %v1790 = vpack.c.b16 %v1761, %v1760
        %v1791 = vpack.c.b16 %v1763, %v1762
        %v1792 = vpack.c.b16 %v1765, %v1764
        %v1793 = vpack.c.b16 %v1767, %v1766
        %v1794 = vpack.c.b16 %v1769, %v1768
        %v1795 = vpack.c.b16 %v1771, %v1770
        %1820 = vmatprep.subr.bf16.mxu0 0
        %1821 = vmatpush1.bf16.msra.mxu0 %v1772
        %1822 = vmatprep.subr.bf16.mxu0 0
        %1823 = vmatpush1.bf16.msra.mxu0 %v1773
        %1824 = vmatprep.subr.bf16.mxu0 0
        %1825 = vmatpush1.bf16.msra.mxu0 %v1774
        %1826 = vmatprep.subr.bf16.mxu0 0
        %1827 = vmatpush1.bf16.msra.mxu0 %v1775
        %1828 = vmatprep.subr.bf16.mxu0 0
        %1829 = vmatpush1.bf16.msra.mxu0 %v1776
        %1830 = vmatprep.subr.bf16.mxu0 0
        %1831 = vmatpush1.bf16.msra.mxu0 %v1777
        %1832 = vmatprep.subr.bf16.mxu0 0
        %1833 = vmatpush1.bf16.msra.mxu0 %v1778
        %1834 = vmatprep.subr.bf16.mxu0 0
        %1835 = vmatpush1.bf16.msra.mxu0 %v1779
        %1836 = vmatprep.subr.bf16.mxu0 0
        %1837 = vmatpush1.bf16.msra.mxu0 %v1780
        %1838 = vmatprep.subr.bf16.mxu0 0
        %1839 = vmatpush1.bf16.msra.mxu0 %v1781
        %1840 = vmatprep.subr.bf16.mxu0 0
        %1841 = vmatpush1.bf16.msra.mxu0 %v1782
        %1842 = vmatprep.subr.bf16.mxu0 0
        %1843 = vmatpush1.bf16.msra.mxu0 %v1783
        %1844 = vmatprep.subr.bf16.mxu0 0
        %1845 = vmatpush1.bf16.msra.mxu0 %v1784
        %1846 = vmatprep.subr.bf16.mxu0 0
        %1847 = vmatpush1.bf16.msra.mxu0 %v1785
        %1848 = vmatprep.subr.bf16.mxu0 0
        %1849 = vmatpush1.bf16.msra.mxu0 %v1786
        %1850 = vmatprep.subr.bf16.mxu0 0
        %1851 = vmatpush1.bf16.msra.mxu0 %v1787
        %1852 = vmatprep.mubr.bf16.mxu0 %v1604
        %1853 = vmatmul.mubr.bf16.gmra.mrb[0].mxu0 %v1603
        %v1854 = vpop.f32.mrb[0].mxu0
        %v1855 = vadd.f32 0.0, %v1854
        %v1856 = vpop.f32.mrb[0].mxu0
        %v1857 = vpop.f32.mrb[0].mxu0
        %v1858 = vadd.f32 0.0, %v1857
        %v1859 = vpop.f32.mrb[0].mxu0
        %1860 = vmatprep.mubr.bf16.mxu0 %v1607
        %1861 = vmatmul.mubr.bf16.gmra.mrb[0].mxu0 %v1606
        %v1862 = vpop.f32.mrb[0].mxu0
        %v1863 = vadd.f32 0.0, %v1862
        %v1864 = vpop.f32.mrb[0].mxu0
        %v1865 = vpop.f32.mrb[0].mxu0
        %v1866 = vadd.f32 0.0, %v1865
        %v1867 = vpop.f32.mrb[0].mxu0
        %1868 = vmatprep.mubr.bf16.mxu0 %v1610
        %1869 = vmatmul.mubr.bf16.gmra.mrb[0].mxu0 %v1609
        %v1870 = vpop.f32.mrb[0].mxu0
        %v1871 = vadd.f32 0.0, %v1870
        %v1872 = vpop.f32.mrb[0].mxu0
        %v1873 = vpop.f32.mrb[0].mxu0
        %v1874 = vadd.f32 0.0, %v1873
        %v1875 = vpop.f32.mrb[0].mxu0
        %1876 = vmatprep.mubr.bf16.mxu0 %v1613
        %1877 = vmatmul.mubr.bf16.gmra.mrb[0].mxu0 %v1612
        %v1878 = vpop.f32.mrb[0].mxu0
        %v1879 = vadd.f32 0.0, %v1878
        %v1880 = vpop.f32.mrb[0].mxu0
        %v1881 = vpop.f32.mrb[0].mxu0
        %v1882 = vadd.f32 0.0, %v1881
        %v1883 = vpop.f32.mrb[0].mxu0
        %1884 = vmatprep.mubr.bf16.mxu0 %v1616
        %1885 = vmatmul.mubr.bf16.gmra.mrb[0].mxu0 %v1615
        %v1886 = vpop.f32.mrb[0].mxu0
        %v1887 = vadd.f32 0.0, %v1886
        %v1888 = vpop.f32.mrb[0].mxu0
        %v1889 = vpop.f32.mrb[0].mxu0
        %v1890 = vadd.f32 0.0, %v1889
        %v1891 = vpop.f32.mrb[0].mxu0
        %1892 = vmatprep.mubr.bf16.mxu0 %v1619
        %1893 = vmatmul.mubr.bf16.gmra.mrb[0].mxu0 %v1618
        %v1894 = vpop.f32.mrb[0].mxu0
        %v1895 = vadd.f32 0.0, %v1894
        %v1896 = vpop.f32.mrb[0].mxu0
        %v1897 = vpop.f32.mrb[0].mxu0
        %v1898 = vadd.f32 0.0, %v1897
        %v1899 = vpop.f32.mrb[0].mxu0
        %1900 = vmatprep.mubr.bf16.mxu0 %v1622
        %1901 = vmatmul.mubr.bf16.gmra.mrb[0].mxu0 %v1621
        %v1902 = vpop.f32.mrb[0].mxu0
        %v1903 = vadd.f32 0.0, %v1902
        %v1904 = vpop.f32.mrb[0].mxu0
        %v1905 = vpop.f32.mrb[0].mxu0
        %v1906 = vadd.f32 0.0, %v1905
        %v1907 = vpop.f32.mrb[0].mxu0
        %1908 = vmatprep.mubr.bf16.mxu0 %v1625
        %1909 = vmatmul.mubr.bf16.gmra.mrb[0].mxu0 %v1624
        %v1910 = vpop.f32.mrb[0].mxu0
        %v1911 = vadd.f32 0.0, %v1910
        %v1912 = vpop.f32.mrb[0].mxu0
        %v1913 = vpop.f32.mrb[0].mxu0
        %v1914 = vadd.f32 0.0, %v1913
        %v1915 = vpop.f32.mrb[0].mxu0
        %1916 = vdwg.mxu0
        %1917 = vmatprep.subr.bf16.mxu0 0
        %1918 = vmatpush1.bf16.msra.mxu0 %v1788
        %1919 = vmatprep.subr.bf16.mxu0 0
        %1920 = vmatpush1.bf16.msra.mxu0 %v1789
        %1921 = vmatprep.subr.bf16.mxu0 0
        %1922 = vmatpush1.bf16.msra.mxu0 %v1790
        %1923 = vmatprep.subr.bf16.mxu0 0
        %1924 = vmatpush1.bf16.msra.mxu0 %v1791
        %1925 = vmatprep.subr.bf16.mxu0 0
        %1926 = vmatpush1.bf16.msra.mxu0 %v1792
        %1927 = vmatprep.subr.bf16.mxu0 0
        %1928 = vmatpush1.bf16.msra.mxu0 %v1793
        %1929 = vmatprep.subr.bf16.mxu0 0
        %1930 = vmatpush1.bf16.msra.mxu0 %v1794
        %1931 = vmatprep.subr.bf16.mxu0 0
        %1932 = vmatpush1.bf16.msra.mxu0 %v1795
        %1933 = vmatprep.subr.bf16.mxu0 0
        %1934 = vmatpush1.bf16.msra.mxu0 0
        %1935 = vmatprep.subr.bf16.mxu0 0
        %1936 = vmatpush1.bf16.msra.mxu0 0
        %1937 = vmatprep.subr.bf16.mxu0 0
        %1938 = vmatpush1.bf16.msra.mxu0 0
        %1939 = vmatprep.subr.bf16.mxu0 0
        %1940 = vmatpush1.bf16.msra.mxu0 0
        %1941 = vmatprep.subr.bf16.mxu0 0
        %1942 = vmatpush1.bf16.msra.mxu0 0
        %1943 = vmatprep.subr.bf16.mxu0 0
        %1944 = vmatpush1.bf16.msra.mxu0 0
        %1945 = vmatprep.subr.bf16.mxu0 0
        %1946 = vmatpush1.bf16.msra.mxu0 0
        %1947 = vmatprep.subr.bf16.mxu0 0
        %1948 = vmatpush1.bf16.msra.mxu0 0
        %1949 = vmatprep.mubr.bf16.mxu0 0
        %1950 = vmatmul.mubr.bf16.gmra.mrb[0].mxu0 %v1605
        %v1951 = vpop.f32.mrb[0].mxu0
        %v1952 = vadd.f32 %v1855, %v1951
        %v1953 = vpop.f32.mrb[0].mxu0
        %v1954 = vpop.f32.mrb[0].mxu0
        %v1955 = vadd.f32 %v1858, %v1954
        %v1956 = vpop.f32.mrb[0].mxu0
        %1957 = vmatprep.mubr.bf16.mxu0 0
        %1958 = vmatmul.mubr.bf16.gmra.mrb[0].mxu0 %v1608
        %v1959 = vpop.f32.mrb[0].mxu0
        %v1960 = vadd.f32 %v1863, %v1959
        %v1961 = vpop.f32.mrb[0].mxu0
        %v1962 = vpop.f32.mrb[0].mxu0
        %v1963 = vadd.f32 %v1866, %v1962
        %v1964 = vpop.f32.mrb[0].mxu0
        %1965 = vmatprep.mubr.bf16.mxu0 0
        %1966 = vmatmul.mubr.bf16.gmra.mrb[0].mxu0 %v1611
        %v1967 = vpop.f32.mrb[0].mxu0
        %v1968 = vadd.f32 %v1871, %v1967
        %v1969 = vpop.f32.mrb[0].mxu0
        %v1970 = vpop.f32.mrb[0].mxu0
        %v1971 = vadd.f32 %v1874, %v1970
        %v1972 = vpop.f32.mrb[0].mxu0
        %1973 = vmatprep.mubr.bf16.mxu0 0
        %1974 = vmatmul.mubr.bf16.gmra.mrb[0].mxu0 %v1614
        %v1975 = vpop.f32.mrb[0].mxu0
        %v1976 = vadd.f32 %v1879, %v1975
        %v1977 = vpop.f32.mrb[0].mxu0
        %v1978 = vpop.f32.mrb[0].mxu0
        %v1979 = vadd.f32 %v1882, %v1978
        %v1980 = vpop.f32.mrb[0].mxu0
        %1981 = vmatprep.mubr.bf16.mxu0 0
        %1982 = vmatmul.mubr.bf16.gmra.mrb[0].mxu0 %v1617
        %v1983 = vpop.f32.mrb[0].mxu0
        %v1984 = vadd.f32 %v1887, %v1983
        %v1985 = vpop.f32.mrb[0].mxu0
        %v1986 = vpop.f32.mrb[0].mxu0
        %v1987 = vadd.f32 %v1890, %v1986
        %v1988 = vpop.f32.mrb[0].mxu0
        %1989 = vmatprep.mubr.bf16.mxu0 0
        %1990 = vmatmul.mubr.bf16.gmra.mrb[0].mxu0 %v1620
        %v1991 = vpop.f32.mrb[0].mxu0
        %v1992 = vadd.f32 %v1895, %v1991
        %v1993 = vpop.f32.mrb[0].mxu0
        %v1994 = vpop.f32.mrb[0].mxu0
        %v1995 = vadd.f32 %v1898, %v1994
        %v1996 = vpop.f32.mrb[0].mxu0
        %1997 = vmatprep.mubr.bf16.mxu0 0
        %1998 = vmatmul.mubr.bf16.gmra.mrb[0].mxu0 %v1623
        %v1999 = vpop.f32.mrb[0].mxu0
        %v2000 = vadd.f32 %v1903, %v1999
        %v2001 = vpop.f32.mrb[0].mxu0
        %v2002 = vpop.f32.mrb[0].mxu0
        %v2003 = vadd.f32 %v1906, %v2002
        %v2004 = vpop.f32.mrb[0].mxu0
        %2005 = vmatprep.mubr.bf16.mxu0 0
        %2006 = vmatmul.mubr.bf16.gmra.mrb[0].mxu0 %v1626
        %v2007 = vpop.f32.mrb[0].mxu0
        %v2008 = vadd.f32 %v1911, %v2007
        %v2009 = vpop.f32.mrb[0].mxu0
        %v2010 = vpop.f32.mrb[0].mxu0
        %v2011 = vadd.f32 %v1914, %v2010
        %v2012 = vpop.f32.mrb[0].mxu0
        %2013 = vdwg.mxu0
        %v2014 = vadd.f32 %v1541, %v1952
        %v2015 = vadd.f32 %v1544, %v1955
        %v2016 = vadd.f32 %v1549, %v1960
        %v2017 = vadd.f32 %v1552, %v1963
        %v2018 = vadd.f32 %v1557, %v1968
        %v2019 = vadd.f32 %v1560, %v1971
        %v2020 = vadd.f32 %v1565, %v1976
        %v2021 = vadd.f32 %v1568, %v1979
        %v2022 = vadd.f32 %v1573, %v1984
        %v2023 = vadd.f32 %v1576, %v1987
        %v2024 = vadd.f32 %v1581, %v1992
        %v2025 = vadd.f32 %v1584, %v1995
        %v2026 = vadd.f32 %v1589, %v2000
        %v2027 = vadd.f32 %v1592, %v2003
        %v2028 = vadd.f32 %v1597, %v2008
        %v2029 = vadd.f32 %v1600, %v2011
        %2030 = vst [vmem:[%s212] sm:$0xff] %v2014
        %2031 = vst [vmem:[%s212 + $0x8] sm:$0xff] %v2015
        %2032 = vst [vmem:[%s212 + $0x10] sm:$0xff] %v2016
        %2033 = vst [vmem:[%s212 + $0x18] sm:$0xff] %v2017
        %2034 = vst [vmem:[%s212 + $0x20] sm:$0xff] %v2018
        %2035 = vst [vmem:[%s212 + $0x28] sm:$0xff] %v2019
        %2036 = vst [vmem:[%s212 + $0x30] sm:$0xff] %v2020
        %2037 = vst [vmem:[%s212 + $0x38] sm:$0xff] %v2021
        %2038 = vst [vmem:[%s212 + $0x40] sm:$0xff] %v2022
        %2039 = vst [vmem:[%s212 + $0x48] sm:$0xff] %v2023
        %2040 = vst [vmem:[%s212 + $0x50] sm:$0xff] %v2024
        %2041 = vst [vmem:[%s212 + $0x58] sm:$0xff] %v2025
        %2042 = vst [vmem:[%s212 + $0x60] sm:$0xff] %v2026
        %2043 = vst [vmem:[%s212 + $0x68] sm:$0xff] %v2027
        %2044 = vst [vmem:[%s212 + $0x70] sm:$0xff] %v2028
        %2045 = vst [vmem:[%s212 + $0x78] sm:$0xff] %v2029
        %v2046 = vadd.f32 %v2014, %v2015
        %v2047 = vadd.f32 %v2046, %v2016
        %v2048 = vadd.f32 %v2047, %v2017
        %v2049 = vadd.f32 %v2048, %v2018
        %v2050 = vadd.f32 %v2049, %v2019
        %v2051 = vadd.f32 %v2050, %v2020
        %v2052 = vadd.f32 %v2051, %v2021
        %v2053 = vadd.f32 %v2052, %v2022
        %v2054 = vadd.f32 %v2053, %v2023
        %v2055 = vadd.f32 %v2054, %v2024
        %v2056 = vadd.f32 %v2055, %v2025
        %v2057 = vadd.f32 %v2056, %v2026
        %v2058 = vadd.f32 %v2057, %v2027
        %v2059 = vadd.f32 %v2058, %v2028
        %v2060 = vadd.f32 %v2059, %v2029
        %v2061 = vrot.slane %v2060, 4
        %v2062 = vadd.f32 %v2060, %v2061
        %v2063 = vrot.slane %v2062, 2
        %v2064 = vadd.f32 %v2062, %v2063
        %v2065 = vrot.slane %v2064, 1
        %v2066 = vadd.f32 %v2064, %v2065
        %v2067 = vadd.f32 %v2066, 0.0
        %v2068 = vmul.f32 %v2014, %v2014
        %v2069 = vmul.f32 %v2015, %v2015
        %v2070 = vmul.f32 %v2016, %v2016
        %v2071 = vmul.f32 %v2017, %v2017
        %v2072 = vmul.f32 %v2018, %v2018
        %v2073 = vmul.f32 %v2019, %v2019
        %v2074 = vmul.f32 %v2020, %v2020
        %v2075 = vmul.f32 %v2021, %v2021
        %v2076 = vmul.f32 %v2022, %v2022
        %v2077 = vmul.f32 %v2023, %v2023
        %v2078 = vmul.f32 %v2024, %v2024
        %v2079 = vmul.f32 %v2025, %v2025
        %v2080 = vmul.f32 %v2026, %v2026
        %v2081 = vmul.f32 %v2027, %v2027
        %v2082 = vmul.f32 %v2028, %v2028
        %v2083 = vmul.f32 %v2029, %v2029
        %v2084 = vadd.f32 %v2068, %v2069
        %v2085 = vadd.f32 %v2084, %v2070
        %v2086 = vadd.f32 %v2085, %v2071
        %v2087 = vadd.f32 %v2086, %v2072
        %v2088 = vadd.f32 %v2087, %v2073
        %v2089 = vadd.f32 %v2088, %v2074
        %v2090 = vadd.f32 %v2089, %v2075
        %v2091 = vadd.f32 %v2090, %v2076
        %v2092 = vadd.f32 %v2091, %v2077
        %v2093 = vadd.f32 %v2092, %v2078
        %v2094 = vadd.f32 %v2093, %v2079
        %v2095 = vadd.f32 %v2094, %v2080
        %v2096 = vadd.f32 %v2095, %v2081
        %v2097 = vadd.f32 %v2096, %v2082
        %v2098 = vadd.f32 %v2097, %v2083
        %v2099 = vrot.slane %v2098, 4
        %v2100 = vadd.f32 %v2098, %v2099
        %v2101 = vrot.slane %v2100, 2
        %v2102 = vadd.f32 %v2100, %v2101
        %v2103 = vrot.slane %v2102, 1
        %v2104 = vadd.f32 %v2102, %v2103
        %v2105 = vadd.f32 %v2104, 0.0
        %v2106 = vld [vmem:[#allocation2 + $0xc0] sm:$0xff]
        %v2107 = vld [vmem:[#allocation2 + $0xc8] sm:$0xff]
        %v2108 = vld [vmem:[#allocation2 + $0xd0] sm:$0xff]
        %v2109 = vld [vmem:[#allocation2 + $0xd8] sm:$0xff]
        %v2110 = vld [vmem:[#allocation2 + $0xe0] sm:$0xff]
        %v2111 = vld [vmem:[#allocation2 + $0xe8] sm:$0xff]
        %v2112 = vld [vmem:[#allocation2 + $0xf0] sm:$0xff]
        %v2113 = vld [vmem:[#allocation2 + $0xf8] sm:$0xff]
        %v2114 = vld [vmem:[#allocation2 + $0x100] sm:$0xff]
        %v2115 = vld [vmem:[#allocation2 + $0x108] sm:$0xff]
        %v2116 = vld [vmem:[#allocation2 + $0x110] sm:$0xff]
        %v2117 = vld [vmem:[#allocation2 + $0x118] sm:$0xff]
        %v2118 = vld [vmem:[#allocation2 + $0x120] sm:$0xff]
        %v2119 = vld [vmem:[#allocation2 + $0x128] sm:$0xff]
        %v2120 = vld [vmem:[#allocation2 + $0x130] sm:$0xff]
        %v2121 = vld [vmem:[#allocation2 + $0x138] sm:$0xff]
        %v2122 = vld [vmem:[#allocation2 + $0x140] sm:$0xff]
        %v2123 = vld [vmem:[#allocation2 + $0x148] sm:$0xff]
        %v2124 = vld [vmem:[#allocation2 + $0x150] sm:$0xff]
        %v2125 = vld [vmem:[#allocation2 + $0x158] sm:$0xff]
        %v2126 = vld [vmem:[#allocation2 + $0x160] sm:$0xff]
        %v2127 = vld [vmem:[#allocation2 + $0x168] sm:$0xff]
        %v2128 = vld [vmem:[#allocation2 + $0x170] sm:$0xff]
        %v2129 = vld [vmem:[#allocation2 + $0x178] sm:$0xff]
        %v2130 = vld [vmem:[#allocation5] sm:$0xf]
        %v2131 = vld [vmem:[#allocation5 + $0x4] sm:$0xf]
        %v2132 = vld [vmem:[#allocation5 + $0x8] sm:$0xf]
        %v2133 = vld [vmem:[#allocation5 + $0xc] sm:$0xf]
        %v2134 = vld [vmem:[#allocation5 + $0x10] sm:$0xf]
        %v2135 = vld [vmem:[#allocation5 + $0x14] sm:$0xf]
        %v2136 = vld [vmem:[#allocation5 + $0x18] sm:$0xf]
        %v2137 = vld [vmem:[#allocation5 + $0x1c] sm:$0xf]
        %v2138 = vld [vmem:[#allocation5 + $0x20] sm:$0xf]
        %v2139 = vld [vmem:[#allocation5 + $0x24] sm:$0xf]
        %v2140 = vld [vmem:[#allocation5 + $0x28] sm:$0xf]
        %v2141 = vld [vmem:[#allocation5 + $0x2c] sm:$0xf]
        %v2142 = vld [vmem:[#allocation5 + $0x30] sm:$0xf]
        %v2143 = vld [vmem:[#allocation5 + $0x34] sm:$0xf]
        %v2144 = vld [vmem:[#allocation5 + $0x38] sm:$0xf]
        %v2145 = vld [vmem:[#allocation5 + $0x3c] sm:$0xf]
        %v2146 = vld [vmem:[#allocation5 + $0x40] sm:$0xf]
        %v2147 = vld [vmem:[#allocation5 + $0x44] sm:$0xf]
        %v2148 = vld [vmem:[#allocation5 + $0x48] sm:$0xf]
        %v2149 = vld [vmem:[#allocation5 + $0x4c] sm:$0xf]
        %v2150 = vld [vmem:[#allocation5 + $0x50] sm:$0xf]
        %v2151 = vld [vmem:[#allocation5 + $0x54] sm:$0xf]
        %v2152 = vld [vmem:[#allocation5 + $0x58] sm:$0xf]
        %v2153 = vld [vmem:[#allocation5 + $0x5c] sm:$0xf]
        %v2154 = vld [vmem:[#allocation5 + $0x60] sm:$0xf]
        %v2155 = vld [vmem:[#allocation5 + $0x64] sm:$0xf]
        %v2156 = vld [vmem:[#allocation5 + $0x68] sm:$0xf]
        %v2157 = vld [vmem:[#allocation5 + $0x6c] sm:$0xf]
        %v2158 = vld [vmem:[#allocation5 + $0x70] sm:$0xf]
        %v2159 = vld [vmem:[#allocation5 + $0x74] sm:$0xf]
        %v2160 = vld [vmem:[#allocation5 + $0x78] sm:$0xf]
        %v2161 = vld [vmem:[#allocation5 + $0x7c] sm:$0xf]
        %v2162 = vld [vmem:[#allocation5 + $0x80] sm:$0xf]
        %v2163 = vld [vmem:[#allocation5 + $0x84] sm:$0xf]
        %v2164 = vld [vmem:[#allocation5 + $0x88] sm:$0xf]
        %v2165 = vld [vmem:[#allocation5 + $0x8c] sm:$0xf]
        %v2166 = vld [vmem:[#allocation5 + $0x90] sm:$0xf]
        %v2167 = vld [vmem:[#allocation5 + $0x94] sm:$0xf]
        %v2168 = vld [vmem:[#allocation5 + $0x98] sm:$0xf]
        %v2169 = vld [vmem:[#allocation5 + $0x9c] sm:$0xf]
        %v2170 = vld [vmem:[#allocation5 + $0xa0] sm:$0xf]
        %v2171 = vld [vmem:[#allocation5 + $0xa4] sm:$0xf]
        %v2172 = vld [vmem:[#allocation5 + $0xa8] sm:$0xf]
        %v2173 = vld [vmem:[#allocation5 + $0xac] sm:$0xf]
        %v2174 = vld [vmem:[#allocation5 + $0xb0] sm:$0xf]
        %v2175 = vld [vmem:[#allocation5 + $0xb4] sm:$0xf]
        %v2176 = vld [vmem:[#allocation5 + $0xb8] sm:$0xf]
        %v2177 = vld [vmem:[#allocation5 + $0xbc] sm:$0xf]
        %v2178 = vld [vmem:[#allocation2 + $0x180] sm:$0xff]
        %v2179 = vld [vmem:[#allocation2 + $0x188] sm:$0xff]
        %v2180 = vld [vmem:[#allocation2 + $0x190] sm:$0xff]
        %v2181 = vld [vmem:[%s878] sm:$0xf]
        %v2182 = vld [vmem:[%s878 + $0x4] sm:$0xf]
        %v2183 = vld [vmem:[%s878 + $0x8] sm:$0xf]
        %v2184 = vld [vmem:[%s878 + $0xc] sm:$0xf]
        %v2185 = vld [vmem:[%s878 + $0x10] sm:$0xf]
        %v2186 = vld [vmem:[%s878 + $0x14] sm:$0xf]
        %v2187 = vld [vmem:[%s878 + $0x18] sm:$0xf]
        %v2188 = vld [vmem:[%s878 + $0x1c] sm:$0xf]
        %v2189 = vld [vmem:[%s878 + $0x20] sm:$0xf]
        %v2190 = vld [vmem:[%s878 + $0x24] sm:$0xf]
        %v2191 = vld [vmem:[%s878 + $0x28] sm:$0xf]
        %v2192 = vld [vmem:[%s878 + $0x2c] sm:$0xf]
        %v2193 = vld [vmem:[%s878 + $0x30] sm:$0xf]
        %v2194 = vld [vmem:[%s878 + $0x34] sm:$0xf]
        %v2195 = vld [vmem:[%s878 + $0x38] sm:$0xf]
        %v2196 = vld [vmem:[%s878 + $0x3c] sm:$0xf]
        %v2197 = vld [vmem:[%s878 + $0x40] sm:$0xf]
        %v2198 = vld [vmem:[%s878 + $0x44] sm:$0xf]
        %v2199 = vld [vmem:[%s878 + $0x48] sm:$0xf]
        %v2200 = vld [vmem:[%s878 + $0x4c] sm:$0xf]
        %v2201 = vld [vmem:[%s878 + $0x50] sm:$0xf]
        %v2202 = vld [vmem:[%s878 + $0x54] sm:$0xf]
        %v2203 = vld [vmem:[%s878 + $0x58] sm:$0xf]
        %v2204 = vld [vmem:[%s878 + $0x5c] sm:$0xf]
        %v2205 = vld [vmem:[%s878 + $0x60] sm:$0xf]
        %v2206 = vld [vmem:[%s878 + $0x64] sm:$0xf]
        %v2207 = vld [vmem:[%s878 + $0x68] sm:$0xf]
        %v2208 = vld [vmem:[%s878 + $0x6c] sm:$0xf]
        %v2209 = vld [vmem:[%s878 + $0x70] sm:$0xf]
        %v2210 = vld [vmem:[%s878 + $0x74] sm:$0xf]
        %v2211 = vld [vmem:[%s878 + $0x78] sm:$0xf]
        %v2212 = vld [vmem:[%s878 + $0x7c] sm:$0xf]
        %v2213 = vld [vmem:[%s878 + $0x80] sm:$0xf]
        %v2214 = vld [vmem:[%s878 + $0x84] sm:$0xf]
        %v2215 = vld [vmem:[%s878 + $0x88] sm:$0xf]
        %v2216 = vld [vmem:[%s878 + $0x8c] sm:$0xf]
        %v2217 = vld [vmem:[%s878 + $0x90] sm:$0xf]
        %v2218 = vld [vmem:[%s878 + $0x94] sm:$0xf]
        %v2219 = vld [vmem:[%s878 + $0x98] sm:$0xf]
        %v2220 = vld [vmem:[%s878 + $0x9c] sm:$0xf]
        %v2221 = vld [vmem:[%s878 + $0xa0] sm:$0xf]
        %v2222 = vld [vmem:[%s878 + $0xa4] sm:$0xf]
        %v2223 = vld [vmem:[%s878 + $0xa8] sm:$0xf]
        %v2224 = vld [vmem:[%s878 + $0xac] sm:$0xf]
        %v2225 = vld [vmem:[%s878 + $0xb0] sm:$0xf]
        %v2226 = vld [vmem:[%s878 + $0xb4] sm:$0xf]
        %v2227 = vld [vmem:[%s878 + $0xb8] sm:$0xf]
        %v2228 = vld [vmem:[%s878 + $0xbc] sm:$0xf]
        %v2277 = vunpack.c.l.b16 %v2181
        %v2278 = vunpack.c.l.b16 %v2182
        %v2279 = vunpack.c.l.b16 %v2183
        %v2280 = vunpack.c.l.b16 %v2184
        %v2281 = vunpack.c.l.b16 %v2185
        %v2282 = vunpack.c.l.b16 %v2186
        %v2283 = vunpack.c.l.b16 %v2187
        %v2284 = vunpack.c.l.b16 %v2188
        %v2285 = vunpack.c.l.b16 %v2189
        %v2286 = vunpack.c.l.b16 %v2190
        %v2287 = vunpack.c.l.b16 %v2191
        %v2288 = vunpack.c.l.b16 %v2192
        %v2289 = vunpack.c.l.b16 %v2193
        %v2290 = vunpack.c.l.b16 %v2194
        %v2291 = vunpack.c.l.b16 %v2195
        %v2292 = vunpack.c.l.b16 %v2196
        %v2293 = vunpack.c.l.b16 %v2197
        %v2294 = vunpack.c.l.b16 %v2198
        %v2295 = vunpack.c.l.b16 %v2199
        %v2296 = vunpack.c.l.b16 %v2200
        %v2297 = vunpack.c.l.b16 %v2201
        %v2298 = vunpack.c.l.b16 %v2202
        %v2299 = vunpack.c.l.b16 %v2203
        %v2300 = vunpack.c.l.b16 %v2204
        %v2301 = vunpack.c.l.b16 %v2205
        %v2302 = vunpack.c.l.b16 %v2206
        %v2303 = vunpack.c.l.b16 %v2207
        %v2304 = vunpack.c.l.b16 %v2208
        %v2305 = vunpack.c.l.b16 %v2209
        %v2306 = vunpack.c.l.b16 %v2210
        %v2307 = vunpack.c.l.b16 %v2211
        %v2308 = vunpack.c.l.b16 %v2212
        %v2309 = vunpack.c.l.b16 %v2213
        %v2310 = vunpack.c.l.b16 %v2214
        %v2311 = vunpack.c.l.b16 %v2215
        %v2312 = vunpack.c.l.b16 %v2216
        %v2313 = vunpack.c.l.b16 %v2217
        %v2314 = vunpack.c.l.b16 %v2218
        %v2315 = vunpack.c.l.b16 %v2219
        %v2316 = vunpack.c.l.b16 %v2220
        %v2317 = vunpack.c.l.b16 %v2221
        %v2318 = vunpack.c.l.b16 %v2222
        %v2319 = vunpack.c.l.b16 %v2223
        %v2320 = vunpack.c.l.b16 %v2224
        %v2321 = vunpack.c.l.b16 %v2225
        %v2322 = vunpack.c.l.b16 %v2226
        %v2323 = vunpack.c.l.b16 %v2227
        %v2324 = vunpack.c.l.b16 %v2228
        %v2325 = vpack.c.b16 %v2278, %v2277
        %v2326 = vpack.c.b16 %v2280, %v2279
        %v2327 = vpack.c.b16 %v2282, %v2281
        %v2328 = vpack.c.b16 %v2284, %v2283
        %v2329 = vpack.c.b16 %v2286, %v2285
        %v2330 = vpack.c.b16 %v2288, %v2287
        %v2331 = vpack.c.b16 %v2290, %v2289
        %v2332 = vpack.c.b16 %v2292, %v2291
        %v2333 = vpack.c.b16 %v2294, %v2293
        %v2334 = vpack.c.b16 %v2296, %v2295
        %v2335 = vpack.c.b16 %v2298, %v2297
        %v2336 = vpack.c.b16 %v2300, %v2299
        %v2337 = vpack.c.b16 %v2302, %v2301
        %v2338 = vpack.c.b16 %v2304, %v2303
        %v2339 = vpack.c.b16 %v2306, %v2305
        %v2340 = vpack.c.b16 %v2308, %v2307
        %v2341 = vpack.c.b16 %v2310, %v2309
        %v2342 = vpack.c.b16 %v2312, %v2311
        %v2343 = vpack.c.b16 %v2314, %v2313
        %v2344 = vpack.c.b16 %v2316, %v2315
        %v2345 = vpack.c.b16 %v2318, %v2317
        %v2346 = vpack.c.b16 %v2320, %v2319
        %v2347 = vpack.c.b16 %v2322, %v2321
        %v2348 = vpack.c.b16 %v2324, %v2323
        %2373 = vmatprep.subr.bf16.mxu0 0
        %2374 = vmatpush1.bf16.msra.mxu0 %v2325
        %2375 = vmatprep.subr.bf16.mxu0 0
        %2376 = vmatpush1.bf16.msra.mxu0 %v2326
        %2377 = vmatprep.subr.bf16.mxu0 0
        %2378 = vmatpush1.bf16.msra.mxu0 %v2327
        %2379 = vmatprep.subr.bf16.mxu0 0
        %2380 = vmatpush1.bf16.msra.mxu0 %v2328
        %2381 = vmatprep.subr.bf16.mxu0 0
        %2382 = vmatpush1.bf16.msra.mxu0 %v2329
        %2383 = vmatprep.subr.bf16.mxu0 0
        %2384 = vmatpush1.bf16.msra.mxu0 %v2330
        %2385 = vmatprep.subr.bf16.mxu0 0
        %2386 = vmatpush1.bf16.msra.mxu0 %v2331
        %2387 = vmatprep.subr.bf16.mxu0 0
        %2388 = vmatpush1.bf16.msra.mxu0 %v2332
        %2389 = vmatprep.subr.bf16.mxu0 0
        %2390 = vmatpush1.bf16.msra.mxu0 %v2333
        %2391 = vmatprep.subr.bf16.mxu0 0
        %2392 = vmatpush1.bf16.msra.mxu0 %v2334
        %2393 = vmatprep.subr.bf16.mxu0 0
        %2394 = vmatpush1.bf16.msra.mxu0 %v2335
        %2395 = vmatprep.subr.bf16.mxu0 0
        %2396 = vmatpush1.bf16.msra.mxu0 %v2336
        %2397 = vmatprep.subr.bf16.mxu0 0
        %2398 = vmatpush1.bf16.msra.mxu0 %v2337
        %2399 = vmatprep.subr.bf16.mxu0 0
        %2400 = vmatpush1.bf16.msra.mxu0 %v2338
        %2401 = vmatprep.subr.bf16.mxu0 0
        %2402 = vmatpush1.bf16.msra.mxu0 %v2339
        %2403 = vmatprep.subr.bf16.mxu0 0
        %2404 = vmatpush1.bf16.msra.mxu0 %v2340
        %2405 = vmatprep.mubr.bf16.mxu0 %v2110
        %2406 = vmatmul.mubr.bf16.gmra.mrb[0].mxu0 %v2109
        %v2407 = vpop.f32.mrb[0].mxu0
        %v2408 = vadd.f32 0.0, %v2407
        %v2409 = vpop.f32.mrb[0].mxu0
        %v2410 = vpop.f32.mrb[0].mxu0
        %v2411 = vadd.f32 0.0, %v2410
        %v2412 = vpop.f32.mrb[0].mxu0
        %2413 = vmatprep.mubr.bf16.mxu0 %v2113
        %2414 = vmatmul.mubr.bf16.gmra.mrb[0].mxu0 %v2112
        %v2415 = vpop.f32.mrb[0].mxu0
        %v2416 = vadd.f32 0.0, %v2415
        %v2417 = vpop.f32.mrb[0].mxu0
        %v2418 = vpop.f32.mrb[0].mxu0
        %v2419 = vadd.f32 0.0, %v2418
        %v2420 = vpop.f32.mrb[0].mxu0
        %2421 = vmatprep.mubr.bf16.mxu0 %v2116
        %2422 = vmatmul.mubr.bf16.gmra.mrb[0].mxu0 %v2115
        %v2423 = vpop.f32.mrb[0].mxu0
        %v2424 = vadd.f32 0.0, %v2423
        %v2425 = vpop.f32.mrb[0].mxu0
        %v2426 = vpop.f32.mrb[0].mxu0
        %v2427 = vadd.f32 0.0, %v2426
        %v2428 = vpop.f32.mrb[0].mxu0
        %2429 = vmatprep.mubr.bf16.mxu0 %v2119
        %2430 = vmatmul.mubr.bf16.gmra.mrb[0].mxu0 %v2118
        %v2431 = vpop.f32.mrb[0].mxu0
        %v2432 = vadd.f32 0.0, %v2431
        %v2433 = vpop.f32.mrb[0].mxu0
        %v2434 = vpop.f32.mrb[0].mxu0
        %v2435 = vadd.f32 0.0, %v2434
        %v2436 = vpop.f32.mrb[0].mxu0
        %2437 = vmatprep.mubr.bf16.mxu0 %v2122
        %2438 = vmatmul.mubr.bf16.gmra.mrb[0].mxu0 %v2121
        %v2439 = vpop.f32.mrb[0].mxu0
        %v2440 = vadd.f32 0.0, %v2439
        %v2441 = vpop.f32.mrb[0].mxu0
        %v2442 = vpop.f32.mrb[0].mxu0
        %v2443 = vadd.f32 0.0, %v2442
        %v2444 = vpop.f32.mrb[0].mxu0
        %2445 = vmatprep.mubr.bf16.mxu0 %v2125
        %2446 = vmatmul.mubr.bf16.gmra.mrb[0].mxu0 %v2124
        %v2447 = vpop.f32.mrb[0].mxu0
        %v2448 = vadd.f32 0.0, %v2447
        %v2449 = vpop.f32.mrb[0].mxu0
        %v2450 = vpop.f32.mrb[0].mxu0
        %v2451 = vadd.f32 0.0, %v2450
        %v2452 = vpop.f32.mrb[0].mxu0
        %2453 = vmatprep.mubr.bf16.mxu0 %v2128
        %2454 = vmatmul.mubr.bf16.gmra.mrb[0].mxu0 %v2127
        %v2455 = vpop.f32.mrb[0].mxu0
        %v2456 = vadd.f32 0.0, %v2455
        %v2457 = vpop.f32.mrb[0].mxu0
        %v2458 = vpop.f32.mrb[0].mxu0
        %v2459 = vadd.f32 0.0, %v2458
        %v2460 = vpop.f32.mrb[0].mxu0
        %2461 = vmatprep.mubr.bf16.mxu0 %v2179
        %2462 = vmatmul.mubr.bf16.gmra.mrb[0].mxu0 %v2178
        %v2463 = vpop.f32.mrb[0].mxu0
        %v2464 = vadd.f32 0.0, %v2463
        %v2465 = vpop.f32.mrb[0].mxu0
        %v2466 = vpop.f32.mrb[0].mxu0
        %v2467 = vadd.f32 0.0, %v2466
        %v2468 = vpop.f32.mrb[0].mxu0
        %2469 = vdwg.mxu0
        %2470 = vmatprep.subr.bf16.mxu0 0
        %2471 = vmatpush1.bf16.msra.mxu0 %v2341
        %2472 = vmatprep.subr.bf16.mxu0 0
        %2473 = vmatpush1.bf16.msra.mxu0 %v2342
        %2474 = vmatprep.subr.bf16.mxu0 0
        %2475 = vmatpush1.bf16.msra.mxu0 %v2343
        %2476 = vmatprep.subr.bf16.mxu0 0
        %2477 = vmatpush1.bf16.msra.mxu0 %v2344
        %2478 = vmatprep.subr.bf16.mxu0 0
        %2479 = vmatpush1.bf16.msra.mxu0 %v2345
        %2480 = vmatprep.subr.bf16.mxu0 0
        %2481 = vmatpush1.bf16.msra.mxu0 %v2346
        %2482 = vmatprep.subr.bf16.mxu0 0
        %2483 = vmatpush1.bf16.msra.mxu0 %v2347
        %2484 = vmatprep.subr.bf16.mxu0 0
        %2485 = vmatpush1.bf16.msra.mxu0 %v2348
        %2486 = vmatprep.subr.bf16.mxu0 0
        %2487 = vmatpush1.bf16.msra.mxu0 0
        %2488 = vmatprep.subr.bf16.mxu0 0
        %2489 = vmatpush1.bf16.msra.mxu0 0
        %2490 = vmatprep.subr.bf16.mxu0 0
        %2491 = vmatpush1.bf16.msra.mxu0 0
        %2492 = vmatprep.subr.bf16.mxu0 0
        %2493 = vmatpush1.bf16.msra.mxu0 0
        %2494 = vmatprep.subr.bf16.mxu0 0
        %2495 = vmatpush1.bf16.msra.mxu0 0
        %2496 = vmatprep.subr.bf16.mxu0 0
        %2497 = vmatpush1.bf16.msra.mxu0 0
        %2498 = vmatprep.subr.bf16.mxu0 0
        %2499 = vmatpush1.bf16.msra.mxu0 0
        %2500 = vmatprep.subr.bf16.mxu0 0
        %2501 = vmatpush1.bf16.msra.mxu0 0
        %2502 = vmatprep.mubr.bf16.mxu0 0
        %2503 = vmatmul.mubr.bf16.gmra.mrb[0].mxu0 %v2111
        %v2504 = vpop.f32.mrb[0].mxu0
        %v2505 = vadd.f32 %v2408, %v2504
        %v2506 = vpop.f32.mrb[0].mxu0
        %v2507 = vpop.f32.mrb[0].mxu0
        %v2508 = vadd.f32 %v2411, %v2507
        %v2509 = vpop.f32.mrb[0].mxu0
        %2510 = vmatprep.mubr.bf16.mxu0 0
        %2511 = vmatmul.mubr.bf16.gmra.mrb[0].mxu0 %v2114
        %v2512 = vpop.f32.mrb[0].mxu0
        %v2513 = vadd.f32 %v2416, %v2512
        %v2514 = vpop.f32.mrb[0].mxu0
        %v2515 = vpop.f32.mrb[0].mxu0
        %v2516 = vadd.f32 %v2419, %v2515
        %v2517 = vpop.f32.mrb[0].mxu0
        %2518 = vmatprep.mubr.bf16.mxu0 0
        %2519 = vmatmul.mubr.bf16.gmra.mrb[0].mxu0 %v2117
        %v2520 = vpop.f32.mrb[0].mxu0
        %v2521 = vadd.f32 %v2424, %v2520
        %v2522 = vpop.f32.mrb[0].mxu0
        %v2523 = vpop.f32.mrb[0].mxu0
        %v2524 = vadd.f32 %v2427, %v2523
        %v2525 = vpop.f32.mrb[0].mxu0
        %2526 = vmatprep.mubr.bf16.mxu0 0
        %2527 = vmatmul.mubr.bf16.gmra.mrb[0].mxu0 %v2120
        %v2528 = vpop.f32.mrb[0].mxu0
        %v2529 = vadd.f32 %v2432, %v2528
        %v2530 = vpop.f32.mrb[0].mxu0
        %v2531 = vpop.f32.mrb[0].mxu0
        %v2532 = vadd.f32 %v2435, %v2531
        %v2533 = vpop.f32.mrb[0].mxu0
        %2534 = vmatprep.mubr.bf16.mxu0 0
        %2535 = vmatmul.mubr.bf16.gmra.mrb[0].mxu0 %v2123
        %v2536 = vpop.f32.mrb[0].mxu0
        %v2537 = vadd.f32 %v2440, %v2536
        %v2538 = vpop.f32.mrb[0].mxu0
        %v2539 = vpop.f32.mrb[0].mxu0
        %v2540 = vadd.f32 %v2443, %v2539
        %v2541 = vpop.f32.mrb[0].mxu0
        %2542 = vmatprep.mubr.bf16.mxu0 0
        %2543 = vmatmul.mubr.bf16.gmra.mrb[0].mxu0 %v2126
        %v2544 = vpop.f32.mrb[0].mxu0
        %v2545 = vadd.f32 %v2448, %v2544
        %v2546 = vpop.f32.mrb[0].mxu0
        %v2547 = vpop.f32.mrb[0].mxu0
        %v2548 = vadd.f32 %v2451, %v2547
        %v2549 = vpop.f32.mrb[0].mxu0
        %2550 = vmatprep.mubr.bf16.mxu0 0
        %2551 = vmatmul.mubr.bf16.gmra.mrb[0].mxu0 %v2129
        %v2552 = vpop.f32.mrb[0].mxu0
        %v2553 = vadd.f32 %v2456, %v2552
        %v2554 = vpop.f32.mrb[0].mxu0
        %v2555 = vpop.f32.mrb[0].mxu0
        %v2556 = vadd.f32 %v2459, %v2555
        %v2557 = vpop.f32.mrb[0].mxu0
        %2558 = vmatprep.mubr.bf16.mxu0 0
        %2559 = vmatmul.mubr.bf16.gmra.mrb[0].mxu0 %v2180
        %v2560 = vpop.f32.mrb[0].mxu0
        %v2561 = vadd.f32 %v2464, %v2560
        %v2562 = vpop.f32.mrb[0].mxu0
        %v2563 = vpop.f32.mrb[0].mxu0
        %v2564 = vadd.f32 %v2467, %v2563
        %v2565 = vpop.f32.mrb[0].mxu0
        %2566 = vdwg.mxu0
        %v2615 = vunpack.c.l.b16 %v2130
        %v2616 = vunpack.c.l.b16 %v2131
        %v2617 = vunpack.c.l.b16 %v2132
        %v2618 = vunpack.c.l.b16 %v2133
        %v2619 = vunpack.c.l.b16 %v2134
        %v2620 = vunpack.c.l.b16 %v2135
        %v2621 = vunpack.c.l.b16 %v2136
        %v2622 = vunpack.c.l.b16 %v2137
        %v2623 = vunpack.c.l.b16 %v2138
        %v2624 = vunpack.c.l.b16 %v2139
        %v2625 = vunpack.c.l.b16 %v2140
        %v2626 = vunpack.c.l.b16 %v2141
        %v2627 = vunpack.c.l.b16 %v2142
        %v2628 = vunpack.c.l.b16 %v2143
        %v2629 = vunpack.c.l.b16 %v2144
        %v2630 = vunpack.c.l.b16 %v2145
        %v2631 = vunpack.c.l.b16 %v2146
        %v2632 = vunpack.c.l.b16 %v2147
        %v2633 = vunpack.c.l.b16 %v2148
        %v2634 = vunpack.c.l.b16 %v2149
        %v2635 = vunpack.c.l.b16 %v2150
        %v2636 = vunpack.c.l.b16 %v2151
        %v2637 = vunpack.c.l.b16 %v2152
        %v2638 = vunpack.c.l.b16 %v2153
        %v2639 = vunpack.c.l.b16 %v2154
        %v2640 = vunpack.c.l.b16 %v2155
        %v2641 = vunpack.c.l.b16 %v2156
        %v2642 = vunpack.c.l.b16 %v2157
        %v2643 = vunpack.c.l.b16 %v2158
        %v2644 = vunpack.c.l.b16 %v2159
        %v2645 = vunpack.c.l.b16 %v2160
        %v2646 = vunpack.c.l.b16 %v2161
        %v2647 = vunpack.c.l.b16 %v2162
        %v2648 = vunpack.c.l.b16 %v2163
        %v2649 = vunpack.c.l.b16 %v2164
        %v2650 = vunpack.c.l.b16 %v2165
        %v2651 = vunpack.c.l.b16 %v2166
        %v2652 = vunpack.c.l.b16 %v2167
        %v2653 = vunpack.c.l.b16 %v2168
        %v2654 = vunpack.c.l.b16 %v2169
        %v2655 = vunpack.c.l.b16 %v2170
        %v2656 = vunpack.c.l.b16 %v2171
        %v2657 = vunpack.c.l.b16 %v2172
        %v2658 = vunpack.c.l.b16 %v2173
        %v2659 = vunpack.c.l.b16 %v2174
        %v2660 = vunpack.c.l.b16 %v2175
        %v2661 = vunpack.c.l.b16 %v2176
        %v2662 = vunpack.c.l.b16 %v2177
        %v2663 = vpack.c.b16 %v2616, %v2615
        %v2664 = vpack.c.b16 %v2618, %v2617
        %v2665 = vpack.c.b16 %v2620, %v2619
        %v2666 = vpack.c.b16 %v2622, %v2621
        %v2667 = vpack.c.b16 %v2624, %v2623
        %v2668 = vpack.c.b16 %v2626, %v2625
        %v2669 = vpack.c.b16 %v2628, %v2627
        %v2670 = vpack.c.b16 %v2630, %v2629
        %v2671 = vpack.c.b16 %v2632, %v2631
        %v2672 = vpack.c.b16 %v2634, %v2633
        %v2673 = vpack.c.b16 %v2636, %v2635
        %v2674 = vpack.c.b16 %v2638, %v2637
        %v2675 = vpack.c.b16 %v2640, %v2639
        %v2676 = vpack.c.b16 %v2642, %v2641
        %v2677 = vpack.c.b16 %v2644, %v2643
        %v2678 = vpack.c.b16 %v2646, %v2645
        %v2679 = vpack.c.b16 %v2648, %v2647
        %v2680 = vpack.c.b16 %v2650, %v2649
        %v2681 = vpack.c.b16 %v2652, %v2651
        %v2682 = vpack.c.b16 %v2654, %v2653
        %v2683 = vpack.c.b16 %v2656, %v2655
        %v2684 = vpack.c.b16 %v2658, %v2657
        %v2685 = vpack.c.b16 %v2660, %v2659
        %v2686 = vpack.c.b16 %v2662, %v2661
        %2711 = vmatprep.subr.bf16.mxu0 0
        %2712 = vmatpush1.bf16.msra.mxu0 %v2663
        %2713 = vmatprep.subr.bf16.mxu0 0
        %2714 = vmatpush1.bf16.msra.mxu0 %v2664
        %2715 = vmatprep.subr.bf16.mxu0 0
        %2716 = vmatpush1.bf16.msra.mxu0 %v2665
        %2717 = vmatprep.subr.bf16.mxu0 0
        %2718 = vmatpush1.bf16.msra.mxu0 %v2666
        %2719 = vmatprep.subr.bf16.mxu0 0
        %2720 = vmatpush1.bf16.msra.mxu0 %v2667
        %2721 = vmatprep.subr.bf16.mxu0 0
        %2722 = vmatpush1.bf16.msra.mxu0 %v2668
        %2723 = vmatprep.subr.bf16.mxu0 0
        %2724 = vmatpush1.bf16.msra.mxu0 %v2669
        %2725 = vmatprep.subr.bf16.mxu0 0
        %2726 = vmatpush1.bf16.msra.mxu0 %v2670
        %2727 = vmatprep.subr.bf16.mxu0 0
        %2728 = vmatpush1.bf16.msra.mxu0 %v2671
        %2729 = vmatprep.subr.bf16.mxu0 0
        %2730 = vmatpush1.bf16.msra.mxu0 %v2672
        %2731 = vmatprep.subr.bf16.mxu0 0
        %2732 = vmatpush1.bf16.msra.mxu0 %v2673
        %2733 = vmatprep.subr.bf16.mxu0 0
        %2734 = vmatpush1.bf16.msra.mxu0 %v2674
        %2735 = vmatprep.subr.bf16.mxu0 0
        %2736 = vmatpush1.bf16.msra.mxu0 %v2675
        %2737 = vmatprep.subr.bf16.mxu0 0
        %2738 = vmatpush1.bf16.msra.mxu0 %v2676
        %2739 = vmatprep.subr.bf16.mxu0 0
        %2740 = vmatpush1.bf16.msra.mxu0 %v2677
        %2741 = vmatprep.subr.bf16.mxu0 0
        %2742 = vmatpush1.bf16.msra.mxu0 %v2678
        %2743 = vmatprep.mubr.bf16.mxu0 %v2107
        %2744 = vmatmul.mubr.bf16.gmra.mrb[0].mxu0 %v2106
        %v2745 = vpop.f32.mrb[0].mxu0
        %v2746 = vadd.f32 %v2505, %v2745
        %v2747 = vpop.f32.mrb[0].mxu0
        %v2748 = vpop.f32.mrb[0].mxu0
        %v2749 = vadd.f32 %v2508, %v2748
        %v2750 = vpop.f32.mrb[0].mxu0
        %2751 = vmatprep.mubr.bf16.mxu0 %v2110
        %2752 = vmatmul.mubr.bf16.gmra.mrb[0].mxu0 %v2109
        %v2753 = vpop.f32.mrb[0].mxu0
        %v2754 = vadd.f32 %v2513, %v2753
        %v2755 = vpop.f32.mrb[0].mxu0
        %v2756 = vpop.f32.mrb[0].mxu0
        %v2757 = vadd.f32 %v2516, %v2756
        %v2758 = vpop.f32.mrb[0].mxu0
        %2759 = vmatprep.mubr.bf16.mxu0 %v2113
        %2760 = vmatmul.mubr.bf16.gmra.mrb[0].mxu0 %v2112
        %v2761 = vpop.f32.mrb[0].mxu0
        %v2762 = vadd.f32 %v2521, %v2761
        %v2763 = vpop.f32.mrb[0].mxu0
        %v2764 = vpop.f32.mrb[0].mxu0
        %v2765 = vadd.f32 %v2524, %v2764
        %v2766 = vpop.f32.mrb[0].mxu0
        %2767 = vmatprep.mubr.bf16.mxu0 %v2116
        %2768 = vmatmul.mubr.bf16.gmra.mrb[0].mxu0 %v2115
        %v2769 = vpop.f32.mrb[0].mxu0
        %v2770 = vadd.f32 %v2529, %v2769
        %v2771 = vpop.f32.mrb[0].mxu0
        %v2772 = vpop.f32.mrb[0].mxu0
        %v2773 = vadd.f32 %v2532, %v2772
        %v2774 = vpop.f32.mrb[0].mxu0
        %2775 = vmatprep.mubr.bf16.mxu0 %v2119
        %2776 = vmatmul.mubr.bf16.gmra.mrb[0].mxu0 %v2118
        %v2777 = vpop.f32.mrb[0].mxu0
        %v2778 = vadd.f32 %v2537, %v2777
        %v2779 = vpop.f32.mrb[0].mxu0
        %v2780 = vpop.f32.mrb[0].mxu0
        %v2781 = vadd.f32 %v2540, %v2780
        %v2782 = vpop.f32.mrb[0].mxu0
        %2783 = vmatprep.mubr.bf16.mxu0 %v2122
        %2784 = vmatmul.mubr.bf16.gmra.mrb[0].mxu0 %v2121
        %v2785 = vpop.f32.mrb[0].mxu0
        %v2786 = vadd.f32 %v2545, %v2785
        %v2787 = vpop.f32.mrb[0].mxu0
        %v2788 = vpop.f32.mrb[0].mxu0
        %v2789 = vadd.f32 %v2548, %v2788
        %v2790 = vpop.f32.mrb[0].mxu0
        %2791 = vmatprep.mubr.bf16.mxu0 %v2125
        %2792 = vmatmul.mubr.bf16.gmra.mrb[0].mxu0 %v2124
        %v2793 = vpop.f32.mrb[0].mxu0
        %v2794 = vadd.f32 %v2553, %v2793
        %v2795 = vpop.f32.mrb[0].mxu0
        %v2796 = vpop.f32.mrb[0].mxu0
        %v2797 = vadd.f32 %v2556, %v2796
        %v2798 = vpop.f32.mrb[0].mxu0
        %2799 = vmatprep.mubr.bf16.mxu0 %v2128
        %2800 = vmatmul.mubr.bf16.gmra.mrb[0].mxu0 %v2127
        %v2801 = vpop.f32.mrb[0].mxu0
        %v2802 = vadd.f32 %v2561, %v2801
        %v2803 = vpop.f32.mrb[0].mxu0
        %v2804 = vpop.f32.mrb[0].mxu0
        %v2805 = vadd.f32 %v2564, %v2804
        %v2806 = vpop.f32.mrb[0].mxu0
        %2807 = vdwg.mxu0
        %2808 = vmatprep.subr.bf16.mxu0 0
        %2809 = vmatpush1.bf16.msra.mxu0 %v2679
        %2810 = vmatprep.subr.bf16.mxu0 0
        %2811 = vmatpush1.bf16.msra.mxu0 %v2680
        %2812 = vmatprep.subr.bf16.mxu0 0
        %2813 = vmatpush1.bf16.msra.mxu0 %v2681
        %2814 = vmatprep.subr.bf16.mxu0 0
        %2815 = vmatpush1.bf16.msra.mxu0 %v2682
        %2816 = vmatprep.subr.bf16.mxu0 0
        %2817 = vmatpush1.bf16.msra.mxu0 %v2683
        %2818 = vmatprep.subr.bf16.mxu0 0
        %2819 = vmatpush1.bf16.msra.mxu0 %v2684
        %2820 = vmatprep.subr.bf16.mxu0 0
        %2821 = vmatpush1.bf16.msra.mxu0 %v2685
        %2822 = vmatprep.subr.bf16.mxu0 0
        %2823 = vmatpush1.bf16.msra.mxu0 %v2686
        %2824 = vmatprep.subr.bf16.mxu0 0
        %2825 = vmatpush1.bf16.msra.mxu0 0
        %2826 = vmatprep.subr.bf16.mxu0 0
        %2827 = vmatpush1.bf16.msra.mxu0 0
        %2828 = vmatprep.subr.bf16.mxu0 0
        %2829 = vmatpush1.bf16.msra.mxu0 0
        %2830 = vmatprep.subr.bf16.mxu0 0
        %2831 = vmatpush1.bf16.msra.mxu0 0
        %2832 = vmatprep.subr.bf16.mxu0 0
        %2833 = vmatpush1.bf16.msra.mxu0 0
        %2834 = vmatprep.subr.bf16.mxu0 0
        %2835 = vmatpush1.bf16.msra.mxu0 0
        %2836 = vmatprep.subr.bf16.mxu0 0
        %2837 = vmatpush1.bf16.msra.mxu0 0
        %2838 = vmatprep.subr.bf16.mxu0 0
        %2839 = vmatpush1.bf16.msra.mxu0 0
        %2840 = vmatprep.mubr.bf16.mxu0 0
        %2841 = vmatmul.mubr.bf16.gmra.mrb[0].mxu0 %v2108
        %v2842 = vpop.f32.mrb[0].mxu0
        %v2843 = vadd.f32 %v2746, %v2842
        %v2844 = vpop.f32.mrb[0].mxu0
        %v2845 = vpop.f32.mrb[0].mxu0
        %v2846 = vadd.f32 %v2749, %v2845
        %v2847 = vpop.f32.mrb[0].mxu0
        %2848 = vmatprep.mubr.bf16.mxu0 0
        %2849 = vmatmul.mubr.bf16.gmra.mrb[0].mxu0 %v2111
        %v2850 = vpop.f32.mrb[0].mxu0
        %v2851 = vadd.f32 %v2754, %v2850
        %v2852 = vpop.f32.mrb[0].mxu0
        %v2853 = vpop.f32.mrb[0].mxu0
        %v2854 = vadd.f32 %v2757, %v2853
        %v2855 = vpop.f32.mrb[0].mxu0
        %2856 = vmatprep.mubr.bf16.mxu0 0
        %2857 = vmatmul.mubr.bf16.gmra.mrb[0].mxu0 %v2114
        %v2858 = vpop.f32.mrb[0].mxu0
        %v2859 = vadd.f32 %v2762, %v2858
        %v2860 = vpop.f32.mrb[0].mxu0
        %v2861 = vpop.f32.mrb[0].mxu0
        %v2862 = vadd.f32 %v2765, %v2861
        %v2863 = vpop.f32.mrb[0].mxu0
        %2864 = vmatprep.mubr.bf16.mxu0 0
        %2865 = vmatmul.mubr.bf16.gmra.mrb[0].mxu0 %v2117
        %v2866 = vpop.f32.mrb[0].mxu0
        %v2867 = vadd.f32 %v2770, %v2866
        %v2868 = vpop.f32.mrb[0].mxu0
        %v2869 = vpop.f32.mrb[0].mxu0
        %v2870 = vadd.f32 %v2773, %v2869
        %v2871 = vpop.f32.mrb[0].mxu0
        %2872 = vmatprep.mubr.bf16.mxu0 0
        %2873 = vmatmul.mubr.bf16.gmra.mrb[0].mxu0 %v2120
        %v2874 = vpop.f32.mrb[0].mxu0
        %v2875 = vadd.f32 %v2778, %v2874
        %v2876 = vpop.f32.mrb[0].mxu0
        %v2877 = vpop.f32.mrb[0].mxu0
        %v2878 = vadd.f32 %v2781, %v2877
        %v2879 = vpop.f32.mrb[0].mxu0
        %2880 = vmatprep.mubr.bf16.mxu0 0
        %2881 = vmatmul.mubr.bf16.gmra.mrb[0].mxu0 %v2123
        %v2882 = vpop.f32.mrb[0].mxu0
        %v2883 = vadd.f32 %v2786, %v2882
        %v2884 = vpop.f32.mrb[0].mxu0
        %v2885 = vpop.f32.mrb[0].mxu0
        %v2886 = vadd.f32 %v2789, %v2885
        %v2887 = vpop.f32.mrb[0].mxu0
        %2888 = vmatprep.mubr.bf16.mxu0 0
        %2889 = vmatmul.mubr.bf16.gmra.mrb[0].mxu0 %v2126
        %v2890 = vpop.f32.mrb[0].mxu0
        %v2891 = vadd.f32 %v2794, %v2890
        %v2892 = vpop.f32.mrb[0].mxu0
        %v2893 = vpop.f32.mrb[0].mxu0
        %v2894 = vadd.f32 %v2797, %v2893
        %v2895 = vpop.f32.mrb[0].mxu0
        %2896 = vmatprep.mubr.bf16.mxu0 0
        %2897 = vmatmul.mubr.bf16.gmra.mrb[0].mxu0 %v2129
        %v2898 = vpop.f32.mrb[0].mxu0
        %v2899 = vadd.f32 %v2802, %v2898
        %v2900 = vpop.f32.mrb[0].mxu0
        %v2901 = vpop.f32.mrb[0].mxu0
        %v2902 = vadd.f32 %v2805, %v2901
        %v2903 = vpop.f32.mrb[0].mxu0
        %2904 = vdwg.mxu0
        %v2905 = vld [vmem:[#allocation2 + $0xf0] sm:$0xff]
        %v2906 = vld [vmem:[#allocation2 + $0xf8] sm:$0xff]
        %v2907 = vld [vmem:[#allocation2 + $0x100] sm:$0xff]
        %v2908 = vld [vmem:[#allocation2 + $0x108] sm:$0xff]
        %v2909 = vld [vmem:[#allocation2 + $0x110] sm:$0xff]
        %v2910 = vld [vmem:[#allocation2 + $0x118] sm:$0xff]
        %v2911 = vld [vmem:[#allocation2 + $0x120] sm:$0xff]
        %v2912 = vld [vmem:[#allocation2 + $0x128] sm:$0xff]
        %v2913 = vld [vmem:[#allocation2 + $0x130] sm:$0xff]
        %v2914 = vld [vmem:[#allocation2 + $0x138] sm:$0xff]
        %v2915 = vld [vmem:[#allocation2 + $0x140] sm:$0xff]
        %v2916 = vld [vmem:[#allocation2 + $0x148] sm:$0xff]
        %v2917 = vld [vmem:[#allocation2 + $0x150] sm:$0xff]
        %v2918 = vld [vmem:[#allocation2 + $0x158] sm:$0xff]
        %v2919 = vld [vmem:[#allocation2 + $0x160] sm:$0xff]
        %v2920 = vld [vmem:[#allocation2 + $0x168] sm:$0xff]
        %v2921 = vld [vmem:[#allocation2 + $0x170] sm:$0xff]
        %v2922 = vld [vmem:[#allocation2 + $0x178] sm:$0xff]
        %v2923 = vld [vmem:[#allocation2 + $0x180] sm:$0xff]
        %v2924 = vld [vmem:[#allocation2 + $0x188] sm:$0xff]
        %v2925 = vld [vmem:[#allocation2 + $0x190] sm:$0xff]
        %v2926 = vld [vmem:[#allocation2 + $0x198] sm:$0xff]
        %v2927 = vld [vmem:[#allocation2 + $0x1a0] sm:$0xff]
        %v2928 = vld [vmem:[#allocation2 + $0x1a8] sm:$0xff]
        %v2929 = vld [vmem:[%s1627] sm:$0xf]
        %v2930 = vld [vmem:[%s1627 + $0x4] sm:$0xf]
        %v2931 = vld [vmem:[%s1627 + $0x8] sm:$0xf]
        %v2932 = vld [vmem:[%s1627 + $0xc] sm:$0xf]
        %v2933 = vld [vmem:[%s1627 + $0x10] sm:$0xf]
        %v2934 = vld [vmem:[%s1627 + $0x14] sm:$0xf]
        %v2935 = vld [vmem:[%s1627 + $0x18] sm:$0xf]
        %v2936 = vld [vmem:[%s1627 + $0x1c] sm:$0xf]
        %v2937 = vld [vmem:[%s1627 + $0x20] sm:$0xf]
        %v2938 = vld [vmem:[%s1627 + $0x24] sm:$0xf]
        %v2939 = vld [vmem:[%s1627 + $0x28] sm:$0xf]
        %v2940 = vld [vmem:[%s1627 + $0x2c] sm:$0xf]
        %v2941 = vld [vmem:[%s1627 + $0x30] sm:$0xf]
        %v2942 = vld [vmem:[%s1627 + $0x34] sm:$0xf]
        %v2943 = vld [vmem:[%s1627 + $0x38] sm:$0xf]
        %v2944 = vld [vmem:[%s1627 + $0x3c] sm:$0xf]
        %v2945 = vld [vmem:[%s1627 + $0x40] sm:$0xf]
        %v2946 = vld [vmem:[%s1627 + $0x44] sm:$0xf]
        %v2947 = vld [vmem:[%s1627 + $0x48] sm:$0xf]
        %v2948 = vld [vmem:[%s1627 + $0x4c] sm:$0xf]
        %v2949 = vld [vmem:[%s1627 + $0x50] sm:$0xf]
        %v2950 = vld [vmem:[%s1627 + $0x54] sm:$0xf]
        %v2951 = vld [vmem:[%s1627 + $0x58] sm:$0xf]
        %v2952 = vld [vmem:[%s1627 + $0x5c] sm:$0xf]
        %v2953 = vld [vmem:[%s1627 + $0x60] sm:$0xf]
        %v2954 = vld [vmem:[%s1627 + $0x64] sm:$0xf]
        %v2955 = vld [vmem:[%s1627 + $0x68] sm:$0xf]
        %v2956 = vld [vmem:[%s1627 + $0x6c] sm:$0xf]
        %v2957 = vld [vmem:[%s1627 + $0x70] sm:$0xf]
        %v2958 = vld [vmem:[%s1627 + $0x74] sm:$0xf]
        %v2959 = vld [vmem:[%s1627 + $0x78] sm:$0xf]
        %v2960 = vld [vmem:[%s1627 + $0x7c] sm:$0xf]
        %v2961 = vld [vmem:[%s1627 + $0x80] sm:$0xf]
        %v2962 = vld [vmem:[%s1627 + $0x84] sm:$0xf]
        %v2963 = vld [vmem:[%s1627 + $0x88] sm:$0xf]
        %v2964 = vld [vmem:[%s1627 + $0x8c] sm:$0xf]
        %v2965 = vld [vmem:[%s1627 + $0x90] sm:$0xf]
        %v2966 = vld [vmem:[%s1627 + $0x94] sm:$0xf]
        %v2967 = vld [vmem:[%s1627 + $0x98] sm:$0xf]
        %v2968 = vld [vmem:[%s1627 + $0x9c] sm:$0xf]
        %v2969 = vld [vmem:[%s1627 + $0xa0] sm:$0xf]
        %v2970 = vld [vmem:[%s1627 + $0xa4] sm:$0xf]
        %v2971 = vld [vmem:[%s1627 + $0xa8] sm:$0xf]
        %v2972 = vld [vmem:[%s1627 + $0xac] sm:$0xf]
        %v2973 = vld [vmem:[%s1627 + $0xb0] sm:$0xf]
        %v2974 = vld [vmem:[%s1627 + $0xb4] sm:$0xf]
        %v2975 = vld [vmem:[%s1627 + $0xb8] sm:$0xf]
        %v2976 = vld [vmem:[%s1627 + $0xbc] sm:$0xf]
        %v3025 = vunpack.c.l.b16 %v2929
        %v3026 = vunpack.c.l.b16 %v2930
        %v3027 = vunpack.c.l.b16 %v2931
        %v3028 = vunpack.c.l.b16 %v2932
        %v3029 = vunpack.c.l.b16 %v2933
        %v3030 = vunpack.c.l.b16 %v2934
        %v3031 = vunpack.c.l.b16 %v2935
        %v3032 = vunpack.c.l.b16 %v2936
        %v3033 = vunpack.c.l.b16 %v2937
        %v3034 = vunpack.c.l.b16 %v2938
        %v3035 = vunpack.c.l.b16 %v2939
        %v3036 = vunpack.c.l.b16 %v2940
        %v3037 = vunpack.c.l.b16 %v2941
        %v3038 = vunpack.c.l.b16 %v2942
        %v3039 = vunpack.c.l.b16 %v2943
        %v3040 = vunpack.c.l.b16 %v2944
        %v3041 = vunpack.c.l.b16 %v2945
        %v3042 = vunpack.c.l.b16 %v2946
        %v3043 = vunpack.c.l.b16 %v2947
        %v3044 = vunpack.c.l.b16 %v2948
        %v3045 = vunpack.c.l.b16 %v2949
        %v3046 = vunpack.c.l.b16 %v2950
        %v3047 = vunpack.c.l.b16 %v2951
        %v3048 = vunpack.c.l.b16 %v2952
        %v3049 = vunpack.c.l.b16 %v2953
        %v3050 = vunpack.c.l.b16 %v2954
        %v3051 = vunpack.c.l.b16 %v2955
        %v3052 = vunpack.c.l.b16 %v2956
        %v3053 = vunpack.c.l.b16 %v2957
        %v3054 = vunpack.c.l.b16 %v2958
        %v3055 = vunpack.c.l.b16 %v2959
        %v3056 = vunpack.c.l.b16 %v2960
        %v3057 = vunpack.c.l.b16 %v2961
        %v3058 = vunpack.c.l.b16 %v2962
        %v3059 = vunpack.c.l.b16 %v2963
        %v3060 = vunpack.c.l.b16 %v2964
        %v3061 = vunpack.c.l.b16 %v2965
        %v3062 = vunpack.c.l.b16 %v2966
        %v3063 = vunpack.c.l.b16 %v2967
        %v3064 = vunpack.c.l.b16 %v2968
        %v3065 = vunpack.c.l.b16 %v2969
        %v3066 = vunpack.c.l.b16 %v2970
        %v3067 = vunpack.c.l.b16 %v2971
        %v3068 = vunpack.c.l.b16 %v2972
        %v3069 = vunpack.c.l.b16 %v2973
        %v3070 = vunpack.c.l.b16 %v2974
        %v3071 = vunpack.c.l.b16 %v2975
        %v3072 = vunpack.c.l.b16 %v2976
        %v3073 = vpack.c.b16 %v3026, %v3025
        %v3074 = vpack.c.b16 %v3028, %v3027
        %v3075 = vpack.c.b16 %v3030, %v3029
        %v3076 = vpack.c.b16 %v3032, %v3031
        %v3077 = vpack.c.b16 %v3034, %v3033
        %v3078 = vpack.c.b16 %v3036, %v3035
        %v3079 = vpack.c.b16 %v3038, %v3037
        %v3080 = vpack.c.b16 %v3040, %v3039
        %v3081 = vpack.c.b16 %v3042, %v3041
        %v3082 = vpack.c.b16 %v3044, %v3043
        %v3083 = vpack.c.b16 %v3046, %v3045
        %v3084 = vpack.c.b16 %v3048, %v3047
        %v3085 = vpack.c.b16 %v3050, %v3049
        %v3086 = vpack.c.b16 %v3052, %v3051
        %v3087 = vpack.c.b16 %v3054, %v3053
        %v3088 = vpack.c.b16 %v3056, %v3055
        %v3089 = vpack.c.b16 %v3058, %v3057
        %v3090 = vpack.c.b16 %v3060, %v3059
        %v3091 = vpack.c.b16 %v3062, %v3061
        %v3092 = vpack.c.b16 %v3064, %v3063
        %v3093 = vpack.c.b16 %v3066, %v3065
        %v3094 = vpack.c.b16 %v3068, %v3067
        %v3095 = vpack.c.b16 %v3070, %v3069
        %v3096 = vpack.c.b16 %v3072, %v3071
        %3121 = vmatprep.subr.bf16.mxu0 0
        %3122 = vmatpush1.bf16.msra.mxu0 %v3073
        %3123 = vmatprep.subr.bf16.mxu0 0
        %3124 = vmatpush1.bf16.msra.mxu0 %v3074
        %3125 = vmatprep.subr.bf16.mxu0 0
        %3126 = vmatpush1.bf16.msra.mxu0 %v3075
        %3127 = vmatprep.subr.bf16.mxu0 0
        %3128 = vmatpush1.bf16.msra.mxu0 %v3076
        %3129 = vmatprep.subr.bf16.mxu0 0
        %3130 = vmatpush1.bf16.msra.mxu0 %v3077
        %3131 = vmatprep.subr.bf16.mxu0 0
        %3132 = vmatpush1.bf16.msra.mxu0 %v3078
        %3133 = vmatprep.subr.bf16.mxu0 0
        %3134 = vmatpush1.bf16.msra.mxu0 %v3079
        %3135 = vmatprep.subr.bf16.mxu0 0
        %3136 = vmatpush1.bf16.msra.mxu0 %v3080
        %3137 = vmatprep.subr.bf16.mxu0 0
        %3138 = vmatpush1.bf16.msra.mxu0 %v3081
        %3139 = vmatprep.subr.bf16.mxu0 0
        %3140 = vmatpush1.bf16.msra.mxu0 %v3082
        %3141 = vmatprep.subr.bf16.mxu0 0
        %3142 = vmatpush1.bf16.msra.mxu0 %v3083
        %3143 = vmatprep.subr.bf16.mxu0 0
        %3144 = vmatpush1.bf16.msra.mxu0 %v3084
        %3145 = vmatprep.subr.bf16.mxu0 0
        %3146 = vmatpush1.bf16.msra.mxu0 %v3085
        %3147 = vmatprep.subr.bf16.mxu0 0
        %3148 = vmatpush1.bf16.msra.mxu0 %v3086
        %3149 = vmatprep.subr.bf16.mxu0 0
        %3150 = vmatpush1.bf16.msra.mxu0 %v3087
        %3151 = vmatprep.subr.bf16.mxu0 0
        %3152 = vmatpush1.bf16.msra.mxu0 %v3088
        %3153 = vmatprep.mubr.bf16.mxu0 %v2906
        %3154 = vmatmul.mubr.bf16.gmra.mrb[0].mxu0 %v2905
        %v3155 = vpop.f32.mrb[0].mxu0
        %v3156 = vadd.f32 0.0, %v3155
        %v3157 = vpop.f32.mrb[0].mxu0
        %v3158 = vpop.f32.mrb[0].mxu0
        %v3159 = vadd.f32 0.0, %v3158
        %v3160 = vpop.f32.mrb[0].mxu0
        %3161 = vmatprep.mubr.bf16.mxu0 %v2909
        %3162 = vmatmul.mubr.bf16.gmra.mrb[0].mxu0 %v2908
        %v3163 = vpop.f32.mrb[0].mxu0
        %v3164 = vadd.f32 0.0, %v3163
        %v3165 = vpop.f32.mrb[0].mxu0
        %v3166 = vpop.f32.mrb[0].mxu0
        %v3167 = vadd.f32 0.0, %v3166
        %v3168 = vpop.f32.mrb[0].mxu0
        %3169 = vmatprep.mubr.bf16.mxu0 %v2912
        %3170 = vmatmul.mubr.bf16.gmra.mrb[0].mxu0 %v2911
        %v3171 = vpop.f32.mrb[0].mxu0
        %v3172 = vadd.f32 0.0, %v3171
        %v3173 = vpop.f32.mrb[0].mxu0
        %v3174 = vpop.f32.mrb[0].mxu0
        %v3175 = vadd.f32 0.0, %v3174
        %v3176 = vpop.f32.mrb[0].mxu0
        %3177 = vmatprep.mubr.bf16.mxu0 %v2915
        %3178 = vmatmul.mubr.bf16.gmra.mrb[0].mxu0 %v2914
        %v3179 = vpop.f32.mrb[0].mxu0
        %v3180 = vadd.f32 0.0, %v3179
        %v3181 = vpop.f32.mrb[0].mxu0
        %v3182 = vpop.f32.mrb[0].mxu0
        %v3183 = vadd.f32 0.0, %v3182
        %v3184 = vpop.f32.mrb[0].mxu0
        %3185 = vmatprep.mubr.bf16.mxu0 %v2918
        %3186 = vmatmul.mubr.bf16.gmra.mrb[0].mxu0 %v2917
        %v3187 = vpop.f32.mrb[0].mxu0
        %v3188 = vadd.f32 0.0, %v3187
        %v3189 = vpop.f32.mrb[0].mxu0
        %v3190 = vpop.f32.mrb[0].mxu0
        %v3191 = vadd.f32 0.0, %v3190
        %v3192 = vpop.f32.mrb[0].mxu0
        %3193 = vmatprep.mubr.bf16.mxu0 %v2921
        %3194 = vmatmul.mubr.bf16.gmra.mrb[0].mxu0 %v2920
        %v3195 = vpop.f32.mrb[0].mxu0
        %v3196 = vadd.f32 0.0, %v3195
        %v3197 = vpop.f32.mrb[0].mxu0
        %v3198 = vpop.f32.mrb[0].mxu0
        %v3199 = vadd.f32 0.0, %v3198
        %v3200 = vpop.f32.mrb[0].mxu0
        %3201 = vmatprep.mubr.bf16.mxu0 %v2924
        %3202 = vmatmul.mubr.bf16.gmra.mrb[0].mxu0 %v2923
        %v3203 = vpop.f32.mrb[0].mxu0
        %v3204 = vadd.f32 0.0, %v3203
        %v3205 = vpop.f32.mrb[0].mxu0
        %v3206 = vpop.f32.mrb[0].mxu0
        %v3207 = vadd.f32 0.0, %v3206
        %v3208 = vpop.f32.mrb[0].mxu0
        %3209 = vmatprep.mubr.bf16.mxu0 %v2927
        %3210 = vmatmul.mubr.bf16.gmra.mrb[0].mxu0 %v2926
        %v3211 = vpop.f32.mrb[0].mxu0
        %v3212 = vadd.f32 0.0, %v3211
        %v3213 = vpop.f32.mrb[0].mxu0
        %v3214 = vpop.f32.mrb[0].mxu0
        %v3215 = vadd.f32 0.0, %v3214
        %v3216 = vpop.f32.mrb[0].mxu0
        %3217 = vdwg.mxu0
        %3218 = vmatprep.subr.bf16.mxu0 0
        %3219 = vmatpush1.bf16.msra.mxu0 %v3089
        %3220 = vmatprep.subr.bf16.mxu0 0
        %3221 = vmatpush1.bf16.msra.mxu0 %v3090
        %3222 = vmatprep.subr.bf16.mxu0 0
        %3223 = vmatpush1.bf16.msra.mxu0 %v3091
        %3224 = vmatprep.subr.bf16.mxu0 0
        %3225 = vmatpush1.bf16.msra.mxu0 %v3092
        %3226 = vmatprep.subr.bf16.mxu0 0
        %3227 = vmatpush1.bf16.msra.mxu0 %v3093
        %3228 = vmatprep.subr.bf16.mxu0 0
        %3229 = vmatpush1.bf16.msra.mxu0 %v3094
        %3230 = vmatprep.subr.bf16.mxu0 0
        %3231 = vmatpush1.bf16.msra.mxu0 %v3095
        %3232 = vmatprep.subr.bf16.mxu0 0
        %3233 = vmatpush1.bf16.msra.mxu0 %v3096
        %3234 = vmatprep.subr.bf16.mxu0 0
        %3235 = vmatpush1.bf16.msra.mxu0 0
        %3236 = vmatprep.subr.bf16.mxu0 0
        %3237 = vmatpush1.bf16.msra.mxu0 0
        %3238 = vmatprep.subr.bf16.mxu0 0
        %3239 = vmatpush1.bf16.msra.mxu0 0
        %3240 = vmatprep.subr.bf16.mxu0 0
        %3241 = vmatpush1.bf16.msra.mxu0 0
        %3242 = vmatprep.subr.bf16.mxu0 0
        %3243 = vmatpush1.bf16.msra.mxu0 0
        %3244 = vmatprep.subr.bf16.mxu0 0
        %3245 = vmatpush1.bf16.msra.mxu0 0
        %3246 = vmatprep.subr.bf16.mxu0 0
        %3247 = vmatpush1.bf16.msra.mxu0 0
        %3248 = vmatprep.subr.bf16.mxu0 0
        %3249 = vmatpush1.bf16.msra.mxu0 0
        %3250 = vmatprep.mubr.bf16.mxu0 0
        %3251 = vmatmul.mubr.bf16.gmra.mrb[0].mxu0 %v2907
        %v3252 = vpop.f32.mrb[0].mxu0
        %v3253 = vadd.f32 %v3156, %v3252
        %v3254 = vpop.f32.mrb[0].mxu0
        %v3255 = vpop.f32.mrb[0].mxu0
        %v3256 = vadd.f32 %v3159, %v3255
        %v3257 = vpop.f32.mrb[0].mxu0
        %3258 = vmatprep.mubr.bf16.mxu0 0
        %3259 = vmatmul.mubr.bf16.gmra.mrb[0].mxu0 %v2910
        %v3260 = vpop.f32.mrb[0].mxu0
        %v3261 = vadd.f32 %v3164, %v3260
        %v3262 = vpop.f32.mrb[0].mxu0
        %v3263 = vpop.f32.mrb[0].mxu0
        %v3264 = vadd.f32 %v3167, %v3263
        %v3265 = vpop.f32.mrb[0].mxu0
        %3266 = vmatprep.mubr.bf16.mxu0 0
        %3267 = vmatmul.mubr.bf16.gmra.mrb[0].mxu0 %v2913
        %v3268 = vpop.f32.mrb[0].mxu0
        %v3269 = vadd.f32 %v3172, %v3268
        %v3270 = vpop.f32.mrb[0].mxu0
        %v3271 = vpop.f32.mrb[0].mxu0
        %v3272 = vadd.f32 %v3175, %v3271
        %v3273 = vpop.f32.mrb[0].mxu0
        %3274 = vmatprep.mubr.bf16.mxu0 0
        %3275 = vmatmul.mubr.bf16.gmra.mrb[0].mxu0 %v2916
        %v3276 = vpop.f32.mrb[0].mxu0
        %v3277 = vadd.f32 %v3180, %v3276
        %v3278 = vpop.f32.mrb[0].mxu0
        %v3279 = vpop.f32.mrb[0].mxu0
        %v3280 = vadd.f32 %v3183, %v3279
        %v3281 = vpop.f32.mrb[0].mxu0
        %3282 = vmatprep.mubr.bf16.mxu0 0
        %3283 = vmatmul.mubr.bf16.gmra.mrb[0].mxu0 %v2919
        %v3284 = vpop.f32.mrb[0].mxu0
        %v3285 = vadd.f32 %v3188, %v3284
        %v3286 = vpop.f32.mrb[0].mxu0
        %v3287 = vpop.f32.mrb[0].mxu0
        %v3288 = vadd.f32 %v3191, %v3287
        %v3289 = vpop.f32.mrb[0].mxu0
        %3290 = vmatprep.mubr.bf16.mxu0 0
        %3291 = vmatmul.mubr.bf16.gmra.mrb[0].mxu0 %v2922
        %v3292 = vpop.f32.mrb[0].mxu0
        %v3293 = vadd.f32 %v3196, %v3292
        %v3294 = vpop.f32.mrb[0].mxu0
        %v3295 = vpop.f32.mrb[0].mxu0
        %v3296 = vadd.f32 %v3199, %v3295
        %v3297 = vpop.f32.mrb[0].mxu0
        %3298 = vmatprep.mubr.bf16.mxu0 0
        %3299 = vmatmul.mubr.bf16.gmra.mrb[0].mxu0 %v2925
        %v3300 = vpop.f32.mrb[0].mxu0
        %v3301 = vadd.f32 %v3204, %v3300
        %v3302 = vpop.f32.mrb[0].mxu0
        %v3303 = vpop.f32.mrb[0].mxu0
        %v3304 = vadd.f32 %v3207, %v3303
        %v3305 = vpop.f32.mrb[0].mxu0
        %3306 = vmatprep.mubr.bf16.mxu0 0
        %3307 = vmatmul.mubr.bf16.gmra.mrb[0].mxu0 %v2928
        %v3308 = vpop.f32.mrb[0].mxu0
        %v3309 = vadd.f32 %v3212, %v3308
        %v3310 = vpop.f32.mrb[0].mxu0
        %v3311 = vpop.f32.mrb[0].mxu0
        %v3312 = vadd.f32 %v3215, %v3311
        %v3313 = vpop.f32.mrb[0].mxu0
        %3314 = vdwg.mxu0
        %v3315 = vadd.f32 %v2843, %v3253
        %v3316 = vadd.f32 %v2846, %v3256
        %v3317 = vadd.f32 %v2851, %v3261
        %v3318 = vadd.f32 %v2854, %v3264
        %v3319 = vadd.f32 %v2859, %v3269
        %v3320 = vadd.f32 %v2862, %v3272
        %v3321 = vadd.f32 %v2867, %v3277
        %v3322 = vadd.f32 %v2870, %v3280
        %v3323 = vadd.f32 %v2875, %v3285
        %v3324 = vadd.f32 %v2878, %v3288
        %v3325 = vadd.f32 %v2883, %v3293
        %v3326 = vadd.f32 %v2886, %v3296
        %v3327 = vadd.f32 %v2891, %v3301
        %v3328 = vadd.f32 %v2894, %v3304
        %v3329 = vadd.f32 %v2899, %v3309
        %v3330 = vadd.f32 %v2902, %v3312
        %3331 = vst [vmem:[%s212 + $0x80] sm:$0xff] %v3315
        %3332 = vst [vmem:[%s212 + $0x88] sm:$0xff] %v3316
        %3333 = vst [vmem:[%s212 + $0x90] sm:$0xff] %v3317
        %3334 = vst [vmem:[%s212 + $0x98] sm:$0xff] %v3318
        %3335 = vst [vmem:[%s212 + $0xa0] sm:$0xff] %v3319
        %3336 = vst [vmem:[%s212 + $0xa8] sm:$0xff] %v3320
        %3337 = vst [vmem:[%s212 + $0xb0] sm:$0xff] %v3321
        %3338 = vst [vmem:[%s212 + $0xb8] sm:$0xff] %v3322
        %3339 = vst [vmem:[%s212 + $0xc0] sm:$0xff] %v3323
        %3340 = vst [vmem:[%s212 + $0xc8] sm:$0xff] %v3324
        %3341 = vst [vmem:[%s212 + $0xd0] sm:$0xff] %v3325
        %3342 = vst [vmem:[%s212 + $0xd8] sm:$0xff] %v3326
        %3343 = vst [vmem:[%s212 + $0xe0] sm:$0xff] %v3327
        %3344 = vst [vmem:[%s212 + $0xe8] sm:$0xff] %v3328
        %3345 = vst [vmem:[%s212 + $0xf0] sm:$0xff] %v3329
        %3346 = vst [vmem:[%s212 + $0xf8] sm:$0xff] %v3330
        %v3347 = vadd.f32 %v3315, %v3316
        %v3348 = vadd.f32 %v3347, %v3317
        %v3349 = vadd.f32 %v3348, %v3318
        %v3350 = vadd.f32 %v3349, %v3319
        %v3351 = vadd.f32 %v3350, %v3320
        %v3352 = vadd.f32 %v3351, %v3321
        %v3353 = vadd.f32 %v3352, %v3322
        %v3354 = vadd.f32 %v3353, %v3323
        %v3355 = vadd.f32 %v3354, %v3324
        %v3356 = vadd.f32 %v3355, %v3325
        %v3357 = vadd.f32 %v3356, %v3326
        %v3358 = vadd.f32 %v3357, %v3327
        %v3359 = vadd.f32 %v3358, %v3328
        %v3360 = vadd.f32 %v3359, %v3329
        %v3361 = vadd.f32 %v3360, %v3330
        %v3362 = vrot.slane %v3361, 4
        %v3363 = vadd.f32 %v3361, %v3362
        %v3364 = vrot.slane %v3363, 2
        %v3365 = vadd.f32 %v3363, %v3364
        %v3366 = vrot.slane %v3365, 1
        %v3367 = vadd.f32 %v3365, %v3366
        %v3368 = vadd.f32 %v2067, %v3367
        %v3369 = vmul.f32 %v3315, %v3315
        %v3370 = vmul.f32 %v3316, %v3316
        %v3371 = vmul.f32 %v3317, %v3317
        %v3372 = vmul.f32 %v3318, %v3318
        %v3373 = vmul.f32 %v3319, %v3319
        %v3374 = vmul.f32 %v3320, %v3320
        %v3375 = vmul.f32 %v3321, %v3321
        %v3376 = vmul.f32 %v3322, %v3322
        %v3377 = vmul.f32 %v3323, %v3323
        %v3378 = vmul.f32 %v3324, %v3324
        %v3379 = vmul.f32 %v3325, %v3325
        %v3380 = vmul.f32 %v3326, %v3326
        %v3381 = vmul.f32 %v3327, %v3327
        %v3382 = vmul.f32 %v3328, %v3328
        %v3383 = vmul.f32 %v3329, %v3329
        %v3384 = vmul.f32 %v3330, %v3330
        %v3385 = vadd.f32 %v3369, %v3370
        %v3386 = vadd.f32 %v3385, %v3371
        %v3387 = vadd.f32 %v3386, %v3372
        %v3388 = vadd.f32 %v3387, %v3373
        %v3389 = vadd.f32 %v3388, %v3374
        %v3390 = vadd.f32 %v3389, %v3375
        %v3391 = vadd.f32 %v3390, %v3376
        %v3392 = vadd.f32 %v3391, %v3377
        %v3393 = vadd.f32 %v3392, %v3378
        %v3394 = vadd.f32 %v3393, %v3379
        %v3395 = vadd.f32 %v3394, %v3380
        %v3396 = vadd.f32 %v3395, %v3381
        %v3397 = vadd.f32 %v3396, %v3382
        %v3398 = vadd.f32 %v3397, %v3383
        %v3399 = vadd.f32 %v3398, %v3384
        %v3400 = vrot.slane %v3399, 4
        %v3401 = vadd.f32 %v3399, %v3400
        %v3402 = vrot.slane %v3401, 2
        %v3403 = vadd.f32 %v3401, %v3402
        %v3404 = vrot.slane %v3403, 1
        %v3405 = vadd.f32 %v3403, %v3404
        %v3406 = vadd.f32 %v2105, %v3405
        %vm3407 = vcmask 1040384
        %v3408 = vsel %vm3407, %v3368, %v3406
        %3409 = vst [vmem:[%s216] sm:$0x3] %v3408
        %p3410 = scmp.lt.s32.totalorder %s19, 1
        %s3411 = scalar_select %p3410, %s19, 1
        %s3412 = smul.addr %s3411, 32
        %s3413 = smul.addr %s3412, 8
        %s3414 = scalar_lea.vmem %s2, %s3413
        %p3415 = scmp.lt.s32.totalorder %s19, 1
        %s3416 = scalar_select %p3415, %s19, 1
        %s3417 = smul.addr %s3416, 2
        %s3418 = scalar_lea.vmem %s3, %s3417
        // Predicated region
        $region37: #{projected_residual_block_forward.3} parent=27 // pred_check
          %p3419 = pneg %p84
        $region38: #{projected_residual_block_forward.3} parent=27 // pred_check_branch
          %3421 = sbr.rel (%p3419) target = $region40
        $region39: #{projected_residual_block_forward.3} parent=27 // pred_region
          _
        $region40: #{projected_residual_block_forward.3} parent=27 // pred_fallthru
          _
        // Predicated region
        $region41: #{projected_residual_block_forward.3} parent=27 // pred_check
          %p3422 = pneg %p110
        $region42: #{projected_residual_block_forward.3} parent=27 // pred_check_branch
          %3424 = sbr.rel (%p3422) target = $region44
        $region43: #{projected_residual_block_forward.3} parent=27 // pred_region
          _
        $region44: #{projected_residual_block_forward.3} parent=27 // pred_fallthru
          _
      $region28: #{projected_residual_block_forward.3} parent=5 // pred_fallthru
        _
      %p3425 = scmp.le.s32.totalorder 2, %s14
      // Predicated region
      $region45: #{projected_residual_block_forward.3} parent=5 // pred_check
        %p3426 = pneg %p3425
      $region46: #{projected_residual_block_forward.3} parent=5 // pred_check_branch
        %3428 = sbr.rel (%p3426) target = $region48
      $region47: #{projected_residual_block_forward.3} parent=5 // pred_region
        %s3429 = ssub.s32 %s14, 2
        // Predicated region
        $region49: #{projected_residual_block_forward.3} parent=47 // pred_check
          %p3430 = pneg %p90
        $region50: #{projected_residual_block_forward.3} parent=47 // pred_check_branch
          %3432 = sbr.rel (%p3430) target = $region52
        $region51: #{projected_residual_block_forward.3} parent=47 // pred_region
          %p3433 = scmp.lt.s32.totalorder %s20, 1
          %s3434 = scalar_select %p3433, %s20, 1
          %s3435 = smul.addr %s3434, 32
          %s3436 = smul.addr %s3435, 8
          %s3437 = scalar_lea.vmem %s2, %s3436
        $region52: #{projected_residual_block_forward.3} parent=47 // pred_fallthru
          _
        // Predicated region
        $region53: #{projected_residual_block_forward.3} parent=47 // pred_check
          %p3438 = pneg %p116
        $region54: #{projected_residual_block_forward.3} parent=47 // pred_check_branch
          %3440 = sbr.rel (%p3438) target = $region56
        $region55: #{projected_residual_block_forward.3} parent=47 // pred_region
          %p3441 = scmp.lt.s32.totalorder %s20, 1
          %s3442 = scalar_select %p3441, %s20, 1
          %s3443 = smul.addr %s3442, 2
          %s3444 = scalar_lea.vmem %s3, %s3443
        $region56: #{projected_residual_block_forward.3} parent=47 // pred_fallthru
          _
      $region48: #{projected_residual_block_forward.3} parent=5 // pred_fallthru
        _
    $region6: #{projected_residual_block_forward.3} parent=1 // loop_footer
      %s18 = sadd.s32 1, %s14
    $region7: #{projected_residual_block_forward.3} parent=1 // loop_footer_branch
      %13 = sbr.rel target = $region3
    $region8: #{projected_residual_block_forward.3} parent=1 // loop_exit
      _
    %3445 = vsyncpa [#allocation4], 1
    %s3446 = scalar_lea.sflag [#allocation4], 1
    %3447 = vsyncpa %s3446, 1
    %3448 = vsyncpa [#allocation6], 1

</llo_original>
